<compile_context>
chip_gen: v5e
topology: v5e:2x2
jax: 0.10.0
libtpu: 0.0.40
codegen_flags: <defaults>
</compile_context>

<pallas_src>
import functools

import jax
import jax.numpy as jnp
from jax.experimental import pallas as pl
from jax.experimental.pallas import tpu as pltpu


# ----------------------------- fused kernel ----------------------------------


def fused_forward_kernel(x_ref, *refs, num_layers, hidden, num_heads):
    # Unpack refs: per-layer GRU (wih, bih, whh, bhh), attention (win,bin,wout,bout),
    # head (w1,b1,w2,b2,gamma,beta,w3,b3), then the output ref.
    idx = 0
    gru_w = []
    for _ in range(num_layers):
        gru_w.append(refs[idx:idx + 4])
        idx += 4
    win_ref, bin_ref, wout_ref, bout_ref = refs[idx:idx + 4]
    idx += 4
    (w1_ref, b1_ref, w2_ref, b2_ref,
     g_ref, bta_ref, w3_ref, b3_ref) = refs[idx:idx + 8]
    idx += 8
    o_ref = refs[idx]

    H = hidden
    E = 2 * H
    x = x_ref[...]                                  # (Bb, T, F)  batch-block
    Bb, T, _ = x.shape

    def gru_cell(xr, hg, h_prev):
        # PyTorch gate order r, z, n.  xr/hg: (Bb, 3H), h_prev: (Bb, H)
        r = jax.nn.sigmoid(xr[:, :H] + hg[:, :H])
        z = jax.nn.sigmoid(xr[:, H:2 * H] + hg[:, H:2 * H])
        n = jnp.tanh(xr[:, 2 * H:] + r * hg[:, 2 * H:])
        return (1.0 - z) * n + z * h_prev

    # ---- bidirectional multi-layer GRU: both directions share one matmul/step ----
    h_seq = x
    for (wih_ref, bih_ref, whh_ref, bhh_ref) in gru_w:
        din = h_seq.shape[-1]
        # Input projection for all timesteps & both directions in one MXU matmul.
        xg = jnp.dot(h_seq.reshape(Bb * T, din), wih_ref[...],
                     preferred_element_type=jnp.float32) + bih_ref[...]
        xg = xg.reshape(Bb, T, 6 * H)               # cols: [fwd r,z,n | bwd r,z,n]
        whh = whh_ref[...]                          # (2H, 6H) block-diagonal
        bhh = bhh_ref[...]                          # (1, 6H)

        h = jnp.zeros((Bb, 2 * H), jnp.float32)     # [h_fwd | h_bwd]
        fwd_steps = []
        bwd_steps = []
        for i in range(T):                          # fully unrolled (T static)
            hg = jnp.dot(h, whh, preferred_element_type=jnp.float32) + bhh  # (Bb, 6H)
            h_f = gru_cell(xg[:, i, :3 * H],         hg[:, :3 * H], h[:, :H])
            h_b = gru_cell(xg[:, T - 1 - i, 3 * H:], hg[:, 3 * H:], h[:, H:])
            h = jnp.concatenate([h_f, h_b], axis=-1)
            fwd_steps.append(h_f)
            bwd_steps.append(h_b)
        fwd_seq = jnp.stack(fwd_steps, axis=1)          # (Bb, T, H), time-ordered
        bwd_seq = jnp.stack(bwd_steps[::-1], axis=1)    # (Bb, T, H), time-aligned
        h_seq = jnp.concatenate([fwd_seq, bwd_seq], axis=-1)   # (Bb, T, 2H)
        # TODO(synk): inter-layer GRU dropout is a no-op at inference.

    # ---- MultiheadAttention (self) + residual ----
    x2 = h_seq.reshape(Bb * T, E)
    qkv = jnp.dot(x2, win_ref[...], preferred_element_type=jnp.float32) + bin_ref[...]
    q = qkv[:, :E].reshape(Bb, T, E)                # 1/sqrt(head_dim) folded into win/bin
    k = qkv[:, E:2 * E].reshape(Bb, T, E)
    v = qkv[:, 2 * E:].reshape(Bb, T, E)
    hd = E // num_heads
    ctx_heads = []
    for hh in range(num_heads):
        sl = slice(hh * hd, (hh + 1) * hd)
        s = jnp.einsum('bqd,bkd->bqk', q[:, :, sl], k[:, :, sl],
                       preferred_element_type=jnp.float32)
        s = s - jnp.max(s, axis=-1, keepdims=True)
        p = jnp.exp(s)
        p = p * pl.reciprocal(jnp.sum(p, axis=-1, keepdims=True), approx=True)
        ctx_heads.append(jnp.einsum('bqk,bkd->bqd', p, v[:, :, sl],
                                    preferred_element_type=jnp.float32))
    ctx = jnp.concatenate(ctx_heads, axis=-1).reshape(Bb * T, E)
    attn = jnp.dot(ctx, wout_ref[...], preferred_element_type=jnp.float32) + bout_ref[...]
    res = h_seq + attn.reshape(Bb, T, E)            # residual: x + attn_out

    # ---- head MLP on the last timestep ----
    hdn = res[:, T - 1, :]                          # (Bb, E)
    hdn = jnp.dot(hdn, w1_ref[...], preferred_element_type=jnp.float32) + b1_ref[...]
    hdn = hdn * jax.nn.sigmoid(hdn)                 # SiLU
    hdn = jnp.dot(hdn, w2_ref[...], preferred_element_type=jnp.float32) + b2_ref[...]
    mu = jnp.mean(hdn, axis=-1, keepdims=True)      # LayerNorm(64), eps=1e-5
    var = jnp.mean((hdn - mu) ** 2, axis=-1, keepdims=True)
    hdn = (hdn - mu) * jax.lax.rsqrt(var + 1e-5) * g_ref[...] + bta_ref[...]
    hdn = hdn * jax.nn.sigmoid(hdn)                 # SiLU
    out = jnp.dot(hdn, w3_ref[...], preferred_element_type=jnp.float32) + b3_ref[...]
    o_ref[...] = jax.nn.sigmoid(out).reshape(1, Bb, 1)


# ----------------------------- param prep (one-time folds) -------------------


def prepare_fused_params(params, hidden, num_heads):
    """Fold eval-BN into layer-0 GRU weights, fuse fwd/bwd per-layer weights,
    fold 1/sqrt(head_dim) into the attention in-projection."""
    H = hidden
    E = 2 * H

    bn = params['bn']
    s = bn['gamma'] * jax.lax.rsqrt(bn['var'] + 1e-5)      # (1, F)
    t = bn['beta'] - bn['mean'] * s                        # (1, F)

    gru = []
    for li, layer in enumerate(params['gru']):
        wih_f, whh_f, bih_f, bhh_f = layer['fwd']
        wih_b, whh_b, bih_b, bhh_b = layer['bwd']
        wih = jnp.concatenate([wih_f, wih_b], axis=1)      # (Din, 6H)
        bih = jnp.concatenate([bih_f, bih_b], axis=1)      # (1, 6H)
        if li == 0:                                        # BN affine fold
            bih = bih + t @ wih
            wih = s.reshape(-1, 1) * wih
        z = jnp.zeros((H, 3 * H), jnp.float32)
        whh = jnp.concatenate(
            [jnp.concatenate([whh_f, z], axis=1),
             jnp.concatenate([z, whh_b], axis=1)], axis=0)  # (2H, 6H) block-diag
        bhh = jnp.concatenate([bhh_f, bhh_b], axis=1)       # (1, 6H)
        gru.append((wih, bih, whh, bhh))

    att = params['attn']
    scale = 1.0 / ((E // num_heads) ** 0.5)
    win = jnp.concatenate([att['win'][:, :E] * scale, att['win'][:, E:]], axis=1)
    bqkv = jnp.concatenate([att['bin'][:, :E] * scale, att['bin'][:, E:]], axis=1)

    fc = params['fc']
    return dict(
        gru=gru,
        attn=(win, bqkv, att['wout'], att['bout']),
        fc=(fc['w1'], fc['b1'], fc['w2'], fc['b2'],
            fc['g'], fc['beta'], fc['w3'], fc['b3']),
    )


# ----------------------------- wrapper ----------------------------------------


def make_alphanet_forward(fused_params, hidden, num_heads, batch_block=None):
    flat_w = []
    for layer in fused_params['gru']:
        flat_w.extend(layer)
    flat_w.extend(fused_params['attn'])
    flat_w.extend(fused_params['fc'])
    flat_w = tuple(flat_w)
    num_layers = len(fused_params['gru'])

    kernel = functools.partial(
        fused_forward_kernel,
        num_layers=num_layers, hidden=hidden, num_heads=num_heads)

    def forward(x):
        B, T, F = x.shape
        bblk = batch_block if (batch_block and B % batch_block == 0) else B
        nblk = B // bblk

        # Weights: full-array VMEM-resident blocks (constant index map -> loaded once).
        w_specs = [pl.BlockSpec(w.shape, lambda i: (0, 0)) for w in flat_w]

        out = pl.pallas_call(
            kernel,
            out_shape=jax.ShapeDtypeStruct((nblk, bblk, 1), jnp.float32),
            grid=(nblk,),
            in_specs=[pl.BlockSpec((bblk, T, F), lambda i: (i, 0, 0))] + w_specs,
            out_specs=pl.BlockSpec((1, bblk, 1), lambda i: (i, 0, 0)),
            compiler_params=pltpu.CompilerParams(
                dimension_semantics=("parallel",)),
        )(x, *flat_w)
        return out.reshape(B, 1)

    return jax.jit(forward)


# ----------------------------- params ------------------------------------------


def init_params(key, input_size, hidden, num_layers):
    E = 2 * hidden
    keys = iter(jax.random.split(key, 128))

    def u(shape, scale):
        return jax.random.uniform(next(keys), shape, jnp.float32, -scale, scale)

    params = {}
    params['bn'] = dict(
        gamma=1.0 + 0.1 * u((1, input_size), 1.0),
        beta=0.1 * u((1, input_size), 1.0),
        mean=0.1 * u((1, input_size), 1.0),
        var=1.0 + 0.1 * jnp.abs(u((1, input_size), 1.0)),
    )

    k = 1.0 / (hidden ** 0.5)
    gru_layers = []
    for layer in range(num_layers):
        din = input_size if layer == 0 else 2 * hidden
        layer_p = {}
        for d in ('fwd', 'bwd'):
            layer_p[d] = (
                u((din, 3 * hidden), k),      # W_ih^T   cols [r|z|n]
                u((hidden, 3 * hidden), k),   # W_hh^T   cols [r|z|n]
                u((1, 3 * hidden), k),        # b_ih
                u((1, 3 * hidden), k),        # b_hh
            )
        gru_layers.append(layer_p)
    params['gru'] = gru_layers

    ka = 1.0 / (E ** 0.5)
    params['attn'] = dict(
        win=u((E, 3 * E), ka),    # in_proj_weight^T
        bin=u((1, 3 * E), ka),
        wout=u((E, E), ka),       # out_proj.weight^T
        bout=u((1, E), ka),
    )

    params['fc'] = dict(
        w1=u((E, 256), 1.0 / (E ** 0.5)), b1=u((1, 256), 1.0 / (E ** 0.5)),
        w2=u((256, 64), 1.0 / 16.0),      b2=u((1, 64), 1.0 / 16.0),
        g=1.0 + 0.1 * u((1, 64), 1.0),    beta=0.1 * u((1, 64), 1.0),
        w3=u((64, 1), 1.0 / 8.0),         b3=u((1, 1), 1.0 / 8.0),
    )
    return params


# ----------------------------- main ---------------------------------------------


if __name__ == "__main__":
    B, T, F = 4, 8, 16                 # batch, seq, input_size
    HIDDEN, LAYERS, HEADS = 32, 2, 8   # 2*HIDDEN = 64 divisible by 8 heads

    key = jax.random.PRNGKey(0)
    kx, kp = jax.random.split(key)
    x = jax.random.normal(kx, (B, T, F), jnp.float32)

    params = init_params(kp, F, HIDDEN, LAYERS)
    fused = prepare_fused_params(params, HIDDEN, HEADS)
    forward = make_alphanet_forward(fused, HIDDEN, HEADS, batch_block=2)

    out = forward(x)
    jax.block_until_ready(out)
    assert out.shape == (B, 1)
    assert bool(jnp.all(jnp.isfinite(out)))
    print("KERNEL_OK")
</pallas_src>

<mosaic_0001>
module attributes {stable_mosaic.version = 11 : i64} {
  func.func @fused_forward_kernel(%arg0: i32, %arg1: memref<2x8x16xf32, #tpu.memory_space<vmem>>, %arg2: memref<16x192xf32, #tpu.memory_space<vmem>>, %arg3: memref<1x192xf32, #tpu.memory_space<vmem>>, %arg4: memref<64x192xf32, #tpu.memory_space<vmem>>, %arg5: memref<1x192xf32, #tpu.memory_space<vmem>>, %arg6: memref<64x192xf32, #tpu.memory_space<vmem>>, %arg7: memref<1x192xf32, #tpu.memory_space<vmem>>, %arg8: memref<64x192xf32, #tpu.memory_space<vmem>>, %arg9: memref<1x192xf32, #tpu.memory_space<vmem>>, %arg10: memref<64x192xf32, #tpu.memory_space<vmem>>, %arg11: memref<1x192xf32, #tpu.memory_space<vmem>>, %arg12: memref<64x64xf32, #tpu.memory_space<vmem>>, %arg13: memref<1x64xf32, #tpu.memory_space<vmem>>, %arg14: memref<64x256xf32, #tpu.memory_space<vmem>>, %arg15: memref<1x256xf32, #tpu.memory_space<vmem>>, %arg16: memref<256x64xf32, #tpu.memory_space<vmem>>, %arg17: memref<1x64xf32, #tpu.memory_space<vmem>>, %arg18: memref<1x64xf32, #tpu.memory_space<vmem>>, %arg19: memref<1x64xf32, #tpu.memory_space<vmem>>, %arg20: memref<64x1xf32, #tpu.memory_space<vmem>>, %arg21: memref<1x1xf32, #tpu.memory_space<vmem>>, %arg22: memref<1x2x1xf32, #tpu.memory_space<vmem>>) attributes {dimension_semantics = [#tpu.dimension_semantics<parallel>], iteration_bounds = array<i64: 2>, scalar_prefetch = 0 : i64, scratch_operands = 0 : i64, tpu.core_type = #tpu.core_type<tc>, window_params = [{transform_indices = @transform_0, window_bounds = array<i64: 2, 8, 16>}, {pipeline_mode = #tpu.pipeline_mode<synchronous>, transform_indices = @transform_1, window_bounds = array<i64: 16, 192>}, {pipeline_mode = #tpu.pipeline_mode<synchronous>, transform_indices = @transform_2, window_bounds = array<i64: 1, 192>}, {pipeline_mode = #tpu.pipeline_mode<synchronous>, transform_indices = @transform_3, window_bounds = array<i64: 64, 192>}, {pipeline_mode = #tpu.pipeline_mode<synchronous>, transform_indices = @transform_4, window_bounds = array<i64: 1, 192>}, {pipeline_mode = #tpu.pipeline_mode<synchronous>, transform_indices = @transform_5, window_bounds = array<i64: 64, 192>}, {pipeline_mode = #tpu.pipeline_mode<synchronous>, transform_indices = @transform_6, window_bounds = array<i64: 1, 192>}, {pipeline_mode = #tpu.pipeline_mode<synchronous>, transform_indices = @transform_7, window_bounds = array<i64: 64, 192>}, {pipeline_mode = #tpu.pipeline_mode<synchronous>, transform_indices = @transform_8, window_bounds = array<i64: 1, 192>}, {pipeline_mode = #tpu.pipeline_mode<synchronous>, transform_indices = @transform_9, window_bounds = array<i64: 64, 192>}, {pipeline_mode = #tpu.pipeline_mode<synchronous>, transform_indices = @transform_10, window_bounds = array<i64: 1, 192>}, {pipeline_mode = #tpu.pipeline_mode<synchronous>, transform_indices = @transform_11, window_bounds = array<i64: 64, 64>}, {pipeline_mode = #tpu.pipeline_mode<synchronous>, transform_indices = @transform_12, window_bounds = array<i64: 1, 64>}, {pipeline_mode = #tpu.pipeline_mode<synchronous>, transform_indices = @transform_13, window_bounds = array<i64: 64, 256>}, {pipeline_mode = #tpu.pipeline_mode<synchronous>, transform_indices = @transform_14, window_bounds = array<i64: 1, 256>}, {pipeline_mode = #tpu.pipeline_mode<synchronous>, transform_indices = @transform_15, window_bounds = array<i64: 256, 64>}, {pipeline_mode = #tpu.pipeline_mode<synchronous>, transform_indices = @transform_16, window_bounds = array<i64: 1, 64>}, {pipeline_mode = #tpu.pipeline_mode<synchronous>, transform_indices = @transform_17, window_bounds = array<i64: 1, 64>}, {pipeline_mode = #tpu.pipeline_mode<synchronous>, transform_indices = @transform_18, window_bounds = array<i64: 1, 64>}, {pipeline_mode = #tpu.pipeline_mode<synchronous>, transform_indices = @transform_19, window_bounds = array<i64: 64, 1>}, {pipeline_mode = #tpu.pipeline_mode<synchronous>, transform_indices = @transform_20, window_bounds = array<i64: 1, 1>}, {transform_indices = @transform_21, window_bounds = array<i64: 1, 2, 1>}]} {
    %c0 = arith.constant 0 : index
    %c0_0 = arith.constant 0 : index
    %c0_1 = arith.constant 0 : index
    %0 = vector.load %arg1[%c0, %c0_0, %c0_1] : memref<2x8x16xf32, #tpu.memory_space<vmem>>, vector<2x8x16xf32>
    %1 = vector.shape_cast %0 : vector<2x8x16xf32> to vector<16x16xf32>
    %c0_2 = arith.constant 0 : index
    %c0_3 = arith.constant 0 : index
    %2 = vector.load %arg2[%c0_2, %c0_3] : memref<16x192xf32, #tpu.memory_space<vmem>>, vector<16x192xf32>
    %cst = arith.constant dense<0.000000e+00> : vector<16x192xf32>
    %3 = tpu.matmul %1, %2, %cst {dimension_numbers = #tpu.dot_dimension_numbers<[1], [0], [0], [1], [0, 0, 1, 1], [], []>} : vector<16x16xf32>, vector<16x192xf32>, vector<16x192xf32> -> vector<16x192xf32>
    %c0_4 = arith.constant 0 : index
    %c0_5 = arith.constant 0 : index
    %4 = vector.load %arg3[%c0_4, %c0_5] : memref<1x192xf32, #tpu.memory_space<vmem>>, vector<1x192xf32>
    %5 = vector.broadcast %4 : vector<1x192xf32> to vector<16x192xf32>
    %6 = arith.addf %3, %5 : vector<16x192xf32>
    %7 = vector.shape_cast %6 : vector<16x192xf32> to vector<2x8x192xf32>
    %c0_6 = arith.constant 0 : index
    %c0_7 = arith.constant 0 : index
    %8 = vector.load %arg4[%c0_6, %c0_7] : memref<64x192xf32, #tpu.memory_space<vmem>>, vector<64x192xf32>
    %c0_8 = arith.constant 0 : index
    %c0_9 = arith.constant 0 : index
    %9 = vector.load %arg5[%c0_8, %c0_9] : memref<1x192xf32, #tpu.memory_space<vmem>>, vector<1x192xf32>
    %cst_10 = arith.constant 0.000000e+00 : f32
    %10 = vector.broadcast %cst_10 : f32 to vector<2x64xf32>
    %cst_11 = arith.constant dense<0.000000e+00> : vector<2x192xf32>
    %11 = tpu.matmul %10, %8, %cst_11 {dimension_numbers = #tpu.dot_dimension_numbers<[1], [0], [0], [1], [0, 0, 1, 1], [], []>} : vector<2x64xf32>, vector<64x192xf32>, vector<2x192xf32> -> vector<2x192xf32>
    %12 = vector.broadcast %9 : vector<1x192xf32> to vector<2x192xf32>
    %13 = arith.addf %11, %12 : vector<2x192xf32>
    %14 = vector.extract_strided_slice %7 {offsets = [0, 0, 0], sizes = [2, 1, 96], strides = [1, 1, 1]} : vector<2x8x192xf32> to vector<2x1x96xf32>
    %15 = vector.shape_cast %14 : vector<2x1x96xf32> to vector<2x96xf32>
    %16 = vector.extract_strided_slice %13 {offsets = [0, 0], sizes = [2, 96], strides = [1, 1]} : vector<2x192xf32> to vector<2x96xf32>
    %17 = vector.extract_strided_slice %10 {offsets = [0, 0], sizes = [2, 32], strides = [1, 1]} : vector<2x64xf32> to vector<2x32xf32>
    %18 = vector.extract_strided_slice %15 {offsets = [0, 0], sizes = [2, 32], strides = [1, 1]} : vector<2x96xf32> to vector<2x32xf32>
    %19 = vector.extract_strided_slice %16 {offsets = [0, 0], sizes = [2, 32], strides = [1, 1]} : vector<2x96xf32> to vector<2x32xf32>
    %20 = arith.addf %18, %19 : vector<2x32xf32>
    %21 = arith.negf %20 : vector<2x32xf32>
    %22 = math.exp %21 : vector<2x32xf32>
    %cst_12 = arith.constant 1.000000e+00 : f32
    %23 = vector.broadcast %cst_12 : f32 to vector<2x32xf32>
    %24 = arith.addf %23, %22 : vector<2x32xf32>
    %25 = arith.divf %23, %24 : vector<2x32xf32>
    %26 = vector.extract_strided_slice %15 {offsets = [0, 32], sizes = [2, 32], strides = [1, 1]} : vector<2x96xf32> to vector<2x32xf32>
    %27 = vector.extract_strided_slice %16 {offsets = [0, 32], sizes = [2, 32], strides = [1, 1]} : vector<2x96xf32> to vector<2x32xf32>
    %28 = arith.addf %26, %27 : vector<2x32xf32>
    %29 = arith.negf %28 : vector<2x32xf32>
    %30 = math.exp %29 : vector<2x32xf32>
    %cst_13 = arith.constant 1.000000e+00 : f32
    %31 = vector.broadcast %cst_13 : f32 to vector<2x32xf32>
    %32 = arith.addf %31, %30 : vector<2x32xf32>
    %33 = arith.divf %31, %32 : vector<2x32xf32>
    %34 = vector.extract_strided_slice %15 {offsets = [0, 64], sizes = [2, 32], strides = [1, 1]} : vector<2x96xf32> to vector<2x32xf32>
    %35 = vector.extract_strided_slice %16 {offsets = [0, 64], sizes = [2, 32], strides = [1, 1]} : vector<2x96xf32> to vector<2x32xf32>
    %36 = arith.mulf %25, %35 : vector<2x32xf32>
    %37 = arith.addf %34, %36 : vector<2x32xf32>
    %38 = math.tanh %37 : vector<2x32xf32>
    %cst_14 = arith.constant 1.000000e+00 : f32
    %39 = vector.broadcast %cst_14 : f32 to vector<2x32xf32>
    %40 = arith.subf %39, %33 : vector<2x32xf32>
    %41 = arith.mulf %40, %38 : vector<2x32xf32>
    %42 = arith.mulf %33, %17 : vector<2x32xf32>
    %43 = arith.addf %41, %42 : vector<2x32xf32>
    %44 = vector.extract_strided_slice %7 {offsets = [0, 7, 96], sizes = [2, 1, 96], strides = [1, 1, 1]} : vector<2x8x192xf32> to vector<2x1x96xf32>
    %45 = vector.shape_cast %44 : vector<2x1x96xf32> to vector<2x96xf32>
    %46 = vector.extract_strided_slice %13 {offsets = [0, 96], sizes = [2, 96], strides = [1, 1]} : vector<2x192xf32> to vector<2x96xf32>
    %47 = vector.extract_strided_slice %10 {offsets = [0, 32], sizes = [2, 32], strides = [1, 1]} : vector<2x64xf32> to vector<2x32xf32>
    %48 = vector.extract_strided_slice %45 {offsets = [0, 0], sizes = [2, 32], strides = [1, 1]} : vector<2x96xf32> to vector<2x32xf32>
    %49 = vector.extract_strided_slice %46 {offsets = [0, 0], sizes = [2, 32], strides = [1, 1]} : vector<2x96xf32> to vector<2x32xf32>
    %50 = arith.addf %48, %49 : vector<2x32xf32>
    %51 = arith.negf %50 : vector<2x32xf32>
    %52 = math.exp %51 : vector<2x32xf32>
    %cst_15 = arith.constant 1.000000e+00 : f32
    %53 = vector.broadcast %cst_15 : f32 to vector<2x32xf32>
    %54 = arith.addf %53, %52 : vector<2x32xf32>
    %55 = arith.divf %53, %54 : vector<2x32xf32>
    %56 = vector.extract_strided_slice %45 {offsets = [0, 32], sizes = [2, 32], strides = [1, 1]} : vector<2x96xf32> to vector<2x32xf32>
    %57 = vector.extract_strided_slice %46 {offsets = [0, 32], sizes = [2, 32], strides = [1, 1]} : vector<2x96xf32> to vector<2x32xf32>
    %58 = arith.addf %56, %57 : vector<2x32xf32>
    %59 = arith.negf %58 : vector<2x32xf32>
    %60 = math.exp %59 : vector<2x32xf32>
    %cst_16 = arith.constant 1.000000e+00 : f32
    %61 = vector.broadcast %cst_16 : f32 to vector<2x32xf32>
    %62 = arith.addf %61, %60 : vector<2x32xf32>
    %63 = arith.divf %61, %62 : vector<2x32xf32>
    %64 = vector.extract_strided_slice %45 {offsets = [0, 64], sizes = [2, 32], strides = [1, 1]} : vector<2x96xf32> to vector<2x32xf32>
    %65 = vector.extract_strided_slice %46 {offsets = [0, 64], sizes = [2, 32], strides = [1, 1]} : vector<2x96xf32> to vector<2x32xf32>
    %66 = arith.mulf %55, %65 : vector<2x32xf32>
    %67 = arith.addf %64, %66 : vector<2x32xf32>
    %68 = math.tanh %67 : vector<2x32xf32>
    %cst_17 = arith.constant 1.000000e+00 : f32
    %69 = vector.broadcast %cst_17 : f32 to vector<2x32xf32>
    %70 = arith.subf %69, %63 : vector<2x32xf32>
    %71 = arith.mulf %70, %68 : vector<2x32xf32>
    %72 = arith.mulf %63, %47 : vector<2x32xf32>
    %73 = arith.addf %71, %72 : vector<2x32xf32>
    %74 = tpu.concatenate %43, %73 in 1 : vector<2x32xf32>, vector<2x32xf32> -> vector<2x64xf32>
    %cst_18 = arith.constant dense<0.000000e+00> : vector<2x192xf32>
    %75 = tpu.matmul %74, %8, %cst_18 {dimension_numbers = #tpu.dot_dimension_numbers<[1], [0], [0], [1], [0, 0, 1, 1], [], []>} : vector<2x64xf32>, vector<64x192xf32>, vector<2x192xf32> -> vector<2x192xf32>
    %76 = vector.broadcast %9 : vector<1x192xf32> to vector<2x192xf32>
    %77 = arith.addf %75, %76 : vector<2x192xf32>
    %78 = vector.extract_strided_slice %7 {offsets = [0, 1, 0], sizes = [2, 1, 96], strides = [1, 1, 1]} : vector<2x8x192xf32> to vector<2x1x96xf32>
    %79 = vector.shape_cast %78 : vector<2x1x96xf32> to vector<2x96xf32>
    %80 = vector.extract_strided_slice %77 {offsets = [0, 0], sizes = [2, 96], strides = [1, 1]} : vector<2x192xf32> to vector<2x96xf32>
    %81 = vector.extract_strided_slice %74 {offsets = [0, 0], sizes = [2, 32], strides = [1, 1]} : vector<2x64xf32> to vector<2x32xf32>
    %82 = vector.extract_strided_slice %79 {offsets = [0, 0], sizes = [2, 32], strides = [1, 1]} : vector<2x96xf32> to vector<2x32xf32>
    %83 = vector.extract_strided_slice %80 {offsets = [0, 0], sizes = [2, 32], strides = [1, 1]} : vector<2x96xf32> to vector<2x32xf32>
    %84 = arith.addf %82, %83 : vector<2x32xf32>
    %85 = arith.negf %84 : vector<2x32xf32>
    %86 = math.exp %85 : vector<2x32xf32>
    %cst_19 = arith.constant 1.000000e+00 : f32
    %87 = vector.broadcast %cst_19 : f32 to vector<2x32xf32>
    %88 = arith.addf %87, %86 : vector<2x32xf32>
    %89 = arith.divf %87, %88 : vector<2x32xf32>
    %90 = vector.extract_strided_slice %79 {offsets = [0, 32], sizes = [2, 32], strides = [1, 1]} : vector<2x96xf32> to vector<2x32xf32>
    %91 = vector.extract_strided_slice %80 {offsets = [0, 32], sizes = [2, 32], strides = [1, 1]} : vector<2x96xf32> to vector<2x32xf32>
    %92 = arith.addf %90, %91 : vector<2x32xf32>
    %93 = arith.negf %92 : vector<2x32xf32>
    %94 = math.exp %93 : vector<2x32xf32>
    %cst_20 = arith.constant 1.000000e+00 : f32
    %95 = vector.broadcast %cst_20 : f32 to vector<2x32xf32>
    %96 = arith.addf %95, %94 : vector<2x32xf32>
    %97 = arith.divf %95, %96 : vector<2x32xf32>
    %98 = vector.extract_strided_slice %79 {offsets = [0, 64], sizes = [2, 32], strides = [1, 1]} : vector<2x96xf32> to vector<2x32xf32>
    %99 = vector.extract_strided_slice %80 {offsets = [0, 64], sizes = [2, 32], strides = [1, 1]} : vector<2x96xf32> to vector<2x32xf32>
    %100 = arith.mulf %89, %99 : vector<2x32xf32>
    %101 = arith.addf %98, %100 : vector<2x32xf32>
    %102 = math.tanh %101 : vector<2x32xf32>
    %cst_21 = arith.constant 1.000000e+00 : f32
    %103 = vector.broadcast %cst_21 : f32 to vector<2x32xf32>
    %104 = arith.subf %103, %97 : vector<2x32xf32>
    %105 = arith.mulf %104, %102 : vector<2x32xf32>
    %106 = arith.mulf %97, %81 : vector<2x32xf32>
    %107 = arith.addf %105, %106 : vector<2x32xf32>
    %108 = vector.extract_strided_slice %7 {offsets = [0, 6, 96], sizes = [2, 1, 96], strides = [1, 1, 1]} : vector<2x8x192xf32> to vector<2x1x96xf32>
    %109 = vector.shape_cast %108 : vector<2x1x96xf32> to vector<2x96xf32>
    %110 = vector.extract_strided_slice %77 {offsets = [0, 96], sizes = [2, 96], strides = [1, 1]} : vector<2x192xf32> to vector<2x96xf32>
    %111 = vector.extract_strided_slice %74 {offsets = [0, 32], sizes = [2, 32], strides = [1, 1]} : vector<2x64xf32> to vector<2x32xf32>
    %112 = vector.extract_strided_slice %109 {offsets = [0, 0], sizes = [2, 32], strides = [1, 1]} : vector<2x96xf32> to vector<2x32xf32>
    %113 = vector.extract_strided_slice %110 {offsets = [0, 0], sizes = [2, 32], strides = [1, 1]} : vector<2x96xf32> to vector<2x32xf32>
    %114 = arith.addf %112, %113 : vector<2x32xf32>
    %115 = arith.negf %114 : vector<2x32xf32>
    %116 = math.exp %115 : vector<2x32xf32>
    %cst_22 = arith.constant 1.000000e+00 : f32
    %117 = vector.broadcast %cst_22 : f32 to vector<2x32xf32>
    %118 = arith.addf %117, %116 : vector<2x32xf32>
    %119 = arith.divf %117, %118 : vector<2x32xf32>
    %120 = vector.extract_strided_slice %109 {offsets = [0, 32], sizes = [2, 32], strides = [1, 1]} : vector<2x96xf32> to vector<2x32xf32>
    %121 = vector.extract_strided_slice %110 {offsets = [0, 32], sizes = [2, 32], strides = [1, 1]} : vector<2x96xf32> to vector<2x32xf32>
    %122 = arith.addf %120, %121 : vector<2x32xf32>
    %123 = arith.negf %122 : vector<2x32xf32>
    %124 = math.exp %123 : vector<2x32xf32>
    %cst_23 = arith.constant 1.000000e+00 : f32
    %125 = vector.broadcast %cst_23 : f32 to vector<2x32xf32>
    %126 = arith.addf %125, %124 : vector<2x32xf32>
    %127 = arith.divf %125, %126 : vector<2x32xf32>
    %128 = vector.extract_strided_slice %109 {offsets = [0, 64], sizes = [2, 32], strides = [1, 1]} : vector<2x96xf32> to vector<2x32xf32>
    %129 = vector.extract_strided_slice %110 {offsets = [0, 64], sizes = [2, 32], strides = [1, 1]} : vector<2x96xf32> to vector<2x32xf32>
    %130 = arith.mulf %119, %129 : vector<2x32xf32>
    %131 = arith.addf %128, %130 : vector<2x32xf32>
    %132 = math.tanh %131 : vector<2x32xf32>
    %cst_24 = arith.constant 1.000000e+00 : f32
    %133 = vector.broadcast %cst_24 : f32 to vector<2x32xf32>
    %134 = arith.subf %133, %127 : vector<2x32xf32>
    %135 = arith.mulf %134, %132 : vector<2x32xf32>
    %136 = arith.mulf %127, %111 : vector<2x32xf32>
    %137 = arith.addf %135, %136 : vector<2x32xf32>
    %138 = tpu.concatenate %107, %137 in 1 : vector<2x32xf32>, vector<2x32xf32> -> vector<2x64xf32>
    %cst_25 = arith.constant dense<0.000000e+00> : vector<2x192xf32>
    %139 = tpu.matmul %138, %8, %cst_25 {dimension_numbers = #tpu.dot_dimension_numbers<[1], [0], [0], [1], [0, 0, 1, 1], [], []>} : vector<2x64xf32>, vector<64x192xf32>, vector<2x192xf32> -> vector<2x192xf32>
    %140 = vector.broadcast %9 : vector<1x192xf32> to vector<2x192xf32>
    %141 = arith.addf %139, %140 : vector<2x192xf32>
    %142 = vector.extract_strided_slice %7 {offsets = [0, 2, 0], sizes = [2, 1, 96], strides = [1, 1, 1]} : vector<2x8x192xf32> to vector<2x1x96xf32>
    %143 = vector.shape_cast %142 : vector<2x1x96xf32> to vector<2x96xf32>
    %144 = vector.extract_strided_slice %141 {offsets = [0, 0], sizes = [2, 96], strides = [1, 1]} : vector<2x192xf32> to vector<2x96xf32>
    %145 = vector.extract_strided_slice %138 {offsets = [0, 0], sizes = [2, 32], strides = [1, 1]} : vector<2x64xf32> to vector<2x32xf32>
    %146 = vector.extract_strided_slice %143 {offsets = [0, 0], sizes = [2, 32], strides = [1, 1]} : vector<2x96xf32> to vector<2x32xf32>
    %147 = vector.extract_strided_slice %144 {offsets = [0, 0], sizes = [2, 32], strides = [1, 1]} : vector<2x96xf32> to vector<2x32xf32>
    %148 = arith.addf %146, %147 : vector<2x32xf32>
    %149 = arith.negf %148 : vector<2x32xf32>
    %150 = math.exp %149 : vector<2x32xf32>
    %cst_26 = arith.constant 1.000000e+00 : f32
    %151 = vector.broadcast %cst_26 : f32 to vector<2x32xf32>
    %152 = arith.addf %151, %150 : vector<2x32xf32>
    %153 = arith.divf %151, %152 : vector<2x32xf32>
    %154 = vector.extract_strided_slice %143 {offsets = [0, 32], sizes = [2, 32], strides = [1, 1]} : vector<2x96xf32> to vector<2x32xf32>
    %155 = vector.extract_strided_slice %144 {offsets = [0, 32], sizes = [2, 32], strides = [1, 1]} : vector<2x96xf32> to vector<2x32xf32>
    %156 = arith.addf %154, %155 : vector<2x32xf32>
    %157 = arith.negf %156 : vector<2x32xf32>
    %158 = math.exp %157 : vector<2x32xf32>
    %cst_27 = arith.constant 1.000000e+00 : f32
    %159 = vector.broadcast %cst_27 : f32 to vector<2x32xf32>
    %160 = arith.addf %159, %158 : vector<2x32xf32>
    %161 = arith.divf %159, %160 : vector<2x32xf32>
    %162 = vector.extract_strided_slice %143 {offsets = [0, 64], sizes = [2, 32], strides = [1, 1]} : vector<2x96xf32> to vector<2x32xf32>
    %163 = vector.extract_strided_slice %144 {offsets = [0, 64], sizes = [2, 32], strides = [1, 1]} : vector<2x96xf32> to vector<2x32xf32>
    %164 = arith.mulf %153, %163 : vector<2x32xf32>
    %165 = arith.addf %162, %164 : vector<2x32xf32>
    %166 = math.tanh %165 : vector<2x32xf32>
    %cst_28 = arith.constant 1.000000e+00 : f32
    %167 = vector.broadcast %cst_28 : f32 to vector<2x32xf32>
    %168 = arith.subf %167, %161 : vector<2x32xf32>
    %169 = arith.mulf %168, %166 : vector<2x32xf32>
    %170 = arith.mulf %161, %145 : vector<2x32xf32>
    %171 = arith.addf %169, %170 : vector<2x32xf32>
    %172 = vector.extract_strided_slice %7 {offsets = [0, 5, 96], sizes = [2, 1, 96], strides = [1, 1, 1]} : vector<2x8x192xf32> to vector<2x1x96xf32>
    %173 = vector.shape_cast %172 : vector<2x1x96xf32> to vector<2x96xf32>
    %174 = vector.extract_strided_slice %141 {offsets = [0, 96], sizes = [2, 96], strides = [1, 1]} : vector<2x192xf32> to vector<2x96xf32>
    %175 = vector.extract_strided_slice %138 {offsets = [0, 32], sizes = [2, 32], strides = [1, 1]} : vector<2x64xf32> to vector<2x32xf32>
    %176 = vector.extract_strided_slice %173 {offsets = [0, 0], sizes = [2, 32], strides = [1, 1]} : vector<2x96xf32> to vector<2x32xf32>
    %177 = vector.extract_strided_slice %174 {offsets = [0, 0], sizes = [2, 32], strides = [1, 1]} : vector<2x96xf32> to vector<2x32xf32>
    %178 = arith.addf %176, %177 : vector<2x32xf32>
    %179 = arith.negf %178 : vector<2x32xf32>
    %180 = math.exp %179 : vector<2x32xf32>
    %cst_29 = arith.constant 1.000000e+00 : f32
    %181 = vector.broadcast %cst_29 : f32 to vector<2x32xf32>
    %182 = arith.addf %181, %180 : vector<2x32xf32>
    %183 = arith.divf %181, %182 : vector<2x32xf32>
    %184 = vector.extract_strided_slice %173 {offsets = [0, 32], sizes = [2, 32], strides = [1, 1]} : vector<2x96xf32> to vector<2x32xf32>
    %185 = vector.extract_strided_slice %174 {offsets = [0, 32], sizes = [2, 32], strides = [1, 1]} : vector<2x96xf32> to vector<2x32xf32>
    %186 = arith.addf %184, %185 : vector<2x32xf32>
    %187 = arith.negf %186 : vector<2x32xf32>
    %188 = math.exp %187 : vector<2x32xf32>
    %cst_30 = arith.constant 1.000000e+00 : f32
    %189 = vector.broadcast %cst_30 : f32 to vector<2x32xf32>
    %190 = arith.addf %189, %188 : vector<2x32xf32>
    %191 = arith.divf %189, %190 : vector<2x32xf32>
    %192 = vector.extract_strided_slice %173 {offsets = [0, 64], sizes = [2, 32], strides = [1, 1]} : vector<2x96xf32> to vector<2x32xf32>
    %193 = vector.extract_strided_slice %174 {offsets = [0, 64], sizes = [2, 32], strides = [1, 1]} : vector<2x96xf32> to vector<2x32xf32>
    %194 = arith.mulf %183, %193 : vector<2x32xf32>
    %195 = arith.addf %192, %194 : vector<2x32xf32>
    %196 = math.tanh %195 : vector<2x32xf32>
    %cst_31 = arith.constant 1.000000e+00 : f32
    %197 = vector.broadcast %cst_31 : f32 to vector<2x32xf32>
    %198 = arith.subf %197, %191 : vector<2x32xf32>
    %199 = arith.mulf %198, %196 : vector<2x32xf32>
    %200 = arith.mulf %191, %175 : vector<2x32xf32>
    %201 = arith.addf %199, %200 : vector<2x32xf32>
    %202 = tpu.concatenate %171, %201 in 1 : vector<2x32xf32>, vector<2x32xf32> -> vector<2x64xf32>
    %cst_32 = arith.constant dense<0.000000e+00> : vector<2x192xf32>
    %203 = tpu.matmul %202, %8, %cst_32 {dimension_numbers = #tpu.dot_dimension_numbers<[1], [0], [0], [1], [0, 0, 1, 1], [], []>} : vector<2x64xf32>, vector<64x192xf32>, vector<2x192xf32> -> vector<2x192xf32>
    %204 = vector.broadcast %9 : vector<1x192xf32> to vector<2x192xf32>
    %205 = arith.addf %203, %204 : vector<2x192xf32>
    %206 = vector.extract_strided_slice %7 {offsets = [0, 3, 0], sizes = [2, 1, 96], strides = [1, 1, 1]} : vector<2x8x192xf32> to vector<2x1x96xf32>
    %207 = vector.shape_cast %206 : vector<2x1x96xf32> to vector<2x96xf32>
    %208 = vector.extract_strided_slice %205 {offsets = [0, 0], sizes = [2, 96], strides = [1, 1]} : vector<2x192xf32> to vector<2x96xf32>
    %209 = vector.extract_strided_slice %202 {offsets = [0, 0], sizes = [2, 32], strides = [1, 1]} : vector<2x64xf32> to vector<2x32xf32>
    %210 = vector.extract_strided_slice %207 {offsets = [0, 0], sizes = [2, 32], strides = [1, 1]} : vector<2x96xf32> to vector<2x32xf32>
    %211 = vector.extract_strided_slice %208 {offsets = [0, 0], sizes = [2, 32], strides = [1, 1]} : vector<2x96xf32> to vector<2x32xf32>
    %212 = arith.addf %210, %211 : vector<2x32xf32>
    %213 = arith.negf %212 : vector<2x32xf32>
    %214 = math.exp %213 : vector<2x32xf32>
    %cst_33 = arith.constant 1.000000e+00 : f32
    %215 = vector.broadcast %cst_33 : f32 to vector<2x32xf32>
    %216 = arith.addf %215, %214 : vector<2x32xf32>
    %217 = arith.divf %215, %216 : vector<2x32xf32>
    %218 = vector.extract_strided_slice %207 {offsets = [0, 32], sizes = [2, 32], strides = [1, 1]} : vector<2x96xf32> to vector<2x32xf32>
    %219 = vector.extract_strided_slice %208 {offsets = [0, 32], sizes = [2, 32], strides = [1, 1]} : vector<2x96xf32> to vector<2x32xf32>
    %220 = arith.addf %218, %219 : vector<2x32xf32>
    %221 = arith.negf %220 : vector<2x32xf32>
    %222 = math.exp %221 : vector<2x32xf32>
    %cst_34 = arith.constant 1.000000e+00 : f32
    %223 = vector.broadcast %cst_34 : f32 to vector<2x32xf32>
    %224 = arith.addf %223, %222 : vector<2x32xf32>
    %225 = arith.divf %223, %224 : vector<2x32xf32>
    %226 = vector.extract_strided_slice %207 {offsets = [0, 64], sizes = [2, 32], strides = [1, 1]} : vector<2x96xf32> to vector<2x32xf32>
    %227 = vector.extract_strided_slice %208 {offsets = [0, 64], sizes = [2, 32], strides = [1, 1]} : vector<2x96xf32> to vector<2x32xf32>
    %228 = arith.mulf %217, %227 : vector<2x32xf32>
    %229 = arith.addf %226, %228 : vector<2x32xf32>
    %230 = math.tanh %229 : vector<2x32xf32>
    %cst_35 = arith.constant 1.000000e+00 : f32
    %231 = vector.broadcast %cst_35 : f32 to vector<2x32xf32>
    %232 = arith.subf %231, %225 : vector<2x32xf32>
    %233 = arith.mulf %232, %230 : vector<2x32xf32>
    %234 = arith.mulf %225, %209 : vector<2x32xf32>
    %235 = arith.addf %233, %234 : vector<2x32xf32>
    %236 = vector.extract_strided_slice %7 {offsets = [0, 4, 96], sizes = [2, 1, 96], strides = [1, 1, 1]} : vector<2x8x192xf32> to vector<2x1x96xf32>
    %237 = vector.shape_cast %236 : vector<2x1x96xf32> to vector<2x96xf32>
    %238 = vector.extract_strided_slice %205 {offsets = [0, 96], sizes = [2, 96], strides = [1, 1]} : vector<2x192xf32> to vector<2x96xf32>
    %239 = vector.extract_strided_slice %202 {offsets = [0, 32], sizes = [2, 32], strides = [1, 1]} : vector<2x64xf32> to vector<2x32xf32>
    %240 = vector.extract_strided_slice %237 {offsets = [0, 0], sizes = [2, 32], strides = [1, 1]} : vector<2x96xf32> to vector<2x32xf32>
    %241 = vector.extract_strided_slice %238 {offsets = [0, 0], sizes = [2, 32], strides = [1, 1]} : vector<2x96xf32> to vector<2x32xf32>
    %242 = arith.addf %240, %241 : vector<2x32xf32>
    %243 = arith.negf %242 : vector<2x32xf32>
    %244 = math.exp %243 : vector<2x32xf32>
    %cst_36 = arith.constant 1.000000e+00 : f32
    %245 = vector.broadcast %cst_36 : f32 to vector<2x32xf32>
    %246 = arith.addf %245, %244 : vector<2x32xf32>
    %247 = arith.divf %245, %246 : vector<2x32xf32>
    %248 = vector.extract_strided_slice %237 {offsets = [0, 32], sizes = [2, 32], strides = [1, 1]} : vector<2x96xf32> to vector<2x32xf32>
    %249 = vector.extract_strided_slice %238 {offsets = [0, 32], sizes = [2, 32], strides = [1, 1]} : vector<2x96xf32> to vector<2x32xf32>
    %250 = arith.addf %248, %249 : vector<2x32xf32>
    %251 = arith.negf %250 : vector<2x32xf32>
    %252 = math.exp %251 : vector<2x32xf32>
    %cst_37 = arith.constant 1.000000e+00 : f32
    %253 = vector.broadcast %cst_37 : f32 to vector<2x32xf32>
    %254 = arith.addf %253, %252 : vector<2x32xf32>
    %255 = arith.divf %253, %254 : vector<2x32xf32>
    %256 = vector.extract_strided_slice %237 {offsets = [0, 64], sizes = [2, 32], strides = [1, 1]} : vector<2x96xf32> to vector<2x32xf32>
    %257 = vector.extract_strided_slice %238 {offsets = [0, 64], sizes = [2, 32], strides = [1, 1]} : vector<2x96xf32> to vector<2x32xf32>
    %258 = arith.mulf %247, %257 : vector<2x32xf32>
    %259 = arith.addf %256, %258 : vector<2x32xf32>
    %260 = math.tanh %259 : vector<2x32xf32>
    %cst_38 = arith.constant 1.000000e+00 : f32
    %261 = vector.broadcast %cst_38 : f32 to vector<2x32xf32>
    %262 = arith.subf %261, %255 : vector<2x32xf32>
    %263 = arith.mulf %262, %260 : vector<2x32xf32>
    %264 = arith.mulf %255, %239 : vector<2x32xf32>
    %265 = arith.addf %263, %264 : vector<2x32xf32>
    %266 = tpu.concatenate %235, %265 in 1 : vector<2x32xf32>, vector<2x32xf32> -> vector<2x64xf32>
    %cst_39 = arith.constant dense<0.000000e+00> : vector<2x192xf32>
    %267 = tpu.matmul %266, %8, %cst_39 {dimension_numbers = #tpu.dot_dimension_numbers<[1], [0], [0], [1], [0, 0, 1, 1], [], []>} : vector<2x64xf32>, vector<64x192xf32>, vector<2x192xf32> -> vector<2x192xf32>
    %268 = vector.broadcast %9 : vector<1x192xf32> to vector<2x192xf32>
    %269 = arith.addf %267, %268 : vector<2x192xf32>
    %270 = vector.extract_strided_slice %7 {offsets = [0, 4, 0], sizes = [2, 1, 96], strides = [1, 1, 1]} : vector<2x8x192xf32> to vector<2x1x96xf32>
    %271 = vector.shape_cast %270 : vector<2x1x96xf32> to vector<2x96xf32>
    %272 = vector.extract_strided_slice %269 {offsets = [0, 0], sizes = [2, 96], strides = [1, 1]} : vector<2x192xf32> to vector<2x96xf32>
    %273 = vector.extract_strided_slice %266 {offsets = [0, 0], sizes = [2, 32], strides = [1, 1]} : vector<2x64xf32> to vector<2x32xf32>
    %274 = vector.extract_strided_slice %271 {offsets = [0, 0], sizes = [2, 32], strides = [1, 1]} : vector<2x96xf32> to vector<2x32xf32>
    %275 = vector.extract_strided_slice %272 {offsets = [0, 0], sizes = [2, 32], strides = [1, 1]} : vector<2x96xf32> to vector<2x32xf32>
    %276 = arith.addf %274, %275 : vector<2x32xf32>
    %277 = arith.negf %276 : vector<2x32xf32>
    %278 = math.exp %277 : vector<2x32xf32>
    %cst_40 = arith.constant 1.000000e+00 : f32
    %279 = vector.broadcast %cst_40 : f32 to vector<2x32xf32>
    %280 = arith.addf %279, %278 : vector<2x32xf32>
    %281 = arith.divf %279, %280 : vector<2x32xf32>
    %282 = vector.extract_strided_slice %271 {offsets = [0, 32], sizes = [2, 32], strides = [1, 1]} : vector<2x96xf32> to vector<2x32xf32>
    %283 = vector.extract_strided_slice %272 {offsets = [0, 32], sizes = [2, 32], strides = [1, 1]} : vector<2x96xf32> to vector<2x32xf32>
    %284 = arith.addf %282, %283 : vector<2x32xf32>
    %285 = arith.negf %284 : vector<2x32xf32>
    %286 = math.exp %285 : vector<2x32xf32>
    %cst_41 = arith.constant 1.000000e+00 : f32
    %287 = vector.broadcast %cst_41 : f32 to vector<2x32xf32>
    %288 = arith.addf %287, %286 : vector<2x32xf32>
    %289 = arith.divf %287, %288 : vector<2x32xf32>
    %290 = vector.extract_strided_slice %271 {offsets = [0, 64], sizes = [2, 32], strides = [1, 1]} : vector<2x96xf32> to vector<2x32xf32>
    %291 = vector.extract_strided_slice %272 {offsets = [0, 64], sizes = [2, 32], strides = [1, 1]} : vector<2x96xf32> to vector<2x32xf32>
    %292 = arith.mulf %281, %291 : vector<2x32xf32>
    %293 = arith.addf %290, %292 : vector<2x32xf32>
    %294 = math.tanh %293 : vector<2x32xf32>
    %cst_42 = arith.constant 1.000000e+00 : f32
    %295 = vector.broadcast %cst_42 : f32 to vector<2x32xf32>
    %296 = arith.subf %295, %289 : vector<2x32xf32>
    %297 = arith.mulf %296, %294 : vector<2x32xf32>
    %298 = arith.mulf %289, %273 : vector<2x32xf32>
    %299 = arith.addf %297, %298 : vector<2x32xf32>
    %300 = vector.extract_strided_slice %7 {offsets = [0, 3, 96], sizes = [2, 1, 96], strides = [1, 1, 1]} : vector<2x8x192xf32> to vector<2x1x96xf32>
    %301 = vector.shape_cast %300 : vector<2x1x96xf32> to vector<2x96xf32>
    %302 = vector.extract_strided_slice %269 {offsets = [0, 96], sizes = [2, 96], strides = [1, 1]} : vector<2x192xf32> to vector<2x96xf32>
    %303 = vector.extract_strided_slice %266 {offsets = [0, 32], sizes = [2, 32], strides = [1, 1]} : vector<2x64xf32> to vector<2x32xf32>
    %304 = vector.extract_strided_slice %301 {offsets = [0, 0], sizes = [2, 32], strides = [1, 1]} : vector<2x96xf32> to vector<2x32xf32>
    %305 = vector.extract_strided_slice %302 {offsets = [0, 0], sizes = [2, 32], strides = [1, 1]} : vector<2x96xf32> to vector<2x32xf32>
    %306 = arith.addf %304, %305 : vector<2x32xf32>
    %307 = arith.negf %306 : vector<2x32xf32>
    %308 = math.exp %307 : vector<2x32xf32>
    %cst_43 = arith.constant 1.000000e+00 : f32
    %309 = vector.broadcast %cst_43 : f32 to vector<2x32xf32>
    %310 = arith.addf %309, %308 : vector<2x32xf32>
    %311 = arith.divf %309, %310 : vector<2x32xf32>
    %312 = vector.extract_strided_slice %301 {offsets = [0, 32], sizes = [2, 32], strides = [1, 1]} : vector<2x96xf32> to vector<2x32xf32>
    %313 = vector.extract_strided_slice %302 {offsets = [0, 32], sizes = [2, 32], strides = [1, 1]} : vector<2x96xf32> to vector<2x32xf32>
    %314 = arith.addf %312, %313 : vector<2x32xf32>
    %315 = arith.negf %314 : vector<2x32xf32>
    %316 = math.exp %315 : vector<2x32xf32>
    %cst_44 = arith.constant 1.000000e+00 : f32
    %317 = vector.broadcast %cst_44 : f32 to vector<2x32xf32>
    %318 = arith.addf %317, %316 : vector<2x32xf32>
    %319 = arith.divf %317, %318 : vector<2x32xf32>
    %320 = vector.extract_strided_slice %301 {offsets = [0, 64], sizes = [2, 32], strides = [1, 1]} : vector<2x96xf32> to vector<2x32xf32>
    %321 = vector.extract_strided_slice %302 {offsets = [0, 64], sizes = [2, 32], strides = [1, 1]} : vector<2x96xf32> to vector<2x32xf32>
    %322 = arith.mulf %311, %321 : vector<2x32xf32>
    %323 = arith.addf %320, %322 : vector<2x32xf32>
    %324 = math.tanh %323 : vector<2x32xf32>
    %cst_45 = arith.constant 1.000000e+00 : f32
    %325 = vector.broadcast %cst_45 : f32 to vector<2x32xf32>
    %326 = arith.subf %325, %319 : vector<2x32xf32>
    %327 = arith.mulf %326, %324 : vector<2x32xf32>
    %328 = arith.mulf %319, %303 : vector<2x32xf32>
    %329 = arith.addf %327, %328 : vector<2x32xf32>
    %330 = tpu.concatenate %299, %329 in 1 : vector<2x32xf32>, vector<2x32xf32> -> vector<2x64xf32>
    %cst_46 = arith.constant dense<0.000000e+00> : vector<2x192xf32>
    %331 = tpu.matmul %330, %8, %cst_46 {dimension_numbers = #tpu.dot_dimension_numbers<[1], [0], [0], [1], [0, 0, 1, 1], [], []>} : vector<2x64xf32>, vector<64x192xf32>, vector<2x192xf32> -> vector<2x192xf32>
    %332 = vector.broadcast %9 : vector<1x192xf32> to vector<2x192xf32>
    %333 = arith.addf %331, %332 : vector<2x192xf32>
    %334 = vector.extract_strided_slice %7 {offsets = [0, 5, 0], sizes = [2, 1, 96], strides = [1, 1, 1]} : vector<2x8x192xf32> to vector<2x1x96xf32>
    %335 = vector.shape_cast %334 : vector<2x1x96xf32> to vector<2x96xf32>
    %336 = vector.extract_strided_slice %333 {offsets = [0, 0], sizes = [2, 96], strides = [1, 1]} : vector<2x192xf32> to vector<2x96xf32>
    %337 = vector.extract_strided_slice %330 {offsets = [0, 0], sizes = [2, 32], strides = [1, 1]} : vector<2x64xf32> to vector<2x32xf32>
    %338 = vector.extract_strided_slice %335 {offsets = [0, 0], sizes = [2, 32], strides = [1, 1]} : vector<2x96xf32> to vector<2x32xf32>
    %339 = vector.extract_strided_slice %336 {offsets = [0, 0], sizes = [2, 32], strides = [1, 1]} : vector<2x96xf32> to vector<2x32xf32>
    %340 = arith.addf %338, %339 : vector<2x32xf32>
    %341 = arith.negf %340 : vector<2x32xf32>
    %342 = math.exp %341 : vector<2x32xf32>
    %cst_47 = arith.constant 1.000000e+00 : f32
    %343 = vector.broadcast %cst_47 : f32 to vector<2x32xf32>
    %344 = arith.addf %343, %342 : vector<2x32xf32>
    %345 = arith.divf %343, %344 : vector<2x32xf32>
    %346 = vector.extract_strided_slice %335 {offsets = [0, 32], sizes = [2, 32], strides = [1, 1]} : vector<2x96xf32> to vector<2x32xf32>
    %347 = vector.extract_strided_slice %336 {offsets = [0, 32], sizes = [2, 32], strides = [1, 1]} : vector<2x96xf32> to vector<2x32xf32>
    %348 = arith.addf %346, %347 : vector<2x32xf32>
    %349 = arith.negf %348 : vector<2x32xf32>
    %350 = math.exp %349 : vector<2x32xf32>
    %cst_48 = arith.constant 1.000000e+00 : f32
    %351 = vector.broadcast %cst_48 : f32 to vector<2x32xf32>
    %352 = arith.addf %351, %350 : vector<2x32xf32>
    %353 = arith.divf %351, %352 : vector<2x32xf32>
    %354 = vector.extract_strided_slice %335 {offsets = [0, 64], sizes = [2, 32], strides = [1, 1]} : vector<2x96xf32> to vector<2x32xf32>
    %355 = vector.extract_strided_slice %336 {offsets = [0, 64], sizes = [2, 32], strides = [1, 1]} : vector<2x96xf32> to vector<2x32xf32>
    %356 = arith.mulf %345, %355 : vector<2x32xf32>
    %357 = arith.addf %354, %356 : vector<2x32xf32>
    %358 = math.tanh %357 : vector<2x32xf32>
    %cst_49 = arith.constant 1.000000e+00 : f32
    %359 = vector.broadcast %cst_49 : f32 to vector<2x32xf32>
    %360 = arith.subf %359, %353 : vector<2x32xf32>
    %361 = arith.mulf %360, %358 : vector<2x32xf32>
    %362 = arith.mulf %353, %337 : vector<2x32xf32>
    %363 = arith.addf %361, %362 : vector<2x32xf32>
    %364 = vector.extract_strided_slice %7 {offsets = [0, 2, 96], sizes = [2, 1, 96], strides = [1, 1, 1]} : vector<2x8x192xf32> to vector<2x1x96xf32>
    %365 = vector.shape_cast %364 : vector<2x1x96xf32> to vector<2x96xf32>
    %366 = vector.extract_strided_slice %333 {offsets = [0, 96], sizes = [2, 96], strides = [1, 1]} : vector<2x192xf32> to vector<2x96xf32>
    %367 = vector.extract_strided_slice %330 {offsets = [0, 32], sizes = [2, 32], strides = [1, 1]} : vector<2x64xf32> to vector<2x32xf32>
    %368 = vector.extract_strided_slice %365 {offsets = [0, 0], sizes = [2, 32], strides = [1, 1]} : vector<2x96xf32> to vector<2x32xf32>
    %369 = vector.extract_strided_slice %366 {offsets = [0, 0], sizes = [2, 32], strides = [1, 1]} : vector<2x96xf32> to vector<2x32xf32>
    %370 = arith.addf %368, %369 : vector<2x32xf32>
    %371 = arith.negf %370 : vector<2x32xf32>
    %372 = math.exp %371 : vector<2x32xf32>
    %cst_50 = arith.constant 1.000000e+00 : f32
    %373 = vector.broadcast %cst_50 : f32 to vector<2x32xf32>
    %374 = arith.addf %373, %372 : vector<2x32xf32>
    %375 = arith.divf %373, %374 : vector<2x32xf32>
    %376 = vector.extract_strided_slice %365 {offsets = [0, 32], sizes = [2, 32], strides = [1, 1]} : vector<2x96xf32> to vector<2x32xf32>
    %377 = vector.extract_strided_slice %366 {offsets = [0, 32], sizes = [2, 32], strides = [1, 1]} : vector<2x96xf32> to vector<2x32xf32>
    %378 = arith.addf %376, %377 : vector<2x32xf32>
    %379 = arith.negf %378 : vector<2x32xf32>
    %380 = math.exp %379 : vector<2x32xf32>
    %cst_51 = arith.constant 1.000000e+00 : f32
    %381 = vector.broadcast %cst_51 : f32 to vector<2x32xf32>
    %382 = arith.addf %381, %380 : vector<2x32xf32>
    %383 = arith.divf %381, %382 : vector<2x32xf32>
    %384 = vector.extract_strided_slice %365 {offsets = [0, 64], sizes = [2, 32], strides = [1, 1]} : vector<2x96xf32> to vector<2x32xf32>
    %385 = vector.extract_strided_slice %366 {offsets = [0, 64], sizes = [2, 32], strides = [1, 1]} : vector<2x96xf32> to vector<2x32xf32>
    %386 = arith.mulf %375, %385 : vector<2x32xf32>
    %387 = arith.addf %384, %386 : vector<2x32xf32>
    %388 = math.tanh %387 : vector<2x32xf32>
    %cst_52 = arith.constant 1.000000e+00 : f32
    %389 = vector.broadcast %cst_52 : f32 to vector<2x32xf32>
    %390 = arith.subf %389, %383 : vector<2x32xf32>
    %391 = arith.mulf %390, %388 : vector<2x32xf32>
    %392 = arith.mulf %383, %367 : vector<2x32xf32>
    %393 = arith.addf %391, %392 : vector<2x32xf32>
    %394 = tpu.concatenate %363, %393 in 1 : vector<2x32xf32>, vector<2x32xf32> -> vector<2x64xf32>
    %cst_53 = arith.constant dense<0.000000e+00> : vector<2x192xf32>
    %395 = tpu.matmul %394, %8, %cst_53 {dimension_numbers = #tpu.dot_dimension_numbers<[1], [0], [0], [1], [0, 0, 1, 1], [], []>} : vector<2x64xf32>, vector<64x192xf32>, vector<2x192xf32> -> vector<2x192xf32>
    %396 = vector.broadcast %9 : vector<1x192xf32> to vector<2x192xf32>
    %397 = arith.addf %395, %396 : vector<2x192xf32>
    %398 = vector.extract_strided_slice %7 {offsets = [0, 6, 0], sizes = [2, 1, 96], strides = [1, 1, 1]} : vector<2x8x192xf32> to vector<2x1x96xf32>
    %399 = vector.shape_cast %398 : vector<2x1x96xf32> to vector<2x96xf32>
    %400 = vector.extract_strided_slice %397 {offsets = [0, 0], sizes = [2, 96], strides = [1, 1]} : vector<2x192xf32> to vector<2x96xf32>
    %401 = vector.extract_strided_slice %394 {offsets = [0, 0], sizes = [2, 32], strides = [1, 1]} : vector<2x64xf32> to vector<2x32xf32>
    %402 = vector.extract_strided_slice %399 {offsets = [0, 0], sizes = [2, 32], strides = [1, 1]} : vector<2x96xf32> to vector<2x32xf32>
    %403 = vector.extract_strided_slice %400 {offsets = [0, 0], sizes = [2, 32], strides = [1, 1]} : vector<2x96xf32> to vector<2x32xf32>
    %404 = arith.addf %402, %403 : vector<2x32xf32>
    %405 = arith.negf %404 : vector<2x32xf32>
    %406 = math.exp %405 : vector<2x32xf32>
    %cst_54 = arith.constant 1.000000e+00 : f32
    %407 = vector.broadcast %cst_54 : f32 to vector<2x32xf32>
    %408 = arith.addf %407, %406 : vector<2x32xf32>
    %409 = arith.divf %407, %408 : vector<2x32xf32>
    %410 = vector.extract_strided_slice %399 {offsets = [0, 32], sizes = [2, 32], strides = [1, 1]} : vector<2x96xf32> to vector<2x32xf32>
    %411 = vector.extract_strided_slice %400 {offsets = [0, 32], sizes = [2, 32], strides = [1, 1]} : vector<2x96xf32> to vector<2x32xf32>
    %412 = arith.addf %410, %411 : vector<2x32xf32>
    %413 = arith.negf %412 : vector<2x32xf32>
    %414 = math.exp %413 : vector<2x32xf32>
    %cst_55 = arith.constant 1.000000e+00 : f32
    %415 = vector.broadcast %cst_55 : f32 to vector<2x32xf32>
    %416 = arith.addf %415, %414 : vector<2x32xf32>
    %417 = arith.divf %415, %416 : vector<2x32xf32>
    %418 = vector.extract_strided_slice %399 {offsets = [0, 64], sizes = [2, 32], strides = [1, 1]} : vector<2x96xf32> to vector<2x32xf32>
    %419 = vector.extract_strided_slice %400 {offsets = [0, 64], sizes = [2, 32], strides = [1, 1]} : vector<2x96xf32> to vector<2x32xf32>
    %420 = arith.mulf %409, %419 : vector<2x32xf32>
    %421 = arith.addf %418, %420 : vector<2x32xf32>
    %422 = math.tanh %421 : vector<2x32xf32>
    %cst_56 = arith.constant 1.000000e+00 : f32
    %423 = vector.broadcast %cst_56 : f32 to vector<2x32xf32>
    %424 = arith.subf %423, %417 : vector<2x32xf32>
    %425 = arith.mulf %424, %422 : vector<2x32xf32>
    %426 = arith.mulf %417, %401 : vector<2x32xf32>
    %427 = arith.addf %425, %426 : vector<2x32xf32>
    %428 = vector.extract_strided_slice %7 {offsets = [0, 1, 96], sizes = [2, 1, 96], strides = [1, 1, 1]} : vector<2x8x192xf32> to vector<2x1x96xf32>
    %429 = vector.shape_cast %428 : vector<2x1x96xf32> to vector<2x96xf32>
    %430 = vector.extract_strided_slice %397 {offsets = [0, 96], sizes = [2, 96], strides = [1, 1]} : vector<2x192xf32> to vector<2x96xf32>
    %431 = vector.extract_strided_slice %394 {offsets = [0, 32], sizes = [2, 32], strides = [1, 1]} : vector<2x64xf32> to vector<2x32xf32>
    %432 = vector.extract_strided_slice %429 {offsets = [0, 0], sizes = [2, 32], strides = [1, 1]} : vector<2x96xf32> to vector<2x32xf32>
    %433 = vector.extract_strided_slice %430 {offsets = [0, 0], sizes = [2, 32], strides = [1, 1]} : vector<2x96xf32> to vector<2x32xf32>
    %434 = arith.addf %432, %433 : vector<2x32xf32>
    %435 = arith.negf %434 : vector<2x32xf32>
    %436 = math.exp %435 : vector<2x32xf32>
    %cst_57 = arith.constant 1.000000e+00 : f32
    %437 = vector.broadcast %cst_57 : f32 to vector<2x32xf32>
    %438 = arith.addf %437, %436 : vector<2x32xf32>
    %439 = arith.divf %437, %438 : vector<2x32xf32>
    %440 = vector.extract_strided_slice %429 {offsets = [0, 32], sizes = [2, 32], strides = [1, 1]} : vector<2x96xf32> to vector<2x32xf32>
    %441 = vector.extract_strided_slice %430 {offsets = [0, 32], sizes = [2, 32], strides = [1, 1]} : vector<2x96xf32> to vector<2x32xf32>
    %442 = arith.addf %440, %441 : vector<2x32xf32>
    %443 = arith.negf %442 : vector<2x32xf32>
    %444 = math.exp %443 : vector<2x32xf32>
    %cst_58 = arith.constant 1.000000e+00 : f32
    %445 = vector.broadcast %cst_58 : f32 to vector<2x32xf32>
    %446 = arith.addf %445, %444 : vector<2x32xf32>
    %447 = arith.divf %445, %446 : vector<2x32xf32>
    %448 = vector.extract_strided_slice %429 {offsets = [0, 64], sizes = [2, 32], strides = [1, 1]} : vector<2x96xf32> to vector<2x32xf32>
    %449 = vector.extract_strided_slice %430 {offsets = [0, 64], sizes = [2, 32], strides = [1, 1]} : vector<2x96xf32> to vector<2x32xf32>
    %450 = arith.mulf %439, %449 : vector<2x32xf32>
    %451 = arith.addf %448, %450 : vector<2x32xf32>
    %452 = math.tanh %451 : vector<2x32xf32>
    %cst_59 = arith.constant 1.000000e+00 : f32
    %453 = vector.broadcast %cst_59 : f32 to vector<2x32xf32>
    %454 = arith.subf %453, %447 : vector<2x32xf32>
    %455 = arith.mulf %454, %452 : vector<2x32xf32>
    %456 = arith.mulf %447, %431 : vector<2x32xf32>
    %457 = arith.addf %455, %456 : vector<2x32xf32>
    %458 = tpu.concatenate %427, %457 in 1 : vector<2x32xf32>, vector<2x32xf32> -> vector<2x64xf32>
    %cst_60 = arith.constant dense<0.000000e+00> : vector<2x192xf32>
    %459 = tpu.matmul %458, %8, %cst_60 {dimension_numbers = #tpu.dot_dimension_numbers<[1], [0], [0], [1], [0, 0, 1, 1], [], []>} : vector<2x64xf32>, vector<64x192xf32>, vector<2x192xf32> -> vector<2x192xf32>
    %460 = vector.broadcast %9 : vector<1x192xf32> to vector<2x192xf32>
    %461 = arith.addf %459, %460 : vector<2x192xf32>
    %462 = vector.extract_strided_slice %7 {offsets = [0, 7, 0], sizes = [2, 1, 96], strides = [1, 1, 1]} : vector<2x8x192xf32> to vector<2x1x96xf32>
    %463 = vector.shape_cast %462 : vector<2x1x96xf32> to vector<2x96xf32>
    %464 = vector.extract_strided_slice %461 {offsets = [0, 0], sizes = [2, 96], strides = [1, 1]} : vector<2x192xf32> to vector<2x96xf32>
    %465 = vector.extract_strided_slice %458 {offsets = [0, 0], sizes = [2, 32], strides = [1, 1]} : vector<2x64xf32> to vector<2x32xf32>
    %466 = vector.extract_strided_slice %463 {offsets = [0, 0], sizes = [2, 32], strides = [1, 1]} : vector<2x96xf32> to vector<2x32xf32>
    %467 = vector.extract_strided_slice %464 {offsets = [0, 0], sizes = [2, 32], strides = [1, 1]} : vector<2x96xf32> to vector<2x32xf32>
    %468 = arith.addf %466, %467 : vector<2x32xf32>
    %469 = arith.negf %468 : vector<2x32xf32>
    %470 = math.exp %469 : vector<2x32xf32>
    %cst_61 = arith.constant 1.000000e+00 : f32
    %471 = vector.broadcast %cst_61 : f32 to vector<2x32xf32>
    %472 = arith.addf %471, %470 : vector<2x32xf32>
    %473 = arith.divf %471, %472 : vector<2x32xf32>
    %474 = vector.extract_strided_slice %463 {offsets = [0, 32], sizes = [2, 32], strides = [1, 1]} : vector<2x96xf32> to vector<2x32xf32>
    %475 = vector.extract_strided_slice %464 {offsets = [0, 32], sizes = [2, 32], strides = [1, 1]} : vector<2x96xf32> to vector<2x32xf32>
    %476 = arith.addf %474, %475 : vector<2x32xf32>
    %477 = arith.negf %476 : vector<2x32xf32>
    %478 = math.exp %477 : vector<2x32xf32>
    %cst_62 = arith.constant 1.000000e+00 : f32
    %479 = vector.broadcast %cst_62 : f32 to vector<2x32xf32>
    %480 = arith.addf %479, %478 : vector<2x32xf32>
    %481 = arith.divf %479, %480 : vector<2x32xf32>
    %482 = vector.extract_strided_slice %463 {offsets = [0, 64], sizes = [2, 32], strides = [1, 1]} : vector<2x96xf32> to vector<2x32xf32>
    %483 = vector.extract_strided_slice %464 {offsets = [0, 64], sizes = [2, 32], strides = [1, 1]} : vector<2x96xf32> to vector<2x32xf32>
    %484 = arith.mulf %473, %483 : vector<2x32xf32>
    %485 = arith.addf %482, %484 : vector<2x32xf32>
    %486 = math.tanh %485 : vector<2x32xf32>
    %cst_63 = arith.constant 1.000000e+00 : f32
    %487 = vector.broadcast %cst_63 : f32 to vector<2x32xf32>
    %488 = arith.subf %487, %481 : vector<2x32xf32>
    %489 = arith.mulf %488, %486 : vector<2x32xf32>
    %490 = arith.mulf %481, %465 : vector<2x32xf32>
    %491 = arith.addf %489, %490 : vector<2x32xf32>
    %492 = vector.extract_strided_slice %7 {offsets = [0, 0, 96], sizes = [2, 1, 96], strides = [1, 1, 1]} : vector<2x8x192xf32> to vector<2x1x96xf32>
    %493 = vector.shape_cast %492 : vector<2x1x96xf32> to vector<2x96xf32>
    %494 = vector.extract_strided_slice %461 {offsets = [0, 96], sizes = [2, 96], strides = [1, 1]} : vector<2x192xf32> to vector<2x96xf32>
    %495 = vector.extract_strided_slice %458 {offsets = [0, 32], sizes = [2, 32], strides = [1, 1]} : vector<2x64xf32> to vector<2x32xf32>
    %496 = vector.extract_strided_slice %493 {offsets = [0, 0], sizes = [2, 32], strides = [1, 1]} : vector<2x96xf32> to vector<2x32xf32>
    %497 = vector.extract_strided_slice %494 {offsets = [0, 0], sizes = [2, 32], strides = [1, 1]} : vector<2x96xf32> to vector<2x32xf32>
    %498 = arith.addf %496, %497 : vector<2x32xf32>
    %499 = arith.negf %498 : vector<2x32xf32>
    %500 = math.exp %499 : vector<2x32xf32>
    %cst_64 = arith.constant 1.000000e+00 : f32
    %501 = vector.broadcast %cst_64 : f32 to vector<2x32xf32>
    %502 = arith.addf %501, %500 : vector<2x32xf32>
    %503 = arith.divf %501, %502 : vector<2x32xf32>
    %504 = vector.extract_strided_slice %493 {offsets = [0, 32], sizes = [2, 32], strides = [1, 1]} : vector<2x96xf32> to vector<2x32xf32>
    %505 = vector.extract_strided_slice %494 {offsets = [0, 32], sizes = [2, 32], strides = [1, 1]} : vector<2x96xf32> to vector<2x32xf32>
    %506 = arith.addf %504, %505 : vector<2x32xf32>
    %507 = arith.negf %506 : vector<2x32xf32>
    %508 = math.exp %507 : vector<2x32xf32>
    %cst_65 = arith.constant 1.000000e+00 : f32
    %509 = vector.broadcast %cst_65 : f32 to vector<2x32xf32>
    %510 = arith.addf %509, %508 : vector<2x32xf32>
    %511 = arith.divf %509, %510 : vector<2x32xf32>
    %512 = vector.extract_strided_slice %493 {offsets = [0, 64], sizes = [2, 32], strides = [1, 1]} : vector<2x96xf32> to vector<2x32xf32>
    %513 = vector.extract_strided_slice %494 {offsets = [0, 64], sizes = [2, 32], strides = [1, 1]} : vector<2x96xf32> to vector<2x32xf32>
    %514 = arith.mulf %503, %513 : vector<2x32xf32>
    %515 = arith.addf %512, %514 : vector<2x32xf32>
    %516 = math.tanh %515 : vector<2x32xf32>
    %cst_66 = arith.constant 1.000000e+00 : f32
    %517 = vector.broadcast %cst_66 : f32 to vector<2x32xf32>
    %518 = arith.subf %517, %511 : vector<2x32xf32>
    %519 = arith.mulf %518, %516 : vector<2x32xf32>
    %520 = arith.mulf %511, %495 : vector<2x32xf32>
    %521 = arith.addf %519, %520 : vector<2x32xf32>
    %522 = vector.shape_cast %43 : vector<2x32xf32> to vector<2x1x32xf32>
    %523 = vector.shape_cast %107 : vector<2x32xf32> to vector<2x1x32xf32>
    %524 = vector.shape_cast %171 : vector<2x32xf32> to vector<2x1x32xf32>
    %525 = vector.shape_cast %235 : vector<2x32xf32> to vector<2x1x32xf32>
    %526 = vector.shape_cast %299 : vector<2x32xf32> to vector<2x1x32xf32>
    %527 = vector.shape_cast %363 : vector<2x32xf32> to vector<2x1x32xf32>
    %528 = vector.shape_cast %427 : vector<2x32xf32> to vector<2x1x32xf32>
    %529 = vector.shape_cast %491 : vector<2x32xf32> to vector<2x1x32xf32>
    %530 = tpu.concatenate %522, %523, %524, %525, %526, %527, %528, %529 in 1 : vector<2x1x32xf32>, vector<2x1x32xf32>, vector<2x1x32xf32>, vector<2x1x32xf32>, vector<2x1x32xf32>, vector<2x1x32xf32>, vector<2x1x32xf32>, vector<2x1x32xf32> -> vector<2x8x32xf32>
    %531 = vector.shape_cast %521 : vector<2x32xf32> to vector<2x1x32xf32>
    %532 = vector.shape_cast %457 : vector<2x32xf32> to vector<2x1x32xf32>
    %533 = vector.shape_cast %393 : vector<2x32xf32> to vector<2x1x32xf32>
    %534 = vector.shape_cast %329 : vector<2x32xf32> to vector<2x1x32xf32>
    %535 = vector.shape_cast %265 : vector<2x32xf32> to vector<2x1x32xf32>
    %536 = vector.shape_cast %201 : vector<2x32xf32> to vector<2x1x32xf32>
    %537 = vector.shape_cast %137 : vector<2x32xf32> to vector<2x1x32xf32>
    %538 = vector.shape_cast %73 : vector<2x32xf32> to vector<2x1x32xf32>
    %539 = tpu.concatenate %531, %532, %533, %534, %535, %536, %537, %538 in 1 : vector<2x1x32xf32>, vector<2x1x32xf32>, vector<2x1x32xf32>, vector<2x1x32xf32>, vector<2x1x32xf32>, vector<2x1x32xf32>, vector<2x1x32xf32>, vector<2x1x32xf32> -> vector<2x8x32xf32>
    %540 = tpu.concatenate %530, %539 in 2 : vector<2x8x32xf32>, vector<2x8x32xf32> -> vector<2x8x64xf32>
    %541 = vector.shape_cast %540 : vector<2x8x64xf32> to vector<16x64xf32>
    %c0_67 = arith.constant 0 : index
    %c0_68 = arith.constant 0 : index
    %542 = vector.load %arg6[%c0_67, %c0_68] : memref<64x192xf32, #tpu.memory_space<vmem>>, vector<64x192xf32>
    %cst_69 = arith.constant dense<0.000000e+00> : vector<16x192xf32>
    %543 = tpu.matmul %541, %542, %cst_69 {dimension_numbers = #tpu.dot_dimension_numbers<[1], [0], [0], [1], [0, 0, 1, 1], [], []>} : vector<16x64xf32>, vector<64x192xf32>, vector<16x192xf32> -> vector<16x192xf32>
    %c0_70 = arith.constant 0 : index
    %c0_71 = arith.constant 0 : index
    %544 = vector.load %arg7[%c0_70, %c0_71] : memref<1x192xf32, #tpu.memory_space<vmem>>, vector<1x192xf32>
    %545 = vector.broadcast %544 : vector<1x192xf32> to vector<16x192xf32>
    %546 = arith.addf %543, %545 : vector<16x192xf32>
    %547 = vector.shape_cast %546 : vector<16x192xf32> to vector<2x8x192xf32>
    %c0_72 = arith.constant 0 : index
    %c0_73 = arith.constant 0 : index
    %548 = vector.load %arg8[%c0_72, %c0_73] : memref<64x192xf32, #tpu.memory_space<vmem>>, vector<64x192xf32>
    %c0_74 = arith.constant 0 : index
    %c0_75 = arith.constant 0 : index
    %549 = vector.load %arg9[%c0_74, %c0_75] : memref<1x192xf32, #tpu.memory_space<vmem>>, vector<1x192xf32>
    %cst_76 = arith.constant 0.000000e+00 : f32
    %550 = vector.broadcast %cst_76 : f32 to vector<2x64xf32>
    %cst_77 = arith.constant dense<0.000000e+00> : vector<2x192xf32>
    %551 = tpu.matmul %550, %548, %cst_77 {dimension_numbers = #tpu.dot_dimension_numbers<[1], [0], [0], [1], [0, 0, 1, 1], [], []>} : vector<2x64xf32>, vector<64x192xf32>, vector<2x192xf32> -> vector<2x192xf32>
    %552 = vector.broadcast %549 : vector<1x192xf32> to vector<2x192xf32>
    %553 = arith.addf %551, %552 : vector<2x192xf32>
    %554 = vector.extract_strided_slice %547 {offsets = [0, 0, 0], sizes = [2, 1, 96], strides = [1, 1, 1]} : vector<2x8x192xf32> to vector<2x1x96xf32>
    %555 = vector.shape_cast %554 : vector<2x1x96xf32> to vector<2x96xf32>
    %556 = vector.extract_strided_slice %553 {offsets = [0, 0], sizes = [2, 96], strides = [1, 1]} : vector<2x192xf32> to vector<2x96xf32>
    %557 = vector.extract_strided_slice %550 {offsets = [0, 0], sizes = [2, 32], strides = [1, 1]} : vector<2x64xf32> to vector<2x32xf32>
    %558 = vector.extract_strided_slice %555 {offsets = [0, 0], sizes = [2, 32], strides = [1, 1]} : vector<2x96xf32> to vector<2x32xf32>
    %559 = vector.extract_strided_slice %556 {offsets = [0, 0], sizes = [2, 32], strides = [1, 1]} : vector<2x96xf32> to vector<2x32xf32>
    %560 = arith.addf %558, %559 : vector<2x32xf32>
    %561 = arith.negf %560 : vector<2x32xf32>
    %562 = math.exp %561 : vector<2x32xf32>
    %cst_78 = arith.constant 1.000000e+00 : f32
    %563 = vector.broadcast %cst_78 : f32 to vector<2x32xf32>
    %564 = arith.addf %563, %562 : vector<2x32xf32>
    %565 = arith.divf %563, %564 : vector<2x32xf32>
    %566 = vector.extract_strided_slice %555 {offsets = [0, 32], sizes = [2, 32], strides = [1, 1]} : vector<2x96xf32> to vector<2x32xf32>
    %567 = vector.extract_strided_slice %556 {offsets = [0, 32], sizes = [2, 32], strides = [1, 1]} : vector<2x96xf32> to vector<2x32xf32>
    %568 = arith.addf %566, %567 : vector<2x32xf32>
    %569 = arith.negf %568 : vector<2x32xf32>
    %570 = math.exp %569 : vector<2x32xf32>
    %cst_79 = arith.constant 1.000000e+00 : f32
    %571 = vector.broadcast %cst_79 : f32 to vector<2x32xf32>
    %572 = arith.addf %571, %570 : vector<2x32xf32>
    %573 = arith.divf %571, %572 : vector<2x32xf32>
    %574 = vector.extract_strided_slice %555 {offsets = [0, 64], sizes = [2, 32], strides = [1, 1]} : vector<2x96xf32> to vector<2x32xf32>
    %575 = vector.extract_strided_slice %556 {offsets = [0, 64], sizes = [2, 32], strides = [1, 1]} : vector<2x96xf32> to vector<2x32xf32>
    %576 = arith.mulf %565, %575 : vector<2x32xf32>
    %577 = arith.addf %574, %576 : vector<2x32xf32>
    %578 = math.tanh %577 : vector<2x32xf32>
    %cst_80 = arith.constant 1.000000e+00 : f32
    %579 = vector.broadcast %cst_80 : f32 to vector<2x32xf32>
    %580 = arith.subf %579, %573 : vector<2x32xf32>
    %581 = arith.mulf %580, %578 : vector<2x32xf32>
    %582 = arith.mulf %573, %557 : vector<2x32xf32>
    %583 = arith.addf %581, %582 : vector<2x32xf32>
    %584 = vector.extract_strided_slice %547 {offsets = [0, 7, 96], sizes = [2, 1, 96], strides = [1, 1, 1]} : vector<2x8x192xf32> to vector<2x1x96xf32>
    %585 = vector.shape_cast %584 : vector<2x1x96xf32> to vector<2x96xf32>
    %586 = vector.extract_strided_slice %553 {offsets = [0, 96], sizes = [2, 96], strides = [1, 1]} : vector<2x192xf32> to vector<2x96xf32>
    %587 = vector.extract_strided_slice %550 {offsets = [0, 32], sizes = [2, 32], strides = [1, 1]} : vector<2x64xf32> to vector<2x32xf32>
    %588 = vector.extract_strided_slice %585 {offsets = [0, 0], sizes = [2, 32], strides = [1, 1]} : vector<2x96xf32> to vector<2x32xf32>
    %589 = vector.extract_strided_slice %586 {offsets = [0, 0], sizes = [2, 32], strides = [1, 1]} : vector<2x96xf32> to vector<2x32xf32>
    %590 = arith.addf %588, %589 : vector<2x32xf32>
    %591 = arith.negf %590 : vector<2x32xf32>
    %592 = math.exp %591 : vector<2x32xf32>
    %cst_81 = arith.constant 1.000000e+00 : f32
    %593 = vector.broadcast %cst_81 : f32 to vector<2x32xf32>
    %594 = arith.addf %593, %592 : vector<2x32xf32>
    %595 = arith.divf %593, %594 : vector<2x32xf32>
    %596 = vector.extract_strided_slice %585 {offsets = [0, 32], sizes = [2, 32], strides = [1, 1]} : vector<2x96xf32> to vector<2x32xf32>
    %597 = vector.extract_strided_slice %586 {offsets = [0, 32], sizes = [2, 32], strides = [1, 1]} : vector<2x96xf32> to vector<2x32xf32>
    %598 = arith.addf %596, %597 : vector<2x32xf32>
    %599 = arith.negf %598 : vector<2x32xf32>
    %600 = math.exp %599 : vector<2x32xf32>
    %cst_82 = arith.constant 1.000000e+00 : f32
    %601 = vector.broadcast %cst_82 : f32 to vector<2x32xf32>
    %602 = arith.addf %601, %600 : vector<2x32xf32>
    %603 = arith.divf %601, %602 : vector<2x32xf32>
    %604 = vector.extract_strided_slice %585 {offsets = [0, 64], sizes = [2, 32], strides = [1, 1]} : vector<2x96xf32> to vector<2x32xf32>
    %605 = vector.extract_strided_slice %586 {offsets = [0, 64], sizes = [2, 32], strides = [1, 1]} : vector<2x96xf32> to vector<2x32xf32>
    %606 = arith.mulf %595, %605 : vector<2x32xf32>
    %607 = arith.addf %604, %606 : vector<2x32xf32>
    %608 = math.tanh %607 : vector<2x32xf32>
    %cst_83 = arith.constant 1.000000e+00 : f32
    %609 = vector.broadcast %cst_83 : f32 to vector<2x32xf32>
    %610 = arith.subf %609, %603 : vector<2x32xf32>
    %611 = arith.mulf %610, %608 : vector<2x32xf32>
    %612 = arith.mulf %603, %587 : vector<2x32xf32>
    %613 = arith.addf %611, %612 : vector<2x32xf32>
    %614 = tpu.concatenate %583, %613 in 1 : vector<2x32xf32>, vector<2x32xf32> -> vector<2x64xf32>
    %cst_84 = arith.constant dense<0.000000e+00> : vector<2x192xf32>
    %615 = tpu.matmul %614, %548, %cst_84 {dimension_numbers = #tpu.dot_dimension_numbers<[1], [0], [0], [1], [0, 0, 1, 1], [], []>} : vector<2x64xf32>, vector<64x192xf32>, vector<2x192xf32> -> vector<2x192xf32>
    %616 = vector.broadcast %549 : vector<1x192xf32> to vector<2x192xf32>
    %617 = arith.addf %615, %616 : vector<2x192xf32>
    %618 = vector.extract_strided_slice %547 {offsets = [0, 1, 0], sizes = [2, 1, 96], strides = [1, 1, 1]} : vector<2x8x192xf32> to vector<2x1x96xf32>
    %619 = vector.shape_cast %618 : vector<2x1x96xf32> to vector<2x96xf32>
    %620 = vector.extract_strided_slice %617 {offsets = [0, 0], sizes = [2, 96], strides = [1, 1]} : vector<2x192xf32> to vector<2x96xf32>
    %621 = vector.extract_strided_slice %614 {offsets = [0, 0], sizes = [2, 32], strides = [1, 1]} : vector<2x64xf32> to vector<2x32xf32>
    %622 = vector.extract_strided_slice %619 {offsets = [0, 0], sizes = [2, 32], strides = [1, 1]} : vector<2x96xf32> to vector<2x32xf32>
    %623 = vector.extract_strided_slice %620 {offsets = [0, 0], sizes = [2, 32], strides = [1, 1]} : vector<2x96xf32> to vector<2x32xf32>
    %624 = arith.addf %622, %623 : vector<2x32xf32>
    %625 = arith.negf %624 : vector<2x32xf32>
    %626 = math.exp %625 : vector<2x32xf32>
    %cst_85 = arith.constant 1.000000e+00 : f32
    %627 = vector.broadcast %cst_85 : f32 to vector<2x32xf32>
    %628 = arith.addf %627, %626 : vector<2x32xf32>
    %629 = arith.divf %627, %628 : vector<2x32xf32>
    %630 = vector.extract_strided_slice %619 {offsets = [0, 32], sizes = [2, 32], strides = [1, 1]} : vector<2x96xf32> to vector<2x32xf32>
    %631 = vector.extract_strided_slice %620 {offsets = [0, 32], sizes = [2, 32], strides = [1, 1]} : vector<2x96xf32> to vector<2x32xf32>
    %632 = arith.addf %630, %631 : vector<2x32xf32>
    %633 = arith.negf %632 : vector<2x32xf32>
    %634 = math.exp %633 : vector<2x32xf32>
    %cst_86 = arith.constant 1.000000e+00 : f32
    %635 = vector.broadcast %cst_86 : f32 to vector<2x32xf32>
    %636 = arith.addf %635, %634 : vector<2x32xf32>
    %637 = arith.divf %635, %636 : vector<2x32xf32>
    %638 = vector.extract_strided_slice %619 {offsets = [0, 64], sizes = [2, 32], strides = [1, 1]} : vector<2x96xf32> to vector<2x32xf32>
    %639 = vector.extract_strided_slice %620 {offsets = [0, 64], sizes = [2, 32], strides = [1, 1]} : vector<2x96xf32> to vector<2x32xf32>
    %640 = arith.mulf %629, %639 : vector<2x32xf32>
    %641 = arith.addf %638, %640 : vector<2x32xf32>
    %642 = math.tanh %641 : vector<2x32xf32>
    %cst_87 = arith.constant 1.000000e+00 : f32
    %643 = vector.broadcast %cst_87 : f32 to vector<2x32xf32>
    %644 = arith.subf %643, %637 : vector<2x32xf32>
    %645 = arith.mulf %644, %642 : vector<2x32xf32>
    %646 = arith.mulf %637, %621 : vector<2x32xf32>
    %647 = arith.addf %645, %646 : vector<2x32xf32>
    %648 = vector.extract_strided_slice %547 {offsets = [0, 6, 96], sizes = [2, 1, 96], strides = [1, 1, 1]} : vector<2x8x192xf32> to vector<2x1x96xf32>
    %649 = vector.shape_cast %648 : vector<2x1x96xf32> to vector<2x96xf32>
    %650 = vector.extract_strided_slice %617 {offsets = [0, 96], sizes = [2, 96], strides = [1, 1]} : vector<2x192xf32> to vector<2x96xf32>
    %651 = vector.extract_strided_slice %614 {offsets = [0, 32], sizes = [2, 32], strides = [1, 1]} : vector<2x64xf32> to vector<2x32xf32>
    %652 = vector.extract_strided_slice %649 {offsets = [0, 0], sizes = [2, 32], strides = [1, 1]} : vector<2x96xf32> to vector<2x32xf32>
    %653 = vector.extract_strided_slice %650 {offsets = [0, 0], sizes = [2, 32], strides = [1, 1]} : vector<2x96xf32> to vector<2x32xf32>
    %654 = arith.addf %652, %653 : vector<2x32xf32>
    %655 = arith.negf %654 : vector<2x32xf32>
    %656 = math.exp %655 : vector<2x32xf32>
    %cst_88 = arith.constant 1.000000e+00 : f32
    %657 = vector.broadcast %cst_88 : f32 to vector<2x32xf32>
    %658 = arith.addf %657, %656 : vector<2x32xf32>
    %659 = arith.divf %657, %658 : vector<2x32xf32>
    %660 = vector.extract_strided_slice %649 {offsets = [0, 32], sizes = [2, 32], strides = [1, 1]} : vector<2x96xf32> to vector<2x32xf32>
    %661 = vector.extract_strided_slice %650 {offsets = [0, 32], sizes = [2, 32], strides = [1, 1]} : vector<2x96xf32> to vector<2x32xf32>
    %662 = arith.addf %660, %661 : vector<2x32xf32>
    %663 = arith.negf %662 : vector<2x32xf32>
    %664 = math.exp %663 : vector<2x32xf32>
    %cst_89 = arith.constant 1.000000e+00 : f32
    %665 = vector.broadcast %cst_89 : f32 to vector<2x32xf32>
    %666 = arith.addf %665, %664 : vector<2x32xf32>
    %667 = arith.divf %665, %666 : vector<2x32xf32>
    %668 = vector.extract_strided_slice %649 {offsets = [0, 64], sizes = [2, 32], strides = [1, 1]} : vector<2x96xf32> to vector<2x32xf32>
    %669 = vector.extract_strided_slice %650 {offsets = [0, 64], sizes = [2, 32], strides = [1, 1]} : vector<2x96xf32> to vector<2x32xf32>
    %670 = arith.mulf %659, %669 : vector<2x32xf32>
    %671 = arith.addf %668, %670 : vector<2x32xf32>
    %672 = math.tanh %671 : vector<2x32xf32>
    %cst_90 = arith.constant 1.000000e+00 : f32
    %673 = vector.broadcast %cst_90 : f32 to vector<2x32xf32>
    %674 = arith.subf %673, %667 : vector<2x32xf32>
    %675 = arith.mulf %674, %672 : vector<2x32xf32>
    %676 = arith.mulf %667, %651 : vector<2x32xf32>
    %677 = arith.addf %675, %676 : vector<2x32xf32>
    %678 = tpu.concatenate %647, %677 in 1 : vector<2x32xf32>, vector<2x32xf32> -> vector<2x64xf32>
    %cst_91 = arith.constant dense<0.000000e+00> : vector<2x192xf32>
    %679 = tpu.matmul %678, %548, %cst_91 {dimension_numbers = #tpu.dot_dimension_numbers<[1], [0], [0], [1], [0, 0, 1, 1], [], []>} : vector<2x64xf32>, vector<64x192xf32>, vector<2x192xf32> -> vector<2x192xf32>
    %680 = vector.broadcast %549 : vector<1x192xf32> to vector<2x192xf32>
    %681 = arith.addf %679, %680 : vector<2x192xf32>
    %682 = vector.extract_strided_slice %547 {offsets = [0, 2, 0], sizes = [2, 1, 96], strides = [1, 1, 1]} : vector<2x8x192xf32> to vector<2x1x96xf32>
    %683 = vector.shape_cast %682 : vector<2x1x96xf32> to vector<2x96xf32>
    %684 = vector.extract_strided_slice %681 {offsets = [0, 0], sizes = [2, 96], strides = [1, 1]} : vector<2x192xf32> to vector<2x96xf32>
    %685 = vector.extract_strided_slice %678 {offsets = [0, 0], sizes = [2, 32], strides = [1, 1]} : vector<2x64xf32> to vector<2x32xf32>
    %686 = vector.extract_strided_slice %683 {offsets = [0, 0], sizes = [2, 32], strides = [1, 1]} : vector<2x96xf32> to vector<2x32xf32>
    %687 = vector.extract_strided_slice %684 {offsets = [0, 0], sizes = [2, 32], strides = [1, 1]} : vector<2x96xf32> to vector<2x32xf32>
    %688 = arith.addf %686, %687 : vector<2x32xf32>
    %689 = arith.negf %688 : vector<2x32xf32>
    %690 = math.exp %689 : vector<2x32xf32>
    %cst_92 = arith.constant 1.000000e+00 : f32
    %691 = vector.broadcast %cst_92 : f32 to vector<2x32xf32>
    %692 = arith.addf %691, %690 : vector<2x32xf32>
    %693 = arith.divf %691, %692 : vector<2x32xf32>
    %694 = vector.extract_strided_slice %683 {offsets = [0, 32], sizes = [2, 32], strides = [1, 1]} : vector<2x96xf32> to vector<2x32xf32>
    %695 = vector.extract_strided_slice %684 {offsets = [0, 32], sizes = [2, 32], strides = [1, 1]} : vector<2x96xf32> to vector<2x32xf32>
    %696 = arith.addf %694, %695 : vector<2x32xf32>
    %697 = arith.negf %696 : vector<2x32xf32>
    %698 = math.exp %697 : vector<2x32xf32>
    %cst_93 = arith.constant 1.000000e+00 : f32
    %699 = vector.broadcast %cst_93 : f32 to vector<2x32xf32>
    %700 = arith.addf %699, %698 : vector<2x32xf32>
    %701 = arith.divf %699, %700 : vector<2x32xf32>
    %702 = vector.extract_strided_slice %683 {offsets = [0, 64], sizes = [2, 32], strides = [1, 1]} : vector<2x96xf32> to vector<2x32xf32>
    %703 = vector.extract_strided_slice %684 {offsets = [0, 64], sizes = [2, 32], strides = [1, 1]} : vector<2x96xf32> to vector<2x32xf32>
    %704 = arith.mulf %693, %703 : vector<2x32xf32>
    %705 = arith.addf %702, %704 : vector<2x32xf32>
    %706 = math.tanh %705 : vector<2x32xf32>
    %cst_94 = arith.constant 1.000000e+00 : f32
    %707 = vector.broadcast %cst_94 : f32 to vector<2x32xf32>
    %708 = arith.subf %707, %701 : vector<2x32xf32>
    %709 = arith.mulf %708, %706 : vector<2x32xf32>
    %710 = arith.mulf %701, %685 : vector<2x32xf32>
    %711 = arith.addf %709, %710 : vector<2x32xf32>
    %712 = vector.extract_strided_slice %547 {offsets = [0, 5, 96], sizes = [2, 1, 96], strides = [1, 1, 1]} : vector<2x8x192xf32> to vector<2x1x96xf32>
    %713 = vector.shape_cast %712 : vector<2x1x96xf32> to vector<2x96xf32>
    %714 = vector.extract_strided_slice %681 {offsets = [0, 96], sizes = [2, 96], strides = [1, 1]} : vector<2x192xf32> to vector<2x96xf32>
    %715 = vector.extract_strided_slice %678 {offsets = [0, 32], sizes = [2, 32], strides = [1, 1]} : vector<2x64xf32> to vector<2x32xf32>
    %716 = vector.extract_strided_slice %713 {offsets = [0, 0], sizes = [2, 32], strides = [1, 1]} : vector<2x96xf32> to vector<2x32xf32>
    %717 = vector.extract_strided_slice %714 {offsets = [0, 0], sizes = [2, 32], strides = [1, 1]} : vector<2x96xf32> to vector<2x32xf32>
    %718 = arith.addf %716, %717 : vector<2x32xf32>
    %719 = arith.negf %718 : vector<2x32xf32>
    %720 = math.exp %719 : vector<2x32xf32>
    %cst_95 = arith.constant 1.000000e+00 : f32
    %721 = vector.broadcast %cst_95 : f32 to vector<2x32xf32>
    %722 = arith.addf %721, %720 : vector<2x32xf32>
    %723 = arith.divf %721, %722 : vector<2x32xf32>
    %724 = vector.extract_strided_slice %713 {offsets = [0, 32], sizes = [2, 32], strides = [1, 1]} : vector<2x96xf32> to vector<2x32xf32>
    %725 = vector.extract_strided_slice %714 {offsets = [0, 32], sizes = [2, 32], strides = [1, 1]} : vector<2x96xf32> to vector<2x32xf32>
    %726 = arith.addf %724, %725 : vector<2x32xf32>
    %727 = arith.negf %726 : vector<2x32xf32>
    %728 = math.exp %727 : vector<2x32xf32>
    %cst_96 = arith.constant 1.000000e+00 : f32
    %729 = vector.broadcast %cst_96 : f32 to vector<2x32xf32>
    %730 = arith.addf %729, %728 : vector<2x32xf32>
    %731 = arith.divf %729, %730 : vector<2x32xf32>
    %732 = vector.extract_strided_slice %713 {offsets = [0, 64], sizes = [2, 32], strides = [1, 1]} : vector<2x96xf32> to vector<2x32xf32>
    %733 = vector.extract_strided_slice %714 {offsets = [0, 64], sizes = [2, 32], strides = [1, 1]} : vector<2x96xf32> to vector<2x32xf32>
    %734 = arith.mulf %723, %733 : vector<2x32xf32>
    %735 = arith.addf %732, %734 : vector<2x32xf32>
    %736 = math.tanh %735 : vector<2x32xf32>
    %cst_97 = arith.constant 1.000000e+00 : f32
    %737 = vector.broadcast %cst_97 : f32 to vector<2x32xf32>
    %738 = arith.subf %737, %731 : vector<2x32xf32>
    %739 = arith.mulf %738, %736 : vector<2x32xf32>
    %740 = arith.mulf %731, %715 : vector<2x32xf32>
    %741 = arith.addf %739, %740 : vector<2x32xf32>
    %742 = tpu.concatenate %711, %741 in 1 : vector<2x32xf32>, vector<2x32xf32> -> vector<2x64xf32>
    %cst_98 = arith.constant dense<0.000000e+00> : vector<2x192xf32>
    %743 = tpu.matmul %742, %548, %cst_98 {dimension_numbers = #tpu.dot_dimension_numbers<[1], [0], [0], [1], [0, 0, 1, 1], [], []>} : vector<2x64xf32>, vector<64x192xf32>, vector<2x192xf32> -> vector<2x192xf32>
    %744 = vector.broadcast %549 : vector<1x192xf32> to vector<2x192xf32>
    %745 = arith.addf %743, %744 : vector<2x192xf32>
    %746 = vector.extract_strided_slice %547 {offsets = [0, 3, 0], sizes = [2, 1, 96], strides = [1, 1, 1]} : vector<2x8x192xf32> to vector<2x1x96xf32>
    %747 = vector.shape_cast %746 : vector<2x1x96xf32> to vector<2x96xf32>
    %748 = vector.extract_strided_slice %745 {offsets = [0, 0], sizes = [2, 96], strides = [1, 1]} : vector<2x192xf32> to vector<2x96xf32>
    %749 = vector.extract_strided_slice %742 {offsets = [0, 0], sizes = [2, 32], strides = [1, 1]} : vector<2x64xf32> to vector<2x32xf32>
    %750 = vector.extract_strided_slice %747 {offsets = [0, 0], sizes = [2, 32], strides = [1, 1]} : vector<2x96xf32> to vector<2x32xf32>
    %751 = vector.extract_strided_slice %748 {offsets = [0, 0], sizes = [2, 32], strides = [1, 1]} : vector<2x96xf32> to vector<2x32xf32>
    %752 = arith.addf %750, %751 : vector<2x32xf32>
    %753 = arith.negf %752 : vector<2x32xf32>
    %754 = math.exp %753 : vector<2x32xf32>
    %cst_99 = arith.constant 1.000000e+00 : f32
    %755 = vector.broadcast %cst_99 : f32 to vector<2x32xf32>
    %756 = arith.addf %755, %754 : vector<2x32xf32>
    %757 = arith.divf %755, %756 : vector<2x32xf32>
    %758 = vector.extract_strided_slice %747 {offsets = [0, 32], sizes = [2, 32], strides = [1, 1]} : vector<2x96xf32> to vector<2x32xf32>
    %759 = vector.extract_strided_slice %748 {offsets = [0, 32], sizes = [2, 32], strides = [1, 1]} : vector<2x96xf32> to vector<2x32xf32>
    %760 = arith.addf %758, %759 : vector<2x32xf32>
    %761 = arith.negf %760 : vector<2x32xf32>
    %762 = math.exp %761 : vector<2x32xf32>
    %cst_100 = arith.constant 1.000000e+00 : f32
    %763 = vector.broadcast %cst_100 : f32 to vector<2x32xf32>
    %764 = arith.addf %763, %762 : vector<2x32xf32>
    %765 = arith.divf %763, %764 : vector<2x32xf32>
    %766 = vector.extract_strided_slice %747 {offsets = [0, 64], sizes = [2, 32], strides = [1, 1]} : vector<2x96xf32> to vector<2x32xf32>
    %767 = vector.extract_strided_slice %748 {offsets = [0, 64], sizes = [2, 32], strides = [1, 1]} : vector<2x96xf32> to vector<2x32xf32>
    %768 = arith.mulf %757, %767 : vector<2x32xf32>
    %769 = arith.addf %766, %768 : vector<2x32xf32>
    %770 = math.tanh %769 : vector<2x32xf32>
    %cst_101 = arith.constant 1.000000e+00 : f32
    %771 = vector.broadcast %cst_101 : f32 to vector<2x32xf32>
    %772 = arith.subf %771, %765 : vector<2x32xf32>
    %773 = arith.mulf %772, %770 : vector<2x32xf32>
    %774 = arith.mulf %765, %749 : vector<2x32xf32>
    %775 = arith.addf %773, %774 : vector<2x32xf32>
    %776 = vector.extract_strided_slice %547 {offsets = [0, 4, 96], sizes = [2, 1, 96], strides = [1, 1, 1]} : vector<2x8x192xf32> to vector<2x1x96xf32>
    %777 = vector.shape_cast %776 : vector<2x1x96xf32> to vector<2x96xf32>
    %778 = vector.extract_strided_slice %745 {offsets = [0, 96], sizes = [2, 96], strides = [1, 1]} : vector<2x192xf32> to vector<2x96xf32>
    %779 = vector.extract_strided_slice %742 {offsets = [0, 32], sizes = [2, 32], strides = [1, 1]} : vector<2x64xf32> to vector<2x32xf32>
    %780 = vector.extract_strided_slice %777 {offsets = [0, 0], sizes = [2, 32], strides = [1, 1]} : vector<2x96xf32> to vector<2x32xf32>
    %781 = vector.extract_strided_slice %778 {offsets = [0, 0], sizes = [2, 32], strides = [1, 1]} : vector<2x96xf32> to vector<2x32xf32>
    %782 = arith.addf %780, %781 : vector<2x32xf32>
    %783 = arith.negf %782 : vector<2x32xf32>
    %784 = math.exp %783 : vector<2x32xf32>
    %cst_102 = arith.constant 1.000000e+00 : f32
    %785 = vector.broadcast %cst_102 : f32 to vector<2x32xf32>
    %786 = arith.addf %785, %784 : vector<2x32xf32>
    %787 = arith.divf %785, %786 : vector<2x32xf32>
    %788 = vector.extract_strided_slice %777 {offsets = [0, 32], sizes = [2, 32], strides = [1, 1]} : vector<2x96xf32> to vector<2x32xf32>
    %789 = vector.extract_strided_slice %778 {offsets = [0, 32], sizes = [2, 32], strides = [1, 1]} : vector<2x96xf32> to vector<2x32xf32>
    %790 = arith.addf %788, %789 : vector<2x32xf32>
    %791 = arith.negf %790 : vector<2x32xf32>
    %792 = math.exp %791 : vector<2x32xf32>
    %cst_103 = arith.constant 1.000000e+00 : f32
    %793 = vector.broadcast %cst_103 : f32 to vector<2x32xf32>
    %794 = arith.addf %793, %792 : vector<2x32xf32>
    %795 = arith.divf %793, %794 : vector<2x32xf32>
    %796 = vector.extract_strided_slice %777 {offsets = [0, 64], sizes = [2, 32], strides = [1, 1]} : vector<2x96xf32> to vector<2x32xf32>
    %797 = vector.extract_strided_slice %778 {offsets = [0, 64], sizes = [2, 32], strides = [1, 1]} : vector<2x96xf32> to vector<2x32xf32>
    %798 = arith.mulf %787, %797 : vector<2x32xf32>
    %799 = arith.addf %796, %798 : vector<2x32xf32>
    %800 = math.tanh %799 : vector<2x32xf32>
    %cst_104 = arith.constant 1.000000e+00 : f32
    %801 = vector.broadcast %cst_104 : f32 to vector<2x32xf32>
    %802 = arith.subf %801, %795 : vector<2x32xf32>
    %803 = arith.mulf %802, %800 : vector<2x32xf32>
    %804 = arith.mulf %795, %779 : vector<2x32xf32>
    %805 = arith.addf %803, %804 : vector<2x32xf32>
    %806 = tpu.concatenate %775, %805 in 1 : vector<2x32xf32>, vector<2x32xf32> -> vector<2x64xf32>
    %cst_105 = arith.constant dense<0.000000e+00> : vector<2x192xf32>
    %807 = tpu.matmul %806, %548, %cst_105 {dimension_numbers = #tpu.dot_dimension_numbers<[1], [0], [0], [1], [0, 0, 1, 1], [], []>} : vector<2x64xf32>, vector<64x192xf32>, vector<2x192xf32> -> vector<2x192xf32>
    %808 = vector.broadcast %549 : vector<1x192xf32> to vector<2x192xf32>
    %809 = arith.addf %807, %808 : vector<2x192xf32>
    %810 = vector.extract_strided_slice %547 {offsets = [0, 4, 0], sizes = [2, 1, 96], strides = [1, 1, 1]} : vector<2x8x192xf32> to vector<2x1x96xf32>
    %811 = vector.shape_cast %810 : vector<2x1x96xf32> to vector<2x96xf32>
    %812 = vector.extract_strided_slice %809 {offsets = [0, 0], sizes = [2, 96], strides = [1, 1]} : vector<2x192xf32> to vector<2x96xf32>
    %813 = vector.extract_strided_slice %806 {offsets = [0, 0], sizes = [2, 32], strides = [1, 1]} : vector<2x64xf32> to vector<2x32xf32>
    %814 = vector.extract_strided_slice %811 {offsets = [0, 0], sizes = [2, 32], strides = [1, 1]} : vector<2x96xf32> to vector<2x32xf32>
    %815 = vector.extract_strided_slice %812 {offsets = [0, 0], sizes = [2, 32], strides = [1, 1]} : vector<2x96xf32> to vector<2x32xf32>
    %816 = arith.addf %814, %815 : vector<2x32xf32>
    %817 = arith.negf %816 : vector<2x32xf32>
    %818 = math.exp %817 : vector<2x32xf32>
    %cst_106 = arith.constant 1.000000e+00 : f32
    %819 = vector.broadcast %cst_106 : f32 to vector<2x32xf32>
    %820 = arith.addf %819, %818 : vector<2x32xf32>
    %821 = arith.divf %819, %820 : vector<2x32xf32>
    %822 = vector.extract_strided_slice %811 {offsets = [0, 32], sizes = [2, 32], strides = [1, 1]} : vector<2x96xf32> to vector<2x32xf32>
    %823 = vector.extract_strided_slice %812 {offsets = [0, 32], sizes = [2, 32], strides = [1, 1]} : vector<2x96xf32> to vector<2x32xf32>
    %824 = arith.addf %822, %823 : vector<2x32xf32>
    %825 = arith.negf %824 : vector<2x32xf32>
    %826 = math.exp %825 : vector<2x32xf32>
    %cst_107 = arith.constant 1.000000e+00 : f32
    %827 = vector.broadcast %cst_107 : f32 to vector<2x32xf32>
    %828 = arith.addf %827, %826 : vector<2x32xf32>
    %829 = arith.divf %827, %828 : vector<2x32xf32>
    %830 = vector.extract_strided_slice %811 {offsets = [0, 64], sizes = [2, 32], strides = [1, 1]} : vector<2x96xf32> to vector<2x32xf32>
    %831 = vector.extract_strided_slice %812 {offsets = [0, 64], sizes = [2, 32], strides = [1, 1]} : vector<2x96xf32> to vector<2x32xf32>
    %832 = arith.mulf %821, %831 : vector<2x32xf32>
    %833 = arith.addf %830, %832 : vector<2x32xf32>
    %834 = math.tanh %833 : vector<2x32xf32>
    %cst_108 = arith.constant 1.000000e+00 : f32
    %835 = vector.broadcast %cst_108 : f32 to vector<2x32xf32>
    %836 = arith.subf %835, %829 : vector<2x32xf32>
    %837 = arith.mulf %836, %834 : vector<2x32xf32>
    %838 = arith.mulf %829, %813 : vector<2x32xf32>
    %839 = arith.addf %837, %838 : vector<2x32xf32>
    %840 = vector.extract_strided_slice %547 {offsets = [0, 3, 96], sizes = [2, 1, 96], strides = [1, 1, 1]} : vector<2x8x192xf32> to vector<2x1x96xf32>
    %841 = vector.shape_cast %840 : vector<2x1x96xf32> to vector<2x96xf32>
    %842 = vector.extract_strided_slice %809 {offsets = [0, 96], sizes = [2, 96], strides = [1, 1]} : vector<2x192xf32> to vector<2x96xf32>
    %843 = vector.extract_strided_slice %806 {offsets = [0, 32], sizes = [2, 32], strides = [1, 1]} : vector<2x64xf32> to vector<2x32xf32>
    %844 = vector.extract_strided_slice %841 {offsets = [0, 0], sizes = [2, 32], strides = [1, 1]} : vector<2x96xf32> to vector<2x32xf32>
    %845 = vector.extract_strided_slice %842 {offsets = [0, 0], sizes = [2, 32], strides = [1, 1]} : vector<2x96xf32> to vector<2x32xf32>
    %846 = arith.addf %844, %845 : vector<2x32xf32>
    %847 = arith.negf %846 : vector<2x32xf32>
    %848 = math.exp %847 : vector<2x32xf32>
    %cst_109 = arith.constant 1.000000e+00 : f32
    %849 = vector.broadcast %cst_109 : f32 to vector<2x32xf32>
    %850 = arith.addf %849, %848 : vector<2x32xf32>
    %851 = arith.divf %849, %850 : vector<2x32xf32>
    %852 = vector.extract_strided_slice %841 {offsets = [0, 32], sizes = [2, 32], strides = [1, 1]} : vector<2x96xf32> to vector<2x32xf32>
    %853 = vector.extract_strided_slice %842 {offsets = [0, 32], sizes = [2, 32], strides = [1, 1]} : vector<2x96xf32> to vector<2x32xf32>
    %854 = arith.addf %852, %853 : vector<2x32xf32>
    %855 = arith.negf %854 : vector<2x32xf32>
    %856 = math.exp %855 : vector<2x32xf32>
    %cst_110 = arith.constant 1.000000e+00 : f32
    %857 = vector.broadcast %cst_110 : f32 to vector<2x32xf32>
    %858 = arith.addf %857, %856 : vector<2x32xf32>
    %859 = arith.divf %857, %858 : vector<2x32xf32>
    %860 = vector.extract_strided_slice %841 {offsets = [0, 64], sizes = [2, 32], strides = [1, 1]} : vector<2x96xf32> to vector<2x32xf32>
    %861 = vector.extract_strided_slice %842 {offsets = [0, 64], sizes = [2, 32], strides = [1, 1]} : vector<2x96xf32> to vector<2x32xf32>
    %862 = arith.mulf %851, %861 : vector<2x32xf32>
    %863 = arith.addf %860, %862 : vector<2x32xf32>
    %864 = math.tanh %863 : vector<2x32xf32>
    %cst_111 = arith.constant 1.000000e+00 : f32
    %865 = vector.broadcast %cst_111 : f32 to vector<2x32xf32>
    %866 = arith.subf %865, %859 : vector<2x32xf32>
    %867 = arith.mulf %866, %864 : vector<2x32xf32>
    %868 = arith.mulf %859, %843 : vector<2x32xf32>
    %869 = arith.addf %867, %868 : vector<2x32xf32>
    %870 = tpu.concatenate %839, %869 in 1 : vector<2x32xf32>, vector<2x32xf32> -> vector<2x64xf32>
    %cst_112 = arith.constant dense<0.000000e+00> : vector<2x192xf32>
    %871 = tpu.matmul %870, %548, %cst_112 {dimension_numbers = #tpu.dot_dimension_numbers<[1], [0], [0], [1], [0, 0, 1, 1], [], []>} : vector<2x64xf32>, vector<64x192xf32>, vector<2x192xf32> -> vector<2x192xf32>
    %872 = vector.broadcast %549 : vector<1x192xf32> to vector<2x192xf32>
    %873 = arith.addf %871, %872 : vector<2x192xf32>
    %874 = vector.extract_strided_slice %547 {offsets = [0, 5, 0], sizes = [2, 1, 96], strides = [1, 1, 1]} : vector<2x8x192xf32> to vector<2x1x96xf32>
    %875 = vector.shape_cast %874 : vector<2x1x96xf32> to vector<2x96xf32>
    %876 = vector.extract_strided_slice %873 {offsets = [0, 0], sizes = [2, 96], strides = [1, 1]} : vector<2x192xf32> to vector<2x96xf32>
    %877 = vector.extract_strided_slice %870 {offsets = [0, 0], sizes = [2, 32], strides = [1, 1]} : vector<2x64xf32> to vector<2x32xf32>
    %878 = vector.extract_strided_slice %875 {offsets = [0, 0], sizes = [2, 32], strides = [1, 1]} : vector<2x96xf32> to vector<2x32xf32>
    %879 = vector.extract_strided_slice %876 {offsets = [0, 0], sizes = [2, 32], strides = [1, 1]} : vector<2x96xf32> to vector<2x32xf32>
    %880 = arith.addf %878, %879 : vector<2x32xf32>
    %881 = arith.negf %880 : vector<2x32xf32>
    %882 = math.exp %881 : vector<2x32xf32>
    %cst_113 = arith.constant 1.000000e+00 : f32
    %883 = vector.broadcast %cst_113 : f32 to vector<2x32xf32>
    %884 = arith.addf %883, %882 : vector<2x32xf32>
    %885 = arith.divf %883, %884 : vector<2x32xf32>
    %886 = vector.extract_strided_slice %875 {offsets = [0, 32], sizes = [2, 32], strides = [1, 1]} : vector<2x96xf32> to vector<2x32xf32>
    %887 = vector.extract_strided_slice %876 {offsets = [0, 32], sizes = [2, 32], strides = [1, 1]} : vector<2x96xf32> to vector<2x32xf32>
    %888 = arith.addf %886, %887 : vector<2x32xf32>
    %889 = arith.negf %888 : vector<2x32xf32>
    %890 = math.exp %889 : vector<2x32xf32>
    %cst_114 = arith.constant 1.000000e+00 : f32
    %891 = vector.broadcast %cst_114 : f32 to vector<2x32xf32>
    %892 = arith.addf %891, %890 : vector<2x32xf32>
    %893 = arith.divf %891, %892 : vector<2x32xf32>
    %894 = vector.extract_strided_slice %875 {offsets = [0, 64], sizes = [2, 32], strides = [1, 1]} : vector<2x96xf32> to vector<2x32xf32>
    %895 = vector.extract_strided_slice %876 {offsets = [0, 64], sizes = [2, 32], strides = [1, 1]} : vector<2x96xf32> to vector<2x32xf32>
    %896 = arith.mulf %885, %895 : vector<2x32xf32>
    %897 = arith.addf %894, %896 : vector<2x32xf32>
    %898 = math.tanh %897 : vector<2x32xf32>
    %cst_115 = arith.constant 1.000000e+00 : f32
    %899 = vector.broadcast %cst_115 : f32 to vector<2x32xf32>
    %900 = arith.subf %899, %893 : vector<2x32xf32>
    %901 = arith.mulf %900, %898 : vector<2x32xf32>
    %902 = arith.mulf %893, %877 : vector<2x32xf32>
    %903 = arith.addf %901, %902 : vector<2x32xf32>
    %904 = vector.extract_strided_slice %547 {offsets = [0, 2, 96], sizes = [2, 1, 96], strides = [1, 1, 1]} : vector<2x8x192xf32> to vector<2x1x96xf32>
    %905 = vector.shape_cast %904 : vector<2x1x96xf32> to vector<2x96xf32>
    %906 = vector.extract_strided_slice %873 {offsets = [0, 96], sizes = [2, 96], strides = [1, 1]} : vector<2x192xf32> to vector<2x96xf32>
    %907 = vector.extract_strided_slice %870 {offsets = [0, 32], sizes = [2, 32], strides = [1, 1]} : vector<2x64xf32> to vector<2x32xf32>
    %908 = vector.extract_strided_slice %905 {offsets = [0, 0], sizes = [2, 32], strides = [1, 1]} : vector<2x96xf32> to vector<2x32xf32>
    %909 = vector.extract_strided_slice %906 {offsets = [0, 0], sizes = [2, 32], strides = [1, 1]} : vector<2x96xf32> to vector<2x32xf32>
    %910 = arith.addf %908, %909 : vector<2x32xf32>
    %911 = arith.negf %910 : vector<2x32xf32>
    %912 = math.exp %911 : vector<2x32xf32>
    %cst_116 = arith.constant 1.000000e+00 : f32
    %913 = vector.broadcast %cst_116 : f32 to vector<2x32xf32>
    %914 = arith.addf %913, %912 : vector<2x32xf32>
    %915 = arith.divf %913, %914 : vector<2x32xf32>
    %916 = vector.extract_strided_slice %905 {offsets = [0, 32], sizes = [2, 32], strides = [1, 1]} : vector<2x96xf32> to vector<2x32xf32>
    %917 = vector.extract_strided_slice %906 {offsets = [0, 32], sizes = [2, 32], strides = [1, 1]} : vector<2x96xf32> to vector<2x32xf32>
    %918 = arith.addf %916, %917 : vector<2x32xf32>
    %919 = arith.negf %918 : vector<2x32xf32>
    %920 = math.exp %919 : vector<2x32xf32>
    %cst_117 = arith.constant 1.000000e+00 : f32
    %921 = vector.broadcast %cst_117 : f32 to vector<2x32xf32>
    %922 = arith.addf %921, %920 : vector<2x32xf32>
    %923 = arith.divf %921, %922 : vector<2x32xf32>
    %924 = vector.extract_strided_slice %905 {offsets = [0, 64], sizes = [2, 32], strides = [1, 1]} : vector<2x96xf32> to vector<2x32xf32>
    %925 = vector.extract_strided_slice %906 {offsets = [0, 64], sizes = [2, 32], strides = [1, 1]} : vector<2x96xf32> to vector<2x32xf32>
    %926 = arith.mulf %915, %925 : vector<2x32xf32>
    %927 = arith.addf %924, %926 : vector<2x32xf32>
    %928 = math.tanh %927 : vector<2x32xf32>
    %cst_118 = arith.constant 1.000000e+00 : f32
    %929 = vector.broadcast %cst_118 : f32 to vector<2x32xf32>
    %930 = arith.subf %929, %923 : vector<2x32xf32>
    %931 = arith.mulf %930, %928 : vector<2x32xf32>
    %932 = arith.mulf %923, %907 : vector<2x32xf32>
    %933 = arith.addf %931, %932 : vector<2x32xf32>
    %934 = tpu.concatenate %903, %933 in 1 : vector<2x32xf32>, vector<2x32xf32> -> vector<2x64xf32>
    %cst_119 = arith.constant dense<0.000000e+00> : vector<2x192xf32>
    %935 = tpu.matmul %934, %548, %cst_119 {dimension_numbers = #tpu.dot_dimension_numbers<[1], [0], [0], [1], [0, 0, 1, 1], [], []>} : vector<2x64xf32>, vector<64x192xf32>, vector<2x192xf32> -> vector<2x192xf32>
    %936 = vector.broadcast %549 : vector<1x192xf32> to vector<2x192xf32>
    %937 = arith.addf %935, %936 : vector<2x192xf32>
    %938 = vector.extract_strided_slice %547 {offsets = [0, 6, 0], sizes = [2, 1, 96], strides = [1, 1, 1]} : vector<2x8x192xf32> to vector<2x1x96xf32>
    %939 = vector.shape_cast %938 : vector<2x1x96xf32> to vector<2x96xf32>
    %940 = vector.extract_strided_slice %937 {offsets = [0, 0], sizes = [2, 96], strides = [1, 1]} : vector<2x192xf32> to vector<2x96xf32>
    %941 = vector.extract_strided_slice %934 {offsets = [0, 0], sizes = [2, 32], strides = [1, 1]} : vector<2x64xf32> to vector<2x32xf32>
    %942 = vector.extract_strided_slice %939 {offsets = [0, 0], sizes = [2, 32], strides = [1, 1]} : vector<2x96xf32> to vector<2x32xf32>
    %943 = vector.extract_strided_slice %940 {offsets = [0, 0], sizes = [2, 32], strides = [1, 1]} : vector<2x96xf32> to vector<2x32xf32>
    %944 = arith.addf %942, %943 : vector<2x32xf32>
    %945 = arith.negf %944 : vector<2x32xf32>
    %946 = math.exp %945 : vector<2x32xf32>
    %cst_120 = arith.constant 1.000000e+00 : f32
    %947 = vector.broadcast %cst_120 : f32 to vector<2x32xf32>
    %948 = arith.addf %947, %946 : vector<2x32xf32>
    %949 = arith.divf %947, %948 : vector<2x32xf32>
    %950 = vector.extract_strided_slice %939 {offsets = [0, 32], sizes = [2, 32], strides = [1, 1]} : vector<2x96xf32> to vector<2x32xf32>
    %951 = vector.extract_strided_slice %940 {offsets = [0, 32], sizes = [2, 32], strides = [1, 1]} : vector<2x96xf32> to vector<2x32xf32>
    %952 = arith.addf %950, %951 : vector<2x32xf32>
    %953 = arith.negf %952 : vector<2x32xf32>
    %954 = math.exp %953 : vector<2x32xf32>
    %cst_121 = arith.constant 1.000000e+00 : f32
    %955 = vector.broadcast %cst_121 : f32 to vector<2x32xf32>
    %956 = arith.addf %955, %954 : vector<2x32xf32>
    %957 = arith.divf %955, %956 : vector<2x32xf32>
    %958 = vector.extract_strided_slice %939 {offsets = [0, 64], sizes = [2, 32], strides = [1, 1]} : vector<2x96xf32> to vector<2x32xf32>
    %959 = vector.extract_strided_slice %940 {offsets = [0, 64], sizes = [2, 32], strides = [1, 1]} : vector<2x96xf32> to vector<2x32xf32>
    %960 = arith.mulf %949, %959 : vector<2x32xf32>
    %961 = arith.addf %958, %960 : vector<2x32xf32>
    %962 = math.tanh %961 : vector<2x32xf32>
    %cst_122 = arith.constant 1.000000e+00 : f32
    %963 = vector.broadcast %cst_122 : f32 to vector<2x32xf32>
    %964 = arith.subf %963, %957 : vector<2x32xf32>
    %965 = arith.mulf %964, %962 : vector<2x32xf32>
    %966 = arith.mulf %957, %941 : vector<2x32xf32>
    %967 = arith.addf %965, %966 : vector<2x32xf32>
    %968 = vector.extract_strided_slice %547 {offsets = [0, 1, 96], sizes = [2, 1, 96], strides = [1, 1, 1]} : vector<2x8x192xf32> to vector<2x1x96xf32>
    %969 = vector.shape_cast %968 : vector<2x1x96xf32> to vector<2x96xf32>
    %970 = vector.extract_strided_slice %937 {offsets = [0, 96], sizes = [2, 96], strides = [1, 1]} : vector<2x192xf32> to vector<2x96xf32>
    %971 = vector.extract_strided_slice %934 {offsets = [0, 32], sizes = [2, 32], strides = [1, 1]} : vector<2x64xf32> to vector<2x32xf32>
    %972 = vector.extract_strided_slice %969 {offsets = [0, 0], sizes = [2, 32], strides = [1, 1]} : vector<2x96xf32> to vector<2x32xf32>
    %973 = vector.extract_strided_slice %970 {offsets = [0, 0], sizes = [2, 32], strides = [1, 1]} : vector<2x96xf32> to vector<2x32xf32>
    %974 = arith.addf %972, %973 : vector<2x32xf32>
    %975 = arith.negf %974 : vector<2x32xf32>
    %976 = math.exp %975 : vector<2x32xf32>
    %cst_123 = arith.constant 1.000000e+00 : f32
    %977 = vector.broadcast %cst_123 : f32 to vector<2x32xf32>
    %978 = arith.addf %977, %976 : vector<2x32xf32>
    %979 = arith.divf %977, %978 : vector<2x32xf32>
    %980 = vector.extract_strided_slice %969 {offsets = [0, 32], sizes = [2, 32], strides = [1, 1]} : vector<2x96xf32> to vector<2x32xf32>
    %981 = vector.extract_strided_slice %970 {offsets = [0, 32], sizes = [2, 32], strides = [1, 1]} : vector<2x96xf32> to vector<2x32xf32>
    %982 = arith.addf %980, %981 : vector<2x32xf32>
    %983 = arith.negf %982 : vector<2x32xf32>
    %984 = math.exp %983 : vector<2x32xf32>
    %cst_124 = arith.constant 1.000000e+00 : f32
    %985 = vector.broadcast %cst_124 : f32 to vector<2x32xf32>
    %986 = arith.addf %985, %984 : vector<2x32xf32>
    %987 = arith.divf %985, %986 : vector<2x32xf32>
    %988 = vector.extract_strided_slice %969 {offsets = [0, 64], sizes = [2, 32], strides = [1, 1]} : vector<2x96xf32> to vector<2x32xf32>
    %989 = vector.extract_strided_slice %970 {offsets = [0, 64], sizes = [2, 32], strides = [1, 1]} : vector<2x96xf32> to vector<2x32xf32>
    %990 = arith.mulf %979, %989 : vector<2x32xf32>
    %991 = arith.addf %988, %990 : vector<2x32xf32>
    %992 = math.tanh %991 : vector<2x32xf32>
    %cst_125 = arith.constant 1.000000e+00 : f32
    %993 = vector.broadcast %cst_125 : f32 to vector<2x32xf32>
    %994 = arith.subf %993, %987 : vector<2x32xf32>
    %995 = arith.mulf %994, %992 : vector<2x32xf32>
    %996 = arith.mulf %987, %971 : vector<2x32xf32>
    %997 = arith.addf %995, %996 : vector<2x32xf32>
    %998 = tpu.concatenate %967, %997 in 1 : vector<2x32xf32>, vector<2x32xf32> -> vector<2x64xf32>
    %cst_126 = arith.constant dense<0.000000e+00> : vector<2x192xf32>
    %999 = tpu.matmul %998, %548, %cst_126 {dimension_numbers = #tpu.dot_dimension_numbers<[1], [0], [0], [1], [0, 0, 1, 1], [], []>} : vector<2x64xf32>, vector<64x192xf32>, vector<2x192xf32> -> vector<2x192xf32>
    %1000 = vector.broadcast %549 : vector<1x192xf32> to vector<2x192xf32>
    %1001 = arith.addf %999, %1000 : vector<2x192xf32>
    %1002 = vector.extract_strided_slice %547 {offsets = [0, 7, 0], sizes = [2, 1, 96], strides = [1, 1, 1]} : vector<2x8x192xf32> to vector<2x1x96xf32>
    %1003 = vector.shape_cast %1002 : vector<2x1x96xf32> to vector<2x96xf32>
    %1004 = vector.extract_strided_slice %1001 {offsets = [0, 0], sizes = [2, 96], strides = [1, 1]} : vector<2x192xf32> to vector<2x96xf32>
    %1005 = vector.extract_strided_slice %998 {offsets = [0, 0], sizes = [2, 32], strides = [1, 1]} : vector<2x64xf32> to vector<2x32xf32>
    %1006 = vector.extract_strided_slice %1003 {offsets = [0, 0], sizes = [2, 32], strides = [1, 1]} : vector<2x96xf32> to vector<2x32xf32>
    %1007 = vector.extract_strided_slice %1004 {offsets = [0, 0], sizes = [2, 32], strides = [1, 1]} : vector<2x96xf32> to vector<2x32xf32>
    %1008 = arith.addf %1006, %1007 : vector<2x32xf32>
    %1009 = arith.negf %1008 : vector<2x32xf32>
    %1010 = math.exp %1009 : vector<2x32xf32>
    %cst_127 = arith.constant 1.000000e+00 : f32
    %1011 = vector.broadcast %cst_127 : f32 to vector<2x32xf32>
    %1012 = arith.addf %1011, %1010 : vector<2x32xf32>
    %1013 = arith.divf %1011, %1012 : vector<2x32xf32>
    %1014 = vector.extract_strided_slice %1003 {offsets = [0, 32], sizes = [2, 32], strides = [1, 1]} : vector<2x96xf32> to vector<2x32xf32>
    %1015 = vector.extract_strided_slice %1004 {offsets = [0, 32], sizes = [2, 32], strides = [1, 1]} : vector<2x96xf32> to vector<2x32xf32>
    %1016 = arith.addf %1014, %1015 : vector<2x32xf32>
    %1017 = arith.negf %1016 : vector<2x32xf32>
    %1018 = math.exp %1017 : vector<2x32xf32>
    %cst_128 = arith.constant 1.000000e+00 : f32
    %1019 = vector.broadcast %cst_128 : f32 to vector<2x32xf32>
    %1020 = arith.addf %1019, %1018 : vector<2x32xf32>
    %1021 = arith.divf %1019, %1020 : vector<2x32xf32>
    %1022 = vector.extract_strided_slice %1003 {offsets = [0, 64], sizes = [2, 32], strides = [1, 1]} : vector<2x96xf32> to vector<2x32xf32>
    %1023 = vector.extract_strided_slice %1004 {offsets = [0, 64], sizes = [2, 32], strides = [1, 1]} : vector<2x96xf32> to vector<2x32xf32>
    %1024 = arith.mulf %1013, %1023 : vector<2x32xf32>
    %1025 = arith.addf %1022, %1024 : vector<2x32xf32>
    %1026 = math.tanh %1025 : vector<2x32xf32>
    %cst_129 = arith.constant 1.000000e+00 : f32
    %1027 = vector.broadcast %cst_129 : f32 to vector<2x32xf32>
    %1028 = arith.subf %1027, %1021 : vector<2x32xf32>
    %1029 = arith.mulf %1028, %1026 : vector<2x32xf32>
    %1030 = arith.mulf %1021, %1005 : vector<2x32xf32>
    %1031 = arith.addf %1029, %1030 : vector<2x32xf32>
    %1032 = vector.extract_strided_slice %547 {offsets = [0, 0, 96], sizes = [2, 1, 96], strides = [1, 1, 1]} : vector<2x8x192xf32> to vector<2x1x96xf32>
    %1033 = vector.shape_cast %1032 : vector<2x1x96xf32> to vector<2x96xf32>
    %1034 = vector.extract_strided_slice %1001 {offsets = [0, 96], sizes = [2, 96], strides = [1, 1]} : vector<2x192xf32> to vector<2x96xf32>
    %1035 = vector.extract_strided_slice %998 {offsets = [0, 32], sizes = [2, 32], strides = [1, 1]} : vector<2x64xf32> to vector<2x32xf32>
    %1036 = vector.extract_strided_slice %1033 {offsets = [0, 0], sizes = [2, 32], strides = [1, 1]} : vector<2x96xf32> to vector<2x32xf32>
    %1037 = vector.extract_strided_slice %1034 {offsets = [0, 0], sizes = [2, 32], strides = [1, 1]} : vector<2x96xf32> to vector<2x32xf32>
    %1038 = arith.addf %1036, %1037 : vector<2x32xf32>
    %1039 = arith.negf %1038 : vector<2x32xf32>
    %1040 = math.exp %1039 : vector<2x32xf32>
    %cst_130 = arith.constant 1.000000e+00 : f32
    %1041 = vector.broadcast %cst_130 : f32 to vector<2x32xf32>
    %1042 = arith.addf %1041, %1040 : vector<2x32xf32>
    %1043 = arith.divf %1041, %1042 : vector<2x32xf32>
    %1044 = vector.extract_strided_slice %1033 {offsets = [0, 32], sizes = [2, 32], strides = [1, 1]} : vector<2x96xf32> to vector<2x32xf32>
    %1045 = vector.extract_strided_slice %1034 {offsets = [0, 32], sizes = [2, 32], strides = [1, 1]} : vector<2x96xf32> to vector<2x32xf32>
    %1046 = arith.addf %1044, %1045 : vector<2x32xf32>
    %1047 = arith.negf %1046 : vector<2x32xf32>
    %1048 = math.exp %1047 : vector<2x32xf32>
    %cst_131 = arith.constant 1.000000e+00 : f32
    %1049 = vector.broadcast %cst_131 : f32 to vector<2x32xf32>
    %1050 = arith.addf %1049, %1048 : vector<2x32xf32>
    %1051 = arith.divf %1049, %1050 : vector<2x32xf32>
    %1052 = vector.extract_strided_slice %1033 {offsets = [0, 64], sizes = [2, 32], strides = [1, 1]} : vector<2x96xf32> to vector<2x32xf32>
    %1053 = vector.extract_strided_slice %1034 {offsets = [0, 64], sizes = [2, 32], strides = [1, 1]} : vector<2x96xf32> to vector<2x32xf32>
    %1054 = arith.mulf %1043, %1053 : vector<2x32xf32>
    %1055 = arith.addf %1052, %1054 : vector<2x32xf32>
    %1056 = math.tanh %1055 : vector<2x32xf32>
    %cst_132 = arith.constant 1.000000e+00 : f32
    %1057 = vector.broadcast %cst_132 : f32 to vector<2x32xf32>
    %1058 = arith.subf %1057, %1051 : vector<2x32xf32>
    %1059 = arith.mulf %1058, %1056 : vector<2x32xf32>
    %1060 = arith.mulf %1051, %1035 : vector<2x32xf32>
    %1061 = arith.addf %1059, %1060 : vector<2x32xf32>
    %1062 = vector.shape_cast %583 : vector<2x32xf32> to vector<2x1x32xf32>
    %1063 = vector.shape_cast %647 : vector<2x32xf32> to vector<2x1x32xf32>
    %1064 = vector.shape_cast %711 : vector<2x32xf32> to vector<2x1x32xf32>
    %1065 = vector.shape_cast %775 : vector<2x32xf32> to vector<2x1x32xf32>
    %1066 = vector.shape_cast %839 : vector<2x32xf32> to vector<2x1x32xf32>
    %1067 = vector.shape_cast %903 : vector<2x32xf32> to vector<2x1x32xf32>
    %1068 = vector.shape_cast %967 : vector<2x32xf32> to vector<2x1x32xf32>
    %1069 = vector.shape_cast %1031 : vector<2x32xf32> to vector<2x1x32xf32>
    %1070 = tpu.concatenate %1062, %1063, %1064, %1065, %1066, %1067, %1068, %1069 in 1 : vector<2x1x32xf32>, vector<2x1x32xf32>, vector<2x1x32xf32>, vector<2x1x32xf32>, vector<2x1x32xf32>, vector<2x1x32xf32>, vector<2x1x32xf32>, vector<2x1x32xf32> -> vector<2x8x32xf32>
    %1071 = vector.shape_cast %1061 : vector<2x32xf32> to vector<2x1x32xf32>
    %1072 = vector.shape_cast %997 : vector<2x32xf32> to vector<2x1x32xf32>
    %1073 = vector.shape_cast %933 : vector<2x32xf32> to vector<2x1x32xf32>
    %1074 = vector.shape_cast %869 : vector<2x32xf32> to vector<2x1x32xf32>
    %1075 = vector.shape_cast %805 : vector<2x32xf32> to vector<2x1x32xf32>
    %1076 = vector.shape_cast %741 : vector<2x32xf32> to vector<2x1x32xf32>
    %1077 = vector.shape_cast %677 : vector<2x32xf32> to vector<2x1x32xf32>
    %1078 = vector.shape_cast %613 : vector<2x32xf32> to vector<2x1x32xf32>
    %1079 = tpu.concatenate %1071, %1072, %1073, %1074, %1075, %1076, %1077, %1078 in 1 : vector<2x1x32xf32>, vector<2x1x32xf32>, vector<2x1x32xf32>, vector<2x1x32xf32>, vector<2x1x32xf32>, vector<2x1x32xf32>, vector<2x1x32xf32>, vector<2x1x32xf32> -> vector<2x8x32xf32>
    %1080 = tpu.concatenate %1070, %1079 in 2 : vector<2x8x32xf32>, vector<2x8x32xf32> -> vector<2x8x64xf32>
    %1081 = vector.shape_cast %1080 : vector<2x8x64xf32> to vector<16x64xf32>
    %c0_133 = arith.constant 0 : index
    %c0_134 = arith.constant 0 : index
    %1082 = vector.load %arg10[%c0_133, %c0_134] : memref<64x192xf32, #tpu.memory_space<vmem>>, vector<64x192xf32>
    %cst_135 = arith.constant dense<0.000000e+00> : vector<16x192xf32>
    %1083 = tpu.matmul %1081, %1082, %cst_135 {dimension_numbers = #tpu.dot_dimension_numbers<[1], [0], [0], [1], [0, 0, 1, 1], [], []>} : vector<16x64xf32>, vector<64x192xf32>, vector<16x192xf32> -> vector<16x192xf32>
    %c0_136 = arith.constant 0 : index
    %c0_137 = arith.constant 0 : index
    %1084 = vector.load %arg11[%c0_136, %c0_137] : memref<1x192xf32, #tpu.memory_space<vmem>>, vector<1x192xf32>
    %1085 = vector.broadcast %1084 : vector<1x192xf32> to vector<16x192xf32>
    %1086 = arith.addf %1083, %1085 : vector<16x192xf32>
    %1087 = vector.extract_strided_slice %1086 {offsets = [0, 0], sizes = [16, 64], strides = [1, 1]} : vector<16x192xf32> to vector<16x64xf32>
    %1088 = vector.shape_cast %1087 : vector<16x64xf32> to vector<2x8x64xf32>
    %1089 = vector.extract_strided_slice %1086 {offsets = [0, 64], sizes = [16, 64], strides = [1, 1]} : vector<16x192xf32> to vector<16x64xf32>
    %1090 = vector.shape_cast %1089 : vector<16x64xf32> to vector<2x8x64xf32>
    %1091 = vector.extract_strided_slice %1086 {offsets = [0, 128], sizes = [16, 64], strides = [1, 1]} : vector<16x192xf32> to vector<16x64xf32>
    %1092 = vector.shape_cast %1091 : vector<16x64xf32> to vector<2x8x64xf32>
    %1093 = vector.extract_strided_slice %1088 {offsets = [0, 0, 0], sizes = [2, 8, 8], strides = [1, 1, 1]} : vector<2x8x64xf32> to vector<2x8x8xf32>
    %1094 = vector.extract_strided_slice %1090 {offsets = [0, 0, 0], sizes = [2, 8, 8], strides = [1, 1, 1]} : vector<2x8x64xf32> to vector<2x8x8xf32>
    "tpu.trace_start"() <{level = 10 : i32, message = "bqd,bkd->bqk"}> : () -> ()
    %cst_138 = arith.constant dense<0.000000e+00> : vector<2x8x8xf32>
    %1095 = tpu.matmul %1093, %1094, %cst_138 {dimension_numbers = #tpu.dot_dimension_numbers<[2], [2], [1], [1], [0, 0, 0, 1, 1, 1], [0], [0]>} : vector<2x8x8xf32>, vector<2x8x8xf32>, vector<2x8x8xf32> -> vector<2x8x8xf32>
    "tpu.trace_stop"() : () -> ()
    %cst_139 = arith.constant dense<0xFF800000> : vector<2x8xf32>
    %1096 = vector.multi_reduction <maximumf>, %1095, %cst_139 [2] : vector<2x8x8xf32> to vector<2x8xf32>
    %1097 = vector.shape_cast %1096 : vector<2x8xf32> to vector<2x8x1xf32>
    %1098 = vector.broadcast %1097 : vector<2x8x1xf32> to vector<2x8x8xf32>
    %1099 = arith.subf %1095, %1098 : vector<2x8x8xf32>
    %1100 = math.exp %1099 : vector<2x8x8xf32>
    %cst_140 = arith.constant dense<0.000000e+00> : vector<2x8xf32>
    %1101 = vector.multi_reduction <add>, %1100, %cst_140 [2] : vector<2x8x8xf32> to vector<2x8xf32>
    %1102 = vector.shape_cast %1101 : vector<2x8xf32> to vector<2x8x1xf32>
    %1103 = tpu.reciprocal %1102 {approx = true} : vector<2x8x1xf32> -> vector<2x8x1xf32>
    %1104 = vector.broadcast %1103 : vector<2x8x1xf32> to vector<2x8x8xf32>
    %1105 = arith.mulf %1100, %1104 : vector<2x8x8xf32>
    %1106 = vector.extract_strided_slice %1092 {offsets = [0, 0, 0], sizes = [2, 8, 8], strides = [1, 1, 1]} : vector<2x8x64xf32> to vector<2x8x8xf32>
    "tpu.trace_start"() <{level = 10 : i32, message = "bqk,bkd->bqd"}> : () -> ()
    %cst_141 = arith.constant dense<0.000000e+00> : vector<2x8x8xf32>
    %1107 = tpu.matmul %1105, %1106, %cst_141 {dimension_numbers = #tpu.dot_dimension_numbers<[2], [1], [1], [2], [0, 0, 0, 1, 1, 2], [0], [0]>} : vector<2x8x8xf32>, vector<2x8x8xf32>, vector<2x8x8xf32> -> vector<2x8x8xf32>
    "tpu.trace_stop"() : () -> ()
    %1108 = vector.extract_strided_slice %1088 {offsets = [0, 0, 8], sizes = [2, 8, 8], strides = [1, 1, 1]} : vector<2x8x64xf32> to vector<2x8x8xf32>
    %1109 = vector.extract_strided_slice %1090 {offsets = [0, 0, 8], sizes = [2, 8, 8], strides = [1, 1, 1]} : vector<2x8x64xf32> to vector<2x8x8xf32>
    "tpu.trace_start"() <{level = 10 : i32, message = "bqd,bkd->bqk"}> : () -> ()
    %cst_142 = arith.constant dense<0.000000e+00> : vector<2x8x8xf32>
    %1110 = tpu.matmul %1108, %1109, %cst_142 {dimension_numbers = #tpu.dot_dimension_numbers<[2], [2], [1], [1], [0, 0, 0, 1, 1, 1], [0], [0]>} : vector<2x8x8xf32>, vector<2x8x8xf32>, vector<2x8x8xf32> -> vector<2x8x8xf32>
    "tpu.trace_stop"() : () -> ()
    %cst_143 = arith.constant dense<0xFF800000> : vector<2x8xf32>
    %1111 = vector.multi_reduction <maximumf>, %1110, %cst_143 [2] : vector<2x8x8xf32> to vector<2x8xf32>
    %1112 = vector.shape_cast %1111 : vector<2x8xf32> to vector<2x8x1xf32>
    %1113 = vector.broadcast %1112 : vector<2x8x1xf32> to vector<2x8x8xf32>
    %1114 = arith.subf %1110, %1113 : vector<2x8x8xf32>
    %1115 = math.exp %1114 : vector<2x8x8xf32>
    %cst_144 = arith.constant dense<0.000000e+00> : vector<2x8xf32>
    %1116 = vector.multi_reduction <add>, %1115, %cst_144 [2] : vector<2x8x8xf32> to vector<2x8xf32>
    %1117 = vector.shape_cast %1116 : vector<2x8xf32> to vector<2x8x1xf32>
    %1118 = tpu.reciprocal %1117 {approx = true} : vector<2x8x1xf32> -> vector<2x8x1xf32>
    %1119 = vector.broadcast %1118 : vector<2x8x1xf32> to vector<2x8x8xf32>
    %1120 = arith.mulf %1115, %1119 : vector<2x8x8xf32>
    %1121 = vector.extract_strided_slice %1092 {offsets = [0, 0, 8], sizes = [2, 8, 8], strides = [1, 1, 1]} : vector<2x8x64xf32> to vector<2x8x8xf32>
    "tpu.trace_start"() <{level = 10 : i32, message = "bqk,bkd->bqd"}> : () -> ()
    %cst_145 = arith.constant dense<0.000000e+00> : vector<2x8x8xf32>
    %1122 = tpu.matmul %1120, %1121, %cst_145 {dimension_numbers = #tpu.dot_dimension_numbers<[2], [1], [1], [2], [0, 0, 0, 1, 1, 2], [0], [0]>} : vector<2x8x8xf32>, vector<2x8x8xf32>, vector<2x8x8xf32> -> vector<2x8x8xf32>
    "tpu.trace_stop"() : () -> ()
    %1123 = vector.extract_strided_slice %1088 {offsets = [0, 0, 16], sizes = [2, 8, 8], strides = [1, 1, 1]} : vector<2x8x64xf32> to vector<2x8x8xf32>
    %1124 = vector.extract_strided_slice %1090 {offsets = [0, 0, 16], sizes = [2, 8, 8], strides = [1, 1, 1]} : vector<2x8x64xf32> to vector<2x8x8xf32>
    "tpu.trace_start"() <{level = 10 : i32, message = "bqd,bkd->bqk"}> : () -> ()
    %cst_146 = arith.constant dense<0.000000e+00> : vector<2x8x8xf32>
    %1125 = tpu.matmul %1123, %1124, %cst_146 {dimension_numbers = #tpu.dot_dimension_numbers<[2], [2], [1], [1], [0, 0, 0, 1, 1, 1], [0], [0]>} : vector<2x8x8xf32>, vector<2x8x8xf32>, vector<2x8x8xf32> -> vector<2x8x8xf32>
    "tpu.trace_stop"() : () -> ()
    %cst_147 = arith.constant dense<0xFF800000> : vector<2x8xf32>
    %1126 = vector.multi_reduction <maximumf>, %1125, %cst_147 [2] : vector<2x8x8xf32> to vector<2x8xf32>
    %1127 = vector.shape_cast %1126 : vector<2x8xf32> to vector<2x8x1xf32>
    %1128 = vector.broadcast %1127 : vector<2x8x1xf32> to vector<2x8x8xf32>
    %1129 = arith.subf %1125, %1128 : vector<2x8x8xf32>
    %1130 = math.exp %1129 : vector<2x8x8xf32>
    %cst_148 = arith.constant dense<0.000000e+00> : vector<2x8xf32>
    %1131 = vector.multi_reduction <add>, %1130, %cst_148 [2] : vector<2x8x8xf32> to vector<2x8xf32>
    %1132 = vector.shape_cast %1131 : vector<2x8xf32> to vector<2x8x1xf32>
    %1133 = tpu.reciprocal %1132 {approx = true} : vector<2x8x1xf32> -> vector<2x8x1xf32>
    %1134 = vector.broadcast %1133 : vector<2x8x1xf32> to vector<2x8x8xf32>
    %1135 = arith.mulf %1130, %1134 : vector<2x8x8xf32>
    %1136 = vector.extract_strided_slice %1092 {offsets = [0, 0, 16], sizes = [2, 8, 8], strides = [1, 1, 1]} : vector<2x8x64xf32> to vector<2x8x8xf32>
    "tpu.trace_start"() <{level = 10 : i32, message = "bqk,bkd->bqd"}> : () -> ()
    %cst_149 = arith.constant dense<0.000000e+00> : vector<2x8x8xf32>
    %1137 = tpu.matmul %1135, %1136, %cst_149 {dimension_numbers = #tpu.dot_dimension_numbers<[2], [1], [1], [2], [0, 0, 0, 1, 1, 2], [0], [0]>} : vector<2x8x8xf32>, vector<2x8x8xf32>, vector<2x8x8xf32> -> vector<2x8x8xf32>
    "tpu.trace_stop"() : () -> ()
    %1138 = vector.extract_strided_slice %1088 {offsets = [0, 0, 24], sizes = [2, 8, 8], strides = [1, 1, 1]} : vector<2x8x64xf32> to vector<2x8x8xf32>
    %1139 = vector.extract_strided_slice %1090 {offsets = [0, 0, 24], sizes = [2, 8, 8], strides = [1, 1, 1]} : vector<2x8x64xf32> to vector<2x8x8xf32>
    "tpu.trace_start"() <{level = 10 : i32, message = "bqd,bkd->bqk"}> : () -> ()
    %cst_150 = arith.constant dense<0.000000e+00> : vector<2x8x8xf32>
    %1140 = tpu.matmul %1138, %1139, %cst_150 {dimension_numbers = #tpu.dot_dimension_numbers<[2], [2], [1], [1], [0, 0, 0, 1, 1, 1], [0], [0]>} : vector<2x8x8xf32>, vector<2x8x8xf32>, vector<2x8x8xf32> -> vector<2x8x8xf32>
    "tpu.trace_stop"() : () -> ()
    %cst_151 = arith.constant dense<0xFF800000> : vector<2x8xf32>
    %1141 = vector.multi_reduction <maximumf>, %1140, %cst_151 [2] : vector<2x8x8xf32> to vector<2x8xf32>
    %1142 = vector.shape_cast %1141 : vector<2x8xf32> to vector<2x8x1xf32>
    %1143 = vector.broadcast %1142 : vector<2x8x1xf32> to vector<2x8x8xf32>
    %1144 = arith.subf %1140, %1143 : vector<2x8x8xf32>
    %1145 = math.exp %1144 : vector<2x8x8xf32>
    %cst_152 = arith.constant dense<0.000000e+00> : vector<2x8xf32>
    %1146 = vector.multi_reduction <add>, %1145, %cst_152 [2] : vector<2x8x8xf32> to vector<2x8xf32>
    %1147 = vector.shape_cast %1146 : vector<2x8xf32> to vector<2x8x1xf32>
    %1148 = tpu.reciprocal %1147 {approx = true} : vector<2x8x1xf32> -> vector<2x8x1xf32>
    %1149 = vector.broadcast %1148 : vector<2x8x1xf32> to vector<2x8x8xf32>
    %1150 = arith.mulf %1145, %1149 : vector<2x8x8xf32>
    %1151 = vector.extract_strided_slice %1092 {offsets = [0, 0, 24], sizes = [2, 8, 8], strides = [1, 1, 1]} : vector<2x8x64xf32> to vector<2x8x8xf32>
    "tpu.trace_start"() <{level = 10 : i32, message = "bqk,bkd->bqd"}> : () -> ()
    %cst_153 = arith.constant dense<0.000000e+00> : vector<2x8x8xf32>
    %1152 = tpu.matmul %1150, %1151, %cst_153 {dimension_numbers = #tpu.dot_dimension_numbers<[2], [1], [1], [2], [0, 0, 0, 1, 1, 2], [0], [0]>} : vector<2x8x8xf32>, vector<2x8x8xf32>, vector<2x8x8xf32> -> vector<2x8x8xf32>
    "tpu.trace_stop"() : () -> ()
    %1153 = vector.extract_strided_slice %1088 {offsets = [0, 0, 32], sizes = [2, 8, 8], strides = [1, 1, 1]} : vector<2x8x64xf32> to vector<2x8x8xf32>
    %1154 = vector.extract_strided_slice %1090 {offsets = [0, 0, 32], sizes = [2, 8, 8], strides = [1, 1, 1]} : vector<2x8x64xf32> to vector<2x8x8xf32>
    "tpu.trace_start"() <{level = 10 : i32, message = "bqd,bkd->bqk"}> : () -> ()
    %cst_154 = arith.constant dense<0.000000e+00> : vector<2x8x8xf32>
    %1155 = tpu.matmul %1153, %1154, %cst_154 {dimension_numbers = #tpu.dot_dimension_numbers<[2], [2], [1], [1], [0, 0, 0, 1, 1, 1], [0], [0]>} : vector<2x8x8xf32>, vector<2x8x8xf32>, vector<2x8x8xf32> -> vector<2x8x8xf32>
    "tpu.trace_stop"() : () -> ()
    %cst_155 = arith.constant dense<0xFF800000> : vector<2x8xf32>
    %1156 = vector.multi_reduction <maximumf>, %1155, %cst_155 [2] : vector<2x8x8xf32> to vector<2x8xf32>
    %1157 = vector.shape_cast %1156 : vector<2x8xf32> to vector<2x8x1xf32>
    %1158 = vector.broadcast %1157 : vector<2x8x1xf32> to vector<2x8x8xf32>
    %1159 = arith.subf %1155, %1158 : vector<2x8x8xf32>
    %1160 = math.exp %1159 : vector<2x8x8xf32>
    %cst_156 = arith.constant dense<0.000000e+00> : vector<2x8xf32>
    %1161 = vector.multi_reduction <add>, %1160, %cst_156 [2] : vector<2x8x8xf32> to vector<2x8xf32>
    %1162 = vector.shape_cast %1161 : vector<2x8xf32> to vector<2x8x1xf32>
    %1163 = tpu.reciprocal %1162 {approx = true} : vector<2x8x1xf32> -> vector<2x8x1xf32>
    %1164 = vector.broadcast %1163 : vector<2x8x1xf32> to vector<2x8x8xf32>
    %1165 = arith.mulf %1160, %1164 : vector<2x8x8xf32>
    %1166 = vector.extract_strided_slice %1092 {offsets = [0, 0, 32], sizes = [2, 8, 8], strides = [1, 1, 1]} : vector<2x8x64xf32> to vector<2x8x8xf32>
    "tpu.trace_start"() <{level = 10 : i32, message = "bqk,bkd->bqd"}> : () -> ()
    %cst_157 = arith.constant dense<0.000000e+00> : vector<2x8x8xf32>
    %1167 = tpu.matmul %1165, %1166, %cst_157 {dimension_numbers = #tpu.dot_dimension_numbers<[2], [1], [1], [2], [0, 0, 0, 1, 1, 2], [0], [0]>} : vector<2x8x8xf32>, vector<2x8x8xf32>, vector<2x8x8xf32> -> vector<2x8x8xf32>
    "tpu.trace_stop"() : () -> ()
    %1168 = vector.extract_strided_slice %1088 {offsets = [0, 0, 40], sizes = [2, 8, 8], strides = [1, 1, 1]} : vector<2x8x64xf32> to vector<2x8x8xf32>
    %1169 = vector.extract_strided_slice %1090 {offsets = [0, 0, 40], sizes = [2, 8, 8], strides = [1, 1, 1]} : vector<2x8x64xf32> to vector<2x8x8xf32>
    "tpu.trace_start"() <{level = 10 : i32, message = "bqd,bkd->bqk"}> : () -> ()
    %cst_158 = arith.constant dense<0.000000e+00> : vector<2x8x8xf32>
    %1170 = tpu.matmul %1168, %1169, %cst_158 {dimension_numbers = #tpu.dot_dimension_numbers<[2], [2], [1], [1], [0, 0, 0, 1, 1, 1], [0], [0]>} : vector<2x8x8xf32>, vector<2x8x8xf32>, vector<2x8x8xf32> -> vector<2x8x8xf32>
    "tpu.trace_stop"() : () -> ()
    %cst_159 = arith.constant dense<0xFF800000> : vector<2x8xf32>
    %1171 = vector.multi_reduction <maximumf>, %1170, %cst_159 [2] : vector<2x8x8xf32> to vector<2x8xf32>
    %1172 = vector.shape_cast %1171 : vector<2x8xf32> to vector<2x8x1xf32>
    %1173 = vector.broadcast %1172 : vector<2x8x1xf32> to vector<2x8x8xf32>
    %1174 = arith.subf %1170, %1173 : vector<2x8x8xf32>
    %1175 = math.exp %1174 : vector<2x8x8xf32>
    %cst_160 = arith.constant dense<0.000000e+00> : vector<2x8xf32>
    %1176 = vector.multi_reduction <add>, %1175, %cst_160 [2] : vector<2x8x8xf32> to vector<2x8xf32>
    %1177 = vector.shape_cast %1176 : vector<2x8xf32> to vector<2x8x1xf32>
    %1178 = tpu.reciprocal %1177 {approx = true} : vector<2x8x1xf32> -> vector<2x8x1xf32>
    %1179 = vector.broadcast %1178 : vector<2x8x1xf32> to vector<2x8x8xf32>
    %1180 = arith.mulf %1175, %1179 : vector<2x8x8xf32>
    %1181 = vector.extract_strided_slice %1092 {offsets = [0, 0, 40], sizes = [2, 8, 8], strides = [1, 1, 1]} : vector<2x8x64xf32> to vector<2x8x8xf32>
    "tpu.trace_start"() <{level = 10 : i32, message = "bqk,bkd->bqd"}> : () -> ()
    %cst_161 = arith.constant dense<0.000000e+00> : vector<2x8x8xf32>
    %1182 = tpu.matmul %1180, %1181, %cst_161 {dimension_numbers = #tpu.dot_dimension_numbers<[2], [1], [1], [2], [0, 0, 0, 1, 1, 2], [0], [0]>} : vector<2x8x8xf32>, vector<2x8x8xf32>, vector<2x8x8xf32> -> vector<2x8x8xf32>
    "tpu.trace_stop"() : () -> ()
    %1183 = vector.extract_strided_slice %1088 {offsets = [0, 0, 48], sizes = [2, 8, 8], strides = [1, 1, 1]} : vector<2x8x64xf32> to vector<2x8x8xf32>
    %1184 = vector.extract_strided_slice %1090 {offsets = [0, 0, 48], sizes = [2, 8, 8], strides = [1, 1, 1]} : vector<2x8x64xf32> to vector<2x8x8xf32>
    "tpu.trace_start"() <{level = 10 : i32, message = "bqd,bkd->bqk"}> : () -> ()
    %cst_162 = arith.constant dense<0.000000e+00> : vector<2x8x8xf32>
    %1185 = tpu.matmul %1183, %1184, %cst_162 {dimension_numbers = #tpu.dot_dimension_numbers<[2], [2], [1], [1], [0, 0, 0, 1, 1, 1], [0], [0]>} : vector<2x8x8xf32>, vector<2x8x8xf32>, vector<2x8x8xf32> -> vector<2x8x8xf32>
    "tpu.trace_stop"() : () -> ()
    %cst_163 = arith.constant dense<0xFF800000> : vector<2x8xf32>
    %1186 = vector.multi_reduction <maximumf>, %1185, %cst_163 [2] : vector<2x8x8xf32> to vector<2x8xf32>
    %1187 = vector.shape_cast %1186 : vector<2x8xf32> to vector<2x8x1xf32>
    %1188 = vector.broadcast %1187 : vector<2x8x1xf32> to vector<2x8x8xf32>
    %1189 = arith.subf %1185, %1188 : vector<2x8x8xf32>
    %1190 = math.exp %1189 : vector<2x8x8xf32>
    %cst_164 = arith.constant dense<0.000000e+00> : vector<2x8xf32>
    %1191 = vector.multi_reduction <add>, %1190, %cst_164 [2] : vector<2x8x8xf32> to vector<2x8xf32>
    %1192 = vector.shape_cast %1191 : vector<2x8xf32> to vector<2x8x1xf32>
    %1193 = tpu.reciprocal %1192 {approx = true} : vector<2x8x1xf32> -> vector<2x8x1xf32>
    %1194 = vector.broadcast %1193 : vector<2x8x1xf32> to vector<2x8x8xf32>
    %1195 = arith.mulf %1190, %1194 : vector<2x8x8xf32>
    %1196 = vector.extract_strided_slice %1092 {offsets = [0, 0, 48], sizes = [2, 8, 8], strides = [1, 1, 1]} : vector<2x8x64xf32> to vector<2x8x8xf32>
    "tpu.trace_start"() <{level = 10 : i32, message = "bqk,bkd->bqd"}> : () -> ()
    %cst_165 = arith.constant dense<0.000000e+00> : vector<2x8x8xf32>
    %1197 = tpu.matmul %1195, %1196, %cst_165 {dimension_numbers = #tpu.dot_dimension_numbers<[2], [1], [1], [2], [0, 0, 0, 1, 1, 2], [0], [0]>} : vector<2x8x8xf32>, vector<2x8x8xf32>, vector<2x8x8xf32> -> vector<2x8x8xf32>
    "tpu.trace_stop"() : () -> ()
    %1198 = vector.extract_strided_slice %1088 {offsets = [0, 0, 56], sizes = [2, 8, 8], strides = [1, 1, 1]} : vector<2x8x64xf32> to vector<2x8x8xf32>
    %1199 = vector.extract_strided_slice %1090 {offsets = [0, 0, 56], sizes = [2, 8, 8], strides = [1, 1, 1]} : vector<2x8x64xf32> to vector<2x8x8xf32>
    "tpu.trace_start"() <{level = 10 : i32, message = "bqd,bkd->bqk"}> : () -> ()
    %cst_166 = arith.constant dense<0.000000e+00> : vector<2x8x8xf32>
    %1200 = tpu.matmul %1198, %1199, %cst_166 {dimension_numbers = #tpu.dot_dimension_numbers<[2], [2], [1], [1], [0, 0, 0, 1, 1, 1], [0], [0]>} : vector<2x8x8xf32>, vector<2x8x8xf32>, vector<2x8x8xf32> -> vector<2x8x8xf32>
    "tpu.trace_stop"() : () -> ()
    %cst_167 = arith.constant dense<0xFF800000> : vector<2x8xf32>
    %1201 = vector.multi_reduction <maximumf>, %1200, %cst_167 [2] : vector<2x8x8xf32> to vector<2x8xf32>
    %1202 = vector.shape_cast %1201 : vector<2x8xf32> to vector<2x8x1xf32>
    %1203 = vector.broadcast %1202 : vector<2x8x1xf32> to vector<2x8x8xf32>
    %1204 = arith.subf %1200, %1203 : vector<2x8x8xf32>
    %1205 = math.exp %1204 : vector<2x8x8xf32>
    %cst_168 = arith.constant dense<0.000000e+00> : vector<2x8xf32>
    %1206 = vector.multi_reduction <add>, %1205, %cst_168 [2] : vector<2x8x8xf32> to vector<2x8xf32>
    %1207 = vector.shape_cast %1206 : vector<2x8xf32> to vector<2x8x1xf32>
    %1208 = tpu.reciprocal %1207 {approx = true} : vector<2x8x1xf32> -> vector<2x8x1xf32>
    %1209 = vector.broadcast %1208 : vector<2x8x1xf32> to vector<2x8x8xf32>
    %1210 = arith.mulf %1205, %1209 : vector<2x8x8xf32>
    %1211 = vector.extract_strided_slice %1092 {offsets = [0, 0, 56], sizes = [2, 8, 8], strides = [1, 1, 1]} : vector<2x8x64xf32> to vector<2x8x8xf32>
    "tpu.trace_start"() <{level = 10 : i32, message = "bqk,bkd->bqd"}> : () -> ()
    %cst_169 = arith.constant dense<0.000000e+00> : vector<2x8x8xf32>
    %1212 = tpu.matmul %1210, %1211, %cst_169 {dimension_numbers = #tpu.dot_dimension_numbers<[2], [1], [1], [2], [0, 0, 0, 1, 1, 2], [0], [0]>} : vector<2x8x8xf32>, vector<2x8x8xf32>, vector<2x8x8xf32> -> vector<2x8x8xf32>
    "tpu.trace_stop"() : () -> ()
    %1213 = tpu.concatenate %1107, %1122, %1137, %1152, %1167, %1182, %1197, %1212 in 2 : vector<2x8x8xf32>, vector<2x8x8xf32>, vector<2x8x8xf32>, vector<2x8x8xf32>, vector<2x8x8xf32>, vector<2x8x8xf32>, vector<2x8x8xf32>, vector<2x8x8xf32> -> vector<2x8x64xf32>
    %1214 = vector.shape_cast %1213 : vector<2x8x64xf32> to vector<16x64xf32>
    %c0_170 = arith.constant 0 : index
    %c0_171 = arith.constant 0 : index
    %1215 = vector.load %arg12[%c0_170, %c0_171] : memref<64x64xf32, #tpu.memory_space<vmem>>, vector<64x64xf32>
    %cst_172 = arith.constant dense<0.000000e+00> : vector<16x64xf32>
    %1216 = tpu.matmul %1214, %1215, %cst_172 {dimension_numbers = #tpu.dot_dimension_numbers<[1], [0], [0], [1], [0, 0, 1, 1], [], []>} : vector<16x64xf32>, vector<64x64xf32>, vector<16x64xf32> -> vector<16x64xf32>
    %c0_173 = arith.constant 0 : index
    %c0_174 = arith.constant 0 : index
    %1217 = vector.load %arg13[%c0_173, %c0_174] : memref<1x64xf32, #tpu.memory_space<vmem>>, vector<1x64xf32>
    %1218 = vector.broadcast %1217 : vector<1x64xf32> to vector<16x64xf32>
    %1219 = arith.addf %1216, %1218 : vector<16x64xf32>
    %1220 = vector.shape_cast %1219 : vector<16x64xf32> to vector<2x8x64xf32>
    %1221 = arith.addf %1080, %1220 : vector<2x8x64xf32>
    %1222 = vector.extract_strided_slice %1221 {offsets = [0, 7, 0], sizes = [2, 1, 64], strides = [1, 1, 1]} : vector<2x8x64xf32> to vector<2x1x64xf32>
    %1223 = vector.shape_cast %1222 : vector<2x1x64xf32> to vector<2x64xf32>
    %c0_175 = arith.constant 0 : index
    %c0_176 = arith.constant 0 : index
    %1224 = vector.load %arg14[%c0_175, %c0_176] : memref<64x256xf32, #tpu.memory_space<vmem>>, vector<64x256xf32>
    %cst_177 = arith.constant dense<0.000000e+00> : vector<2x256xf32>
    %1225 = tpu.matmul %1223, %1224, %cst_177 {dimension_numbers = #tpu.dot_dimension_numbers<[1], [0], [0], [1], [0, 0, 1, 1], [], []>} : vector<2x64xf32>, vector<64x256xf32>, vector<2x256xf32> -> vector<2x256xf32>
    %c0_178 = arith.constant 0 : index
    %c0_179 = arith.constant 0 : index
    %1226 = vector.load %arg15[%c0_178, %c0_179] : memref<1x256xf32, #tpu.memory_space<vmem>>, vector<1x256xf32>
    %1227 = vector.broadcast %1226 : vector<1x256xf32> to vector<2x256xf32>
    %1228 = arith.addf %1225, %1227 : vector<2x256xf32>
    %1229 = arith.negf %1228 : vector<2x256xf32>
    %1230 = math.exp %1229 : vector<2x256xf32>
    %cst_180 = arith.constant 1.000000e+00 : f32
    %1231 = vector.broadcast %cst_180 : f32 to vector<2x256xf32>
    %1232 = arith.addf %1231, %1230 : vector<2x256xf32>
    %1233 = arith.divf %1231, %1232 : vector<2x256xf32>
    %1234 = arith.mulf %1228, %1233 : vector<2x256xf32>
    %c0_181 = arith.constant 0 : index
    %c0_182 = arith.constant 0 : index
    %1235 = vector.load %arg16[%c0_181, %c0_182] : memref<256x64xf32, #tpu.memory_space<vmem>>, vector<256x64xf32>
    %cst_183 = arith.constant dense<0.000000e+00> : vector<2x64xf32>
    %1236 = tpu.matmul %1234, %1235, %cst_183 {dimension_numbers = #tpu.dot_dimension_numbers<[1], [0], [0], [1], [0, 0, 1, 1], [], []>} : vector<2x256xf32>, vector<256x64xf32>, vector<2x64xf32> -> vector<2x64xf32>
    %c0_184 = arith.constant 0 : index
    %c0_185 = arith.constant 0 : index
    %1237 = vector.load %arg17[%c0_184, %c0_185] : memref<1x64xf32, #tpu.memory_space<vmem>>, vector<1x64xf32>
    %1238 = vector.broadcast %1237 : vector<1x64xf32> to vector<2x64xf32>
    %1239 = arith.addf %1236, %1238 : vector<2x64xf32>
    %cst_186 = arith.constant dense<0.000000e+00> : vector<2xf32>
    %1240 = vector.multi_reduction <add>, %1239, %cst_186 [1] : vector<2x64xf32> to vector<2xf32>
    %1241 = vector.shape_cast %1240 : vector<2xf32> to vector<2x1xf32>
    %cst_187 = arith.constant 6.400000e+01 : f32
    %1242 = vector.broadcast %cst_187 : f32 to vector<2x1xf32>
    %1243 = arith.divf %1241, %1242 : vector<2x1xf32>
    %1244 = vector.broadcast %1243 : vector<2x1xf32> to vector<2x64xf32>
    %1245 = arith.subf %1239, %1244 : vector<2x64xf32>
    %1246 = arith.mulf %1245, %1245 : vector<2x64xf32>
    %cst_188 = arith.constant dense<0.000000e+00> : vector<2xf32>
    %1247 = vector.multi_reduction <add>, %1246, %cst_188 [1] : vector<2x64xf32> to vector<2xf32>
    %1248 = vector.shape_cast %1247 : vector<2xf32> to vector<2x1xf32>
    %cst_189 = arith.constant 6.400000e+01 : f32
    %1249 = vector.broadcast %cst_189 : f32 to vector<2x1xf32>
    %1250 = arith.divf %1248, %1249 : vector<2x1xf32>
    %1251 = vector.broadcast %1243 : vector<2x1xf32> to vector<2x64xf32>
    %1252 = arith.subf %1239, %1251 : vector<2x64xf32>
    %cst_190 = arith.constant 9.99999974E-6 : f32
    %1253 = vector.broadcast %cst_190 : f32 to vector<2x1xf32>
    %1254 = arith.addf %1250, %1253 : vector<2x1xf32>
    %1255 = math.rsqrt %1254 : vector<2x1xf32>
    %1256 = vector.broadcast %1255 : vector<2x1xf32> to vector<2x64xf32>
    %1257 = arith.mulf %1252, %1256 : vector<2x64xf32>
    %c0_191 = arith.constant 0 : index
    %c0_192 = arith.constant 0 : index
    %1258 = vector.load %arg18[%c0_191, %c0_192] : memref<1x64xf32, #tpu.memory_space<vmem>>, vector<1x64xf32>
    %1259 = vector.broadcast %1258 : vector<1x64xf32> to vector<2x64xf32>
    %1260 = arith.mulf %1257, %1259 : vector<2x64xf32>
    %c0_193 = arith.constant 0 : index
    %c0_194 = arith.constant 0 : index
    %1261 = vector.load %arg19[%c0_193, %c0_194] : memref<1x64xf32, #tpu.memory_space<vmem>>, vector<1x64xf32>
    %1262 = vector.broadcast %1261 : vector<1x64xf32> to vector<2x64xf32>
    %1263 = arith.addf %1260, %1262 : vector<2x64xf32>
    %1264 = arith.negf %1263 : vector<2x64xf32>
    %1265 = math.exp %1264 : vector<2x64xf32>
    %cst_195 = arith.constant 1.000000e+00 : f32
    %1266 = vector.broadcast %cst_195 : f32 to vector<2x64xf32>
    %1267 = arith.addf %1266, %1265 : vector<2x64xf32>
    %1268 = arith.divf %1266, %1267 : vector<2x64xf32>
    %1269 = arith.mulf %1263, %1268 : vector<2x64xf32>
    %c0_196 = arith.constant 0 : index
    %c0_197 = arith.constant 0 : index
    %1270 = vector.load %arg20[%c0_196, %c0_197] : memref<64x1xf32, #tpu.memory_space<vmem>>, vector<64x1xf32>
    %cst_198 = arith.constant dense<0.000000e+00> : vector<2x1xf32>
    %1271 = tpu.matmul %1269, %1270, %cst_198 {dimension_numbers = #tpu.dot_dimension_numbers<[1], [0], [0], [1], [0, 0, 1, 1], [], []>} : vector<2x64xf32>, vector<64x1xf32>, vector<2x1xf32> -> vector<2x1xf32>
    %c0_199 = arith.constant 0 : index
    %c0_200 = arith.constant 0 : index
    %1272 = vector.load %arg21[%c0_199, %c0_200] : memref<1x1xf32, #tpu.memory_space<vmem>>, vector<1x1xf32>
    %1273 = vector.broadcast %1272 : vector<1x1xf32> to vector<2x1xf32>
    %1274 = arith.addf %1271, %1273 : vector<2x1xf32>
    %1275 = arith.negf %1274 : vector<2x1xf32>
    %1276 = math.exp %1275 : vector<2x1xf32>
    %cst_201 = arith.constant 1.000000e+00 : f32
    %1277 = vector.broadcast %cst_201 : f32 to vector<2x1xf32>
    %1278 = arith.addf %1277, %1276 : vector<2x1xf32>
    %1279 = arith.divf %1277, %1278 : vector<2x1xf32>
    %1280 = vector.shape_cast %1279 : vector<2x1xf32> to vector<1x2x1xf32>
    %c0_202 = arith.constant 0 : index
    %c0_203 = arith.constant 0 : index
    %c0_204 = arith.constant 0 : index
    %1281 = vector.load %arg22[%c0_202, %c0_203, %c0_204] : memref<1x2x1xf32, #tpu.memory_space<vmem>>, vector<1x2x1xf32>
    tpu.vector_store %arg22[%c0_202, %c0_203, %c0_204], %1280 {strides = array<i32>} : memref<1x2x1xf32, #tpu.memory_space<vmem>>, vector<1x2x1xf32>,
    return
  }
  func.func @transform_0(%arg0: i32) -> (i32, i32, i32) {
    %c0_i32 = arith.constant 0 : i32
    %c0_i32_0 = arith.constant 0 : i32
    %c0_i32_1 = arith.constant 0 : i32
    return %arg0, %c0_i32, %c0_i32_0 : i32, i32, i32
  }
  func.func @transform_1(%arg0: i32) -> (i32, i32) {
    %c0_i32 = arith.constant 0 : i32
    %c0_i32_0 = arith.constant 0 : i32
    %c0_i32_1 = arith.constant 0 : i32
    return %c0_i32, %c0_i32_0 : i32, i32
  }
  func.func @transform_2(%arg0: i32) -> (i32, i32) {
    %c0_i32 = arith.constant 0 : i32
    %c0_i32_0 = arith.constant 0 : i32
    %c0_i32_1 = arith.constant 0 : i32
    return %c0_i32, %c0_i32_0 : i32, i32
  }
  func.func @transform_3(%arg0: i32) -> (i32, i32) {
    %c0_i32 = arith.constant 0 : i32
    %c0_i32_0 = arith.constant 0 : i32
    %c0_i32_1 = arith.constant 0 : i32
    return %c0_i32, %c0_i32_0 : i32, i32
  }
  func.func @transform_4(%arg0: i32) -> (i32, i32) {
    %c0_i32 = arith.constant 0 : i32
    %c0_i32_0 = arith.constant 0 : i32
    %c0_i32_1 = arith.constant 0 : i32
    return %c0_i32, %c0_i32_0 : i32, i32
  }
  func.func @transform_5(%arg0: i32) -> (i32, i32) {
    %c0_i32 = arith.constant 0 : i32
    %c0_i32_0 = arith.constant 0 : i32
    %c0_i32_1 = arith.constant 0 : i32
    return %c0_i32, %c0_i32_0 : i32, i32
  }
  func.func @transform_6(%arg0: i32) -> (i32, i32) {
    %c0_i32 = arith.constant 0 : i32
    %c0_i32_0 = arith.constant 0 : i32
    %c0_i32_1 = arith.constant 0 : i32
    return %c0_i32, %c0_i32_0 : i32, i32
  }
  func.func @transform_7(%arg0: i32) -> (i32, i32) {
    %c0_i32 = arith.constant 0 : i32
    %c0_i32_0 = arith.constant 0 : i32
    %c0_i32_1 = arith.constant 0 : i32
    return %c0_i32, %c0_i32_0 : i32, i32
  }
  func.func @transform_8(%arg0: i32) -> (i32, i32) {
    %c0_i32 = arith.constant 0 : i32
    %c0_i32_0 = arith.constant 0 : i32
    %c0_i32_1 = arith.constant 0 : i32
    return %c0_i32, %c0_i32_0 : i32, i32
  }
  func.func @transform_9(%arg0: i32) -> (i32, i32) {
    %c0_i32 = arith.constant 0 : i32
    %c0_i32_0 = arith.constant 0 : i32
    %c0_i32_1 = arith.constant 0 : i32
    return %c0_i32, %c0_i32_0 : i32, i32
  }
  func.func @transform_10(%arg0: i32) -> (i32, i32) {
    %c0_i32 = arith.constant 0 : i32
    %c0_i32_0 = arith.constant 0 : i32
    %c0_i32_1 = arith.constant 0 : i32
    return %c0_i32, %c0_i32_0 : i32, i32
  }
  func.func @transform_11(%arg0: i32) -> (i32, i32) {
    %c0_i32 = arith.constant 0 : i32
    %c0_i32_0 = arith.constant 0 : i32
    %c0_i32_1 = arith.constant 0 : i32
    return %c0_i32, %c0_i32_0 : i32, i32
  }
  func.func @transform_12(%arg0: i32) -> (i32, i32) {
    %c0_i32 = arith.constant 0 : i32
    %c0_i32_0 = arith.constant 0 : i32
    %c0_i32_1 = arith.constant 0 : i32
    return %c0_i32, %c0_i32_0 : i32, i32
  }
  func.func @transform_13(%arg0: i32) -> (i32, i32) {
    %c0_i32 = arith.constant 0 : i32
    %c0_i32_0 = arith.constant 0 : i32
    %c0_i32_1 = arith.constant 0 : i32
    return %c0_i32, %c0_i32_0 : i32, i32
  }
  func.func @transform_14(%arg0: i32) -> (i32, i32) {
    %c0_i32 = arith.constant 0 : i32
    %c0_i32_0 = arith.constant 0 : i32
    %c0_i32_1 = arith.constant 0 : i32
    return %c0_i32, %c0_i32_0 : i32, i32
  }
  func.func @transform_15(%arg0: i32) -> (i32, i32) {
    %c0_i32 = arith.constant 0 : i32
    %c0_i32_0 = arith.constant 0 : i32
    %c0_i32_1 = arith.constant 0 : i32
    return %c0_i32, %c0_i32_0 : i32, i32
  }
  func.func @transform_16(%arg0: i32) -> (i32, i32) {
    %c0_i32 = arith.constant 0 : i32
    %c0_i32_0 = arith.constant 0 : i32
    %c0_i32_1 = arith.constant 0 : i32
    return %c0_i32, %c0_i32_0 : i32, i32
  }
  func.func @transform_17(%arg0: i32) -> (i32, i32) {
    %c0_i32 = arith.constant 0 : i32
    %c0_i32_0 = arith.constant 0 : i32
    %c0_i32_1 = arith.constant 0 : i32
    return %c0_i32, %c0_i32_0 : i32, i32
  }
  func.func @transform_18(%arg0: i32) -> (i32, i32) {
    %c0_i32 = arith.constant 0 : i32
    %c0_i32_0 = arith.constant 0 : i32
    %c0_i32_1 = arith.constant 0 : i32
    return %c0_i32, %c0_i32_0 : i32, i32
  }
  func.func @transform_19(%arg0: i32) -> (i32, i32) {
    %c0_i32 = arith.constant 0 : i32
    %c0_i32_0 = arith.constant 0 : i32
    %c0_i32_1 = arith.constant 0 : i32
    return %c0_i32, %c0_i32_0 : i32, i32
  }
  func.func @transform_20(%arg0: i32) -> (i32, i32) {
    %c0_i32 = arith.constant 0 : i32
    %c0_i32_0 = arith.constant 0 : i32
    %c0_i32_1 = arith.constant 0 : i32
    return %c0_i32, %c0_i32_0 : i32, i32
  }
  func.func @transform_21(%arg0: i32) -> (i32, i32, i32) {
    %c0_i32 = arith.constant 0 : i32
    %c0_i32_0 = arith.constant 0 : i32
    %c0_i32_1 = arith.constant 0 : i32
    return %arg0, %c0_i32, %c0_i32_0 : i32, i32, i32
  }
}

</mosaic_0001>

<llo_original>
// kernel: forward.1
$region0: #{forward.1}
  #allocation0 [shape = 'u32[]', space=smem, size = 0x4, offset = 0x4, fixed_abs, tag = 'smem constant byte address 0x4 - core index']
  #allocation1 [shape = 'u32[72,128]{1,0:T(1,128)}', space=vmem, size = 0x9000, scoped, tag = 'internal scratch']
  #allocation2 [shape = 'f32[1,1]{1,0:T(1,128)S(1)}', space=vmem, size = 0x200, scoped, tag = 'scoped memory for forward.1']
  %s0 = inlined_call_operand.hbm [shape: f32[4,8,16], index: 0, kind: input, shape index: {}]
  %s1 = inlined_call_operand.hbm [shape: f32[16,192], index: 1, kind: input, shape index: {}]
  %s2 = inlined_call_operand.hbm [shape: f32[1,192], index: 2, kind: input, shape index: {}]
  %s3 = inlined_call_operand.hbm [shape: f32[64,192], index: 3, kind: input, shape index: {}]
  %s4 = inlined_call_operand.hbm [shape: f32[1,192], index: 4, kind: input, shape index: {}]
  %s5 = inlined_call_operand.hbm [shape: f32[64,192], index: 5, kind: input, shape index: {}]
  %s6 = inlined_call_operand.hbm [shape: f32[1,192], index: 6, kind: input, shape index: {}]
  %s7 = inlined_call_operand.hbm [shape: f32[64,192], index: 7, kind: input, shape index: {}]
  %s8 = inlined_call_operand.vmem [shape: f32[1,192], index: 8, kind: input, shape index: {}]
  %s9 = inlined_call_operand.hbm [shape: f32[64,192], index: 9, kind: input, shape index: {}]
  %s10 = inlined_call_operand.vmem [shape: f32[1,192], index: 10, kind: input, shape index: {}]
  %s11 = inlined_call_operand.hbm [shape: f32[64,64], index: 11, kind: input, shape index: {}]
  %s12 = inlined_call_operand.vmem [shape: f32[1,64], index: 12, kind: input, shape index: {}]
  %s13 = inlined_call_operand.hbm [shape: f32[64,256], index: 13, kind: input, shape index: {}]
  %s14 = inlined_call_operand.vmem [shape: f32[1,256], index: 14, kind: input, shape index: {}]
  %s15 = inlined_call_operand.hbm [shape: f32[256,64], index: 15, kind: input, shape index: {}]
  %s16 = inlined_call_operand.vmem [shape: f32[1,64], index: 16, kind: input, shape index: {}]
  %s17 = inlined_call_operand.vmem [shape: f32[1,64], index: 17, kind: input, shape index: {}]
  %s18 = inlined_call_operand.vmem [shape: f32[1,64], index: 18, kind: input, shape index: {}]
  %s19 = inlined_call_operand.hbm [shape: f32[64,1], index: 19, kind: input, shape index: {}]
  %s20 = inlined_call_operand.<no memory space> [shape: f32[1,1], index: 20, kind: input, shape index: {}]
  %s21 = inlined_call_operand.vmem [shape: f32[2,2,1], index: 21, kind: output, shape index: {}]
  %s22 = sld [smem:[#allocation0]]
  $region169: #{forward.1} parent=0
    _
  %s24 = ssub.s32 1, %s22
  %s25 = scalar_select 0, %s24, %s22
  %v26 = vstv %s20
  %27 = vst [vmem:[#allocation2] sm:$0x1] %v26
  $region1: #{forward.1} parent=0
    #allocation3 [shape = 'u8[16384]{0}', space=vmem, size = 0x4000, scoped, tag = 'input window, operand 0']
    #allocation4 [shape = 's32[2]{0}', space=sflag, size = 0x8, scoped, tag = 'scoped memory for forward.1']
    #allocation5 [shape = 'u8[16384]{0}', space=vmem, size = 0x4000, scoped, tag = 'input window, operand 1, single buffered']
    #allocation6 [shape = 's32[1]{0}', space=sflag, size = 0x4, scoped, tag = 'scoped memory for forward.1']
    #allocation7 [shape = 'u8[1024]{0}', space=vmem, size = 0x400, scoped, tag = 'input window, operand 2, single buffered']
    #allocation8 [shape = 'u8[65536]{0}', space=vmem, size = 0x10000, scoped, tag = 'input window, operand 3, single buffered']
    #allocation9 [shape = 's32[1]{0}', space=sflag, size = 0x4, scoped, tag = 'scoped memory for forward.1']
    #allocation10 [shape = 'u8[1024]{0}', space=vmem, size = 0x400, scoped, tag = 'input window, operand 4, single buffered']
    #allocation11 [shape = 'u8[65536]{0}', space=vmem, size = 0x10000, scoped, tag = 'input window, operand 5, single buffered']
    #allocation12 [shape = 's32[1]{0}', space=sflag, size = 0x4, scoped, tag = 'scoped memory for forward.1']
    #allocation13 [shape = 'u8[1024]{0}', space=vmem, size = 0x400, scoped, tag = 'input window, operand 6, single buffered']
    #allocation14 [shape = 'u8[65536]{0}', space=vmem, size = 0x10000, scoped, tag = 'input window, operand 7, single buffered']
    #allocation15 [shape = 's32[1]{0}', space=sflag, size = 0x4, scoped, tag = 'scoped memory for forward.1']
    #allocation16 [shape = 'u8[65536]{0}', space=vmem, size = 0x10000, scoped, tag = 'input window, operand 9, single buffered']
    #allocation17 [shape = 'u8[32768]{0}', space=vmem, size = 0x8000, scoped, tag = 'input window, operand 11, single buffered']
    #allocation18 [shape = 's32[1]{0}', space=sflag, size = 0x4, scoped, tag = 'scoped memory for forward.1']
    #allocation19 [shape = 'u8[65536]{0}', space=vmem, size = 0x10000, scoped, tag = 'input window, operand 13, single buffered']
    #allocation20 [shape = 'u8[131072]{0}', space=vmem, size = 0x20000, scoped, tag = 'input window, operand 15, single buffered']
    #allocation21 [shape = 's32[1]{0}', space=sflag, size = 0x4, scoped, tag = 'scoped memory for forward.1']
    #allocation22 [shape = 'u8[32768]{0}', space=vmem, size = 0x8000, scoped, tag = 'input window, operand 19, single buffered']
    %28 = vsyncpa [#allocation4], 0
    %s29 = scalar_lea.sflag [#allocation4], 1
    %30 = vsyncpa %s29, 0
    %31 = vsyncpa [#allocation6], 0
    %32 = vsyncpa [#allocation9], 0
    %33 = vsyncpa [#allocation12], 0
    %34 = vsyncpa [#allocation15], 0
    %35 = vsyncpa [#allocation18], 0
    %36 = vsyncpa [#allocation21], 0
    loop: start=0, step=1, limit=4
    $region2: #{forward.1} parent=1 // loop_pre_header
      _
    $region3: #{forward.1} parent=1 // loop_header
      %s38 = sphi 0, %s42
      %p39 = scmp.ge.s32.totalorder %s38, 4
      %s48 = sphi 0, %s50
      %s51 = sphi 0, %s48
      %s52 = sphi 0, %s51
      %s68 = sphi 0, %s52
      %s72 = sphi 0, %s72
      %s74 = sphi 0, %s72
      %s75 = sphi 0, %s74
      %s89 = sphi 0, %s75
      %s93 = sphi 0, %s93
      %s95 = sphi 0, %s93
      %s96 = sphi 0, %s95
      %s110 = sphi 0, %s96
      %s114 = sphi 0, %s114
      %s116 = sphi 0, %s114
      %s117 = sphi 0, %s116
      %s131 = sphi 0, %s117
      %s135 = sphi 0, %s135
      %s137 = sphi 0, %s135
      %s138 = sphi 0, %s137
      %s152 = sphi 0, %s138
      %s156 = sphi 0, %s156
      %s158 = sphi 0, %s156
      %s159 = sphi 0, %s158
      %s173 = sphi 0, %s159
      %s177 = sphi 0, %s177
      %s179 = sphi 0, %s177
      %s180 = sphi 0, %s179
      %s194 = sphi 0, %s180
      %s198 = sphi 0, %s198
      %s200 = sphi 0, %s198
      %s201 = sphi 0, %s200
      %s215 = sphi 0, %s201
      %s219 = sphi 0, %s219
      %s221 = sphi 0, %s219
      %s222 = sphi 0, %s221
      %s236 = sphi 0, %s222
      %s240 = sphi 0, %s240
      %s242 = sphi 0, %s240
      %s243 = sphi 0, %s242
      %s257 = sphi 0, %s243
      %s261 = sphi 0, %s261
      %s263 = sphi 0, %s261
      %s264 = sphi 0, %s263
      %s278 = sphi 0, %s264
      %s282 = sphi 0, %s282
      %s284 = sphi 0, %s282
      %s285 = sphi 0, %s284
      %s299 = sphi 0, %s285
      %s303 = sphi 0, %s303
      %s305 = sphi 0, %s303
      %s306 = sphi 0, %s305
      %s320 = sphi 0, %s306
      %s324 = sphi 0, %s324
      %s326 = sphi 0, %s324
      %s327 = sphi 0, %s326
      %s341 = sphi 0, %s327
      %s345 = sphi 0, %s345
      %s347 = sphi 0, %s345
      %s348 = sphi 0, %s347
      %s362 = sphi 0, %s348
      %s366 = sphi 0, %s366
      %s368 = sphi 0, %s366
      %s369 = sphi 0, %s368
      %s383 = sphi 0, %s369
      %s387 = sphi 0, %s387
      %s389 = sphi 0, %s387
      %s390 = sphi 0, %s389
      %s404 = sphi 0, %s390
      %s408 = sphi 0, %s408
      %s410 = sphi 0, %s408
      %s411 = sphi 0, %s410
      %s425 = sphi 0, %s411
      %s429 = sphi 0, %s429
      %s431 = sphi 0, %s429
      %s432 = sphi 0, %s431
      %s446 = sphi 0, %s432
      %s450 = sphi 0, %s450
      %s452 = sphi 0, %s450
      %s453 = sphi 0, %s452
      %s467 = sphi 0, %s453
      %s471 = sphi 0, %s471
      %s473 = sphi 0, %s471
      %s474 = sphi 0, %s473
      %s488 = sphi 0, %s474
      %s494 = sphi 0, %s496
      %s497 = sphi 0, %s494
      %s498 = sphi 0, %s497
      %s514 = sphi 0, %s498
    $region4: #{forward.1} parent=1 // loop_header_branch
      %41 = sbr.rel (%p39) target = $region8
    $region5: #{forward.1} parent=1 // loop_body
      %s43 = ssub.s32 %s38, 1
      %s44 = ssub.s32 %s38, 2
      %s45 = sadd.s32 %s38, 1
      %s46 = ssub.s32 %s38, %s45
      %p47 = scmp.eq.s32.totalorder %s46, 0
      %s49 = sadd.s32 %s48, 1
      %s50 = scalar_select %p47, %s48, %s49
      %p53 = pneg %p47
      %p54 = scmp.eq.s32.totalorder %s38, 1
      %p55 = por %p53, %p54
      %p56 = scmp.ne.s32.totalorder %s48, %s51
      %p57 = scmp.eq.s32.totalorder %s38, 0
      %p58 = por %p56, %p57
      %p59 = scmp.ne.s32.totalorder %s48, %s51
      %p60 = scmp.eq.s32.totalorder %s43, 1
      %p61 = por %p59, %p60
      %p62 = scmp.ne.s32.totalorder %s51, %s52
      %p63 = scmp.eq.s32.totalorder %s43, 0
      %p64 = por %p62, %p63
      %p65 = scmp.ne.s32.totalorder %s51, %s52
      %p66 = scmp.eq.s32.totalorder %s44, 1
      %p67 = por %p65, %p66
      %p69 = scmp.ne.s32.totalorder %s52, %s68
      %p70 = scmp.eq.s32.totalorder %s44, 0
      %p71 = por %p69, %p70
      %s73 = sadd.s32 %s72, 1
      %p76 = scmp.eq.s32.totalorder %s38, 1
      %p77 = scmp.ne.s32.totalorder %s72, %s74
      %p78 = scmp.eq.s32.totalorder %s38, 0
      %p79 = por %p77, %p78
      %p80 = scmp.ne.s32.totalorder %s72, %s74
      %p81 = scmp.eq.s32.totalorder %s43, 1
      %p82 = por %p80, %p81
      %p83 = scmp.ne.s32.totalorder %s74, %s75
      %p84 = scmp.eq.s32.totalorder %s43, 0
      %p85 = por %p83, %p84
      %p86 = scmp.ne.s32.totalorder %s74, %s75
      %p87 = scmp.eq.s32.totalorder %s44, 1
      %p88 = por %p86, %p87
      %p90 = scmp.ne.s32.totalorder %s75, %s89
      %p91 = scmp.eq.s32.totalorder %s44, 0
      %p92 = por %p90, %p91
      %s94 = sadd.s32 %s93, 1
      %p97 = scmp.eq.s32.totalorder %s38, 1
      %p98 = scmp.ne.s32.totalorder %s93, %s95
      %p99 = scmp.eq.s32.totalorder %s38, 0
      %p100 = por %p98, %p99
      %p101 = scmp.ne.s32.totalorder %s93, %s95
      %p102 = scmp.eq.s32.totalorder %s43, 1
      %p103 = por %p101, %p102
      %p104 = scmp.ne.s32.totalorder %s95, %s96
      %p105 = scmp.eq.s32.totalorder %s43, 0
      %p106 = por %p104, %p105
      %p107 = scmp.ne.s32.totalorder %s95, %s96
      %p108 = scmp.eq.s32.totalorder %s44, 1
      %p109 = por %p107, %p108
      %p111 = scmp.ne.s32.totalorder %s96, %s110
      %p112 = scmp.eq.s32.totalorder %s44, 0
      %p113 = por %p111, %p112
      %s115 = sadd.s32 %s114, 1
      %p118 = scmp.eq.s32.totalorder %s38, 1
      %p119 = scmp.ne.s32.totalorder %s114, %s116
      %p120 = scmp.eq.s32.totalorder %s38, 0
      %p121 = por %p119, %p120
      %p122 = scmp.ne.s32.totalorder %s114, %s116
      %p123 = scmp.eq.s32.totalorder %s43, 1
      %p124 = por %p122, %p123
      %p125 = scmp.ne.s32.totalorder %s116, %s117
      %p126 = scmp.eq.s32.totalorder %s43, 0
      %p127 = por %p125, %p126
      %p128 = scmp.ne.s32.totalorder %s116, %s117
      %p129 = scmp.eq.s32.totalorder %s44, 1
      %p130 = por %p128, %p129
      %p132 = scmp.ne.s32.totalorder %s117, %s131
      %p133 = scmp.eq.s32.totalorder %s44, 0
      %p134 = por %p132, %p133
      %s136 = sadd.s32 %s135, 1
      %p139 = scmp.eq.s32.totalorder %s38, 1
      %p140 = scmp.ne.s32.totalorder %s135, %s137
      %p141 = scmp.eq.s32.totalorder %s38, 0
      %p142 = por %p140, %p141
      %p143 = scmp.ne.s32.totalorder %s135, %s137
      %p144 = scmp.eq.s32.totalorder %s43, 1
      %p145 = por %p143, %p144
      %p146 = scmp.ne.s32.totalorder %s137, %s138
      %p147 = scmp.eq.s32.totalorder %s43, 0
      %p148 = por %p146, %p147
      %p149 = scmp.ne.s32.totalorder %s137, %s138
      %p150 = scmp.eq.s32.totalorder %s44, 1
      %p151 = por %p149, %p150
      %p153 = scmp.ne.s32.totalorder %s138, %s152
      %p154 = scmp.eq.s32.totalorder %s44, 0
      %p155 = por %p153, %p154
      %s157 = sadd.s32 %s156, 1
      %p160 = scmp.eq.s32.totalorder %s38, 1
      %p161 = scmp.ne.s32.totalorder %s156, %s158
      %p162 = scmp.eq.s32.totalorder %s38, 0
      %p163 = por %p161, %p162
      %p164 = scmp.ne.s32.totalorder %s156, %s158
      %p165 = scmp.eq.s32.totalorder %s43, 1
      %p166 = por %p164, %p165
      %p167 = scmp.ne.s32.totalorder %s158, %s159
      %p168 = scmp.eq.s32.totalorder %s43, 0
      %p169 = por %p167, %p168
      %p170 = scmp.ne.s32.totalorder %s158, %s159
      %p171 = scmp.eq.s32.totalorder %s44, 1
      %p172 = por %p170, %p171
      %p174 = scmp.ne.s32.totalorder %s159, %s173
      %p175 = scmp.eq.s32.totalorder %s44, 0
      %p176 = por %p174, %p175
      %s178 = sadd.s32 %s177, 1
      %p181 = scmp.eq.s32.totalorder %s38, 1
      %p182 = scmp.ne.s32.totalorder %s177, %s179
      %p183 = scmp.eq.s32.totalorder %s38, 0
      %p184 = por %p182, %p183
      %p185 = scmp.ne.s32.totalorder %s177, %s179
      %p186 = scmp.eq.s32.totalorder %s43, 1
      %p187 = por %p185, %p186
      %p188 = scmp.ne.s32.totalorder %s179, %s180
      %p189 = scmp.eq.s32.totalorder %s43, 0
      %p190 = por %p188, %p189
      %p191 = scmp.ne.s32.totalorder %s179, %s180
      %p192 = scmp.eq.s32.totalorder %s44, 1
      %p193 = por %p191, %p192
      %p195 = scmp.ne.s32.totalorder %s180, %s194
      %p196 = scmp.eq.s32.totalorder %s44, 0
      %p197 = por %p195, %p196
      %s199 = sadd.s32 %s198, 1
      %p202 = scmp.eq.s32.totalorder %s38, 1
      %p203 = scmp.ne.s32.totalorder %s198, %s200
      %p204 = scmp.eq.s32.totalorder %s38, 0
      %p205 = por %p203, %p204
      %p206 = scmp.ne.s32.totalorder %s198, %s200
      %p207 = scmp.eq.s32.totalorder %s43, 1
      %p208 = por %p206, %p207
      %p209 = scmp.ne.s32.totalorder %s200, %s201
      %p210 = scmp.eq.s32.totalorder %s43, 0
      %p211 = por %p209, %p210
      %p212 = scmp.ne.s32.totalorder %s200, %s201
      %p213 = scmp.eq.s32.totalorder %s44, 1
      %p214 = por %p212, %p213
      %p216 = scmp.ne.s32.totalorder %s201, %s215
      %p217 = scmp.eq.s32.totalorder %s44, 0
      %p218 = por %p216, %p217
      %s220 = sadd.s32 %s219, 1
      %p223 = scmp.eq.s32.totalorder %s38, 1
      %p224 = scmp.ne.s32.totalorder %s219, %s221
      %p225 = scmp.eq.s32.totalorder %s38, 0
      %p226 = por %p224, %p225
      %p227 = scmp.ne.s32.totalorder %s219, %s221
      %p228 = scmp.eq.s32.totalorder %s43, 1
      %p229 = por %p227, %p228
      %p230 = scmp.ne.s32.totalorder %s221, %s222
      %p231 = scmp.eq.s32.totalorder %s43, 0
      %p232 = por %p230, %p231
      %p233 = scmp.ne.s32.totalorder %s221, %s222
      %p234 = scmp.eq.s32.totalorder %s44, 1
      %p235 = por %p233, %p234
      %p237 = scmp.ne.s32.totalorder %s222, %s236
      %p238 = scmp.eq.s32.totalorder %s44, 0
      %p239 = por %p237, %p238
      %s241 = sadd.s32 %s240, 1
      %p244 = scmp.eq.s32.totalorder %s38, 1
      %p245 = scmp.ne.s32.totalorder %s240, %s242
      %p246 = scmp.eq.s32.totalorder %s38, 0
      %p247 = por %p245, %p246
      %p248 = scmp.ne.s32.totalorder %s240, %s242
      %p249 = scmp.eq.s32.totalorder %s43, 1
      %p250 = por %p248, %p249
      %p251 = scmp.ne.s32.totalorder %s242, %s243
      %p252 = scmp.eq.s32.totalorder %s43, 0
      %p253 = por %p251, %p252
      %p254 = scmp.ne.s32.totalorder %s242, %s243
      %p255 = scmp.eq.s32.totalorder %s44, 1
      %p256 = por %p254, %p255
      %p258 = scmp.ne.s32.totalorder %s243, %s257
      %p259 = scmp.eq.s32.totalorder %s44, 0
      %p260 = por %p258, %p259
      %s262 = sadd.s32 %s261, 1
      %p265 = scmp.eq.s32.totalorder %s38, 1
      %p266 = scmp.ne.s32.totalorder %s261, %s263
      %p267 = scmp.eq.s32.totalorder %s38, 0
      %p268 = por %p266, %p267
      %p269 = scmp.ne.s32.totalorder %s261, %s263
      %p270 = scmp.eq.s32.totalorder %s43, 1
      %p271 = por %p269, %p270
      %p272 = scmp.ne.s32.totalorder %s263, %s264
      %p273 = scmp.eq.s32.totalorder %s43, 0
      %p274 = por %p272, %p273
      %p275 = scmp.ne.s32.totalorder %s263, %s264
      %p276 = scmp.eq.s32.totalorder %s44, 1
      %p277 = por %p275, %p276
      %p279 = scmp.ne.s32.totalorder %s264, %s278
      %p280 = scmp.eq.s32.totalorder %s44, 0
      %p281 = por %p279, %p280
      %s283 = sadd.s32 %s282, 1
      %p286 = scmp.eq.s32.totalorder %s38, 1
      %p287 = scmp.ne.s32.totalorder %s282, %s284
      %p288 = scmp.eq.s32.totalorder %s38, 0
      %p289 = por %p287, %p288
      %p290 = scmp.ne.s32.totalorder %s282, %s284
      %p291 = scmp.eq.s32.totalorder %s43, 1
      %p292 = por %p290, %p291
      %p293 = scmp.ne.s32.totalorder %s284, %s285
      %p294 = scmp.eq.s32.totalorder %s43, 0
      %p295 = por %p293, %p294
      %p296 = scmp.ne.s32.totalorder %s284, %s285
      %p297 = scmp.eq.s32.totalorder %s44, 1
      %p298 = por %p296, %p297
      %p300 = scmp.ne.s32.totalorder %s285, %s299
      %p301 = scmp.eq.s32.totalorder %s44, 0
      %p302 = por %p300, %p301
      %s304 = sadd.s32 %s303, 1
      %p307 = scmp.eq.s32.totalorder %s38, 1
      %p308 = scmp.ne.s32.totalorder %s303, %s305
      %p309 = scmp.eq.s32.totalorder %s38, 0
      %p310 = por %p308, %p309
      %p311 = scmp.ne.s32.totalorder %s303, %s305
      %p312 = scmp.eq.s32.totalorder %s43, 1
      %p313 = por %p311, %p312
      %p314 = scmp.ne.s32.totalorder %s305, %s306
      %p315 = scmp.eq.s32.totalorder %s43, 0
      %p316 = por %p314, %p315
      %p317 = scmp.ne.s32.totalorder %s305, %s306
      %p318 = scmp.eq.s32.totalorder %s44, 1
      %p319 = por %p317, %p318
      %p321 = scmp.ne.s32.totalorder %s306, %s320
      %p322 = scmp.eq.s32.totalorder %s44, 0
      %p323 = por %p321, %p322
      %s325 = sadd.s32 %s324, 1
      %p328 = scmp.eq.s32.totalorder %s38, 1
      %p329 = scmp.ne.s32.totalorder %s324, %s326
      %p330 = scmp.eq.s32.totalorder %s38, 0
      %p331 = por %p329, %p330
      %p332 = scmp.ne.s32.totalorder %s324, %s326
      %p333 = scmp.eq.s32.totalorder %s43, 1
      %p334 = por %p332, %p333
      %p335 = scmp.ne.s32.totalorder %s326, %s327
      %p336 = scmp.eq.s32.totalorder %s43, 0
      %p337 = por %p335, %p336
      %p338 = scmp.ne.s32.totalorder %s326, %s327
      %p339 = scmp.eq.s32.totalorder %s44, 1
      %p340 = por %p338, %p339
      %p342 = scmp.ne.s32.totalorder %s327, %s341
      %p343 = scmp.eq.s32.totalorder %s44, 0
      %p344 = por %p342, %p343
      %s346 = sadd.s32 %s345, 1
      %p349 = scmp.eq.s32.totalorder %s38, 1
      %p350 = scmp.ne.s32.totalorder %s345, %s347
      %p351 = scmp.eq.s32.totalorder %s38, 0
      %p352 = por %p350, %p351
      %p353 = scmp.ne.s32.totalorder %s345, %s347
      %p354 = scmp.eq.s32.totalorder %s43, 1
      %p355 = por %p353, %p354
      %p356 = scmp.ne.s32.totalorder %s347, %s348
      %p357 = scmp.eq.s32.totalorder %s43, 0
      %p358 = por %p356, %p357
      %p359 = scmp.ne.s32.totalorder %s347, %s348
      %p360 = scmp.eq.s32.totalorder %s44, 1
      %p361 = por %p359, %p360
      %p363 = scmp.ne.s32.totalorder %s348, %s362
      %p364 = scmp.eq.s32.totalorder %s44, 0
      %p365 = por %p363, %p364
      %s367 = sadd.s32 %s366, 1
      %p370 = scmp.eq.s32.totalorder %s38, 1
      %p371 = scmp.ne.s32.totalorder %s366, %s368
      %p372 = scmp.eq.s32.totalorder %s38, 0
      %p373 = por %p371, %p372
      %p374 = scmp.ne.s32.totalorder %s366, %s368
      %p375 = scmp.eq.s32.totalorder %s43, 1
      %p376 = por %p374, %p375
      %p377 = scmp.ne.s32.totalorder %s368, %s369
      %p378 = scmp.eq.s32.totalorder %s43, 0
      %p379 = por %p377, %p378
      %p380 = scmp.ne.s32.totalorder %s368, %s369
      %p381 = scmp.eq.s32.totalorder %s44, 1
      %p382 = por %p380, %p381
      %p384 = scmp.ne.s32.totalorder %s369, %s383
      %p385 = scmp.eq.s32.totalorder %s44, 0
      %p386 = por %p384, %p385
      %s388 = sadd.s32 %s387, 1
      %p391 = scmp.eq.s32.totalorder %s38, 1
      %p392 = scmp.ne.s32.totalorder %s387, %s389
      %p393 = scmp.eq.s32.totalorder %s38, 0
      %p394 = por %p392, %p393
      %p395 = scmp.ne.s32.totalorder %s387, %s389
      %p396 = scmp.eq.s32.totalorder %s43, 1
      %p397 = por %p395, %p396
      %p398 = scmp.ne.s32.totalorder %s389, %s390
      %p399 = scmp.eq.s32.totalorder %s43, 0
      %p400 = por %p398, %p399
      %p401 = scmp.ne.s32.totalorder %s389, %s390
      %p402 = scmp.eq.s32.totalorder %s44, 1
      %p403 = por %p401, %p402
      %p405 = scmp.ne.s32.totalorder %s390, %s404
      %p406 = scmp.eq.s32.totalorder %s44, 0
      %p407 = por %p405, %p406
      %s409 = sadd.s32 %s408, 1
      %p412 = scmp.eq.s32.totalorder %s38, 1
      %p413 = scmp.ne.s32.totalorder %s408, %s410
      %p414 = scmp.eq.s32.totalorder %s38, 0
      %p415 = por %p413, %p414
      %p416 = scmp.ne.s32.totalorder %s408, %s410
      %p417 = scmp.eq.s32.totalorder %s43, 1
      %p418 = por %p416, %p417
      %p419 = scmp.ne.s32.totalorder %s410, %s411
      %p420 = scmp.eq.s32.totalorder %s43, 0
      %p421 = por %p419, %p420
      %p422 = scmp.ne.s32.totalorder %s410, %s411
      %p423 = scmp.eq.s32.totalorder %s44, 1
      %p424 = por %p422, %p423
      %p426 = scmp.ne.s32.totalorder %s411, %s425
      %p427 = scmp.eq.s32.totalorder %s44, 0
      %p428 = por %p426, %p427
      %s430 = sadd.s32 %s429, 1
      %p433 = scmp.eq.s32.totalorder %s38, 1
      %p434 = scmp.ne.s32.totalorder %s429, %s431
      %p435 = scmp.eq.s32.totalorder %s38, 0
      %p436 = por %p434, %p435
      %p437 = scmp.ne.s32.totalorder %s429, %s431
      %p438 = scmp.eq.s32.totalorder %s43, 1
      %p439 = por %p437, %p438
      %p440 = scmp.ne.s32.totalorder %s431, %s432
      %p441 = scmp.eq.s32.totalorder %s43, 0
      %p442 = por %p440, %p441
      %p443 = scmp.ne.s32.totalorder %s431, %s432
      %p444 = scmp.eq.s32.totalorder %s44, 1
      %p445 = por %p443, %p444
      %p447 = scmp.ne.s32.totalorder %s432, %s446
      %p448 = scmp.eq.s32.totalorder %s44, 0
      %p449 = por %p447, %p448
      %s451 = sadd.s32 %s450, 1
      %p454 = scmp.eq.s32.totalorder %s38, 1
      %p455 = scmp.ne.s32.totalorder %s450, %s452
      %p456 = scmp.eq.s32.totalorder %s38, 0
      %p457 = por %p455, %p456
      %p458 = scmp.ne.s32.totalorder %s450, %s452
      %p459 = scmp.eq.s32.totalorder %s43, 1
      %p460 = por %p458, %p459
      %p461 = scmp.ne.s32.totalorder %s452, %s453
      %p462 = scmp.eq.s32.totalorder %s43, 0
      %p463 = por %p461, %p462
      %p464 = scmp.ne.s32.totalorder %s452, %s453
      %p465 = scmp.eq.s32.totalorder %s44, 1
      %p466 = por %p464, %p465
      %p468 = scmp.ne.s32.totalorder %s453, %s467
      %p469 = scmp.eq.s32.totalorder %s44, 0
      %p470 = por %p468, %p469
      %s472 = sadd.s32 %s471, 1
      %p475 = scmp.eq.s32.totalorder %s38, 1
      %p476 = scmp.ne.s32.totalorder %s471, %s473
      %p477 = scmp.eq.s32.totalorder %s38, 0
      %p478 = por %p476, %p477
      %p479 = scmp.ne.s32.totalorder %s471, %s473
      %p480 = scmp.eq.s32.totalorder %s43, 1
      %p481 = por %p479, %p480
      %p482 = scmp.ne.s32.totalorder %s473, %s474
      %p483 = scmp.eq.s32.totalorder %s43, 0
      %p484 = por %p482, %p483
      %p485 = scmp.ne.s32.totalorder %s473, %s474
      %p486 = scmp.eq.s32.totalorder %s44, 1
      %p487 = por %p485, %p486
      %p489 = scmp.ne.s32.totalorder %s474, %s488
      %p490 = scmp.eq.s32.totalorder %s44, 0
      %p491 = por %p489, %p490
      %s492 = ssub.s32 %s38, %s45
      %p493 = scmp.eq.s32.totalorder %s492, 0
      %s495 = sadd.s32 %s494, 1
      %s496 = scalar_select %p493, %s494, %s495
      %p499 = pneg %p493
      %p500 = scmp.eq.s32.totalorder %s38, 1
      %p501 = por %p499, %p500
      %p502 = scmp.ne.s32.totalorder %s494, %s497
      %p503 = scmp.eq.s32.totalorder %s38, 0
      %p504 = por %p502, %p503
      %p505 = scmp.ne.s32.totalorder %s494, %s497
      %p506 = scmp.eq.s32.totalorder %s43, 1
      %p507 = por %p505, %p506
      %p508 = scmp.ne.s32.totalorder %s497, %s498
      %p509 = scmp.eq.s32.totalorder %s43, 0
      %p510 = por %p508, %p509
      %p511 = scmp.ne.s32.totalorder %s497, %s498
      %p512 = scmp.eq.s32.totalorder %s44, 1
      %p513 = por %p511, %p512
      %p515 = scmp.ne.s32.totalorder %s498, %s514
      %p516 = scmp.eq.s32.totalorder %s44, 0
      %p517 = por %p515, %p516
      %p518 = scmp.le.s32.totalorder 1, %s38
      %p519 = scmp.lt.s32.totalorder %s38, 3
      %p520 = pnand %p518, %p519
      %p521 = pneg %p520
      // Predicated region
      $region9: #{forward.1} parent=5 // pred_check
        _
      $region10: #{forward.1} parent=5 // pred_check_branch
        %523 = sbr.rel (%p520) target = $region12
      $region11: #{forward.1} parent=5 // pred_region
        %s524 = ssub.s32 %s38, 1
        // Predicated region
        $region13: #{forward.1} parent=11 // pred_check
          %p525 = pneg %p85
        $region14: #{forward.1} parent=11 // pred_check_branch
          %527 = sbr.rel (%p525) target = $region16
        $region15: #{forward.1} parent=11 // pred_region
          %529 = vsyncadd [#allocation6], 0
          %s530 = sshll.u32 %s1, 4
          %s531 = int_to_ptr.hbm [resolvable:$true] %s530
          %s532 = sshll.u32 [#allocation5], 4
          %s533 = int_to_ptr.vmem [resolvable:$true] %s532
          %538 = dma.hbm_to_vmem [thread:$0]  %s531, 512, %s533, [#allocation6], 256, 256, 16
        $region16: #{forward.1} parent=11 // pred_fallthru
          _
        // Predicated region
        $region17: #{forward.1} parent=11 // pred_check
          %p539 = pneg %p106
        $region18: #{forward.1} parent=11 // pred_check_branch
          %541 = sbr.rel (%p539) target = $region20
        $region19: #{forward.1} parent=11 // pred_region
          %543 = vsyncadd [#allocation6], 0
          %s545 = sshll.u32 %s2, 4
          %s546 = int_to_ptr.hbm [resolvable:$true] %s545
          %s547 = sshll.u32 [#allocation7], 4
          %s548 = int_to_ptr.vmem [resolvable:$true] %s547
          %550 = dma.hbm_to_vmem [thread:$0]  %s546, 32, %s548, [#allocation6]
        $region20: #{forward.1} parent=11 // pred_fallthru
          _
        // Predicated region
        $region21: #{forward.1} parent=11 // pred_check
          %p551 = pneg %p127
        $region22: #{forward.1} parent=11 // pred_check_branch
          %553 = sbr.rel (%p551) target = $region24
        $region23: #{forward.1} parent=11 // pred_region
          %555 = vsyncadd [#allocation9], 0
          %s556 = sshll.u32 %s3, 4
          %s557 = int_to_ptr.hbm [resolvable:$true] %s556
          %s558 = sshll.u32 [#allocation8], 4
          %s559 = int_to_ptr.vmem [resolvable:$true] %s558
          %564 = dma.hbm_to_vmem [thread:$0]  %s557, 2048, %s559, [#allocation9], 256, 256, 16
        $region24: #{forward.1} parent=11 // pred_fallthru
          _
        // Predicated region
        $region25: #{forward.1} parent=11 // pred_check
          %p565 = pneg %p148
        $region26: #{forward.1} parent=11 // pred_check_branch
          %567 = sbr.rel (%p565) target = $region28
        $region27: #{forward.1} parent=11 // pred_region
          %569 = vsyncadd [#allocation9], 0
          %s571 = sshll.u32 %s4, 4
          %s572 = int_to_ptr.hbm [resolvable:$true] %s571
          %s573 = sshll.u32 [#allocation10], 4
          %s574 = int_to_ptr.vmem [resolvable:$true] %s573
          %576 = dma.hbm_to_vmem [thread:$0]  %s572, 32, %s574, [#allocation9]
        $region28: #{forward.1} parent=11 // pred_fallthru
          _
        // Predicated region
        $region29: #{forward.1} parent=11 // pred_check
          %p577 = pneg %p169
        $region30: #{forward.1} parent=11 // pred_check_branch
          %579 = sbr.rel (%p577) target = $region32
        $region31: #{forward.1} parent=11 // pred_region
          %581 = vsyncadd [#allocation12], 0
          %s582 = sshll.u32 %s5, 4
          %s583 = int_to_ptr.hbm [resolvable:$true] %s582
          %s584 = sshll.u32 [#allocation11], 4
          %s585 = int_to_ptr.vmem [resolvable:$true] %s584
          %590 = dma.hbm_to_vmem [thread:$0]  %s583, 2048, %s585, [#allocation12], 256, 256, 16
        $region32: #{forward.1} parent=11 // pred_fallthru
          _
        // Predicated region
        $region33: #{forward.1} parent=11 // pred_check
          %p591 = pneg %p190
        $region34: #{forward.1} parent=11 // pred_check_branch
          %593 = sbr.rel (%p591) target = $region36
        $region35: #{forward.1} parent=11 // pred_region
          %595 = vsyncadd [#allocation12], 0
          %s597 = sshll.u32 %s6, 4
          %s598 = int_to_ptr.hbm [resolvable:$true] %s597
          %s599 = sshll.u32 [#allocation13], 4
          %s600 = int_to_ptr.vmem [resolvable:$true] %s599
          %602 = dma.hbm_to_vmem [thread:$0]  %s598, 32, %s600, [#allocation12]
        $region36: #{forward.1} parent=11 // pred_fallthru
          _
        // Predicated region
        $region37: #{forward.1} parent=11 // pred_check
          %p603 = pneg %p211
        $region38: #{forward.1} parent=11 // pred_check_branch
          %605 = sbr.rel (%p603) target = $region40
        $region39: #{forward.1} parent=11 // pred_region
          %607 = vsyncadd [#allocation15], 0
          %s608 = sshll.u32 %s7, 4
          %s609 = int_to_ptr.hbm [resolvable:$true] %s608
          %s610 = sshll.u32 [#allocation14], 4
          %s611 = int_to_ptr.vmem [resolvable:$true] %s610
          %616 = dma.hbm_to_vmem [thread:$0]  %s609, 2048, %s611, [#allocation15], 256, 256, 16
        $region40: #{forward.1} parent=11 // pred_fallthru
          _
        // Predicated region
        $region41: #{forward.1} parent=11 // pred_check
          %p617 = pneg %p232
        $region42: #{forward.1} parent=11 // pred_check_branch
          %619 = sbr.rel (%p617) target = $region44
        $region43: #{forward.1} parent=11 // pred_region
          _
        $region44: #{forward.1} parent=11 // pred_fallthru
          _
        // Predicated region
        $region45: #{forward.1} parent=11 // pred_check
          %p620 = pneg %p253
        $region46: #{forward.1} parent=11 // pred_check_branch
          %622 = sbr.rel (%p620) target = $region48
        $region47: #{forward.1} parent=11 // pred_region
          %624 = vsyncadd [#allocation15], 0
          %s625 = sshll.u32 %s9, 4
          %s626 = int_to_ptr.hbm [resolvable:$true] %s625
          %s627 = sshll.u32 [#allocation16], 4
          %s628 = int_to_ptr.vmem [resolvable:$true] %s627
          %633 = dma.hbm_to_vmem [thread:$0]  %s626, 2048, %s628, [#allocation15], 256, 256, 16
        $region48: #{forward.1} parent=11 // pred_fallthru
          _
        // Predicated region
        $region49: #{forward.1} parent=11 // pred_check
          %p634 = pneg %p274
        $region50: #{forward.1} parent=11 // pred_check_branch
          %636 = sbr.rel (%p634) target = $region52
        $region51: #{forward.1} parent=11 // pred_region
          _
        $region52: #{forward.1} parent=11 // pred_fallthru
          _
        // Predicated region
        $region53: #{forward.1} parent=11 // pred_check
          %p637 = pneg %p295
        $region54: #{forward.1} parent=11 // pred_check_branch
          %639 = sbr.rel (%p637) target = $region56
        $region55: #{forward.1} parent=11 // pred_region
          %641 = vsyncadd [#allocation18], 0
          %s642 = sshll.u32 %s11, 4
          %s643 = int_to_ptr.hbm [resolvable:$true] %s642
          %s644 = sshll.u32 [#allocation17], 4
          %s645 = int_to_ptr.vmem [resolvable:$true] %s644
          %650 = dma.hbm_to_vmem [thread:$0]  %s643, 1024, %s645, [#allocation18], 128, 128, 8
        $region56: #{forward.1} parent=11 // pred_fallthru
          _
        // Predicated region
        $region57: #{forward.1} parent=11 // pred_check
          %p651 = pneg %p316
        $region58: #{forward.1} parent=11 // pred_check_branch
          %653 = sbr.rel (%p651) target = $region60
        $region59: #{forward.1} parent=11 // pred_region
          _
        $region60: #{forward.1} parent=11 // pred_fallthru
          _
        // Predicated region
        $region61: #{forward.1} parent=11 // pred_check
          %p654 = pneg %p337
        $region62: #{forward.1} parent=11 // pred_check_branch
          %656 = sbr.rel (%p654) target = $region64
        $region63: #{forward.1} parent=11 // pred_region
          %658 = vsyncadd [#allocation18], 0
          %s659 = sshll.u32 %s13, 4
          %s660 = int_to_ptr.hbm [resolvable:$true] %s659
          %s661 = sshll.u32 [#allocation19], 4
          %s662 = int_to_ptr.vmem [resolvable:$true] %s661
          %667 = dma.hbm_to_vmem [thread:$0]  %s660, 2048, %s662, [#allocation18], 256, 256, 16
        $region64: #{forward.1} parent=11 // pred_fallthru
          _
        // Predicated region
        $region65: #{forward.1} parent=11 // pred_check
          %p668 = pneg %p358
        $region66: #{forward.1} parent=11 // pred_check_branch
          %670 = sbr.rel (%p668) target = $region68
        $region67: #{forward.1} parent=11 // pred_region
          _
        $region68: #{forward.1} parent=11 // pred_fallthru
          _
        // Predicated region
        $region69: #{forward.1} parent=11 // pred_check
          %p671 = pneg %p379
        $region70: #{forward.1} parent=11 // pred_check_branch
          %673 = sbr.rel (%p671) target = $region72
        $region71: #{forward.1} parent=11 // pred_region
          %675 = vsyncadd [#allocation21], 0
          %s676 = sshll.u32 %s15, 4
          %s677 = int_to_ptr.hbm [resolvable:$true] %s676
          %s678 = sshll.u32 [#allocation20], 4
          %s679 = int_to_ptr.vmem [resolvable:$true] %s678
          %684 = dma.hbm_to_vmem [thread:$0]  %s677, 4096, %s679, [#allocation21], 128, 128, 8
        $region72: #{forward.1} parent=11 // pred_fallthru
          _
        // Predicated region
        $region73: #{forward.1} parent=11 // pred_check
          %p685 = pneg %p400
        $region74: #{forward.1} parent=11 // pred_check_branch
          %687 = sbr.rel (%p685) target = $region76
        $region75: #{forward.1} parent=11 // pred_region
          _
        $region76: #{forward.1} parent=11 // pred_fallthru
          _
        // Predicated region
        $region77: #{forward.1} parent=11 // pred_check
          %p688 = pneg %p421
        $region78: #{forward.1} parent=11 // pred_check_branch
          %690 = sbr.rel (%p688) target = $region80
        $region79: #{forward.1} parent=11 // pred_region
          _
        $region80: #{forward.1} parent=11 // pred_fallthru
          _
        // Predicated region
        $region81: #{forward.1} parent=11 // pred_check
          %p691 = pneg %p442
        $region82: #{forward.1} parent=11 // pred_check_branch
          %693 = sbr.rel (%p691) target = $region84
        $region83: #{forward.1} parent=11 // pred_region
          _
        $region84: #{forward.1} parent=11 // pred_fallthru
          _
        // Predicated region
        $region85: #{forward.1} parent=11 // pred_check
          %p694 = pneg %p463
        $region86: #{forward.1} parent=11 // pred_check_branch
          %696 = sbr.rel (%p694) target = $region88
        $region87: #{forward.1} parent=11 // pred_region
          %698 = vsyncadd [#allocation21], 0
          %s699 = sshll.u32 %s19, 4
          %s700 = int_to_ptr.hbm [resolvable:$true] %s699
          %s701 = sshll.u32 [#allocation22], 4
          %s702 = int_to_ptr.vmem [resolvable:$true] %s701
          %707 = dma.hbm_to_vmem [thread:$0]  %s700, 1024, %s702, [#allocation21], 128, 128, 8
        $region88: #{forward.1} parent=11 // pred_fallthru
          _
        // Predicated region
        $region89: #{forward.1} parent=11 // pred_check
          %p708 = pneg %p484
        $region90: #{forward.1} parent=11 // pred_check_branch
          %710 = sbr.rel (%p708) target = $region92
        $region91: #{forward.1} parent=11 // pred_region
          _
        $region92: #{forward.1} parent=11 // pred_fallthru
          _
      $region12: #{forward.1} parent=5 // pred_fallthru
        _
      %p711 = scmp.lt.s32.totalorder %s38, 2
      // Predicated region
      $region93: #{forward.1} parent=5 // pred_check
        %p712 = pneg %p711
      $region94: #{forward.1} parent=5 // pred_check_branch
        %714 = sbr.rel (%p712) target = $region96
      $region95: #{forward.1} parent=5 // pred_region
        // Predicated region
        $region97: #{forward.1} parent=95 // pred_check
          %p715 = pneg %p58
        $region98: #{forward.1} parent=95 // pred_check_branch
          %717 = sbr.rel (%p715) target = $region100
        $region99: #{forward.1} parent=95 // pred_region
          %s718 = sand.u32 %s48, 1
          %s719 = scalar_lea.sflag [#allocation4], %s718
          %s720 = sand.u32 %s48, 1
          %s721 = smul.addr %s720, 16
          %s722 = scalar_lea.vmem [#allocation3], %s721
          %s723 = smul.u32 2, %s38
          %725 = vsyncadd %s719, 0
          %s726 = smul.addr %s723, 8
          %s727 = scalar_lea.hbm %s0, %s726
          %s728 = sshll.u32 %s727, 4
          %s729 = int_to_ptr.hbm [resolvable:$true] %s728
          %s730 = sshll.u32 %s722, 4
          %s731 = int_to_ptr.vmem [resolvable:$true] %s730
          %736 = dma.hbm_to_vmem [thread:$0]  %s729, 256, %s731, %s719, 128, 128, 8
        $region100: #{forward.1} parent=95 // pred_fallthru
          _
      $region96: #{forward.1} parent=5 // pred_fallthru
        _
      %p737 = scmp.le.s32.totalorder 1, %s38
      %p738 = scmp.lt.s32.totalorder %s38, 3
      %p739 = pnand %p737, %p738
      %p740 = pneg %p739
      // Predicated region
      $region101: #{forward.1} parent=5 // pred_check
        _
      $region102: #{forward.1} parent=5 // pred_check_branch
        %742 = sbr.rel (%p739) target = $region104
      $region103: #{forward.1} parent=5 // pred_region
        %s743 = ssub.s32 %s38, 1
        %s744 = sand.u32 %s51, 1
        %s745 = scalar_lea.sflag [#allocation4], %s744
        %s746 = sand.u32 %s51, 1
        %s747 = smul.addr %s746, 16
        %s748 = scalar_lea.vmem [#allocation3], %s747
        // Predicated region
        $region105: #{forward.1} parent=103 // pred_check
          %p749 = pneg %p64
        $region106: #{forward.1} parent=103 // pred_check_branch
          %751 = sbr.rel (%p749) target = $region108
        $region107: #{forward.1} parent=103 // pred_region
          %753 = dma.done %s745, 256
        $region108: #{forward.1} parent=103 // pred_fallthru
          _
        // Predicated region
        $region109: #{forward.1} parent=103 // pred_check
          %p754 = pneg %p85
        $region110: #{forward.1} parent=103 // pred_check_branch
          %756 = sbr.rel (%p754) target = $region112
        $region111: #{forward.1} parent=103 // pred_region
          %758 = dma.done [#allocation6], 512
        $region112: #{forward.1} parent=103 // pred_fallthru
          _
        // Predicated region
        $region113: #{forward.1} parent=103 // pred_check
          %p759 = pneg %p106
        $region114: #{forward.1} parent=103 // pred_check_branch
          %761 = sbr.rel (%p759) target = $region116
        $region115: #{forward.1} parent=103 // pred_region
          %763 = dma.done [#allocation6], 32
        $region116: #{forward.1} parent=103 // pred_fallthru
          _
        // Predicated region
        $region117: #{forward.1} parent=103 // pred_check
          %p764 = pneg %p127
        $region118: #{forward.1} parent=103 // pred_check_branch
          %766 = sbr.rel (%p764) target = $region120
        $region119: #{forward.1} parent=103 // pred_region
          %768 = dma.done [#allocation9], 2048
        $region120: #{forward.1} parent=103 // pred_fallthru
          _
        // Predicated region
        $region121: #{forward.1} parent=103 // pred_check
          %p769 = pneg %p148
        $region122: #{forward.1} parent=103 // pred_check_branch
          %771 = sbr.rel (%p769) target = $region124
        $region123: #{forward.1} parent=103 // pred_region
          %773 = dma.done [#allocation9], 32
        $region124: #{forward.1} parent=103 // pred_fallthru
          _
        // Predicated region
        $region125: #{forward.1} parent=103 // pred_check
          %p774 = pneg %p169
        $region126: #{forward.1} parent=103 // pred_check_branch
          %776 = sbr.rel (%p774) target = $region128
        $region127: #{forward.1} parent=103 // pred_region
          %778 = dma.done [#allocation12], 2048
        $region128: #{forward.1} parent=103 // pred_fallthru
          _
        // Predicated region
        $region129: #{forward.1} parent=103 // pred_check
          %p779 = pneg %p190
        $region130: #{forward.1} parent=103 // pred_check_branch
          %781 = sbr.rel (%p779) target = $region132
        $region131: #{forward.1} parent=103 // pred_region
          %783 = dma.done [#allocation12], 32
        $region132: #{forward.1} parent=103 // pred_fallthru
          _
        // Predicated region
        $region133: #{forward.1} parent=103 // pred_check
          %p784 = pneg %p211
        $region134: #{forward.1} parent=103 // pred_check_branch
          %786 = sbr.rel (%p784) target = $region136
        $region135: #{forward.1} parent=103 // pred_region
          %788 = dma.done [#allocation15], 2048
        $region136: #{forward.1} parent=103 // pred_fallthru
          _
        // Predicated region
        $region137: #{forward.1} parent=103 // pred_check
          %p789 = pneg %p253
        $region138: #{forward.1} parent=103 // pred_check_branch
          %791 = sbr.rel (%p789) target = $region140
        $region139: #{forward.1} parent=103 // pred_region
          %793 = dma.done [#allocation15], 2048
        $region140: #{forward.1} parent=103 // pred_fallthru
          _
        // Predicated region
        $region141: #{forward.1} parent=103 // pred_check
          %p794 = pneg %p295
        $region142: #{forward.1} parent=103 // pred_check_branch
          %796 = sbr.rel (%p794) target = $region144
        $region143: #{forward.1} parent=103 // pred_region
          %798 = dma.done [#allocation18], 1024
        $region144: #{forward.1} parent=103 // pred_fallthru
          _
        // Predicated region
        $region145: #{forward.1} parent=103 // pred_check
          %p799 = pneg %p337
        $region146: #{forward.1} parent=103 // pred_check_branch
          %801 = sbr.rel (%p799) target = $region148
        $region147: #{forward.1} parent=103 // pred_region
          %803 = dma.done [#allocation18], 2048
        $region148: #{forward.1} parent=103 // pred_fallthru
          _
        // Predicated region
        $region149: #{forward.1} parent=103 // pred_check
          %p804 = pneg %p379
        $region150: #{forward.1} parent=103 // pred_check_branch
          %806 = sbr.rel (%p804) target = $region152
        $region151: #{forward.1} parent=103 // pred_region
          %808 = dma.done [#allocation21], 4096
        $region152: #{forward.1} parent=103 // pred_fallthru
          _
        // Predicated region
        $region153: #{forward.1} parent=103 // pred_check
          %p809 = pneg %p463
        $region154: #{forward.1} parent=103 // pred_check_branch
          %811 = sbr.rel (%p809) target = $region156
        $region155: #{forward.1} parent=103 // pred_region
          %813 = dma.done [#allocation21], 1024
        $region156: #{forward.1} parent=103 // pred_fallthru
          _
        %s814 = sand.u32 %s51, 1
        %s815 = scalar_lea.sflag [#allocation4], %s814
        %s816 = sand.u32 %s51, 1
        %s817 = smul.addr %s816, 16
        %s818 = scalar_lea.vmem [#allocation3], %s817
        %p819 = pneg %p64
        %p820 = pneg %p61
        %p821 = pneg %p85
        %p822 = pneg %p82
        %p823 = pneg %p106
        %p824 = pneg %p103
        %p825 = pneg %p127
        %p826 = pneg %p124
        %p827 = pneg %p148
        %p828 = pneg %p145
        %p829 = pneg %p169
        %p830 = pneg %p166
        %p831 = pneg %p190
        %p832 = pneg %p187
        %p833 = pneg %p211
        %p834 = pneg %p208
        %p835 = pneg %p232
        %p836 = pneg %p229
        %p837 = pneg %p253
        %p838 = pneg %p250
        %p839 = pneg %p274
        %p840 = pneg %p271
        %p841 = pneg %p295
        %p842 = pneg %p292
        %p843 = pneg %p316
        %p844 = pneg %p313
        %p845 = pneg %p337
        %p846 = pneg %p334
        %p847 = pneg %p358
        %p848 = pneg %p355
        %p849 = pneg %p379
        %p850 = pneg %p376
        %p851 = pneg %p400
        %p852 = pneg %p397
        %p853 = pneg %p421
        %p854 = pneg %p418
        %p855 = pneg %p442
        %p856 = pneg %p439
        %p857 = pneg %p463
        %p858 = pneg %p460
        %p859 = pneg %p484
        %p860 = pneg %p481
        %p861 = pneg %p510
        %p862 = pneg %p507
        %p863 = scmp.lt.s32.totalorder %s43, 1
        %s864 = scalar_select %p863, %s43, 1
        %s865 = smul.addr %s864, 2
        %s866 = scalar_lea.vmem %s21, %s865
        %s867 = smul.u32 2, %s43
        %p868 = scmp.lt.s32.totalorder %s43, 1
        %s869 = scalar_select %p868, %s43, 1
        %s870 = smul.addr %s869, 2
        %s871 = scalar_lea.vmem %s21, %s870
        %v872 = vld [vmem:[%s748] sm:$0xff]
        %v873 = vld [vmem:[%s748 + $0x8] sm:$0xff]
        %v874 = vld [vmem:[#allocation5] sm:$0xff]
        %v875 = vld [vmem:[#allocation5 + $0x8] sm:$0xff]
        %v876 = vld [vmem:[#allocation5 + $0x10] sm:$0xff]
        %v877 = vld [vmem:[#allocation5 + $0x18] sm:$0xff]
        %v878 = vld [vmem:[#allocation7] sm:$0x3]
        %v880 = vperm.slane %v878, 0
        %v881 = vperm.slane %v878, 1
        %vm884 = vcmask 130048
        %v886 = vsel %vm884, %v872, 0
        %v889 = vsel %vm884, %v873, 0
        %891 = vmatpush.msra.mxu0 0.0
        %892 = vmatpush.msra.mxu0 0.0
        %893 = vmatpush.msra.mxu0 0.0
        %894 = vmatpush.msra.mxu0 0.0
        %895 = vmatpush.msra.mxu0 0.0
        %896 = vmatpush.msra.mxu0 0.0
        %897 = vmatpush.msra.mxu0 0.0
        %898 = vmatpush.msra.mxu0 0.0
        %899 = vmatpush.msra.mxu0 0.0
        %900 = vmatpush.msra.mxu0 0.0
        %901 = vmatpush.msra.mxu0 0.0
        %902 = vmatpush.msra.mxu0 0.0
        %903 = vmatpush.msra.mxu0 0.0
        %904 = vmatpush.msra.mxu0 0.0
        %905 = vmatpush.msra.mxu0 %v876
        %906 = vmatpush.msra.mxu0 %v874
        %907 = vmatmul.f32.gmra.mxu0 %v886
        %v908 = vpop.f32.mrf.mxu0
        %v909 = vadd.f32 %v880, %v908
        %910 = vmatmul.f32.gmra.mxu0 %v889
        %v911 = vpop.f32.mrf.mxu0
        %v912 = vadd.f32 %v880, %v911
        %913 = vdwg.mxu0
        %914 = vmatpush.msra.mxu0 0.0
        %915 = vmatpush.msra.mxu0 0.0
        %916 = vmatpush.msra.mxu0 0.0
        %917 = vmatpush.msra.mxu0 0.0
        %918 = vmatpush.msra.mxu0 0.0
        %919 = vmatpush.msra.mxu0 0.0
        %920 = vmatpush.msra.mxu0 0.0
        %921 = vmatpush.msra.mxu0 0.0
        %922 = vmatpush.msra.mxu0 0.0
        %923 = vmatpush.msra.mxu0 0.0
        %924 = vmatpush.msra.mxu0 0.0
        %925 = vmatpush.msra.mxu0 0.0
        %926 = vmatpush.msra.mxu0 0.0
        %927 = vmatpush.msra.mxu0 0.0
        %928 = vmatpush.msra.mxu0 %v877
        %929 = vmatpush.msra.mxu0 %v875
        %930 = vmatmul.f32.gmra.mxu0 %v886
        %v931 = vpop.f32.mrf.mxu0
        %v932 = vadd.f32 %v881, %v931
        %933 = vmatmul.f32.gmra.mxu0 %v889
        %v934 = vpop.f32.mrf.mxu0
        %v935 = vadd.f32 %v881, %v934
        %936 = vdwg.mxu0
        %v937 = vld [vmem:[#allocation8] sm:$0xff]
        %v938 = vld [vmem:[#allocation8 + $0x8] sm:$0xff]
        %v939 = vld [vmem:[#allocation8 + $0x10] sm:$0xff]
        %v940 = vld [vmem:[#allocation8 + $0x18] sm:$0xff]
        %v941 = vld [vmem:[#allocation8 + $0x20] sm:$0xff]
        %v942 = vld [vmem:[#allocation8 + $0x28] sm:$0xff]
        %v943 = vld [vmem:[#allocation8 + $0x30] sm:$0xff]
        %v944 = vld [vmem:[#allocation8 + $0x38] sm:$0xff]
        %v945 = vld [vmem:[#allocation8 + $0x40] sm:$0xff]
        %v946 = vld [vmem:[#allocation8 + $0x48] sm:$0xff]
        %v947 = vld [vmem:[#allocation8 + $0x50] sm:$0xff]
        %v948 = vld [vmem:[#allocation8 + $0x58] sm:$0xff]
        %v949 = vld [vmem:[#allocation8 + $0x60] sm:$0xff]
        %v950 = vld [vmem:[#allocation8 + $0x68] sm:$0xff]
        %v951 = vld [vmem:[#allocation8 + $0x70] sm:$0xff]
        %v952 = vld [vmem:[#allocation8 + $0x78] sm:$0xff]
        %v953 = vld [vmem:[#allocation10] sm:$0x3]
        %v955 = vperm.slane %v953, 0
        %v956 = vperm.slane %v953, 1
        %vm959 = vcmask 523264
        %v961 = vsel %vm959, 0.0, 0
        %963 = vmatpush.msra.mxu0 0.0
        %964 = vmatpush.msra.mxu0 0.0
        %965 = vmatpush.msra.mxu0 0.0
        %966 = vmatpush.msra.mxu0 0.0
        %967 = vmatpush.msra.mxu0 0.0
        %968 = vmatpush.msra.mxu0 0.0
        %969 = vmatpush.msra.mxu0 0.0
        %970 = vmatpush.msra.mxu0 0.0
        %971 = vmatpush.msra.mxu0 %v951
        %972 = vmatpush.msra.mxu0 %v949
        %973 = vmatpush.msra.mxu0 %v947
        %974 = vmatpush.msra.mxu0 %v945
        %975 = vmatpush.msra.mxu0 %v943
        %976 = vmatpush.msra.mxu0 %v941
        %977 = vmatpush.msra.mxu0 %v939
        %978 = vmatpush.msra.mxu0 %v937
        %979 = vmatmul.f32.gmra.mxu0 %v961
        %v980 = vpop.f32.mrf.mxu0
        %v981 = vadd.f32 %v955, %v980
        %982 = vdwg.mxu0
        %983 = vmatpush.msra.mxu0 0.0
        %984 = vmatpush.msra.mxu0 0.0
        %985 = vmatpush.msra.mxu0 0.0
        %986 = vmatpush.msra.mxu0 0.0
        %987 = vmatpush.msra.mxu0 0.0
        %988 = vmatpush.msra.mxu0 0.0
        %989 = vmatpush.msra.mxu0 0.0
        %990 = vmatpush.msra.mxu0 0.0
        %991 = vmatpush.msra.mxu0 %v952
        %992 = vmatpush.msra.mxu0 %v950
        %993 = vmatpush.msra.mxu0 %v948
        %994 = vmatpush.msra.mxu0 %v946
        %995 = vmatpush.msra.mxu0 %v944
        %996 = vmatpush.msra.mxu0 %v942
        %997 = vmatpush.msra.mxu0 %v940
        %998 = vmatpush.msra.mxu0 %v938
        %999 = vmatmul.f32.gmra.mxu0 %v961
        %v1000 = vpop.f32.mrf.mxu0
        %v1001 = vadd.f32 %v956, %v1000
        %1002 = vdwg.mxu0
        %v1004 = vrot.slane %v981, 1
        %v1007 = vadd.f32 %v909, %v981
        %v1008 = vadd.f32 %v912, %v1004
        %v1009 = vxor.u32 %v1007, 2147483648
        %v1010 = vxor.u32 %v1008, 2147483648
        %v1011 = vmul.f32 %v1009, 1.442695
        %v1012 = vpow.pop %v1011
        %v1013 = vmul.f32 %v1010, 1.442695
        %v1014 = vpow.pop %v1013
        %v1015 = vadd.f32 %v1012, 1.0
        %v1016 = vadd.f32 %v1014, 1.0
        %v1017 = vrcp.pop %v1015
        %v1018 = vmul.f32 %v1015, %v1017
        %v1019 = vsub.f32 1.0, %v1018
        %v1020 = vmul.f32 %v1017, %v1019
        %v1021 = vadd.f32 %v1017, %v1020
        %vm1022 = vweird.f32 %v1015
        %vm1023 = vweird.f32 %v1017
        %vm1024 = vmor %vm1022, %vm1023
        %v1025 = vsel %vm1024, %v1017, %v1021
        %v1026 = vand.u32 2147483647, %v1015
        %vm1027 = vcmp.eq.f32.partialorder %v1026, 8.507059e+37
        %v1028 = vand.u32 %v1015, 2147483648
        %v1029 = vor.u32 1.1754944e-38, %v1028
        %v1030 = vsel %vm1027, %v1029, %v1025
        %v1031 = vmul.f32 1.0, %v1030
        %v1032 = vrcp.pop %v1016
        %v1033 = vmul.f32 %v1016, %v1032
        %v1034 = vsub.f32 1.0, %v1033
        %v1035 = vmul.f32 %v1032, %v1034
        %v1036 = vadd.f32 %v1032, %v1035
        %vm1037 = vweird.f32 %v1016
        %vm1038 = vweird.f32 %v1032
        %vm1039 = vmor %vm1037, %vm1038
        %v1040 = vsel %vm1039, %v1032, %v1036
        %v1041 = vand.u32 2147483647, %v1016
        %vm1042 = vcmp.eq.f32.partialorder %v1041, 8.507059e+37
        %v1043 = vand.u32 %v1016, 2147483648
        %v1044 = vor.u32 1.1754944e-38, %v1043
        %v1045 = vsel %vm1042, %v1044, %v1040
        %v1046 = vmul.f32 1.0, %v1045
        %1047 = vrot.lane.b32.xlu0 %v981, 64
        %v1048 = vpop.permute.xlu0 %1047
        %1049 = vrot.lane.b32.xlu0 %v1004, 64
        %v1050 = vpop.permute.xlu0 %1049
        %v1053 = vmul.f32 %v1031, %v1048
        %v1054 = vmul.f32 %v1046, %v1050
        %1057 = vrot.lane.b32.xlu0 %v1053, 64
        %v1058 = vpop.permute.xlu0 %1057
        %1059 = vrot.lane.b32.xlu0 %v1054, 64
        %v1060 = vpop.permute.xlu0 %1059
        %v1063 = vadd.f32 %v909, %v1058
        %v1064 = vadd.f32 %v912, %v1060
        %v1065 = vtanh.pop %v1063
        %v1066 = vtanh.pop %v1064
        %v1067 = vsub.f32 1.0, %v1031
        %v1068 = vsub.f32 1.0, %v1046
        %1071 = vrot.lane.b32.xlu0 %v1065, 96
        %v1072 = vpop.permute.xlu0 %1071
        %1073 = vrot.lane.b32.xlu0 %v1066, 96
        %v1074 = vpop.permute.xlu0 %1073
        %v1077 = vmul.f32 %v1067, %v1072
        %v1078 = vmul.f32 %v1068, %v1074
        %v1079 = vmul.f32 %v1031, 0.0
        %v1080 = vmul.f32 %v1046, 0.0
        %v1081 = vadd.f32 %v1077, %v1079
        %v1082 = vadd.f32 %v1078, %v1080
        %v1083 = vrot.slane %v981, 2
        %v1085 = vadd.f32 %v909, %v1004
        %v1086 = vadd.f32 %v912, %v1083
        %v1087 = vxor.u32 %v1085, 2147483648
        %v1088 = vxor.u32 %v1086, 2147483648
        %v1089 = vmul.f32 %v1087, 1.442695
        %v1090 = vpow.pop %v1089
        %v1091 = vmul.f32 %v1088, 1.442695
        %v1092 = vpow.pop %v1091
        %v1093 = vadd.f32 %v1090, 1.0
        %v1094 = vadd.f32 %v1092, 1.0
        %v1095 = vrcp.pop %v1093
        %v1096 = vmul.f32 %v1093, %v1095
        %v1097 = vsub.f32 1.0, %v1096
        %v1098 = vmul.f32 %v1095, %v1097
        %v1099 = vadd.f32 %v1095, %v1098
        %vm1100 = vweird.f32 %v1093
        %vm1101 = vweird.f32 %v1095
        %vm1102 = vmor %vm1100, %vm1101
        %v1103 = vsel %vm1102, %v1095, %v1099
        %v1104 = vand.u32 2147483647, %v1093
        %vm1105 = vcmp.eq.f32.partialorder %v1104, 8.507059e+37
        %v1106 = vand.u32 %v1093, 2147483648
        %v1107 = vor.u32 1.1754944e-38, %v1106
        %v1108 = vsel %vm1105, %v1107, %v1103
        %v1109 = vmul.f32 1.0, %v1108
        %v1110 = vrcp.pop %v1094
        %v1111 = vmul.f32 %v1094, %v1110
        %v1112 = vsub.f32 1.0, %v1111
        %v1113 = vmul.f32 %v1110, %v1112
        %v1114 = vadd.f32 %v1110, %v1113
        %vm1115 = vweird.f32 %v1094
        %vm1116 = vweird.f32 %v1110
        %vm1117 = vmor %vm1115, %vm1116
        %v1118 = vsel %vm1117, %v1110, %v1114
        %v1119 = vand.u32 2147483647, %v1094
        %vm1120 = vcmp.eq.f32.partialorder %v1119, 8.507059e+37
        %v1121 = vand.u32 %v1094, 2147483648
        %v1122 = vor.u32 1.1754944e-38, %v1121
        %v1123 = vsel %vm1120, %v1122, %v1118
        %v1124 = vmul.f32 1.0, %v1123
        %v1126 = vrot.slane %v1001, 1
        %v1127 = vrot.slane %v1001, 2
        %v1130 = vadd.f32 %v932, %v1126
        %v1131 = vadd.f32 %v935, %v1127
        %v1132 = vxor.u32 %v1130, 2147483648
        %v1133 = vxor.u32 %v1131, 2147483648
        %v1134 = vmul.f32 %v1132, 1.442695
        %v1135 = vpow.pop %v1134
        %v1136 = vmul.f32 %v1133, 1.442695
        %v1137 = vpow.pop %v1136
        %v1138 = vadd.f32 %v1135, 1.0
        %v1139 = vadd.f32 %v1137, 1.0
        %v1140 = vrcp.pop %v1138
        %v1141 = vmul.f32 %v1138, %v1140
        %v1142 = vsub.f32 1.0, %v1141
        %v1143 = vmul.f32 %v1140, %v1142
        %v1144 = vadd.f32 %v1140, %v1143
        %vm1145 = vweird.f32 %v1138
        %vm1146 = vweird.f32 %v1140
        %vm1147 = vmor %vm1145, %vm1146
        %v1148 = vsel %vm1147, %v1140, %v1144
        %v1149 = vand.u32 2147483647, %v1138
        %vm1150 = vcmp.eq.f32.partialorder %v1149, 8.507059e+37
        %v1151 = vand.u32 %v1138, 2147483648
        %v1152 = vor.u32 1.1754944e-38, %v1151
        %v1153 = vsel %vm1150, %v1152, %v1148
        %v1154 = vmul.f32 1.0, %v1153
        %v1155 = vrcp.pop %v1139
        %v1156 = vmul.f32 %v1139, %v1155
        %v1157 = vsub.f32 1.0, %v1156
        %v1158 = vmul.f32 %v1155, %v1157
        %v1159 = vadd.f32 %v1155, %v1158
        %vm1160 = vweird.f32 %v1139
        %vm1161 = vweird.f32 %v1155
        %vm1162 = vmor %vm1160, %vm1161
        %v1163 = vsel %vm1162, %v1155, %v1159
        %v1164 = vand.u32 2147483647, %v1139
        %vm1165 = vcmp.eq.f32.partialorder %v1164, 8.507059e+37
        %v1166 = vand.u32 %v1139, 2147483648
        %v1167 = vor.u32 1.1754944e-38, %v1166
        %v1168 = vsel %vm1165, %v1167, %v1163
        %v1169 = vmul.f32 1.0, %v1168
        %1170 = vrot.lane.b32.xlu0 %v1126, 64
        %v1171 = vpop.permute.xlu0 %1170
        %1172 = vrot.lane.b32.xlu0 %v1127, 64
        %v1173 = vpop.permute.xlu0 %1172
        %v1176 = vmul.f32 %v1109, %v1171
        %v1177 = vmul.f32 %v1124, %v1173
        %1180 = vrot.lane.b32.xlu0 %v1176, 64
        %v1181 = vpop.permute.xlu0 %1180
        %1182 = vrot.lane.b32.xlu0 %v1177, 64
        %v1183 = vpop.permute.xlu0 %1182
        %v1186 = vadd.f32 %v932, %v1181
        %v1187 = vadd.f32 %v935, %v1183
        %v1188 = vtanh.pop %v1186
        %v1189 = vtanh.pop %v1187
        %v1190 = vsub.f32 1.0, %v1154
        %v1191 = vsub.f32 1.0, %v1169
        %1194 = vrot.lane.b32.xlu0 %v1188, 96
        %v1195 = vpop.permute.xlu0 %1194
        %1196 = vrot.lane.b32.xlu0 %v1189, 96
        %v1197 = vpop.permute.xlu0 %1196
        %v1200 = vmul.f32 %v1190, %v1195
        %v1201 = vmul.f32 %v1191, %v1197
        %v1202 = vmul.f32 %v1154, 0.0
        %v1203 = vmul.f32 %v1169, 0.0
        %v1204 = vadd.f32 %v1200, %v1202
        %v1205 = vadd.f32 %v1201, %v1203
        %v1208 = vrot.slane %v1082, 7
        %vm1209 = vcmask 1041409
        %v1210 = vsel %vm1209, %v1208, %v1081
        %1211 = vrot.lane.b32.xlu0 %v1210, 96
        %v1212 = vpop.permute.xlu0 %1211
        %v1216 = vrot.slane %v1204, 7
        %v1217 = vrot.slane %v1205, 6
        %v1218 = vsel %vm1209, %v1217, %v1216
        %1219 = vrot.lane.b32.xlu0 %v1218, 32
        %v1220 = vpop.permute.xlu0 %1219
        %vm1222 = vcmask 261120
        %v1223 = vsel %vm1222, %v1212, %v1220
        %v1225 = vsel %vm959, %v1223, 0
        %1227 = vmatpush.msra.mxu0 0.0
        %1228 = vmatpush.msra.mxu0 0.0
        %1229 = vmatpush.msra.mxu0 0.0
        %1230 = vmatpush.msra.mxu0 0.0
        %1231 = vmatpush.msra.mxu0 0.0
        %1232 = vmatpush.msra.mxu0 0.0
        %1233 = vmatpush.msra.mxu0 0.0
        %1234 = vmatpush.msra.mxu0 0.0
        %1235 = vmatpush.msra.mxu0 %v951
        %1236 = vmatpush.msra.mxu0 %v949
        %1237 = vmatpush.msra.mxu0 %v947
        %1238 = vmatpush.msra.mxu0 %v945
        %1239 = vmatpush.msra.mxu0 %v943
        %1240 = vmatpush.msra.mxu0 %v941
        %1241 = vmatpush.msra.mxu0 %v939
        %1242 = vmatpush.msra.mxu0 %v937
        %1243 = vmatmul.f32.gmra.mxu0 %v1225
        %v1244 = vpop.f32.mrf.mxu0
        %v1245 = vadd.f32 %v955, %v1244
        %1246 = vdwg.mxu0
        %1247 = vmatpush.msra.mxu0 0.0
        %1248 = vmatpush.msra.mxu0 0.0
        %1249 = vmatpush.msra.mxu0 0.0
        %1250 = vmatpush.msra.mxu0 0.0
        %1251 = vmatpush.msra.mxu0 0.0
        %1252 = vmatpush.msra.mxu0 0.0
        %1253 = vmatpush.msra.mxu0 0.0
        %1254 = vmatpush.msra.mxu0 0.0
        %1255 = vmatpush.msra.mxu0 %v952
        %1256 = vmatpush.msra.mxu0 %v950
        %1257 = vmatpush.msra.mxu0 %v948
        %1258 = vmatpush.msra.mxu0 %v946
        %1259 = vmatpush.msra.mxu0 %v944
        %1260 = vmatpush.msra.mxu0 %v942
        %1261 = vmatpush.msra.mxu0 %v940
        %1262 = vmatpush.msra.mxu0 %v938
        %1263 = vmatmul.f32.gmra.mxu0 %v1225
        %v1264 = vpop.f32.mrf.mxu0
        %v1265 = vadd.f32 %v956, %v1264
        %1266 = vdwg.mxu0
        %v1268 = vrot.slane %v1245, 7
        %v1271 = vadd.f32 %v909, %v1268
        %v1272 = vadd.f32 %v912, %v1245
        %v1273 = vxor.u32 %v1271, 2147483648
        %v1274 = vxor.u32 %v1272, 2147483648
        %v1275 = vmul.f32 %v1273, 1.442695
        %v1276 = vpow.pop %v1275
        %v1277 = vmul.f32 %v1274, 1.442695
        %v1278 = vpow.pop %v1277
        %v1279 = vadd.f32 %v1276, 1.0
        %v1280 = vadd.f32 %v1278, 1.0
        %v1281 = vrcp.pop %v1279
        %v1282 = vmul.f32 %v1279, %v1281
        %v1283 = vsub.f32 1.0, %v1282
        %v1284 = vmul.f32 %v1281, %v1283
        %v1285 = vadd.f32 %v1281, %v1284
        %vm1286 = vweird.f32 %v1279
        %vm1287 = vweird.f32 %v1281
        %vm1288 = vmor %vm1286, %vm1287
        %v1289 = vsel %vm1288, %v1281, %v1285
        %v1290 = vand.u32 2147483647, %v1279
        %vm1291 = vcmp.eq.f32.partialorder %v1290, 8.507059e+37
        %v1292 = vand.u32 %v1279, 2147483648
        %v1293 = vor.u32 1.1754944e-38, %v1292
        %v1294 = vsel %vm1291, %v1293, %v1289
        %v1295 = vmul.f32 1.0, %v1294
        %v1296 = vrcp.pop %v1280
        %v1297 = vmul.f32 %v1280, %v1296
        %v1298 = vsub.f32 1.0, %v1297
        %v1299 = vmul.f32 %v1296, %v1298
        %v1300 = vadd.f32 %v1296, %v1299
        %vm1301 = vweird.f32 %v1280
        %vm1302 = vweird.f32 %v1296
        %vm1303 = vmor %vm1301, %vm1302
        %v1304 = vsel %vm1303, %v1296, %v1300
        %v1305 = vand.u32 2147483647, %v1280
        %vm1306 = vcmp.eq.f32.partialorder %v1305, 8.507059e+37
        %v1307 = vand.u32 %v1280, 2147483648
        %v1308 = vor.u32 1.1754944e-38, %v1307
        %v1309 = vsel %vm1306, %v1308, %v1304
        %v1310 = vmul.f32 1.0, %v1309
        %1311 = vrot.lane.b32.xlu0 %v1268, 64
        %v1312 = vpop.permute.xlu0 %1311
        %1313 = vrot.lane.b32.xlu0 %v1245, 64
        %v1314 = vpop.permute.xlu0 %1313
        %v1317 = vmul.f32 %v1295, %v1312
        %v1318 = vmul.f32 %v1310, %v1314
        %1321 = vrot.lane.b32.xlu0 %v1317, 64
        %v1322 = vpop.permute.xlu0 %1321
        %1323 = vrot.lane.b32.xlu0 %v1318, 64
        %v1324 = vpop.permute.xlu0 %1323
        %v1327 = vadd.f32 %v909, %v1322
        %v1328 = vadd.f32 %v912, %v1324
        %v1329 = vtanh.pop %v1327
        %v1330 = vtanh.pop %v1328
        %v1331 = vsub.f32 1.0, %v1295
        %v1332 = vsub.f32 1.0, %v1310
        %1335 = vrot.lane.b32.xlu0 %v1329, 96
        %v1336 = vpop.permute.xlu0 %1335
        %1337 = vrot.lane.b32.xlu0 %v1330, 96
        %v1338 = vpop.permute.xlu0 %1337
        %v1341 = vmul.f32 %v1331, %v1336
        %v1342 = vmul.f32 %v1332, %v1338
        %v1343 = vrot.slane %v1223, 7
        %1344 = vrot.lane.b32.xlu0 %v1343, 32
        %v1345 = vpop.permute.xlu0 %1344
        %1346 = vrot.lane.b32.xlu0 %v1223, 32
        %v1347 = vpop.permute.xlu0 %1346
        %v1350 = vmul.f32 %v1295, %v1345
        %v1351 = vmul.f32 %v1310, %v1347
        %v1352 = vadd.f32 %v1341, %v1350
        %v1353 = vadd.f32 %v1342, %v1351
        %v1354 = vrot.slane %v1245, 2
        %v1355 = vrot.slane %v1245, 3
        %v1358 = vadd.f32 %v909, %v1354
        %v1359 = vadd.f32 %v912, %v1355
        %v1360 = vxor.u32 %v1358, 2147483648
        %v1361 = vxor.u32 %v1359, 2147483648
        %v1362 = vmul.f32 %v1360, 1.442695
        %v1363 = vpow.pop %v1362
        %v1364 = vmul.f32 %v1361, 1.442695
        %v1365 = vpow.pop %v1364
        %v1366 = vadd.f32 %v1363, 1.0
        %v1367 = vadd.f32 %v1365, 1.0
        %v1368 = vrcp.pop %v1366
        %v1369 = vmul.f32 %v1366, %v1368
        %v1370 = vsub.f32 1.0, %v1369
        %v1371 = vmul.f32 %v1368, %v1370
        %v1372 = vadd.f32 %v1368, %v1371
        %vm1373 = vweird.f32 %v1366
        %vm1374 = vweird.f32 %v1368
        %vm1375 = vmor %vm1373, %vm1374
        %v1376 = vsel %vm1375, %v1368, %v1372
        %v1377 = vand.u32 2147483647, %v1366
        %vm1378 = vcmp.eq.f32.partialorder %v1377, 8.507059e+37
        %v1379 = vand.u32 %v1366, 2147483648
        %v1380 = vor.u32 1.1754944e-38, %v1379
        %v1381 = vsel %vm1378, %v1380, %v1376
        %v1382 = vmul.f32 1.0, %v1381
        %v1383 = vrcp.pop %v1367
        %v1384 = vmul.f32 %v1367, %v1383
        %v1385 = vsub.f32 1.0, %v1384
        %v1386 = vmul.f32 %v1383, %v1385
        %v1387 = vadd.f32 %v1383, %v1386
        %vm1388 = vweird.f32 %v1367
        %vm1389 = vweird.f32 %v1383
        %vm1390 = vmor %vm1388, %vm1389
        %v1391 = vsel %vm1390, %v1383, %v1387
        %v1392 = vand.u32 2147483647, %v1367
        %vm1393 = vcmp.eq.f32.partialorder %v1392, 8.507059e+37
        %v1394 = vand.u32 %v1367, 2147483648
        %v1395 = vor.u32 1.1754944e-38, %v1394
        %v1396 = vsel %vm1393, %v1395, %v1391
        %v1397 = vmul.f32 1.0, %v1396
        %v1399 = vrot.slane %v1265, 2
        %v1400 = vrot.slane %v1265, 3
        %v1403 = vadd.f32 %v932, %v1399
        %v1404 = vadd.f32 %v935, %v1400
        %v1405 = vxor.u32 %v1403, 2147483648
        %v1406 = vxor.u32 %v1404, 2147483648
        %v1407 = vmul.f32 %v1405, 1.442695
        %v1408 = vpow.pop %v1407
        %v1409 = vmul.f32 %v1406, 1.442695
        %v1410 = vpow.pop %v1409
        %v1411 = vadd.f32 %v1408, 1.0
        %v1412 = vadd.f32 %v1410, 1.0
        %v1413 = vrcp.pop %v1411
        %v1414 = vmul.f32 %v1411, %v1413
        %v1415 = vsub.f32 1.0, %v1414
        %v1416 = vmul.f32 %v1413, %v1415
        %v1417 = vadd.f32 %v1413, %v1416
        %vm1418 = vweird.f32 %v1411
        %vm1419 = vweird.f32 %v1413
        %vm1420 = vmor %vm1418, %vm1419
        %v1421 = vsel %vm1420, %v1413, %v1417
        %v1422 = vand.u32 2147483647, %v1411
        %vm1423 = vcmp.eq.f32.partialorder %v1422, 8.507059e+37
        %v1424 = vand.u32 %v1411, 2147483648
        %v1425 = vor.u32 1.1754944e-38, %v1424
        %v1426 = vsel %vm1423, %v1425, %v1421
        %v1427 = vmul.f32 1.0, %v1426
        %v1428 = vrcp.pop %v1412
        %v1429 = vmul.f32 %v1412, %v1428
        %v1430 = vsub.f32 1.0, %v1429
        %v1431 = vmul.f32 %v1428, %v1430
        %v1432 = vadd.f32 %v1428, %v1431
        %vm1433 = vweird.f32 %v1412
        %vm1434 = vweird.f32 %v1428
        %vm1435 = vmor %vm1433, %vm1434
        %v1436 = vsel %vm1435, %v1428, %v1432
        %v1437 = vand.u32 2147483647, %v1412
        %vm1438 = vcmp.eq.f32.partialorder %v1437, 8.507059e+37
        %v1439 = vand.u32 %v1412, 2147483648
        %v1440 = vor.u32 1.1754944e-38, %v1439
        %v1441 = vsel %vm1438, %v1440, %v1436
        %v1442 = vmul.f32 1.0, %v1441
        %1443 = vrot.lane.b32.xlu0 %v1399, 64
        %v1444 = vpop.permute.xlu0 %1443
        %1445 = vrot.lane.b32.xlu0 %v1400, 64
        %v1446 = vpop.permute.xlu0 %1445
        %v1449 = vmul.f32 %v1382, %v1444
        %v1450 = vmul.f32 %v1397, %v1446
        %1453 = vrot.lane.b32.xlu0 %v1449, 64
        %v1454 = vpop.permute.xlu0 %1453
        %1455 = vrot.lane.b32.xlu0 %v1450, 64
        %v1456 = vpop.permute.xlu0 %1455
        %v1459 = vadd.f32 %v932, %v1454
        %v1460 = vadd.f32 %v935, %v1456
        %v1461 = vtanh.pop %v1459
        %v1462 = vtanh.pop %v1460
        %v1463 = vsub.f32 1.0, %v1427
        %v1464 = vsub.f32 1.0, %v1442
        %1467 = vrot.lane.b32.xlu0 %v1461, 96
        %v1468 = vpop.permute.xlu0 %1467
        %1469 = vrot.lane.b32.xlu0 %v1462, 96
        %v1470 = vpop.permute.xlu0 %1469
        %v1473 = vmul.f32 %v1463, %v1468
        %v1474 = vmul.f32 %v1464, %v1470
        %v1475 = vrot.slane %v1223, 2
        %v1476 = vrot.slane %v1223, 3
        %1477 = vrot.lane.b32.xlu0 %v1475, 96
        %v1478 = vpop.permute.xlu0 %1477
        %1479 = vrot.lane.b32.xlu0 %v1476, 96
        %v1480 = vpop.permute.xlu0 %1479
        %v1483 = vmul.f32 %v1427, %v1478
        %v1484 = vmul.f32 %v1442, %v1480
        %v1485 = vadd.f32 %v1473, %v1483
        %v1486 = vadd.f32 %v1474, %v1484
        %v1489 = vrot.slane %v1353, 7
        %vm1490 = vcmask 1042434
        %v1491 = vsel %vm1490, %v1489, %v1352
        %1492 = vrot.lane.b32.xlu0 %v1491, 96
        %v1493 = vpop.permute.xlu0 %1492
        %v1497 = vrot.slane %v1485, 5
        %v1498 = vrot.slane %v1486, 4
        %v1499 = vsel %vm1490, %v1498, %v1497
        %1500 = vrot.lane.b32.xlu0 %v1499, 32
        %v1501 = vpop.permute.xlu0 %1500
        %v1503 = vsel %vm1222, %v1493, %v1501
        %v1505 = vrot.slane %v1503, 1
        %v1506 = vsel %vm959, %v1505, 0
        %1508 = vmatpush.msra.mxu0 0.0
        %1509 = vmatpush.msra.mxu0 0.0
        %1510 = vmatpush.msra.mxu0 0.0
        %1511 = vmatpush.msra.mxu0 0.0
        %1512 = vmatpush.msra.mxu0 0.0
        %1513 = vmatpush.msra.mxu0 0.0
        %1514 = vmatpush.msra.mxu0 0.0
        %1515 = vmatpush.msra.mxu0 0.0
        %1516 = vmatpush.msra.mxu0 %v951
        %1517 = vmatpush.msra.mxu0 %v949
        %1518 = vmatpush.msra.mxu0 %v947
        %1519 = vmatpush.msra.mxu0 %v945
        %1520 = vmatpush.msra.mxu0 %v943
        %1521 = vmatpush.msra.mxu0 %v941
        %1522 = vmatpush.msra.mxu0 %v939
        %1523 = vmatpush.msra.mxu0 %v937
        %1524 = vmatmul.f32.gmra.mxu0 %v1506
        %v1525 = vpop.f32.mrf.mxu0
        %v1526 = vadd.f32 %v955, %v1525
        %1527 = vdwg.mxu0
        %1528 = vmatpush.msra.mxu0 0.0
        %1529 = vmatpush.msra.mxu0 0.0
        %1530 = vmatpush.msra.mxu0 0.0
        %1531 = vmatpush.msra.mxu0 0.0
        %1532 = vmatpush.msra.mxu0 0.0
        %1533 = vmatpush.msra.mxu0 0.0
        %1534 = vmatpush.msra.mxu0 0.0
        %1535 = vmatpush.msra.mxu0 0.0
        %1536 = vmatpush.msra.mxu0 %v952
        %1537 = vmatpush.msra.mxu0 %v950
        %1538 = vmatpush.msra.mxu0 %v948
        %1539 = vmatpush.msra.mxu0 %v946
        %1540 = vmatpush.msra.mxu0 %v944
        %1541 = vmatpush.msra.mxu0 %v942
        %1542 = vmatpush.msra.mxu0 %v940
        %1543 = vmatpush.msra.mxu0 %v938
        %1544 = vmatmul.f32.gmra.mxu0 %v1506
        %v1545 = vpop.f32.mrf.mxu0
        %v1546 = vadd.f32 %v956, %v1545
        %1547 = vdwg.mxu0
        %v1549 = vrot.slane %v1526, 6
        %v1550 = vrot.slane %v1526, 7
        %v1553 = vadd.f32 %v909, %v1549
        %v1554 = vadd.f32 %v912, %v1550
        %v1555 = vxor.u32 %v1553, 2147483648
        %v1556 = vxor.u32 %v1554, 2147483648
        %v1557 = vmul.f32 %v1555, 1.442695
        %v1558 = vpow.pop %v1557
        %v1559 = vmul.f32 %v1556, 1.442695
        %v1560 = vpow.pop %v1559
        %v1561 = vadd.f32 %v1558, 1.0
        %v1562 = vadd.f32 %v1560, 1.0
        %v1563 = vrcp.pop %v1561
        %v1564 = vmul.f32 %v1561, %v1563
        %v1565 = vsub.f32 1.0, %v1564
        %v1566 = vmul.f32 %v1563, %v1565
        %v1567 = vadd.f32 %v1563, %v1566
        %vm1568 = vweird.f32 %v1561
        %vm1569 = vweird.f32 %v1563
        %vm1570 = vmor %vm1568, %vm1569
        %v1571 = vsel %vm1570, %v1563, %v1567
        %v1572 = vand.u32 2147483647, %v1561
        %vm1573 = vcmp.eq.f32.partialorder %v1572, 8.507059e+37
        %v1574 = vand.u32 %v1561, 2147483648
        %v1575 = vor.u32 1.1754944e-38, %v1574
        %v1576 = vsel %vm1573, %v1575, %v1571
        %v1577 = vmul.f32 1.0, %v1576
        %v1578 = vrcp.pop %v1562
        %v1579 = vmul.f32 %v1562, %v1578
        %v1580 = vsub.f32 1.0, %v1579
        %v1581 = vmul.f32 %v1578, %v1580
        %v1582 = vadd.f32 %v1578, %v1581
        %vm1583 = vweird.f32 %v1562
        %vm1584 = vweird.f32 %v1578
        %vm1585 = vmor %vm1583, %vm1584
        %v1586 = vsel %vm1585, %v1578, %v1582
        %v1587 = vand.u32 2147483647, %v1562
        %vm1588 = vcmp.eq.f32.partialorder %v1587, 8.507059e+37
        %v1589 = vand.u32 %v1562, 2147483648
        %v1590 = vor.u32 1.1754944e-38, %v1589
        %v1591 = vsel %vm1588, %v1590, %v1586
        %v1592 = vmul.f32 1.0, %v1591
        %1593 = vrot.lane.b32.xlu0 %v1549, 64
        %v1594 = vpop.permute.xlu0 %1593
        %1595 = vrot.lane.b32.xlu0 %v1550, 64
        %v1596 = vpop.permute.xlu0 %1595
        %v1599 = vmul.f32 %v1577, %v1594
        %v1600 = vmul.f32 %v1592, %v1596
        %1603 = vrot.lane.b32.xlu0 %v1599, 64
        %v1604 = vpop.permute.xlu0 %1603
        %1605 = vrot.lane.b32.xlu0 %v1600, 64
        %v1606 = vpop.permute.xlu0 %1605
        %v1609 = vadd.f32 %v909, %v1604
        %v1610 = vadd.f32 %v912, %v1606
        %v1611 = vtanh.pop %v1609
        %v1612 = vtanh.pop %v1610
        %v1613 = vsub.f32 1.0, %v1577
        %v1614 = vsub.f32 1.0, %v1592
        %1617 = vrot.lane.b32.xlu0 %v1611, 96
        %v1618 = vpop.permute.xlu0 %1617
        %1619 = vrot.lane.b32.xlu0 %v1612, 96
        %v1620 = vpop.permute.xlu0 %1619
        %v1623 = vmul.f32 %v1613, %v1618
        %v1624 = vmul.f32 %v1614, %v1620
        %v1625 = vrot.slane %v1503, 7
        %1626 = vrot.lane.b32.xlu0 %v1625, 32
        %v1627 = vpop.permute.xlu0 %1626
        %1628 = vrot.lane.b32.xlu0 %v1503, 32
        %v1629 = vpop.permute.xlu0 %1628
        %v1632 = vmul.f32 %v1577, %v1627
        %v1633 = vmul.f32 %v1592, %v1629
        %v1634 = vadd.f32 %v1623, %v1632
        %v1635 = vadd.f32 %v1624, %v1633
        %v1636 = vrot.slane %v1526, 3
        %v1637 = vrot.slane %v1526, 4
        %v1640 = vadd.f32 %v909, %v1636
        %v1641 = vadd.f32 %v912, %v1637
        %v1642 = vxor.u32 %v1640, 2147483648
        %v1643 = vxor.u32 %v1641, 2147483648
        %v1644 = vmul.f32 %v1642, 1.442695
        %v1645 = vpow.pop %v1644
        %v1646 = vmul.f32 %v1643, 1.442695
        %v1647 = vpow.pop %v1646
        %v1648 = vadd.f32 %v1645, 1.0
        %v1649 = vadd.f32 %v1647, 1.0
        %v1650 = vrcp.pop %v1648
        %v1651 = vmul.f32 %v1648, %v1650
        %v1652 = vsub.f32 1.0, %v1651
        %v1653 = vmul.f32 %v1650, %v1652
        %v1654 = vadd.f32 %v1650, %v1653
        %vm1655 = vweird.f32 %v1648
        %vm1656 = vweird.f32 %v1650
        %vm1657 = vmor %vm1655, %vm1656
        %v1658 = vsel %vm1657, %v1650, %v1654
        %v1659 = vand.u32 2147483647, %v1648
        %vm1660 = vcmp.eq.f32.partialorder %v1659, 8.507059e+37
        %v1661 = vand.u32 %v1648, 2147483648
        %v1662 = vor.u32 1.1754944e-38, %v1661
        %v1663 = vsel %vm1660, %v1662, %v1658
        %v1664 = vmul.f32 1.0, %v1663
        %v1665 = vrcp.pop %v1649
        %v1666 = vmul.f32 %v1649, %v1665
        %v1667 = vsub.f32 1.0, %v1666
        %v1668 = vmul.f32 %v1665, %v1667
        %v1669 = vadd.f32 %v1665, %v1668
        %vm1670 = vweird.f32 %v1649
        %vm1671 = vweird.f32 %v1665
        %vm1672 = vmor %vm1670, %vm1671
        %v1673 = vsel %vm1672, %v1665, %v1669
        %v1674 = vand.u32 2147483647, %v1649
        %vm1675 = vcmp.eq.f32.partialorder %v1674, 8.507059e+37
        %v1676 = vand.u32 %v1649, 2147483648
        %v1677 = vor.u32 1.1754944e-38, %v1676
        %v1678 = vsel %vm1675, %v1677, %v1673
        %v1679 = vmul.f32 1.0, %v1678
        %v1681 = vrot.slane %v1546, 3
        %v1682 = vrot.slane %v1546, 4
        %v1685 = vadd.f32 %v932, %v1681
        %v1686 = vadd.f32 %v935, %v1682
        %v1687 = vxor.u32 %v1685, 2147483648
        %v1688 = vxor.u32 %v1686, 2147483648
        %v1689 = vmul.f32 %v1687, 1.442695
        %v1690 = vpow.pop %v1689
        %v1691 = vmul.f32 %v1688, 1.442695
        %v1692 = vpow.pop %v1691
        %v1693 = vadd.f32 %v1690, 1.0
        %v1694 = vadd.f32 %v1692, 1.0
        %v1695 = vrcp.pop %v1693
        %v1696 = vmul.f32 %v1693, %v1695
        %v1697 = vsub.f32 1.0, %v1696
        %v1698 = vmul.f32 %v1695, %v1697
        %v1699 = vadd.f32 %v1695, %v1698
        %vm1700 = vweird.f32 %v1693
        %vm1701 = vweird.f32 %v1695
        %vm1702 = vmor %vm1700, %vm1701
        %v1703 = vsel %vm1702, %v1695, %v1699
        %v1704 = vand.u32 2147483647, %v1693
        %vm1705 = vcmp.eq.f32.partialorder %v1704, 8.507059e+37
        %v1706 = vand.u32 %v1693, 2147483648
        %v1707 = vor.u32 1.1754944e-38, %v1706
        %v1708 = vsel %vm1705, %v1707, %v1703
        %v1709 = vmul.f32 1.0, %v1708
        %v1710 = vrcp.pop %v1694
        %v1711 = vmul.f32 %v1694, %v1710
        %v1712 = vsub.f32 1.0, %v1711
        %v1713 = vmul.f32 %v1710, %v1712
        %v1714 = vadd.f32 %v1710, %v1713
        %vm1715 = vweird.f32 %v1694
        %vm1716 = vweird.f32 %v1710
        %vm1717 = vmor %vm1715, %vm1716
        %v1718 = vsel %vm1717, %v1710, %v1714
        %v1719 = vand.u32 2147483647, %v1694
        %vm1720 = vcmp.eq.f32.partialorder %v1719, 8.507059e+37
        %v1721 = vand.u32 %v1694, 2147483648
        %v1722 = vor.u32 1.1754944e-38, %v1721
        %v1723 = vsel %vm1720, %v1722, %v1718
        %v1724 = vmul.f32 1.0, %v1723
        %1725 = vrot.lane.b32.xlu0 %v1681, 64
        %v1726 = vpop.permute.xlu0 %1725
        %1727 = vrot.lane.b32.xlu0 %v1682, 64
        %v1728 = vpop.permute.xlu0 %1727
        %v1731 = vmul.f32 %v1664, %v1726
        %v1732 = vmul.f32 %v1679, %v1728
        %1735 = vrot.lane.b32.xlu0 %v1731, 64
        %v1736 = vpop.permute.xlu0 %1735
        %1737 = vrot.lane.b32.xlu0 %v1732, 64
        %v1738 = vpop.permute.xlu0 %1737
        %v1741 = vadd.f32 %v932, %v1736
        %v1742 = vadd.f32 %v935, %v1738
        %v1743 = vtanh.pop %v1741
        %v1744 = vtanh.pop %v1742
        %v1745 = vsub.f32 1.0, %v1709
        %v1746 = vsub.f32 1.0, %v1724
        %1749 = vrot.lane.b32.xlu0 %v1743, 96
        %v1750 = vpop.permute.xlu0 %1749
        %1751 = vrot.lane.b32.xlu0 %v1744, 96
        %v1752 = vpop.permute.xlu0 %1751
        %v1755 = vmul.f32 %v1745, %v1750
        %v1756 = vmul.f32 %v1746, %v1752
        %v1757 = vrot.slane %v1503, 4
        %v1758 = vrot.slane %v1503, 5
        %1759 = vrot.lane.b32.xlu0 %v1757, 96
        %v1760 = vpop.permute.xlu0 %1759
        %1761 = vrot.lane.b32.xlu0 %v1758, 96
        %v1762 = vpop.permute.xlu0 %1761
        %v1765 = vmul.f32 %v1709, %v1760
        %v1766 = vmul.f32 %v1724, %v1762
        %v1767 = vadd.f32 %v1755, %v1765
        %v1768 = vadd.f32 %v1756, %v1766
        %v1771 = vrot.slane %v1635, 7
        %vm1772 = vcmask 1043459
        %v1773 = vsel %vm1772, %v1771, %v1634
        %1774 = vrot.lane.b32.xlu0 %v1773, 96
        %v1775 = vpop.permute.xlu0 %1774
        %v1779 = vrot.slane %v1767, 3
        %v1780 = vrot.slane %v1768, 2
        %v1781 = vsel %vm1772, %v1780, %v1779
        %1782 = vrot.lane.b32.xlu0 %v1781, 32
        %v1783 = vpop.permute.xlu0 %1782
        %v1785 = vsel %vm1222, %v1775, %v1783
        %v1787 = vrot.slane %v1785, 2
        %v1788 = vsel %vm959, %v1787, 0
        %1790 = vmatpush.msra.mxu0 0.0
        %1791 = vmatpush.msra.mxu0 0.0
        %1792 = vmatpush.msra.mxu0 0.0
        %1793 = vmatpush.msra.mxu0 0.0
        %1794 = vmatpush.msra.mxu0 0.0
        %1795 = vmatpush.msra.mxu0 0.0
        %1796 = vmatpush.msra.mxu0 0.0
        %1797 = vmatpush.msra.mxu0 0.0
        %1798 = vmatpush.msra.mxu0 %v951
        %1799 = vmatpush.msra.mxu0 %v949
        %1800 = vmatpush.msra.mxu0 %v947
        %1801 = vmatpush.msra.mxu0 %v945
        %1802 = vmatpush.msra.mxu0 %v943
        %1803 = vmatpush.msra.mxu0 %v941
        %1804 = vmatpush.msra.mxu0 %v939
        %1805 = vmatpush.msra.mxu0 %v937
        %1806 = vmatmul.f32.gmra.mxu0 %v1788
        %v1807 = vpop.f32.mrf.mxu0
        %v1808 = vadd.f32 %v955, %v1807
        %1809 = vdwg.mxu0
        %1810 = vmatpush.msra.mxu0 0.0
        %1811 = vmatpush.msra.mxu0 0.0
        %1812 = vmatpush.msra.mxu0 0.0
        %1813 = vmatpush.msra.mxu0 0.0
        %1814 = vmatpush.msra.mxu0 0.0
        %1815 = vmatpush.msra.mxu0 0.0
        %1816 = vmatpush.msra.mxu0 0.0
        %1817 = vmatpush.msra.mxu0 0.0
        %1818 = vmatpush.msra.mxu0 %v952
        %1819 = vmatpush.msra.mxu0 %v950
        %1820 = vmatpush.msra.mxu0 %v948
        %1821 = vmatpush.msra.mxu0 %v946
        %1822 = vmatpush.msra.mxu0 %v944
        %1823 = vmatpush.msra.mxu0 %v942
        %1824 = vmatpush.msra.mxu0 %v940
        %1825 = vmatpush.msra.mxu0 %v938
        %1826 = vmatmul.f32.gmra.mxu0 %v1788
        %v1827 = vpop.f32.mrf.mxu0
        %v1828 = vadd.f32 %v956, %v1827
        %1829 = vdwg.mxu0
        %v1831 = vrot.slane %v1808, 5
        %v1832 = vrot.slane %v1808, 6
        %v1835 = vadd.f32 %v909, %v1831
        %v1836 = vadd.f32 %v912, %v1832
        %v1837 = vxor.u32 %v1835, 2147483648
        %v1838 = vxor.u32 %v1836, 2147483648
        %v1839 = vmul.f32 %v1837, 1.442695
        %v1840 = vpow.pop %v1839
        %v1841 = vmul.f32 %v1838, 1.442695
        %v1842 = vpow.pop %v1841
        %v1843 = vadd.f32 %v1840, 1.0
        %v1844 = vadd.f32 %v1842, 1.0
        %v1845 = vrcp.pop %v1843
        %v1846 = vmul.f32 %v1843, %v1845
        %v1847 = vsub.f32 1.0, %v1846
        %v1848 = vmul.f32 %v1845, %v1847
        %v1849 = vadd.f32 %v1845, %v1848
        %vm1850 = vweird.f32 %v1843
        %vm1851 = vweird.f32 %v1845
        %vm1852 = vmor %vm1850, %vm1851
        %v1853 = vsel %vm1852, %v1845, %v1849
        %v1854 = vand.u32 2147483647, %v1843
        %vm1855 = vcmp.eq.f32.partialorder %v1854, 8.507059e+37
        %v1856 = vand.u32 %v1843, 2147483648
        %v1857 = vor.u32 1.1754944e-38, %v1856
        %v1858 = vsel %vm1855, %v1857, %v1853
        %v1859 = vmul.f32 1.0, %v1858
        %v1860 = vrcp.pop %v1844
        %v1861 = vmul.f32 %v1844, %v1860
        %v1862 = vsub.f32 1.0, %v1861
        %v1863 = vmul.f32 %v1860, %v1862
        %v1864 = vadd.f32 %v1860, %v1863
        %vm1865 = vweird.f32 %v1844
        %vm1866 = vweird.f32 %v1860
        %vm1867 = vmor %vm1865, %vm1866
        %v1868 = vsel %vm1867, %v1860, %v1864
        %v1869 = vand.u32 2147483647, %v1844
        %vm1870 = vcmp.eq.f32.partialorder %v1869, 8.507059e+37
        %v1871 = vand.u32 %v1844, 2147483648
        %v1872 = vor.u32 1.1754944e-38, %v1871
        %v1873 = vsel %vm1870, %v1872, %v1868
        %v1874 = vmul.f32 1.0, %v1873
        %1875 = vrot.lane.b32.xlu0 %v1831, 64
        %v1876 = vpop.permute.xlu0 %1875
        %1877 = vrot.lane.b32.xlu0 %v1832, 64
        %v1878 = vpop.permute.xlu0 %1877
        %v1881 = vmul.f32 %v1859, %v1876
        %v1882 = vmul.f32 %v1874, %v1878
        %1885 = vrot.lane.b32.xlu0 %v1881, 64
        %v1886 = vpop.permute.xlu0 %1885
        %1887 = vrot.lane.b32.xlu0 %v1882, 64
        %v1888 = vpop.permute.xlu0 %1887
        %v1891 = vadd.f32 %v909, %v1886
        %v1892 = vadd.f32 %v912, %v1888
        %v1893 = vtanh.pop %v1891
        %v1894 = vtanh.pop %v1892
        %v1895 = vsub.f32 1.0, %v1859
        %v1896 = vsub.f32 1.0, %v1874
        %1899 = vrot.lane.b32.xlu0 %v1893, 96
        %v1900 = vpop.permute.xlu0 %1899
        %1901 = vrot.lane.b32.xlu0 %v1894, 96
        %v1902 = vpop.permute.xlu0 %1901
        %v1905 = vmul.f32 %v1895, %v1900
        %v1906 = vmul.f32 %v1896, %v1902
        %v1907 = vrot.slane %v1785, 7
        %1908 = vrot.lane.b32.xlu0 %v1907, 32
        %v1909 = vpop.permute.xlu0 %1908
        %1910 = vrot.lane.b32.xlu0 %v1785, 32
        %v1911 = vpop.permute.xlu0 %1910
        %v1914 = vmul.f32 %v1859, %v1909
        %v1915 = vmul.f32 %v1874, %v1911
        %v1916 = vadd.f32 %v1905, %v1914
        %v1917 = vadd.f32 %v1906, %v1915
        %v1918 = vrot.slane %v1808, 4
        %v1920 = vadd.f32 %v909, %v1918
        %v1921 = vadd.f32 %v912, %v1831
        %v1922 = vxor.u32 %v1920, 2147483648
        %v1923 = vxor.u32 %v1921, 2147483648
        %v1924 = vmul.f32 %v1922, 1.442695
        %v1925 = vpow.pop %v1924
        %v1926 = vmul.f32 %v1923, 1.442695
        %v1927 = vpow.pop %v1926
        %v1928 = vadd.f32 %v1925, 1.0
        %v1929 = vadd.f32 %v1927, 1.0
        %v1930 = vrcp.pop %v1928
        %v1931 = vmul.f32 %v1928, %v1930
        %v1932 = vsub.f32 1.0, %v1931
        %v1933 = vmul.f32 %v1930, %v1932
        %v1934 = vadd.f32 %v1930, %v1933
        %vm1935 = vweird.f32 %v1928
        %vm1936 = vweird.f32 %v1930
        %vm1937 = vmor %vm1935, %vm1936
        %v1938 = vsel %vm1937, %v1930, %v1934
        %v1939 = vand.u32 2147483647, %v1928
        %vm1940 = vcmp.eq.f32.partialorder %v1939, 8.507059e+37
        %v1941 = vand.u32 %v1928, 2147483648
        %v1942 = vor.u32 1.1754944e-38, %v1941
        %v1943 = vsel %vm1940, %v1942, %v1938
        %v1944 = vmul.f32 1.0, %v1943
        %v1945 = vrcp.pop %v1929
        %v1946 = vmul.f32 %v1929, %v1945
        %v1947 = vsub.f32 1.0, %v1946
        %v1948 = vmul.f32 %v1945, %v1947
        %v1949 = vadd.f32 %v1945, %v1948
        %vm1950 = vweird.f32 %v1929
        %vm1951 = vweird.f32 %v1945
        %vm1952 = vmor %vm1950, %vm1951
        %v1953 = vsel %vm1952, %v1945, %v1949
        %v1954 = vand.u32 2147483647, %v1929
        %vm1955 = vcmp.eq.f32.partialorder %v1954, 8.507059e+37
        %v1956 = vand.u32 %v1929, 2147483648
        %v1957 = vor.u32 1.1754944e-38, %v1956
        %v1958 = vsel %vm1955, %v1957, %v1953
        %v1959 = vmul.f32 1.0, %v1958
        %v1961 = vrot.slane %v1828, 4
        %v1962 = vrot.slane %v1828, 5
        %v1965 = vadd.f32 %v932, %v1961
        %v1966 = vadd.f32 %v935, %v1962
        %v1967 = vxor.u32 %v1965, 2147483648
        %v1968 = vxor.u32 %v1966, 2147483648
        %v1969 = vmul.f32 %v1967, 1.442695
        %v1970 = vpow.pop %v1969
        %v1971 = vmul.f32 %v1968, 1.442695
        %v1972 = vpow.pop %v1971
        %v1973 = vadd.f32 %v1970, 1.0
        %v1974 = vadd.f32 %v1972, 1.0
        %v1975 = vrcp.pop %v1973
        %v1976 = vmul.f32 %v1973, %v1975
        %v1977 = vsub.f32 1.0, %v1976
        %v1978 = vmul.f32 %v1975, %v1977
        %v1979 = vadd.f32 %v1975, %v1978
        %vm1980 = vweird.f32 %v1973
        %vm1981 = vweird.f32 %v1975
        %vm1982 = vmor %vm1980, %vm1981
        %v1983 = vsel %vm1982, %v1975, %v1979
        %v1984 = vand.u32 2147483647, %v1973
        %vm1985 = vcmp.eq.f32.partialorder %v1984, 8.507059e+37
        %v1986 = vand.u32 %v1973, 2147483648
        %v1987 = vor.u32 1.1754944e-38, %v1986
        %v1988 = vsel %vm1985, %v1987, %v1983
        %v1989 = vmul.f32 1.0, %v1988
        %v1990 = vrcp.pop %v1974
        %v1991 = vmul.f32 %v1974, %v1990
        %v1992 = vsub.f32 1.0, %v1991
        %v1993 = vmul.f32 %v1990, %v1992
        %v1994 = vadd.f32 %v1990, %v1993
        %vm1995 = vweird.f32 %v1974
        %vm1996 = vweird.f32 %v1990
        %vm1997 = vmor %vm1995, %vm1996
        %v1998 = vsel %vm1997, %v1990, %v1994
        %v1999 = vand.u32 2147483647, %v1974
        %vm2000 = vcmp.eq.f32.partialorder %v1999, 8.507059e+37
        %v2001 = vand.u32 %v1974, 2147483648
        %v2002 = vor.u32 1.1754944e-38, %v2001
        %v2003 = vsel %vm2000, %v2002, %v1998
        %v2004 = vmul.f32 1.0, %v2003
        %2005 = vrot.lane.b32.xlu0 %v1961, 64
        %v2006 = vpop.permute.xlu0 %2005
        %2007 = vrot.lane.b32.xlu0 %v1962, 64
        %v2008 = vpop.permute.xlu0 %2007
        %v2011 = vmul.f32 %v1944, %v2006
        %v2012 = vmul.f32 %v1959, %v2008
        %2015 = vrot.lane.b32.xlu0 %v2011, 64
        %v2016 = vpop.permute.xlu0 %2015
        %2017 = vrot.lane.b32.xlu0 %v2012, 64
        %v2018 = vpop.permute.xlu0 %2017
        %v2021 = vadd.f32 %v932, %v2016
        %v2022 = vadd.f32 %v935, %v2018
        %v2023 = vtanh.pop %v2021
        %v2024 = vtanh.pop %v2022
        %v2025 = vsub.f32 1.0, %v1989
        %v2026 = vsub.f32 1.0, %v2004
        %2029 = vrot.lane.b32.xlu0 %v2023, 96
        %v2030 = vpop.permute.xlu0 %2029
        %2031 = vrot.lane.b32.xlu0 %v2024, 96
        %v2032 = vpop.permute.xlu0 %2031
        %v2035 = vmul.f32 %v2025, %v2030
        %v2036 = vmul.f32 %v2026, %v2032
        %v2037 = vrot.slane %v1785, 6
        %2038 = vrot.lane.b32.xlu0 %v2037, 96
        %v2039 = vpop.permute.xlu0 %2038
        %2040 = vrot.lane.b32.xlu0 %v1907, 96
        %v2041 = vpop.permute.xlu0 %2040
        %v2044 = vmul.f32 %v1989, %v2039
        %v2045 = vmul.f32 %v2004, %v2041
        %v2046 = vadd.f32 %v2035, %v2044
        %v2047 = vadd.f32 %v2036, %v2045
        %v2050 = vrot.slane %v1917, 7
        %vm2051 = vcmask 1044484
        %v2052 = vsel %vm2051, %v2050, %v1916
        %2053 = vrot.lane.b32.xlu0 %v2052, 96
        %v2054 = vpop.permute.xlu0 %2053
        %v2058 = vrot.slane %v2046, 1
        %v2059 = vsel %vm2051, %v2047, %v2058
        %2060 = vrot.lane.b32.xlu0 %v2059, 32
        %v2061 = vpop.permute.xlu0 %2060
        %v2063 = vsel %vm1222, %v2054, %v2061
        %v2065 = vrot.slane %v2063, 3
        %v2066 = vsel %vm959, %v2065, 0
        %2068 = vmatpush.msra.mxu0 0.0
        %2069 = vmatpush.msra.mxu0 0.0
        %2070 = vmatpush.msra.mxu0 0.0
        %2071 = vmatpush.msra.mxu0 0.0
        %2072 = vmatpush.msra.mxu0 0.0
        %2073 = vmatpush.msra.mxu0 0.0
        %2074 = vmatpush.msra.mxu0 0.0
        %2075 = vmatpush.msra.mxu0 0.0
        %2076 = vmatpush.msra.mxu0 %v951
        %2077 = vmatpush.msra.mxu0 %v949
        %2078 = vmatpush.msra.mxu0 %v947
        %2079 = vmatpush.msra.mxu0 %v945
        %2080 = vmatpush.msra.mxu0 %v943
        %2081 = vmatpush.msra.mxu0 %v941
        %2082 = vmatpush.msra.mxu0 %v939
        %2083 = vmatpush.msra.mxu0 %v937
        %2084 = vmatmul.f32.gmra.mxu0 %v2066
        %v2085 = vpop.f32.mrf.mxu0
        %v2086 = vadd.f32 %v955, %v2085
        %2087 = vdwg.mxu0
        %2088 = vmatpush.msra.mxu0 0.0
        %2089 = vmatpush.msra.mxu0 0.0
        %2090 = vmatpush.msra.mxu0 0.0
        %2091 = vmatpush.msra.mxu0 0.0
        %2092 = vmatpush.msra.mxu0 0.0
        %2093 = vmatpush.msra.mxu0 0.0
        %2094 = vmatpush.msra.mxu0 0.0
        %2095 = vmatpush.msra.mxu0 0.0
        %2096 = vmatpush.msra.mxu0 %v952
        %2097 = vmatpush.msra.mxu0 %v950
        %2098 = vmatpush.msra.mxu0 %v948
        %2099 = vmatpush.msra.mxu0 %v946
        %2100 = vmatpush.msra.mxu0 %v944
        %2101 = vmatpush.msra.mxu0 %v942
        %2102 = vmatpush.msra.mxu0 %v940
        %2103 = vmatpush.msra.mxu0 %v938
        %2104 = vmatmul.f32.gmra.mxu0 %v2066
        %v2105 = vpop.f32.mrf.mxu0
        %v2106 = vadd.f32 %v956, %v2105
        %2107 = vdwg.mxu0
        %v2109 = vrot.slane %v2086, 4
        %v2110 = vrot.slane %v2086, 5
        %v2113 = vadd.f32 %v909, %v2109
        %v2114 = vadd.f32 %v912, %v2110
        %v2115 = vxor.u32 %v2113, 2147483648
        %v2116 = vxor.u32 %v2114, 2147483648
        %v2117 = vmul.f32 %v2115, 1.442695
        %v2118 = vpow.pop %v2117
        %v2119 = vmul.f32 %v2116, 1.442695
        %v2120 = vpow.pop %v2119
        %v2121 = vadd.f32 %v2118, 1.0
        %v2122 = vadd.f32 %v2120, 1.0
        %v2123 = vrcp.pop %v2121
        %v2124 = vmul.f32 %v2121, %v2123
        %v2125 = vsub.f32 1.0, %v2124
        %v2126 = vmul.f32 %v2123, %v2125
        %v2127 = vadd.f32 %v2123, %v2126
        %vm2128 = vweird.f32 %v2121
        %vm2129 = vweird.f32 %v2123
        %vm2130 = vmor %vm2128, %vm2129
        %v2131 = vsel %vm2130, %v2123, %v2127
        %v2132 = vand.u32 2147483647, %v2121
        %vm2133 = vcmp.eq.f32.partialorder %v2132, 8.507059e+37
        %v2134 = vand.u32 %v2121, 2147483648
        %v2135 = vor.u32 1.1754944e-38, %v2134
        %v2136 = vsel %vm2133, %v2135, %v2131
        %v2137 = vmul.f32 1.0, %v2136
        %v2138 = vrcp.pop %v2122
        %v2139 = vmul.f32 %v2122, %v2138
        %v2140 = vsub.f32 1.0, %v2139
        %v2141 = vmul.f32 %v2138, %v2140
        %v2142 = vadd.f32 %v2138, %v2141
        %vm2143 = vweird.f32 %v2122
        %vm2144 = vweird.f32 %v2138
        %vm2145 = vmor %vm2143, %vm2144
        %v2146 = vsel %vm2145, %v2138, %v2142
        %v2147 = vand.u32 2147483647, %v2122
        %vm2148 = vcmp.eq.f32.partialorder %v2147, 8.507059e+37
        %v2149 = vand.u32 %v2122, 2147483648
        %v2150 = vor.u32 1.1754944e-38, %v2149
        %v2151 = vsel %vm2148, %v2150, %v2146
        %v2152 = vmul.f32 1.0, %v2151
        %2153 = vrot.lane.b32.xlu0 %v2109, 64
        %v2154 = vpop.permute.xlu0 %2153
        %2155 = vrot.lane.b32.xlu0 %v2110, 64
        %v2156 = vpop.permute.xlu0 %2155
        %v2159 = vmul.f32 %v2137, %v2154
        %v2160 = vmul.f32 %v2152, %v2156
        %2163 = vrot.lane.b32.xlu0 %v2159, 64
        %v2164 = vpop.permute.xlu0 %2163
        %2165 = vrot.lane.b32.xlu0 %v2160, 64
        %v2166 = vpop.permute.xlu0 %2165
        %v2169 = vadd.f32 %v909, %v2164
        %v2170 = vadd.f32 %v912, %v2166
        %v2171 = vtanh.pop %v2169
        %v2172 = vtanh.pop %v2170
        %v2173 = vsub.f32 1.0, %v2137
        %v2174 = vsub.f32 1.0, %v2152
        %2177 = vrot.lane.b32.xlu0 %v2171, 96
        %v2178 = vpop.permute.xlu0 %2177
        %2179 = vrot.lane.b32.xlu0 %v2172, 96
        %v2180 = vpop.permute.xlu0 %2179
        %v2183 = vmul.f32 %v2173, %v2178
        %v2184 = vmul.f32 %v2174, %v2180
        %v2185 = vrot.slane %v2063, 7
        %2186 = vrot.lane.b32.xlu0 %v2185, 32
        %v2187 = vpop.permute.xlu0 %2186
        %2188 = vrot.lane.b32.xlu0 %v2063, 32
        %v2189 = vpop.permute.xlu0 %2188
        %v2192 = vmul.f32 %v2137, %v2187
        %v2193 = vmul.f32 %v2152, %v2189
        %v2194 = vadd.f32 %v2183, %v2192
        %v2195 = vadd.f32 %v2184, %v2193
        %v2196 = vrot.slane %v2086, 6
        %v2198 = vadd.f32 %v909, %v2110
        %v2199 = vadd.f32 %v912, %v2196
        %v2200 = vxor.u32 %v2198, 2147483648
        %v2201 = vxor.u32 %v2199, 2147483648
        %v2202 = vmul.f32 %v2200, 1.442695
        %v2203 = vpow.pop %v2202
        %v2204 = vmul.f32 %v2201, 1.442695
        %v2205 = vpow.pop %v2204
        %v2206 = vadd.f32 %v2203, 1.0
        %v2207 = vadd.f32 %v2205, 1.0
        %v2208 = vrcp.pop %v2206
        %v2209 = vmul.f32 %v2206, %v2208
        %v2210 = vsub.f32 1.0, %v2209
        %v2211 = vmul.f32 %v2208, %v2210
        %v2212 = vadd.f32 %v2208, %v2211
        %vm2213 = vweird.f32 %v2206
        %vm2214 = vweird.f32 %v2208
        %vm2215 = vmor %vm2213, %vm2214
        %v2216 = vsel %vm2215, %v2208, %v2212
        %v2217 = vand.u32 2147483647, %v2206
        %vm2218 = vcmp.eq.f32.partialorder %v2217, 8.507059e+37
        %v2219 = vand.u32 %v2206, 2147483648
        %v2220 = vor.u32 1.1754944e-38, %v2219
        %v2221 = vsel %vm2218, %v2220, %v2216
        %v2222 = vmul.f32 1.0, %v2221
        %v2223 = vrcp.pop %v2207
        %v2224 = vmul.f32 %v2207, %v2223
        %v2225 = vsub.f32 1.0, %v2224
        %v2226 = vmul.f32 %v2223, %v2225
        %v2227 = vadd.f32 %v2223, %v2226
        %vm2228 = vweird.f32 %v2207
        %vm2229 = vweird.f32 %v2223
        %vm2230 = vmor %vm2228, %vm2229
        %v2231 = vsel %vm2230, %v2223, %v2227
        %v2232 = vand.u32 2147483647, %v2207
        %vm2233 = vcmp.eq.f32.partialorder %v2232, 8.507059e+37
        %v2234 = vand.u32 %v2207, 2147483648
        %v2235 = vor.u32 1.1754944e-38, %v2234
        %v2236 = vsel %vm2233, %v2235, %v2231
        %v2237 = vmul.f32 1.0, %v2236
        %v2239 = vrot.slane %v2106, 5
        %v2240 = vrot.slane %v2106, 6
        %v2243 = vadd.f32 %v932, %v2239
        %v2244 = vadd.f32 %v935, %v2240
        %v2245 = vxor.u32 %v2243, 2147483648
        %v2246 = vxor.u32 %v2244, 2147483648
        %v2247 = vmul.f32 %v2245, 1.442695
        %v2248 = vpow.pop %v2247
        %v2249 = vmul.f32 %v2246, 1.442695
        %v2250 = vpow.pop %v2249
        %v2251 = vadd.f32 %v2248, 1.0
        %v2252 = vadd.f32 %v2250, 1.0
        %v2253 = vrcp.pop %v2251
        %v2254 = vmul.f32 %v2251, %v2253
        %v2255 = vsub.f32 1.0, %v2254
        %v2256 = vmul.f32 %v2253, %v2255
        %v2257 = vadd.f32 %v2253, %v2256
        %vm2258 = vweird.f32 %v2251
        %vm2259 = vweird.f32 %v2253
        %vm2260 = vmor %vm2258, %vm2259
        %v2261 = vsel %vm2260, %v2253, %v2257
        %v2262 = vand.u32 2147483647, %v2251
        %vm2263 = vcmp.eq.f32.partialorder %v2262, 8.507059e+37
        %v2264 = vand.u32 %v2251, 2147483648
        %v2265 = vor.u32 1.1754944e-38, %v2264
        %v2266 = vsel %vm2263, %v2265, %v2261
        %v2267 = vmul.f32 1.0, %v2266
        %v2268 = vrcp.pop %v2252
        %v2269 = vmul.f32 %v2252, %v2268
        %v2270 = vsub.f32 1.0, %v2269
        %v2271 = vmul.f32 %v2268, %v2270
        %v2272 = vadd.f32 %v2268, %v2271
        %vm2273 = vweird.f32 %v2252
        %vm2274 = vweird.f32 %v2268
        %vm2275 = vmor %vm2273, %vm2274
        %v2276 = vsel %vm2275, %v2268, %v2272
        %v2277 = vand.u32 2147483647, %v2252
        %vm2278 = vcmp.eq.f32.partialorder %v2277, 8.507059e+37
        %v2279 = vand.u32 %v2252, 2147483648
        %v2280 = vor.u32 1.1754944e-38, %v2279
        %v2281 = vsel %vm2278, %v2280, %v2276
        %v2282 = vmul.f32 1.0, %v2281
        %2283 = vrot.lane.b32.xlu0 %v2239, 64
        %v2284 = vpop.permute.xlu0 %2283
        %2285 = vrot.lane.b32.xlu0 %v2240, 64
        %v2286 = vpop.permute.xlu0 %2285
        %v2289 = vmul.f32 %v2222, %v2284
        %v2290 = vmul.f32 %v2237, %v2286
        %2293 = vrot.lane.b32.xlu0 %v2289, 64
        %v2294 = vpop.permute.xlu0 %2293
        %2295 = vrot.lane.b32.xlu0 %v2290, 64
        %v2296 = vpop.permute.xlu0 %2295
        %v2299 = vadd.f32 %v932, %v2294
        %v2300 = vadd.f32 %v935, %v2296
        %v2301 = vtanh.pop %v2299
        %v2302 = vtanh.pop %v2300
        %v2303 = vsub.f32 1.0, %v2267
        %v2304 = vsub.f32 1.0, %v2282
        %2307 = vrot.lane.b32.xlu0 %v2301, 96
        %v2308 = vpop.permute.xlu0 %2307
        %2309 = vrot.lane.b32.xlu0 %v2302, 96
        %v2310 = vpop.permute.xlu0 %2309
        %v2313 = vmul.f32 %v2303, %v2308
        %v2314 = vmul.f32 %v2304, %v2310
        %v2315 = vrot.slane %v2063, 1
        %2316 = vrot.lane.b32.xlu0 %v2063, 96
        %v2317 = vpop.permute.xlu0 %2316
        %2318 = vrot.lane.b32.xlu0 %v2315, 96
        %v2319 = vpop.permute.xlu0 %2318
        %v2322 = vmul.f32 %v2267, %v2317
        %v2323 = vmul.f32 %v2282, %v2319
        %v2324 = vadd.f32 %v2313, %v2322
        %v2325 = vadd.f32 %v2314, %v2323
        %v2328 = vrot.slane %v2195, 7
        %vm2329 = vcmask 1045509
        %v2330 = vsel %vm2329, %v2328, %v2194
        %2331 = vrot.lane.b32.xlu0 %v2330, 96
        %v2332 = vpop.permute.xlu0 %2331
        %v2336 = vrot.slane %v2324, 7
        %v2337 = vrot.slane %v2325, 6
        %v2338 = vsel %vm2329, %v2337, %v2336
        %2339 = vrot.lane.b32.xlu0 %v2338, 32
        %v2340 = vpop.permute.xlu0 %2339
        %v2342 = vsel %vm1222, %v2332, %v2340
        %v2344 = vrot.slane %v2342, 4
        %v2345 = vsel %vm959, %v2344, 0
        %2347 = vmatpush.msra.mxu0 0.0
        %2348 = vmatpush.msra.mxu0 0.0
        %2349 = vmatpush.msra.mxu0 0.0
        %2350 = vmatpush.msra.mxu0 0.0
        %2351 = vmatpush.msra.mxu0 0.0
        %2352 = vmatpush.msra.mxu0 0.0
        %2353 = vmatpush.msra.mxu0 0.0
        %2354 = vmatpush.msra.mxu0 0.0
        %2355 = vmatpush.msra.mxu0 %v951
        %2356 = vmatpush.msra.mxu0 %v949
        %2357 = vmatpush.msra.mxu0 %v947
        %2358 = vmatpush.msra.mxu0 %v945
        %2359 = vmatpush.msra.mxu0 %v943
        %2360 = vmatpush.msra.mxu0 %v941
        %2361 = vmatpush.msra.mxu0 %v939
        %2362 = vmatpush.msra.mxu0 %v937
        %2363 = vmatmul.f32.gmra.mxu0 %v2345
        %v2364 = vpop.f32.mrf.mxu0
        %v2365 = vadd.f32 %v955, %v2364
        %2366 = vdwg.mxu0
        %2367 = vmatpush.msra.mxu0 0.0
        %2368 = vmatpush.msra.mxu0 0.0
        %2369 = vmatpush.msra.mxu0 0.0
        %2370 = vmatpush.msra.mxu0 0.0
        %2371 = vmatpush.msra.mxu0 0.0
        %2372 = vmatpush.msra.mxu0 0.0
        %2373 = vmatpush.msra.mxu0 0.0
        %2374 = vmatpush.msra.mxu0 0.0
        %2375 = vmatpush.msra.mxu0 %v952
        %2376 = vmatpush.msra.mxu0 %v950
        %2377 = vmatpush.msra.mxu0 %v948
        %2378 = vmatpush.msra.mxu0 %v946
        %2379 = vmatpush.msra.mxu0 %v944
        %2380 = vmatpush.msra.mxu0 %v942
        %2381 = vmatpush.msra.mxu0 %v940
        %2382 = vmatpush.msra.mxu0 %v938
        %2383 = vmatmul.f32.gmra.mxu0 %v2345
        %v2384 = vpop.f32.mrf.mxu0
        %v2385 = vadd.f32 %v956, %v2384
        %2386 = vdwg.mxu0
        %v2388 = vrot.slane %v2365, 3
        %v2389 = vrot.slane %v2365, 4
        %v2392 = vadd.f32 %v909, %v2388
        %v2393 = vadd.f32 %v912, %v2389
        %v2394 = vxor.u32 %v2392, 2147483648
        %v2395 = vxor.u32 %v2393, 2147483648
        %v2396 = vmul.f32 %v2394, 1.442695
        %v2397 = vpow.pop %v2396
        %v2398 = vmul.f32 %v2395, 1.442695
        %v2399 = vpow.pop %v2398
        %v2400 = vadd.f32 %v2397, 1.0
        %v2401 = vadd.f32 %v2399, 1.0
        %v2402 = vrcp.pop %v2400
        %v2403 = vmul.f32 %v2400, %v2402
        %v2404 = vsub.f32 1.0, %v2403
        %v2405 = vmul.f32 %v2402, %v2404
        %v2406 = vadd.f32 %v2402, %v2405
        %vm2407 = vweird.f32 %v2400
        %vm2408 = vweird.f32 %v2402
        %vm2409 = vmor %vm2407, %vm2408
        %v2410 = vsel %vm2409, %v2402, %v2406
        %v2411 = vand.u32 2147483647, %v2400
        %vm2412 = vcmp.eq.f32.partialorder %v2411, 8.507059e+37
        %v2413 = vand.u32 %v2400, 2147483648
        %v2414 = vor.u32 1.1754944e-38, %v2413
        %v2415 = vsel %vm2412, %v2414, %v2410
        %v2416 = vmul.f32 1.0, %v2415
        %v2417 = vrcp.pop %v2401
        %v2418 = vmul.f32 %v2401, %v2417
        %v2419 = vsub.f32 1.0, %v2418
        %v2420 = vmul.f32 %v2417, %v2419
        %v2421 = vadd.f32 %v2417, %v2420
        %vm2422 = vweird.f32 %v2401
        %vm2423 = vweird.f32 %v2417
        %vm2424 = vmor %vm2422, %vm2423
        %v2425 = vsel %vm2424, %v2417, %v2421
        %v2426 = vand.u32 2147483647, %v2401
        %vm2427 = vcmp.eq.f32.partialorder %v2426, 8.507059e+37
        %v2428 = vand.u32 %v2401, 2147483648
        %v2429 = vor.u32 1.1754944e-38, %v2428
        %v2430 = vsel %vm2427, %v2429, %v2425
        %v2431 = vmul.f32 1.0, %v2430
        %2432 = vrot.lane.b32.xlu0 %v2388, 64
        %v2433 = vpop.permute.xlu0 %2432
        %2434 = vrot.lane.b32.xlu0 %v2389, 64
        %v2435 = vpop.permute.xlu0 %2434
        %v2438 = vmul.f32 %v2416, %v2433
        %v2439 = vmul.f32 %v2431, %v2435
        %2442 = vrot.lane.b32.xlu0 %v2438, 64
        %v2443 = vpop.permute.xlu0 %2442
        %2444 = vrot.lane.b32.xlu0 %v2439, 64
        %v2445 = vpop.permute.xlu0 %2444
        %v2448 = vadd.f32 %v909, %v2443
        %v2449 = vadd.f32 %v912, %v2445
        %v2450 = vtanh.pop %v2448
        %v2451 = vtanh.pop %v2449
        %v2452 = vsub.f32 1.0, %v2416
        %v2453 = vsub.f32 1.0, %v2431
        %2456 = vrot.lane.b32.xlu0 %v2450, 96
        %v2457 = vpop.permute.xlu0 %2456
        %2458 = vrot.lane.b32.xlu0 %v2451, 96
        %v2459 = vpop.permute.xlu0 %2458
        %v2462 = vmul.f32 %v2452, %v2457
        %v2463 = vmul.f32 %v2453, %v2459
        %v2464 = vrot.slane %v2342, 7
        %2465 = vrot.lane.b32.xlu0 %v2464, 32
        %v2466 = vpop.permute.xlu0 %2465
        %2467 = vrot.lane.b32.xlu0 %v2342, 32
        %v2468 = vpop.permute.xlu0 %2467
        %v2471 = vmul.f32 %v2416, %v2466
        %v2472 = vmul.f32 %v2431, %v2468
        %v2473 = vadd.f32 %v2462, %v2471
        %v2474 = vadd.f32 %v2463, %v2472
        %v2475 = vrot.slane %v2365, 6
        %v2476 = vrot.slane %v2365, 7
        %v2479 = vadd.f32 %v909, %v2475
        %v2480 = vadd.f32 %v912, %v2476
        %v2481 = vxor.u32 %v2479, 2147483648
        %v2482 = vxor.u32 %v2480, 2147483648
        %v2483 = vmul.f32 %v2481, 1.442695
        %v2484 = vpow.pop %v2483
        %v2485 = vmul.f32 %v2482, 1.442695
        %v2486 = vpow.pop %v2485
        %v2487 = vadd.f32 %v2484, 1.0
        %v2488 = vadd.f32 %v2486, 1.0
        %v2489 = vrcp.pop %v2487
        %v2490 = vmul.f32 %v2487, %v2489
        %v2491 = vsub.f32 1.0, %v2490
        %v2492 = vmul.f32 %v2489, %v2491
        %v2493 = vadd.f32 %v2489, %v2492
        %vm2494 = vweird.f32 %v2487
        %vm2495 = vweird.f32 %v2489
        %vm2496 = vmor %vm2494, %vm2495
        %v2497 = vsel %vm2496, %v2489, %v2493
        %v2498 = vand.u32 2147483647, %v2487
        %vm2499 = vcmp.eq.f32.partialorder %v2498, 8.507059e+37
        %v2500 = vand.u32 %v2487, 2147483648
        %v2501 = vor.u32 1.1754944e-38, %v2500
        %v2502 = vsel %vm2499, %v2501, %v2497
        %v2503 = vmul.f32 1.0, %v2502
        %v2504 = vrcp.pop %v2488
        %v2505 = vmul.f32 %v2488, %v2504
        %v2506 = vsub.f32 1.0, %v2505
        %v2507 = vmul.f32 %v2504, %v2506
        %v2508 = vadd.f32 %v2504, %v2507
        %vm2509 = vweird.f32 %v2488
        %vm2510 = vweird.f32 %v2504
        %vm2511 = vmor %vm2509, %vm2510
        %v2512 = vsel %vm2511, %v2504, %v2508
        %v2513 = vand.u32 2147483647, %v2488
        %vm2514 = vcmp.eq.f32.partialorder %v2513, 8.507059e+37
        %v2515 = vand.u32 %v2488, 2147483648
        %v2516 = vor.u32 1.1754944e-38, %v2515
        %v2517 = vsel %vm2514, %v2516, %v2512
        %v2518 = vmul.f32 1.0, %v2517
        %v2520 = vrot.slane %v2385, 6
        %v2521 = vrot.slane %v2385, 7
        %v2524 = vadd.f32 %v932, %v2520
        %v2525 = vadd.f32 %v935, %v2521
        %v2526 = vxor.u32 %v2524, 2147483648
        %v2527 = vxor.u32 %v2525, 2147483648
        %v2528 = vmul.f32 %v2526, 1.442695
        %v2529 = vpow.pop %v2528
        %v2530 = vmul.f32 %v2527, 1.442695
        %v2531 = vpow.pop %v2530
        %v2532 = vadd.f32 %v2529, 1.0
        %v2533 = vadd.f32 %v2531, 1.0
        %v2534 = vrcp.pop %v2532
        %v2535 = vmul.f32 %v2532, %v2534
        %v2536 = vsub.f32 1.0, %v2535
        %v2537 = vmul.f32 %v2534, %v2536
        %v2538 = vadd.f32 %v2534, %v2537
        %vm2539 = vweird.f32 %v2532
        %vm2540 = vweird.f32 %v2534
        %vm2541 = vmor %vm2539, %vm2540
        %v2542 = vsel %vm2541, %v2534, %v2538
        %v2543 = vand.u32 2147483647, %v2532
        %vm2544 = vcmp.eq.f32.partialorder %v2543, 8.507059e+37
        %v2545 = vand.u32 %v2532, 2147483648
        %v2546 = vor.u32 1.1754944e-38, %v2545
        %v2547 = vsel %vm2544, %v2546, %v2542
        %v2548 = vmul.f32 1.0, %v2547
        %v2549 = vrcp.pop %v2533
        %v2550 = vmul.f32 %v2533, %v2549
        %v2551 = vsub.f32 1.0, %v2550
        %v2552 = vmul.f32 %v2549, %v2551
        %v2553 = vadd.f32 %v2549, %v2552
        %vm2554 = vweird.f32 %v2533
        %vm2555 = vweird.f32 %v2549
        %vm2556 = vmor %vm2554, %vm2555
        %v2557 = vsel %vm2556, %v2549, %v2553
        %v2558 = vand.u32 2147483647, %v2533
        %vm2559 = vcmp.eq.f32.partialorder %v2558, 8.507059e+37
        %v2560 = vand.u32 %v2533, 2147483648
        %v2561 = vor.u32 1.1754944e-38, %v2560
        %v2562 = vsel %vm2559, %v2561, %v2557
        %v2563 = vmul.f32 1.0, %v2562
        %2564 = vrot.lane.b32.xlu0 %v2520, 64
        %v2565 = vpop.permute.xlu0 %2564
        %2566 = vrot.lane.b32.xlu0 %v2521, 64
        %v2567 = vpop.permute.xlu0 %2566
        %v2570 = vmul.f32 %v2503, %v2565
        %v2571 = vmul.f32 %v2518, %v2567
        %2574 = vrot.lane.b32.xlu0 %v2570, 64
        %v2575 = vpop.permute.xlu0 %2574
        %2576 = vrot.lane.b32.xlu0 %v2571, 64
        %v2577 = vpop.permute.xlu0 %2576
        %v2580 = vadd.f32 %v932, %v2575
        %v2581 = vadd.f32 %v935, %v2577
        %v2582 = vtanh.pop %v2580
        %v2583 = vtanh.pop %v2581
        %v2584 = vsub.f32 1.0, %v2548
        %v2585 = vsub.f32 1.0, %v2563
        %2588 = vrot.lane.b32.xlu0 %v2582, 96
        %v2589 = vpop.permute.xlu0 %2588
        %2590 = vrot.lane.b32.xlu0 %v2583, 96
        %v2591 = vpop.permute.xlu0 %2590
        %v2594 = vmul.f32 %v2584, %v2589
        %v2595 = vmul.f32 %v2585, %v2591
        %v2596 = vrot.slane %v2342, 2
        %v2597 = vrot.slane %v2342, 3
        %2598 = vrot.lane.b32.xlu0 %v2596, 96
        %v2599 = vpop.permute.xlu0 %2598
        %2600 = vrot.lane.b32.xlu0 %v2597, 96
        %v2601 = vpop.permute.xlu0 %2600
        %v2604 = vmul.f32 %v2548, %v2599
        %v2605 = vmul.f32 %v2563, %v2601
        %v2606 = vadd.f32 %v2594, %v2604
        %v2607 = vadd.f32 %v2595, %v2605
        %v2610 = vrot.slane %v2474, 7
        %vm2611 = vcmask 1046534
        %v2612 = vsel %vm2611, %v2610, %v2473
        %2613 = vrot.lane.b32.xlu0 %v2612, 96
        %v2614 = vpop.permute.xlu0 %2613
        %v2618 = vrot.slane %v2606, 5
        %v2619 = vrot.slane %v2607, 4
        %v2620 = vsel %vm2611, %v2619, %v2618
        %2621 = vrot.lane.b32.xlu0 %v2620, 32
        %v2622 = vpop.permute.xlu0 %2621
        %v2624 = vsel %vm1222, %v2614, %v2622
        %v2626 = vrot.slane %v2624, 5
        %v2627 = vsel %vm959, %v2626, 0
        %2629 = vmatpush.msra.mxu0 0.0
        %2630 = vmatpush.msra.mxu0 0.0
        %2631 = vmatpush.msra.mxu0 0.0
        %2632 = vmatpush.msra.mxu0 0.0
        %2633 = vmatpush.msra.mxu0 0.0
        %2634 = vmatpush.msra.mxu0 0.0
        %2635 = vmatpush.msra.mxu0 0.0
        %2636 = vmatpush.msra.mxu0 0.0
        %2637 = vmatpush.msra.mxu0 %v951
        %2638 = vmatpush.msra.mxu0 %v949
        %2639 = vmatpush.msra.mxu0 %v947
        %2640 = vmatpush.msra.mxu0 %v945
        %2641 = vmatpush.msra.mxu0 %v943
        %2642 = vmatpush.msra.mxu0 %v941
        %2643 = vmatpush.msra.mxu0 %v939
        %2644 = vmatpush.msra.mxu0 %v937
        %2645 = vmatmul.f32.gmra.mxu0 %v2627
        %v2646 = vpop.f32.mrf.mxu0
        %v2647 = vadd.f32 %v955, %v2646
        %2648 = vdwg.mxu0
        %2649 = vmatpush.msra.mxu0 0.0
        %2650 = vmatpush.msra.mxu0 0.0
        %2651 = vmatpush.msra.mxu0 0.0
        %2652 = vmatpush.msra.mxu0 0.0
        %2653 = vmatpush.msra.mxu0 0.0
        %2654 = vmatpush.msra.mxu0 0.0
        %2655 = vmatpush.msra.mxu0 0.0
        %2656 = vmatpush.msra.mxu0 0.0
        %2657 = vmatpush.msra.mxu0 %v952
        %2658 = vmatpush.msra.mxu0 %v950
        %2659 = vmatpush.msra.mxu0 %v948
        %2660 = vmatpush.msra.mxu0 %v946
        %2661 = vmatpush.msra.mxu0 %v944
        %2662 = vmatpush.msra.mxu0 %v942
        %2663 = vmatpush.msra.mxu0 %v940
        %2664 = vmatpush.msra.mxu0 %v938
        %2665 = vmatmul.f32.gmra.mxu0 %v2627
        %v2666 = vpop.f32.mrf.mxu0
        %v2667 = vadd.f32 %v956, %v2666
        %2668 = vdwg.mxu0
        %v2670 = vrot.slane %v2647, 2
        %v2671 = vrot.slane %v2647, 3
        %v2674 = vadd.f32 %v909, %v2670
        %v2675 = vadd.f32 %v912, %v2671
        %v2676 = vxor.u32 %v2674, 2147483648
        %v2677 = vxor.u32 %v2675, 2147483648
        %v2678 = vmul.f32 %v2676, 1.442695
        %v2679 = vpow.pop %v2678
        %v2680 = vmul.f32 %v2677, 1.442695
        %v2681 = vpow.pop %v2680
        %v2682 = vadd.f32 %v2679, 1.0
        %v2683 = vadd.f32 %v2681, 1.0
        %v2684 = vrcp.pop %v2682
        %v2685 = vmul.f32 %v2682, %v2684
        %v2686 = vsub.f32 1.0, %v2685
        %v2687 = vmul.f32 %v2684, %v2686
        %v2688 = vadd.f32 %v2684, %v2687
        %vm2689 = vweird.f32 %v2682
        %vm2690 = vweird.f32 %v2684
        %vm2691 = vmor %vm2689, %vm2690
        %v2692 = vsel %vm2691, %v2684, %v2688
        %v2693 = vand.u32 2147483647, %v2682
        %vm2694 = vcmp.eq.f32.partialorder %v2693, 8.507059e+37
        %v2695 = vand.u32 %v2682, 2147483648
        %v2696 = vor.u32 1.1754944e-38, %v2695
        %v2697 = vsel %vm2694, %v2696, %v2692
        %v2698 = vmul.f32 1.0, %v2697
        %v2699 = vrcp.pop %v2683
        %v2700 = vmul.f32 %v2683, %v2699
        %v2701 = vsub.f32 1.0, %v2700
        %v2702 = vmul.f32 %v2699, %v2701
        %v2703 = vadd.f32 %v2699, %v2702
        %vm2704 = vweird.f32 %v2683
        %vm2705 = vweird.f32 %v2699
        %vm2706 = vmor %vm2704, %vm2705
        %v2707 = vsel %vm2706, %v2699, %v2703
        %v2708 = vand.u32 2147483647, %v2683
        %vm2709 = vcmp.eq.f32.partialorder %v2708, 8.507059e+37
        %v2710 = vand.u32 %v2683, 2147483648
        %v2711 = vor.u32 1.1754944e-38, %v2710
        %v2712 = vsel %vm2709, %v2711, %v2707
        %v2713 = vmul.f32 1.0, %v2712
        %2714 = vrot.lane.b32.xlu0 %v2670, 64
        %v2715 = vpop.permute.xlu0 %2714
        %2716 = vrot.lane.b32.xlu0 %v2671, 64
        %v2717 = vpop.permute.xlu0 %2716
        %v2720 = vmul.f32 %v2698, %v2715
        %v2721 = vmul.f32 %v2713, %v2717
        %2724 = vrot.lane.b32.xlu0 %v2720, 64
        %v2725 = vpop.permute.xlu0 %2724
        %2726 = vrot.lane.b32.xlu0 %v2721, 64
        %v2727 = vpop.permute.xlu0 %2726
        %v2730 = vadd.f32 %v909, %v2725
        %v2731 = vadd.f32 %v912, %v2727
        %v2732 = vtanh.pop %v2730
        %v2733 = vtanh.pop %v2731
        %v2734 = vsub.f32 1.0, %v2698
        %v2735 = vsub.f32 1.0, %v2713
        %2738 = vrot.lane.b32.xlu0 %v2732, 96
        %v2739 = vpop.permute.xlu0 %2738
        %2740 = vrot.lane.b32.xlu0 %v2733, 96
        %v2741 = vpop.permute.xlu0 %2740
        %v2744 = vmul.f32 %v2734, %v2739
        %v2745 = vmul.f32 %v2735, %v2741
        %v2746 = vrot.slane %v2624, 7
        %2747 = vrot.lane.b32.xlu0 %v2746, 32
        %v2748 = vpop.permute.xlu0 %2747
        %2749 = vrot.lane.b32.xlu0 %v2624, 32
        %v2750 = vpop.permute.xlu0 %2749
        %v2753 = vmul.f32 %v2698, %v2748
        %v2754 = vmul.f32 %v2713, %v2750
        %v2755 = vadd.f32 %v2744, %v2753
        %v2756 = vadd.f32 %v2745, %v2754
        %v2757 = vrot.slane %v2647, 7
        %v2760 = vadd.f32 %v909, %v2757
        %v2761 = vadd.f32 %v912, %v2647
        %v2762 = vxor.u32 %v2760, 2147483648
        %v2763 = vxor.u32 %v2761, 2147483648
        %v2764 = vmul.f32 %v2762, 1.442695
        %v2765 = vpow.pop %v2764
        %v2766 = vmul.f32 %v2763, 1.442695
        %v2767 = vpow.pop %v2766
        %v2768 = vadd.f32 %v2765, 1.0
        %v2769 = vadd.f32 %v2767, 1.0
        %v2770 = vrcp.pop %v2768
        %v2771 = vmul.f32 %v2768, %v2770
        %v2772 = vsub.f32 1.0, %v2771
        %v2773 = vmul.f32 %v2770, %v2772
        %v2774 = vadd.f32 %v2770, %v2773
        %vm2775 = vweird.f32 %v2768
        %vm2776 = vweird.f32 %v2770
        %vm2777 = vmor %vm2775, %vm2776
        %v2778 = vsel %vm2777, %v2770, %v2774
        %v2779 = vand.u32 2147483647, %v2768
        %vm2780 = vcmp.eq.f32.partialorder %v2779, 8.507059e+37
        %v2781 = vand.u32 %v2768, 2147483648
        %v2782 = vor.u32 1.1754944e-38, %v2781
        %v2783 = vsel %vm2780, %v2782, %v2778
        %v2784 = vmul.f32 1.0, %v2783
        %v2785 = vrcp.pop %v2769
        %v2786 = vmul.f32 %v2769, %v2785
        %v2787 = vsub.f32 1.0, %v2786
        %v2788 = vmul.f32 %v2785, %v2787
        %v2789 = vadd.f32 %v2785, %v2788
        %vm2790 = vweird.f32 %v2769
        %vm2791 = vweird.f32 %v2785
        %vm2792 = vmor %vm2790, %vm2791
        %v2793 = vsel %vm2792, %v2785, %v2789
        %v2794 = vand.u32 2147483647, %v2769
        %vm2795 = vcmp.eq.f32.partialorder %v2794, 8.507059e+37
        %v2796 = vand.u32 %v2769, 2147483648
        %v2797 = vor.u32 1.1754944e-38, %v2796
        %v2798 = vsel %vm2795, %v2797, %v2793
        %v2799 = vmul.f32 1.0, %v2798
        %v2801 = vrot.slane %v2667, 7
        %v2804 = vadd.f32 %v932, %v2801
        %v2805 = vadd.f32 %v935, %v2667
        %v2806 = vxor.u32 %v2804, 2147483648
        %v2807 = vxor.u32 %v2805, 2147483648
        %v2808 = vmul.f32 %v2806, 1.442695
        %v2809 = vpow.pop %v2808
        %v2810 = vmul.f32 %v2807, 1.442695
        %v2811 = vpow.pop %v2810
        %v2812 = vadd.f32 %v2809, 1.0
        %v2813 = vadd.f32 %v2811, 1.0
        %v2814 = vrcp.pop %v2812
        %v2815 = vmul.f32 %v2812, %v2814
        %v2816 = vsub.f32 1.0, %v2815
        %v2817 = vmul.f32 %v2814, %v2816
        %v2818 = vadd.f32 %v2814, %v2817
        %vm2819 = vweird.f32 %v2812
        %vm2820 = vweird.f32 %v2814
        %vm2821 = vmor %vm2819, %vm2820
        %v2822 = vsel %vm2821, %v2814, %v2818
        %v2823 = vand.u32 2147483647, %v2812
        %vm2824 = vcmp.eq.f32.partialorder %v2823, 8.507059e+37
        %v2825 = vand.u32 %v2812, 2147483648
        %v2826 = vor.u32 1.1754944e-38, %v2825
        %v2827 = vsel %vm2824, %v2826, %v2822
        %v2828 = vmul.f32 1.0, %v2827
        %v2829 = vrcp.pop %v2813
        %v2830 = vmul.f32 %v2813, %v2829
        %v2831 = vsub.f32 1.0, %v2830
        %v2832 = vmul.f32 %v2829, %v2831
        %v2833 = vadd.f32 %v2829, %v2832
        %vm2834 = vweird.f32 %v2813
        %vm2835 = vweird.f32 %v2829
        %vm2836 = vmor %vm2834, %vm2835
        %v2837 = vsel %vm2836, %v2829, %v2833
        %v2838 = vand.u32 2147483647, %v2813
        %vm2839 = vcmp.eq.f32.partialorder %v2838, 8.507059e+37
        %v2840 = vand.u32 %v2813, 2147483648
        %v2841 = vor.u32 1.1754944e-38, %v2840
        %v2842 = vsel %vm2839, %v2841, %v2837
        %v2843 = vmul.f32 1.0, %v2842
        %2844 = vrot.lane.b32.xlu0 %v2801, 64
        %v2845 = vpop.permute.xlu0 %2844
        %2846 = vrot.lane.b32.xlu0 %v2667, 64
        %v2847 = vpop.permute.xlu0 %2846
        %v2850 = vmul.f32 %v2784, %v2845
        %v2851 = vmul.f32 %v2799, %v2847
        %2854 = vrot.lane.b32.xlu0 %v2850, 64
        %v2855 = vpop.permute.xlu0 %2854
        %2856 = vrot.lane.b32.xlu0 %v2851, 64
        %v2857 = vpop.permute.xlu0 %2856
        %v2860 = vadd.f32 %v932, %v2855
        %v2861 = vadd.f32 %v935, %v2857
        %v2862 = vtanh.pop %v2860
        %v2863 = vtanh.pop %v2861
        %v2864 = vsub.f32 1.0, %v2828
        %v2865 = vsub.f32 1.0, %v2843
        %2868 = vrot.lane.b32.xlu0 %v2862, 96
        %v2869 = vpop.permute.xlu0 %2868
        %2870 = vrot.lane.b32.xlu0 %v2863, 96
        %v2871 = vpop.permute.xlu0 %2870
        %v2874 = vmul.f32 %v2864, %v2869
        %v2875 = vmul.f32 %v2865, %v2871
        %v2876 = vrot.slane %v2624, 4
        %2877 = vrot.lane.b32.xlu0 %v2876, 96
        %v2878 = vpop.permute.xlu0 %2877
        %2879 = vrot.lane.b32.xlu0 %v2626, 96
        %v2880 = vpop.permute.xlu0 %2879
        %v2883 = vmul.f32 %v2828, %v2878
        %v2884 = vmul.f32 %v2843, %v2880
        %v2885 = vadd.f32 %v2874, %v2883
        %v2886 = vadd.f32 %v2875, %v2884
        %v2889 = vrot.slane %v2756, 7
        %vm2890 = vcmask 1047559
        %v2891 = vsel %vm2890, %v2889, %v2755
        %2892 = vrot.lane.b32.xlu0 %v2891, 96
        %v2893 = vpop.permute.xlu0 %2892
        %v2897 = vrot.slane %v2885, 3
        %v2898 = vrot.slane %v2886, 2
        %v2899 = vsel %vm2890, %v2898, %v2897
        %2900 = vrot.lane.b32.xlu0 %v2899, 32
        %v2901 = vpop.permute.xlu0 %2900
        %v2903 = vsel %vm1222, %v2893, %v2901
        %v2905 = vrot.slane %v2903, 6
        %v2906 = vsel %vm959, %v2905, 0
        %2908 = vmatpush.msra.mxu0 0.0
        %2909 = vmatpush.msra.mxu0 0.0
        %2910 = vmatpush.msra.mxu0 0.0
        %2911 = vmatpush.msra.mxu0 0.0
        %2912 = vmatpush.msra.mxu0 0.0
        %2913 = vmatpush.msra.mxu0 0.0
        %2914 = vmatpush.msra.mxu0 0.0
        %2915 = vmatpush.msra.mxu0 0.0
        %2916 = vmatpush.msra.mxu0 %v951
        %2917 = vmatpush.msra.mxu0 %v949
        %2918 = vmatpush.msra.mxu0 %v947
        %2919 = vmatpush.msra.mxu0 %v945
        %2920 = vmatpush.msra.mxu0 %v943
        %2921 = vmatpush.msra.mxu0 %v941
        %2922 = vmatpush.msra.mxu0 %v939
        %2923 = vmatpush.msra.mxu0 %v937
        %2924 = vmatmul.f32.gmra.mxu0 %v2906
        %v2925 = vpop.f32.mrf.mxu0
        %v2926 = vadd.f32 %v955, %v2925
        %2927 = vdwg.mxu0
        %2928 = vmatpush.msra.mxu0 0.0
        %2929 = vmatpush.msra.mxu0 0.0
        %2930 = vmatpush.msra.mxu0 0.0
        %2931 = vmatpush.msra.mxu0 0.0
        %2932 = vmatpush.msra.mxu0 0.0
        %2933 = vmatpush.msra.mxu0 0.0
        %2934 = vmatpush.msra.mxu0 0.0
        %2935 = vmatpush.msra.mxu0 0.0
        %2936 = vmatpush.msra.mxu0 %v952
        %2937 = vmatpush.msra.mxu0 %v950
        %2938 = vmatpush.msra.mxu0 %v948
        %2939 = vmatpush.msra.mxu0 %v946
        %2940 = vmatpush.msra.mxu0 %v944
        %2941 = vmatpush.msra.mxu0 %v942
        %2942 = vmatpush.msra.mxu0 %v940
        %2943 = vmatpush.msra.mxu0 %v938
        %2944 = vmatmul.f32.gmra.mxu0 %v2906
        %v2945 = vpop.f32.mrf.mxu0
        %v2946 = vadd.f32 %v956, %v2945
        %2947 = vdwg.mxu0
        %v2949 = vrot.slane %v2926, 1
        %v2950 = vrot.slane %v2926, 2
        %v2953 = vadd.f32 %v909, %v2949
        %v2954 = vadd.f32 %v912, %v2950
        %v2955 = vxor.u32 %v2953, 2147483648
        %v2956 = vxor.u32 %v2954, 2147483648
        %v2957 = vmul.f32 %v2955, 1.442695
        %v2958 = vpow.pop %v2957
        %v2959 = vmul.f32 %v2956, 1.442695
        %v2960 = vpow.pop %v2959
        %v2961 = vadd.f32 %v2958, 1.0
        %v2962 = vadd.f32 %v2960, 1.0
        %v2963 = vrcp.pop %v2961
        %v2964 = vmul.f32 %v2961, %v2963
        %v2965 = vsub.f32 1.0, %v2964
        %v2966 = vmul.f32 %v2963, %v2965
        %v2967 = vadd.f32 %v2963, %v2966
        %vm2968 = vweird.f32 %v2961
        %vm2969 = vweird.f32 %v2963
        %vm2970 = vmor %vm2968, %vm2969
        %v2971 = vsel %vm2970, %v2963, %v2967
        %v2972 = vand.u32 2147483647, %v2961
        %vm2973 = vcmp.eq.f32.partialorder %v2972, 8.507059e+37
        %v2974 = vand.u32 %v2961, 2147483648
        %v2975 = vor.u32 1.1754944e-38, %v2974
        %v2976 = vsel %vm2973, %v2975, %v2971
        %v2977 = vmul.f32 1.0, %v2976
        %v2978 = vrcp.pop %v2962
        %v2979 = vmul.f32 %v2962, %v2978
        %v2980 = vsub.f32 1.0, %v2979
        %v2981 = vmul.f32 %v2978, %v2980
        %v2982 = vadd.f32 %v2978, %v2981
        %vm2983 = vweird.f32 %v2962
        %vm2984 = vweird.f32 %v2978
        %vm2985 = vmor %vm2983, %vm2984
        %v2986 = vsel %vm2985, %v2978, %v2982
        %v2987 = vand.u32 2147483647, %v2962
        %vm2988 = vcmp.eq.f32.partialorder %v2987, 8.507059e+37
        %v2989 = vand.u32 %v2962, 2147483648
        %v2990 = vor.u32 1.1754944e-38, %v2989
        %v2991 = vsel %vm2988, %v2990, %v2986
        %v2992 = vmul.f32 1.0, %v2991
        %2993 = vrot.lane.b32.xlu0 %v2949, 64
        %v2994 = vpop.permute.xlu0 %2993
        %2995 = vrot.lane.b32.xlu0 %v2950, 64
        %v2996 = vpop.permute.xlu0 %2995
        %v2999 = vmul.f32 %v2977, %v2994
        %v3000 = vmul.f32 %v2992, %v2996
        %3003 = vrot.lane.b32.xlu0 %v2999, 64
        %v3004 = vpop.permute.xlu0 %3003
        %3005 = vrot.lane.b32.xlu0 %v3000, 64
        %v3006 = vpop.permute.xlu0 %3005
        %v3009 = vadd.f32 %v909, %v3004
        %v3010 = vadd.f32 %v912, %v3006
        %v3011 = vtanh.pop %v3009
        %v3012 = vtanh.pop %v3010
        %v3013 = vsub.f32 1.0, %v2977
        %v3014 = vsub.f32 1.0, %v2992
        %3017 = vrot.lane.b32.xlu0 %v3011, 96
        %v3018 = vpop.permute.xlu0 %3017
        %3019 = vrot.lane.b32.xlu0 %v3012, 96
        %v3020 = vpop.permute.xlu0 %3019
        %v3023 = vmul.f32 %v3013, %v3018
        %v3024 = vmul.f32 %v3014, %v3020
        %v3025 = vrot.slane %v2903, 7
        %3026 = vrot.lane.b32.xlu0 %v3025, 32
        %v3027 = vpop.permute.xlu0 %3026
        %3028 = vrot.lane.b32.xlu0 %v2903, 32
        %v3029 = vpop.permute.xlu0 %3028
        %v3032 = vmul.f32 %v2977, %v3027
        %v3033 = vmul.f32 %v2992, %v3029
        %v3034 = vadd.f32 %v3023, %v3032
        %v3035 = vadd.f32 %v3024, %v3033
        %v3037 = vadd.f32 %v909, %v2926
        %v3038 = vadd.f32 %v912, %v2949
        %v3039 = vxor.u32 %v3037, 2147483648
        %v3040 = vxor.u32 %v3038, 2147483648
        %v3041 = vmul.f32 %v3039, 1.442695
        %v3042 = vpow.pop %v3041
        %v3043 = vmul.f32 %v3040, 1.442695
        %v3044 = vpow.pop %v3043
        %v3045 = vadd.f32 %v3042, 1.0
        %v3046 = vadd.f32 %v3044, 1.0
        %v3047 = vrcp.pop %v3045
        %v3048 = vmul.f32 %v3045, %v3047
        %v3049 = vsub.f32 1.0, %v3048
        %v3050 = vmul.f32 %v3047, %v3049
        %v3051 = vadd.f32 %v3047, %v3050
        %vm3052 = vweird.f32 %v3045
        %vm3053 = vweird.f32 %v3047
        %vm3054 = vmor %vm3052, %vm3053
        %v3055 = vsel %vm3054, %v3047, %v3051
        %v3056 = vand.u32 2147483647, %v3045
        %vm3057 = vcmp.eq.f32.partialorder %v3056, 8.507059e+37
        %v3058 = vand.u32 %v3045, 2147483648
        %v3059 = vor.u32 1.1754944e-38, %v3058
        %v3060 = vsel %vm3057, %v3059, %v3055
        %v3061 = vmul.f32 1.0, %v3060
        %v3062 = vrcp.pop %v3046
        %v3063 = vmul.f32 %v3046, %v3062
        %v3064 = vsub.f32 1.0, %v3063
        %v3065 = vmul.f32 %v3062, %v3064
        %v3066 = vadd.f32 %v3062, %v3065
        %vm3067 = vweird.f32 %v3046
        %vm3068 = vweird.f32 %v3062
        %vm3069 = vmor %vm3067, %vm3068
        %v3070 = vsel %vm3069, %v3062, %v3066
        %v3071 = vand.u32 2147483647, %v3046
        %vm3072 = vcmp.eq.f32.partialorder %v3071, 8.507059e+37
        %v3073 = vand.u32 %v3046, 2147483648
        %v3074 = vor.u32 1.1754944e-38, %v3073
        %v3075 = vsel %vm3072, %v3074, %v3070
        %v3076 = vmul.f32 1.0, %v3075
        %v3078 = vrot.slane %v2946, 1
        %v3081 = vadd.f32 %v932, %v2946
        %v3082 = vadd.f32 %v935, %v3078
        %v3083 = vxor.u32 %v3081, 2147483648
        %v3084 = vxor.u32 %v3082, 2147483648
        %v3085 = vmul.f32 %v3083, 1.442695
        %v3086 = vpow.pop %v3085
        %v3087 = vmul.f32 %v3084, 1.442695
        %v3088 = vpow.pop %v3087
        %v3089 = vadd.f32 %v3086, 1.0
        %v3090 = vadd.f32 %v3088, 1.0
        %v3091 = vrcp.pop %v3089
        %v3092 = vmul.f32 %v3089, %v3091
        %v3093 = vsub.f32 1.0, %v3092
        %v3094 = vmul.f32 %v3091, %v3093
        %v3095 = vadd.f32 %v3091, %v3094
        %vm3096 = vweird.f32 %v3089
        %vm3097 = vweird.f32 %v3091
        %vm3098 = vmor %vm3096, %vm3097
        %v3099 = vsel %vm3098, %v3091, %v3095
        %v3100 = vand.u32 2147483647, %v3089
        %vm3101 = vcmp.eq.f32.partialorder %v3100, 8.507059e+37
        %v3102 = vand.u32 %v3089, 2147483648
        %v3103 = vor.u32 1.1754944e-38, %v3102
        %v3104 = vsel %vm3101, %v3103, %v3099
        %v3105 = vmul.f32 1.0, %v3104
        %v3106 = vrcp.pop %v3090
        %v3107 = vmul.f32 %v3090, %v3106
        %v3108 = vsub.f32 1.0, %v3107
        %v3109 = vmul.f32 %v3106, %v3108
        %v3110 = vadd.f32 %v3106, %v3109
        %vm3111 = vweird.f32 %v3090
        %vm3112 = vweird.f32 %v3106
        %vm3113 = vmor %vm3111, %vm3112
        %v3114 = vsel %vm3113, %v3106, %v3110
        %v3115 = vand.u32 2147483647, %v3090
        %vm3116 = vcmp.eq.f32.partialorder %v3115, 8.507059e+37
        %v3117 = vand.u32 %v3090, 2147483648
        %v3118 = vor.u32 1.1754944e-38, %v3117
        %v3119 = vsel %vm3116, %v3118, %v3114
        %v3120 = vmul.f32 1.0, %v3119
        %3121 = vrot.lane.b32.xlu0 %v2946, 64
        %v3122 = vpop.permute.xlu0 %3121
        %3123 = vrot.lane.b32.xlu0 %v3078, 64
        %v3124 = vpop.permute.xlu0 %3123
        %v3127 = vmul.f32 %v3061, %v3122
        %v3128 = vmul.f32 %v3076, %v3124
        %3131 = vrot.lane.b32.xlu0 %v3127, 64
        %v3132 = vpop.permute.xlu0 %3131
        %3133 = vrot.lane.b32.xlu0 %v3128, 64
        %v3134 = vpop.permute.xlu0 %3133
        %v3137 = vadd.f32 %v932, %v3132
        %v3138 = vadd.f32 %v935, %v3134
        %v3139 = vtanh.pop %v3137
        %v3140 = vtanh.pop %v3138
        %v3141 = vsub.f32 1.0, %v3105
        %v3142 = vsub.f32 1.0, %v3120
        %3145 = vrot.lane.b32.xlu0 %v3139, 96
        %v3146 = vpop.permute.xlu0 %3145
        %3147 = vrot.lane.b32.xlu0 %v3140, 96
        %v3148 = vpop.permute.xlu0 %3147
        %v3151 = vmul.f32 %v3141, %v3146
        %v3152 = vmul.f32 %v3142, %v3148
        %3153 = vrot.lane.b32.xlu0 %v2905, 96
        %v3154 = vpop.permute.xlu0 %3153
        %3155 = vrot.lane.b32.xlu0 %v3025, 96
        %v3156 = vpop.permute.xlu0 %3155
        %v3159 = vmul.f32 %v3105, %v3154
        %v3160 = vmul.f32 %v3120, %v3156
        %v3161 = vadd.f32 %v3151, %v3159
        %v3162 = vadd.f32 %v3152, %v3160
        %vm3163 = vcmask 1040384
        %v3164 = vsel %vm3163, %v1081, %v1352
        %v3165 = vsel %vm3163, %v1082, %v1353
        %vm3166 = vcmask 1041408
        %v3167 = vsel %vm3166, %v3164, %v1634
        %v3168 = vsel %vm3166, %v3165, %v1635
        %vm3169 = vcmask 1042432
        %v3170 = vsel %vm3169, %v3167, %v1916
        %v3171 = vsel %vm3169, %v3168, %v1917
        %vm3172 = vcmask 1043456
        %v3173 = vsel %vm3172, %v3170, %v2194
        %v3174 = vsel %vm3172, %v3171, %v2195
        %vm3175 = vcmask 1044480
        %v3176 = vsel %vm3175, %v3173, %v2473
        %v3177 = vsel %vm3175, %v3174, %v2474
        %vm3178 = vcmask 1045504
        %v3179 = vsel %vm3178, %v3176, %v2755
        %v3180 = vsel %vm3178, %v3177, %v2756
        %vm3181 = vcmask 1046528
        %v3182 = vsel %vm3181, %v3179, %v3034
        %v3183 = vsel %vm3181, %v3180, %v3035
        %v3184 = vsel %vm3163, %v3161, %v2885
        %v3185 = vsel %vm3163, %v3162, %v2886
        %v3186 = vsel %vm3166, %v3184, %v2606
        %v3187 = vsel %vm3166, %v3185, %v2607
        %v3188 = vsel %vm3169, %v3186, %v2324
        %v3189 = vsel %vm3169, %v3187, %v2325
        %v3190 = vsel %vm3172, %v3188, %v2046
        %v3191 = vsel %vm3172, %v3189, %v2047
        %v3192 = vsel %vm3175, %v3190, %v1767
        %v3193 = vsel %vm3175, %v3191, %v1768
        %v3194 = vsel %vm3178, %v3192, %v1485
        %v3195 = vsel %vm3178, %v3193, %v1486
        %v3196 = vsel %vm3181, %v3194, %v1204
        %v3197 = vsel %vm3181, %v3195, %v1205
        %3200 = vrot.lane.b32.xlu0 %v3182, 96
        %v3201 = vpop.permute.xlu0 %3200
        %3202 = vrot.lane.b32.xlu0 %v3183, 96
        %v3203 = vpop.permute.xlu0 %3202
        %3208 = vrot.lane.b32.xlu0 %v3196, 32
        %v3209 = vpop.permute.xlu0 %3208
        %3210 = vrot.lane.b32.xlu0 %v3197, 32
        %v3211 = vpop.permute.xlu0 %3210
        %v3214 = vsel %vm1222, %v3201, %v3209
        %v3215 = vsel %vm1222, %v3203, %v3211
        %v3216 = vld [vmem:[#allocation11] sm:$0xff]
        %v3217 = vld [vmem:[#allocation11 + $0x8] sm:$0xff]
        %v3218 = vld [vmem:[#allocation11 + $0x10] sm:$0xff]
        %v3219 = vld [vmem:[#allocation11 + $0x18] sm:$0xff]
        %v3220 = vld [vmem:[#allocation11 + $0x20] sm:$0xff]
        %v3221 = vld [vmem:[#allocation11 + $0x28] sm:$0xff]
        %v3222 = vld [vmem:[#allocation11 + $0x30] sm:$0xff]
        %v3223 = vld [vmem:[#allocation11 + $0x38] sm:$0xff]
        %v3224 = vld [vmem:[#allocation11 + $0x40] sm:$0xff]
        %v3225 = vld [vmem:[#allocation11 + $0x48] sm:$0xff]
        %v3226 = vld [vmem:[#allocation11 + $0x50] sm:$0xff]
        %v3227 = vld [vmem:[#allocation11 + $0x58] sm:$0xff]
        %v3228 = vld [vmem:[#allocation11 + $0x60] sm:$0xff]
        %v3229 = vld [vmem:[#allocation11 + $0x68] sm:$0xff]
        %v3230 = vld [vmem:[#allocation11 + $0x70] sm:$0xff]
        %v3231 = vld [vmem:[#allocation11 + $0x78] sm:$0xff]
        %v3232 = vld [vmem:[#allocation13] sm:$0x3]
        %v3234 = vperm.slane %v3232, 0
        %v3235 = vperm.slane %v3232, 1
        %v3239 = vsel %vm959, %v3214, 0
        %v3242 = vsel %vm959, %v3215, 0
        %3244 = vmatpush.msra.mxu0 0.0
        %3245 = vmatpush.msra.mxu0 0.0
        %3246 = vmatpush.msra.mxu0 0.0
        %3247 = vmatpush.msra.mxu0 0.0
        %3248 = vmatpush.msra.mxu0 0.0
        %3249 = vmatpush.msra.mxu0 0.0
        %3250 = vmatpush.msra.mxu0 0.0
        %3251 = vmatpush.msra.mxu0 0.0
        %3252 = vmatpush.msra.mxu0 %v3230
        %3253 = vmatpush.msra.mxu0 %v3228
        %3254 = vmatpush.msra.mxu0 %v3226
        %3255 = vmatpush.msra.mxu0 %v3224
        %3256 = vmatpush.msra.mxu0 %v3222
        %3257 = vmatpush.msra.mxu0 %v3220
        %3258 = vmatpush.msra.mxu0 %v3218
        %3259 = vmatpush.msra.mxu0 %v3216
        %3260 = vmatmul.f32.gmra.mxu0 %v3239
        %v3261 = vpop.f32.mrf.mxu0
        %v3262 = vadd.f32 %v3234, %v3261
        %3263 = vmatmul.f32.gmra.mxu0 %v3242
        %v3264 = vpop.f32.mrf.mxu0
        %v3265 = vadd.f32 %v3234, %v3264
        %3266 = vdwg.mxu0
        %3267 = vmatpush.msra.mxu0 0.0
        %3268 = vmatpush.msra.mxu0 0.0
        %3269 = vmatpush.msra.mxu0 0.0
        %3270 = vmatpush.msra.mxu0 0.0
        %3271 = vmatpush.msra.mxu0 0.0
        %3272 = vmatpush.msra.mxu0 0.0
        %3273 = vmatpush.msra.mxu0 0.0
        %3274 = vmatpush.msra.mxu0 0.0
        %3275 = vmatpush.msra.mxu0 %v3231
        %3276 = vmatpush.msra.mxu0 %v3229
        %3277 = vmatpush.msra.mxu0 %v3227
        %3278 = vmatpush.msra.mxu0 %v3225
        %3279 = vmatpush.msra.mxu0 %v3223
        %3280 = vmatpush.msra.mxu0 %v3221
        %3281 = vmatpush.msra.mxu0 %v3219
        %3282 = vmatpush.msra.mxu0 %v3217
        %3283 = vmatmul.f32.gmra.mxu0 %v3239
        %v3284 = vpop.f32.mrf.mxu0
        %v3285 = vadd.f32 %v3235, %v3284
        %3286 = vmatmul.f32.gmra.mxu0 %v3242
        %v3287 = vpop.f32.mrf.mxu0
        %v3288 = vadd.f32 %v3235, %v3287
        %3289 = vdwg.mxu0
        %v3290 = vld [vmem:[#allocation14] sm:$0xff]
        %v3291 = vld [vmem:[#allocation14 + $0x8] sm:$0xff]
        %v3292 = vld [vmem:[#allocation14 + $0x10] sm:$0xff]
        %v3293 = vld [vmem:[#allocation14 + $0x18] sm:$0xff]
        %v3294 = vld [vmem:[#allocation14 + $0x20] sm:$0xff]
        %v3295 = vld [vmem:[#allocation14 + $0x28] sm:$0xff]
        %v3296 = vld [vmem:[#allocation14 + $0x30] sm:$0xff]
        %v3297 = vld [vmem:[#allocation14 + $0x38] sm:$0xff]
        %v3298 = vld [vmem:[#allocation14 + $0x40] sm:$0xff]
        %v3299 = vld [vmem:[#allocation14 + $0x48] sm:$0xff]
        %v3300 = vld [vmem:[#allocation14 + $0x50] sm:$0xff]
        %v3301 = vld [vmem:[#allocation14 + $0x58] sm:$0xff]
        %v3302 = vld [vmem:[#allocation14 + $0x60] sm:$0xff]
        %v3303 = vld [vmem:[#allocation14 + $0x68] sm:$0xff]
        %v3304 = vld [vmem:[#allocation14 + $0x70] sm:$0xff]
        %v3305 = vld [vmem:[#allocation14 + $0x78] sm:$0xff]
        %v3306 = vld [vmem:[%s8] sm:$0x3]
        %v3308 = vperm.slane %v3306, 0
        %v3309 = vperm.slane %v3306, 1
        %3312 = vmatpush.msra.mxu0 0.0
        %3313 = vmatpush.msra.mxu0 0.0
        %3314 = vmatpush.msra.mxu0 0.0
        %3315 = vmatpush.msra.mxu0 0.0
        %3316 = vmatpush.msra.mxu0 0.0
        %3317 = vmatpush.msra.mxu0 0.0
        %3318 = vmatpush.msra.mxu0 0.0
        %3319 = vmatpush.msra.mxu0 0.0
        %3320 = vmatpush.msra.mxu0 %v3304
        %3321 = vmatpush.msra.mxu0 %v3302
        %3322 = vmatpush.msra.mxu0 %v3300
        %3323 = vmatpush.msra.mxu0 %v3298
        %3324 = vmatpush.msra.mxu0 %v3296
        %3325 = vmatpush.msra.mxu0 %v3294
        %3326 = vmatpush.msra.mxu0 %v3292
        %3327 = vmatpush.msra.mxu0 %v3290
        %3328 = vmatmul.f32.gmra.mxu0 %v961
        %v3329 = vpop.f32.mrf.mxu0
        %v3330 = vadd.f32 %v3308, %v3329
        %3331 = vdwg.mxu0
        %3332 = vmatpush.msra.mxu0 0.0
        %3333 = vmatpush.msra.mxu0 0.0
        %3334 = vmatpush.msra.mxu0 0.0
        %3335 = vmatpush.msra.mxu0 0.0
        %3336 = vmatpush.msra.mxu0 0.0
        %3337 = vmatpush.msra.mxu0 0.0
        %3338 = vmatpush.msra.mxu0 0.0
        %3339 = vmatpush.msra.mxu0 0.0
        %3340 = vmatpush.msra.mxu0 %v3305
        %3341 = vmatpush.msra.mxu0 %v3303
        %3342 = vmatpush.msra.mxu0 %v3301
        %3343 = vmatpush.msra.mxu0 %v3299
        %3344 = vmatpush.msra.mxu0 %v3297
        %3345 = vmatpush.msra.mxu0 %v3295
        %3346 = vmatpush.msra.mxu0 %v3293
        %3347 = vmatpush.msra.mxu0 %v3291
        %3348 = vmatmul.f32.gmra.mxu0 %v961
        %v3349 = vpop.f32.mrf.mxu0
        %v3350 = vadd.f32 %v3309, %v3349
        %3351 = vdwg.mxu0
        %v3353 = vrot.slane %v3330, 1
        %v3356 = vadd.f32 %v3262, %v3330
        %v3357 = vadd.f32 %v3265, %v3353
        %v3358 = vxor.u32 %v3356, 2147483648
        %v3359 = vxor.u32 %v3357, 2147483648
        %v3360 = vmul.f32 %v3358, 1.442695
        %v3361 = vpow.pop %v3360
        %v3362 = vmul.f32 %v3359, 1.442695
        %v3363 = vpow.pop %v3362
        %v3364 = vadd.f32 %v3361, 1.0
        %v3365 = vadd.f32 %v3363, 1.0
        %v3366 = vrcp.pop %v3364
        %v3367 = vmul.f32 %v3364, %v3366
        %v3368 = vsub.f32 1.0, %v3367
        %v3369 = vmul.f32 %v3366, %v3368
        %v3370 = vadd.f32 %v3366, %v3369
        %vm3371 = vweird.f32 %v3364
        %vm3372 = vweird.f32 %v3366
        %vm3373 = vmor %vm3371, %vm3372
        %v3374 = vsel %vm3373, %v3366, %v3370
        %v3375 = vand.u32 2147483647, %v3364
        %vm3376 = vcmp.eq.f32.partialorder %v3375, 8.507059e+37
        %v3377 = vand.u32 %v3364, 2147483648
        %v3378 = vor.u32 1.1754944e-38, %v3377
        %v3379 = vsel %vm3376, %v3378, %v3374
        %v3380 = vmul.f32 1.0, %v3379
        %v3381 = vrcp.pop %v3365
        %v3382 = vmul.f32 %v3365, %v3381
        %v3383 = vsub.f32 1.0, %v3382
        %v3384 = vmul.f32 %v3381, %v3383
        %v3385 = vadd.f32 %v3381, %v3384
        %vm3386 = vweird.f32 %v3365
        %vm3387 = vweird.f32 %v3381
        %vm3388 = vmor %vm3386, %vm3387
        %v3389 = vsel %vm3388, %v3381, %v3385
        %v3390 = vand.u32 2147483647, %v3365
        %vm3391 = vcmp.eq.f32.partialorder %v3390, 8.507059e+37
        %v3392 = vand.u32 %v3365, 2147483648
        %v3393 = vor.u32 1.1754944e-38, %v3392
        %v3394 = vsel %vm3391, %v3393, %v3389
        %v3395 = vmul.f32 1.0, %v3394
        %3396 = vrot.lane.b32.xlu0 %v3330, 64
        %v3397 = vpop.permute.xlu0 %3396
        %3398 = vrot.lane.b32.xlu0 %v3353, 64
        %v3399 = vpop.permute.xlu0 %3398
        %v3402 = vmul.f32 %v3380, %v3397
        %v3403 = vmul.f32 %v3395, %v3399
        %3406 = vrot.lane.b32.xlu0 %v3402, 64
        %v3407 = vpop.permute.xlu0 %3406
        %3408 = vrot.lane.b32.xlu0 %v3403, 64
        %v3409 = vpop.permute.xlu0 %3408
        %v3412 = vadd.f32 %v3262, %v3407
        %v3413 = vadd.f32 %v3265, %v3409
        %v3414 = vtanh.pop %v3412
        %v3415 = vtanh.pop %v3413
        %v3416 = vsub.f32 1.0, %v3380
        %v3417 = vsub.f32 1.0, %v3395
        %3420 = vrot.lane.b32.xlu0 %v3414, 96
        %v3421 = vpop.permute.xlu0 %3420
        %3422 = vrot.lane.b32.xlu0 %v3415, 96
        %v3423 = vpop.permute.xlu0 %3422
        %v3426 = vmul.f32 %v3416, %v3421
        %v3427 = vmul.f32 %v3417, %v3423
        %v3428 = vmul.f32 %v3380, 0.0
        %v3429 = vmul.f32 %v3395, 0.0
        %v3430 = vadd.f32 %v3426, %v3428
        %v3431 = vadd.f32 %v3427, %v3429
        %v3432 = vrot.slane %v3330, 2
        %v3434 = vadd.f32 %v3262, %v3353
        %v3435 = vadd.f32 %v3265, %v3432
        %v3436 = vxor.u32 %v3434, 2147483648
        %v3437 = vxor.u32 %v3435, 2147483648
        %v3438 = vmul.f32 %v3436, 1.442695
        %v3439 = vpow.pop %v3438
        %v3440 = vmul.f32 %v3437, 1.442695
        %v3441 = vpow.pop %v3440
        %v3442 = vadd.f32 %v3439, 1.0
        %v3443 = vadd.f32 %v3441, 1.0
        %v3444 = vrcp.pop %v3442
        %v3445 = vmul.f32 %v3442, %v3444
        %v3446 = vsub.f32 1.0, %v3445
        %v3447 = vmul.f32 %v3444, %v3446
        %v3448 = vadd.f32 %v3444, %v3447
        %vm3449 = vweird.f32 %v3442
        %vm3450 = vweird.f32 %v3444
        %vm3451 = vmor %vm3449, %vm3450
        %v3452 = vsel %vm3451, %v3444, %v3448
        %v3453 = vand.u32 2147483647, %v3442
        %vm3454 = vcmp.eq.f32.partialorder %v3453, 8.507059e+37
        %v3455 = vand.u32 %v3442, 2147483648
        %v3456 = vor.u32 1.1754944e-38, %v3455
        %v3457 = vsel %vm3454, %v3456, %v3452
        %v3458 = vmul.f32 1.0, %v3457
        %v3459 = vrcp.pop %v3443
        %v3460 = vmul.f32 %v3443, %v3459
        %v3461 = vsub.f32 1.0, %v3460
        %v3462 = vmul.f32 %v3459, %v3461
        %v3463 = vadd.f32 %v3459, %v3462
        %vm3464 = vweird.f32 %v3443
        %vm3465 = vweird.f32 %v3459
        %vm3466 = vmor %vm3464, %vm3465
        %v3467 = vsel %vm3466, %v3459, %v3463
        %v3468 = vand.u32 2147483647, %v3443
        %vm3469 = vcmp.eq.f32.partialorder %v3468, 8.507059e+37
        %v3470 = vand.u32 %v3443, 2147483648
        %v3471 = vor.u32 1.1754944e-38, %v3470
        %v3472 = vsel %vm3469, %v3471, %v3467
        %v3473 = vmul.f32 1.0, %v3472
        %v3475 = vrot.slane %v3350, 1
        %v3476 = vrot.slane %v3350, 2
        %v3479 = vadd.f32 %v3285, %v3475
        %v3480 = vadd.f32 %v3288, %v3476
        %v3481 = vxor.u32 %v3479, 2147483648
        %v3482 = vxor.u32 %v3480, 2147483648
        %v3483 = vmul.f32 %v3481, 1.442695
        %v3484 = vpow.pop %v3483
        %v3485 = vmul.f32 %v3482, 1.442695
        %v3486 = vpow.pop %v3485
        %v3487 = vadd.f32 %v3484, 1.0
        %v3488 = vadd.f32 %v3486, 1.0
        %v3489 = vrcp.pop %v3487
        %v3490 = vmul.f32 %v3487, %v3489
        %v3491 = vsub.f32 1.0, %v3490
        %v3492 = vmul.f32 %v3489, %v3491
        %v3493 = vadd.f32 %v3489, %v3492
        %vm3494 = vweird.f32 %v3487
        %vm3495 = vweird.f32 %v3489
        %vm3496 = vmor %vm3494, %vm3495
        %v3497 = vsel %vm3496, %v3489, %v3493
        %v3498 = vand.u32 2147483647, %v3487
        %vm3499 = vcmp.eq.f32.partialorder %v3498, 8.507059e+37
        %v3500 = vand.u32 %v3487, 2147483648
        %v3501 = vor.u32 1.1754944e-38, %v3500
        %v3502 = vsel %vm3499, %v3501, %v3497
        %v3503 = vmul.f32 1.0, %v3502
        %v3504 = vrcp.pop %v3488
        %v3505 = vmul.f32 %v3488, %v3504
        %v3506 = vsub.f32 1.0, %v3505
        %v3507 = vmul.f32 %v3504, %v3506
        %v3508 = vadd.f32 %v3504, %v3507
        %vm3509 = vweird.f32 %v3488
        %vm3510 = vweird.f32 %v3504
        %vm3511 = vmor %vm3509, %vm3510
        %v3512 = vsel %vm3511, %v3504, %v3508
        %v3513 = vand.u32 2147483647, %v3488
        %vm3514 = vcmp.eq.f32.partialorder %v3513, 8.507059e+37
        %v3515 = vand.u32 %v3488, 2147483648
        %v3516 = vor.u32 1.1754944e-38, %v3515
        %v3517 = vsel %vm3514, %v3516, %v3512
        %v3518 = vmul.f32 1.0, %v3517
        %3519 = vrot.lane.b32.xlu0 %v3475, 64
        %v3520 = vpop.permute.xlu0 %3519
        %3521 = vrot.lane.b32.xlu0 %v3476, 64
        %v3522 = vpop.permute.xlu0 %3521
        %v3525 = vmul.f32 %v3458, %v3520
        %v3526 = vmul.f32 %v3473, %v3522
        %3529 = vrot.lane.b32.xlu0 %v3525, 64
        %v3530 = vpop.permute.xlu0 %3529
        %3531 = vrot.lane.b32.xlu0 %v3526, 64
        %v3532 = vpop.permute.xlu0 %3531
        %v3535 = vadd.f32 %v3285, %v3530
        %v3536 = vadd.f32 %v3288, %v3532
        %v3537 = vtanh.pop %v3535
        %v3538 = vtanh.pop %v3536
        %v3539 = vsub.f32 1.0, %v3503
        %v3540 = vsub.f32 1.0, %v3518
        %3543 = vrot.lane.b32.xlu0 %v3537, 96
        %v3544 = vpop.permute.xlu0 %3543
        %3545 = vrot.lane.b32.xlu0 %v3538, 96
        %v3546 = vpop.permute.xlu0 %3545
        %v3549 = vmul.f32 %v3539, %v3544
        %v3550 = vmul.f32 %v3540, %v3546
        %v3551 = vmul.f32 %v3503, 0.0
        %v3552 = vmul.f32 %v3518, 0.0
        %v3553 = vadd.f32 %v3549, %v3551
        %v3554 = vadd.f32 %v3550, %v3552
        %v3557 = vrot.slane %v3431, 7
        %v3558 = vsel %vm1209, %v3557, %v3430
        %3559 = vrot.lane.b32.xlu0 %v3558, 96
        %v3560 = vpop.permute.xlu0 %3559
        %v3564 = vrot.slane %v3553, 7
        %v3565 = vrot.slane %v3554, 6
        %v3566 = vsel %vm1209, %v3565, %v3564
        %3567 = vrot.lane.b32.xlu0 %v3566, 32
        %v3568 = vpop.permute.xlu0 %3567
        %v3570 = vsel %vm1222, %v3560, %v3568
        %v3572 = vsel %vm959, %v3570, 0
        %3574 = vmatpush.msra.mxu0 0.0
        %3575 = vmatpush.msra.mxu0 0.0
        %3576 = vmatpush.msra.mxu0 0.0
        %3577 = vmatpush.msra.mxu0 0.0
        %3578 = vmatpush.msra.mxu0 0.0
        %3579 = vmatpush.msra.mxu0 0.0
        %3580 = vmatpush.msra.mxu0 0.0
        %3581 = vmatpush.msra.mxu0 0.0
        %3582 = vmatpush.msra.mxu0 %v3304
        %3583 = vmatpush.msra.mxu0 %v3302
        %3584 = vmatpush.msra.mxu0 %v3300
        %3585 = vmatpush.msra.mxu0 %v3298
        %3586 = vmatpush.msra.mxu0 %v3296
        %3587 = vmatpush.msra.mxu0 %v3294
        %3588 = vmatpush.msra.mxu0 %v3292
        %3589 = vmatpush.msra.mxu0 %v3290
        %3590 = vmatmul.f32.gmra.mxu0 %v3572
        %v3591 = vpop.f32.mrf.mxu0
        %v3592 = vadd.f32 %v3308, %v3591
        %3593 = vdwg.mxu0
        %3594 = vmatpush.msra.mxu0 0.0
        %3595 = vmatpush.msra.mxu0 0.0
        %3596 = vmatpush.msra.mxu0 0.0
        %3597 = vmatpush.msra.mxu0 0.0
        %3598 = vmatpush.msra.mxu0 0.0
        %3599 = vmatpush.msra.mxu0 0.0
        %3600 = vmatpush.msra.mxu0 0.0
        %3601 = vmatpush.msra.mxu0 0.0
        %3602 = vmatpush.msra.mxu0 %v3305
        %3603 = vmatpush.msra.mxu0 %v3303
        %3604 = vmatpush.msra.mxu0 %v3301
        %3605 = vmatpush.msra.mxu0 %v3299
        %3606 = vmatpush.msra.mxu0 %v3297
        %3607 = vmatpush.msra.mxu0 %v3295
        %3608 = vmatpush.msra.mxu0 %v3293
        %3609 = vmatpush.msra.mxu0 %v3291
        %3610 = vmatmul.f32.gmra.mxu0 %v3572
        %v3611 = vpop.f32.mrf.mxu0
        %v3612 = vadd.f32 %v3309, %v3611
        %3613 = vdwg.mxu0
        %v3615 = vrot.slane %v3592, 7
        %v3618 = vadd.f32 %v3262, %v3615
        %v3619 = vadd.f32 %v3265, %v3592
        %v3620 = vxor.u32 %v3618, 2147483648
        %v3621 = vxor.u32 %v3619, 2147483648
        %v3622 = vmul.f32 %v3620, 1.442695
        %v3623 = vpow.pop %v3622
        %v3624 = vmul.f32 %v3621, 1.442695
        %v3625 = vpow.pop %v3624
        %v3626 = vadd.f32 %v3623, 1.0
        %v3627 = vadd.f32 %v3625, 1.0
        %v3628 = vrcp.pop %v3626
        %v3629 = vmul.f32 %v3626, %v3628
        %v3630 = vsub.f32 1.0, %v3629
        %v3631 = vmul.f32 %v3628, %v3630
        %v3632 = vadd.f32 %v3628, %v3631
        %vm3633 = vweird.f32 %v3626
        %vm3634 = vweird.f32 %v3628
        %vm3635 = vmor %vm3633, %vm3634
        %v3636 = vsel %vm3635, %v3628, %v3632
        %v3637 = vand.u32 2147483647, %v3626
        %vm3638 = vcmp.eq.f32.partialorder %v3637, 8.507059e+37
        %v3639 = vand.u32 %v3626, 2147483648
        %v3640 = vor.u32 1.1754944e-38, %v3639
        %v3641 = vsel %vm3638, %v3640, %v3636
        %v3642 = vmul.f32 1.0, %v3641
        %v3643 = vrcp.pop %v3627
        %v3644 = vmul.f32 %v3627, %v3643
        %v3645 = vsub.f32 1.0, %v3644
        %v3646 = vmul.f32 %v3643, %v3645
        %v3647 = vadd.f32 %v3643, %v3646
        %vm3648 = vweird.f32 %v3627
        %vm3649 = vweird.f32 %v3643
        %vm3650 = vmor %vm3648, %vm3649
        %v3651 = vsel %vm3650, %v3643, %v3647
        %v3652 = vand.u32 2147483647, %v3627
        %vm3653 = vcmp.eq.f32.partialorder %v3652, 8.507059e+37
        %v3654 = vand.u32 %v3627, 2147483648
        %v3655 = vor.u32 1.1754944e-38, %v3654
        %v3656 = vsel %vm3653, %v3655, %v3651
        %v3657 = vmul.f32 1.0, %v3656
        %3658 = vrot.lane.b32.xlu0 %v3615, 64
        %v3659 = vpop.permute.xlu0 %3658
        %3660 = vrot.lane.b32.xlu0 %v3592, 64
        %v3661 = vpop.permute.xlu0 %3660
        %v3664 = vmul.f32 %v3642, %v3659
        %v3665 = vmul.f32 %v3657, %v3661
        %3668 = vrot.lane.b32.xlu0 %v3664, 64
        %v3669 = vpop.permute.xlu0 %3668
        %3670 = vrot.lane.b32.xlu0 %v3665, 64
        %v3671 = vpop.permute.xlu0 %3670
        %v3674 = vadd.f32 %v3262, %v3669
        %v3675 = vadd.f32 %v3265, %v3671
        %v3676 = vtanh.pop %v3674
        %v3677 = vtanh.pop %v3675
        %v3678 = vsub.f32 1.0, %v3642
        %v3679 = vsub.f32 1.0, %v3657
        %3682 = vrot.lane.b32.xlu0 %v3676, 96
        %v3683 = vpop.permute.xlu0 %3682
        %3684 = vrot.lane.b32.xlu0 %v3677, 96
        %v3685 = vpop.permute.xlu0 %3684
        %v3688 = vmul.f32 %v3678, %v3683
        %v3689 = vmul.f32 %v3679, %v3685
        %v3690 = vrot.slane %v3570, 7
        %3691 = vrot.lane.b32.xlu0 %v3690, 32
        %v3692 = vpop.permute.xlu0 %3691
        %3693 = vrot.lane.b32.xlu0 %v3570, 32
        %v3694 = vpop.permute.xlu0 %3693
        %v3697 = vmul.f32 %v3642, %v3692
        %v3698 = vmul.f32 %v3657, %v3694
        %v3699 = vadd.f32 %v3688, %v3697
        %v3700 = vadd.f32 %v3689, %v3698
        %v3701 = vrot.slane %v3592, 2
        %v3702 = vrot.slane %v3592, 3
        %v3705 = vadd.f32 %v3262, %v3701
        %v3706 = vadd.f32 %v3265, %v3702
        %v3707 = vxor.u32 %v3705, 2147483648
        %v3708 = vxor.u32 %v3706, 2147483648
        %v3709 = vmul.f32 %v3707, 1.442695
        %v3710 = vpow.pop %v3709
        %v3711 = vmul.f32 %v3708, 1.442695
        %v3712 = vpow.pop %v3711
        %v3713 = vadd.f32 %v3710, 1.0
        %v3714 = vadd.f32 %v3712, 1.0
        %v3715 = vrcp.pop %v3713
        %v3716 = vmul.f32 %v3713, %v3715
        %v3717 = vsub.f32 1.0, %v3716
        %v3718 = vmul.f32 %v3715, %v3717
        %v3719 = vadd.f32 %v3715, %v3718
        %vm3720 = vweird.f32 %v3713
        %vm3721 = vweird.f32 %v3715
        %vm3722 = vmor %vm3720, %vm3721
        %v3723 = vsel %vm3722, %v3715, %v3719
        %v3724 = vand.u32 2147483647, %v3713
        %vm3725 = vcmp.eq.f32.partialorder %v3724, 8.507059e+37
        %v3726 = vand.u32 %v3713, 2147483648
        %v3727 = vor.u32 1.1754944e-38, %v3726
        %v3728 = vsel %vm3725, %v3727, %v3723
        %v3729 = vmul.f32 1.0, %v3728
        %v3730 = vrcp.pop %v3714
        %v3731 = vmul.f32 %v3714, %v3730
        %v3732 = vsub.f32 1.0, %v3731
        %v3733 = vmul.f32 %v3730, %v3732
        %v3734 = vadd.f32 %v3730, %v3733
        %vm3735 = vweird.f32 %v3714
        %vm3736 = vweird.f32 %v3730
        %vm3737 = vmor %vm3735, %vm3736
        %v3738 = vsel %vm3737, %v3730, %v3734
        %v3739 = vand.u32 2147483647, %v3714
        %vm3740 = vcmp.eq.f32.partialorder %v3739, 8.507059e+37
        %v3741 = vand.u32 %v3714, 2147483648
        %v3742 = vor.u32 1.1754944e-38, %v3741
        %v3743 = vsel %vm3740, %v3742, %v3738
        %v3744 = vmul.f32 1.0, %v3743
        %v3746 = vrot.slane %v3612, 2
        %v3747 = vrot.slane %v3612, 3
        %v3750 = vadd.f32 %v3285, %v3746
        %v3751 = vadd.f32 %v3288, %v3747
        %v3752 = vxor.u32 %v3750, 2147483648
        %v3753 = vxor.u32 %v3751, 2147483648
        %v3754 = vmul.f32 %v3752, 1.442695
        %v3755 = vpow.pop %v3754
        %v3756 = vmul.f32 %v3753, 1.442695
        %v3757 = vpow.pop %v3756
        %v3758 = vadd.f32 %v3755, 1.0
        %v3759 = vadd.f32 %v3757, 1.0
        %v3760 = vrcp.pop %v3758
        %v3761 = vmul.f32 %v3758, %v3760
        %v3762 = vsub.f32 1.0, %v3761
        %v3763 = vmul.f32 %v3760, %v3762
        %v3764 = vadd.f32 %v3760, %v3763
        %vm3765 = vweird.f32 %v3758
        %vm3766 = vweird.f32 %v3760
        %vm3767 = vmor %vm3765, %vm3766
        %v3768 = vsel %vm3767, %v3760, %v3764
        %v3769 = vand.u32 2147483647, %v3758
        %vm3770 = vcmp.eq.f32.partialorder %v3769, 8.507059e+37
        %v3771 = vand.u32 %v3758, 2147483648
        %v3772 = vor.u32 1.1754944e-38, %v3771
        %v3773 = vsel %vm3770, %v3772, %v3768
        %v3774 = vmul.f32 1.0, %v3773
        %v3775 = vrcp.pop %v3759
        %v3776 = vmul.f32 %v3759, %v3775
        %v3777 = vsub.f32 1.0, %v3776
        %v3778 = vmul.f32 %v3775, %v3777
        %v3779 = vadd.f32 %v3775, %v3778
        %vm3780 = vweird.f32 %v3759
        %vm3781 = vweird.f32 %v3775
        %vm3782 = vmor %vm3780, %vm3781
        %v3783 = vsel %vm3782, %v3775, %v3779
        %v3784 = vand.u32 2147483647, %v3759
        %vm3785 = vcmp.eq.f32.partialorder %v3784, 8.507059e+37
        %v3786 = vand.u32 %v3759, 2147483648
        %v3787 = vor.u32 1.1754944e-38, %v3786
        %v3788 = vsel %vm3785, %v3787, %v3783
        %v3789 = vmul.f32 1.0, %v3788
        %3790 = vrot.lane.b32.xlu0 %v3746, 64
        %v3791 = vpop.permute.xlu0 %3790
        %3792 = vrot.lane.b32.xlu0 %v3747, 64
        %v3793 = vpop.permute.xlu0 %3792
        %v3796 = vmul.f32 %v3729, %v3791
        %v3797 = vmul.f32 %v3744, %v3793
        %3800 = vrot.lane.b32.xlu0 %v3796, 64
        %v3801 = vpop.permute.xlu0 %3800
        %3802 = vrot.lane.b32.xlu0 %v3797, 64
        %v3803 = vpop.permute.xlu0 %3802
        %v3806 = vadd.f32 %v3285, %v3801
        %v3807 = vadd.f32 %v3288, %v3803
        %v3808 = vtanh.pop %v3806
        %v3809 = vtanh.pop %v3807
        %v3810 = vsub.f32 1.0, %v3774
        %v3811 = vsub.f32 1.0, %v3789
        %3814 = vrot.lane.b32.xlu0 %v3808, 96
        %v3815 = vpop.permute.xlu0 %3814
        %3816 = vrot.lane.b32.xlu0 %v3809, 96
        %v3817 = vpop.permute.xlu0 %3816
        %v3820 = vmul.f32 %v3810, %v3815
        %v3821 = vmul.f32 %v3811, %v3817
        %v3822 = vrot.slane %v3570, 2
        %v3823 = vrot.slane %v3570, 3
        %3824 = vrot.lane.b32.xlu0 %v3822, 96
        %v3825 = vpop.permute.xlu0 %3824
        %3826 = vrot.lane.b32.xlu0 %v3823, 96
        %v3827 = vpop.permute.xlu0 %3826
        %v3830 = vmul.f32 %v3774, %v3825
        %v3831 = vmul.f32 %v3789, %v3827
        %v3832 = vadd.f32 %v3820, %v3830
        %v3833 = vadd.f32 %v3821, %v3831
        %v3836 = vrot.slane %v3700, 7
        %v3837 = vsel %vm1490, %v3836, %v3699
        %3838 = vrot.lane.b32.xlu0 %v3837, 96
        %v3839 = vpop.permute.xlu0 %3838
        %v3843 = vrot.slane %v3832, 5
        %v3844 = vrot.slane %v3833, 4
        %v3845 = vsel %vm1490, %v3844, %v3843
        %3846 = vrot.lane.b32.xlu0 %v3845, 32
        %v3847 = vpop.permute.xlu0 %3846
        %v3849 = vsel %vm1222, %v3839, %v3847
        %v3851 = vrot.slane %v3849, 1
        %v3852 = vsel %vm959, %v3851, 0
        %3854 = vmatpush.msra.mxu0 0.0
        %3855 = vmatpush.msra.mxu0 0.0
        %3856 = vmatpush.msra.mxu0 0.0
        %3857 = vmatpush.msra.mxu0 0.0
        %3858 = vmatpush.msra.mxu0 0.0
        %3859 = vmatpush.msra.mxu0 0.0
        %3860 = vmatpush.msra.mxu0 0.0
        %3861 = vmatpush.msra.mxu0 0.0
        %3862 = vmatpush.msra.mxu0 %v3304
        %3863 = vmatpush.msra.mxu0 %v3302
        %3864 = vmatpush.msra.mxu0 %v3300
        %3865 = vmatpush.msra.mxu0 %v3298
        %3866 = vmatpush.msra.mxu0 %v3296
        %3867 = vmatpush.msra.mxu0 %v3294
        %3868 = vmatpush.msra.mxu0 %v3292
        %3869 = vmatpush.msra.mxu0 %v3290
        %3870 = vmatmul.f32.gmra.mxu0 %v3852
        %v3871 = vpop.f32.mrf.mxu0
        %v3872 = vadd.f32 %v3308, %v3871
        %3873 = vdwg.mxu0
        %3874 = vmatpush.msra.mxu0 0.0
        %3875 = vmatpush.msra.mxu0 0.0
        %3876 = vmatpush.msra.mxu0 0.0
        %3877 = vmatpush.msra.mxu0 0.0
        %3878 = vmatpush.msra.mxu0 0.0
        %3879 = vmatpush.msra.mxu0 0.0
        %3880 = vmatpush.msra.mxu0 0.0
        %3881 = vmatpush.msra.mxu0 0.0
        %3882 = vmatpush.msra.mxu0 %v3305
        %3883 = vmatpush.msra.mxu0 %v3303
        %3884 = vmatpush.msra.mxu0 %v3301
        %3885 = vmatpush.msra.mxu0 %v3299
        %3886 = vmatpush.msra.mxu0 %v3297
        %3887 = vmatpush.msra.mxu0 %v3295
        %3888 = vmatpush.msra.mxu0 %v3293
        %3889 = vmatpush.msra.mxu0 %v3291
        %3890 = vmatmul.f32.gmra.mxu0 %v3852
        %v3891 = vpop.f32.mrf.mxu0
        %v3892 = vadd.f32 %v3309, %v3891
        %3893 = vdwg.mxu0
        %v3895 = vrot.slane %v3872, 6
        %v3896 = vrot.slane %v3872, 7
        %v3899 = vadd.f32 %v3262, %v3895
        %v3900 = vadd.f32 %v3265, %v3896
        %v3901 = vxor.u32 %v3899, 2147483648
        %v3902 = vxor.u32 %v3900, 2147483648
        %v3903 = vmul.f32 %v3901, 1.442695
        %v3904 = vpow.pop %v3903
        %v3905 = vmul.f32 %v3902, 1.442695
        %v3906 = vpow.pop %v3905
        %v3907 = vadd.f32 %v3904, 1.0
        %v3908 = vadd.f32 %v3906, 1.0
        %v3909 = vrcp.pop %v3907
        %v3910 = vmul.f32 %v3907, %v3909
        %v3911 = vsub.f32 1.0, %v3910
        %v3912 = vmul.f32 %v3909, %v3911
        %v3913 = vadd.f32 %v3909, %v3912
        %vm3914 = vweird.f32 %v3907
        %vm3915 = vweird.f32 %v3909
        %vm3916 = vmor %vm3914, %vm3915
        %v3917 = vsel %vm3916, %v3909, %v3913
        %v3918 = vand.u32 2147483647, %v3907
        %vm3919 = vcmp.eq.f32.partialorder %v3918, 8.507059e+37
        %v3920 = vand.u32 %v3907, 2147483648
        %v3921 = vor.u32 1.1754944e-38, %v3920
        %v3922 = vsel %vm3919, %v3921, %v3917
        %v3923 = vmul.f32 1.0, %v3922
        %v3924 = vrcp.pop %v3908
        %v3925 = vmul.f32 %v3908, %v3924
        %v3926 = vsub.f32 1.0, %v3925
        %v3927 = vmul.f32 %v3924, %v3926
        %v3928 = vadd.f32 %v3924, %v3927
        %vm3929 = vweird.f32 %v3908
        %vm3930 = vweird.f32 %v3924
        %vm3931 = vmor %vm3929, %vm3930
        %v3932 = vsel %vm3931, %v3924, %v3928
        %v3933 = vand.u32 2147483647, %v3908
        %vm3934 = vcmp.eq.f32.partialorder %v3933, 8.507059e+37
        %v3935 = vand.u32 %v3908, 2147483648
        %v3936 = vor.u32 1.1754944e-38, %v3935
        %v3937 = vsel %vm3934, %v3936, %v3932
        %v3938 = vmul.f32 1.0, %v3937
        %3939 = vrot.lane.b32.xlu0 %v3895, 64
        %v3940 = vpop.permute.xlu0 %3939
        %3941 = vrot.lane.b32.xlu0 %v3896, 64
        %v3942 = vpop.permute.xlu0 %3941
        %v3945 = vmul.f32 %v3923, %v3940
        %v3946 = vmul.f32 %v3938, %v3942
        %3949 = vrot.lane.b32.xlu0 %v3945, 64
        %v3950 = vpop.permute.xlu0 %3949
        %3951 = vrot.lane.b32.xlu0 %v3946, 64
        %v3952 = vpop.permute.xlu0 %3951
        %v3955 = vadd.f32 %v3262, %v3950
        %v3956 = vadd.f32 %v3265, %v3952
        %v3957 = vtanh.pop %v3955
        %v3958 = vtanh.pop %v3956
        %v3959 = vsub.f32 1.0, %v3923
        %v3960 = vsub.f32 1.0, %v3938
        %3963 = vrot.lane.b32.xlu0 %v3957, 96
        %v3964 = vpop.permute.xlu0 %3963
        %3965 = vrot.lane.b32.xlu0 %v3958, 96
        %v3966 = vpop.permute.xlu0 %3965
        %v3969 = vmul.f32 %v3959, %v3964
        %v3970 = vmul.f32 %v3960, %v3966
        %v3971 = vrot.slane %v3849, 7
        %3972 = vrot.lane.b32.xlu0 %v3971, 32
        %v3973 = vpop.permute.xlu0 %3972
        %3974 = vrot.lane.b32.xlu0 %v3849, 32
        %v3975 = vpop.permute.xlu0 %3974
        %v3978 = vmul.f32 %v3923, %v3973
        %v3979 = vmul.f32 %v3938, %v3975
        %v3980 = vadd.f32 %v3969, %v3978
        %v3981 = vadd.f32 %v3970, %v3979
        %v3982 = vrot.slane %v3872, 3
        %v3983 = vrot.slane %v3872, 4
        %v3986 = vadd.f32 %v3262, %v3982
        %v3987 = vadd.f32 %v3265, %v3983
        %v3988 = vxor.u32 %v3986, 2147483648
        %v3989 = vxor.u32 %v3987, 2147483648
        %v3990 = vmul.f32 %v3988, 1.442695
        %v3991 = vpow.pop %v3990
        %v3992 = vmul.f32 %v3989, 1.442695
        %v3993 = vpow.pop %v3992
        %v3994 = vadd.f32 %v3991, 1.0
        %v3995 = vadd.f32 %v3993, 1.0
        %v3996 = vrcp.pop %v3994
        %v3997 = vmul.f32 %v3994, %v3996
        %v3998 = vsub.f32 1.0, %v3997
        %v3999 = vmul.f32 %v3996, %v3998
        %v4000 = vadd.f32 %v3996, %v3999
        %vm4001 = vweird.f32 %v3994
        %vm4002 = vweird.f32 %v3996
        %vm4003 = vmor %vm4001, %vm4002
        %v4004 = vsel %vm4003, %v3996, %v4000
        %v4005 = vand.u32 2147483647, %v3994
        %vm4006 = vcmp.eq.f32.partialorder %v4005, 8.507059e+37
        %v4007 = vand.u32 %v3994, 2147483648
        %v4008 = vor.u32 1.1754944e-38, %v4007
        %v4009 = vsel %vm4006, %v4008, %v4004
        %v4010 = vmul.f32 1.0, %v4009
        %v4011 = vrcp.pop %v3995
        %v4012 = vmul.f32 %v3995, %v4011
        %v4013 = vsub.f32 1.0, %v4012
        %v4014 = vmul.f32 %v4011, %v4013
        %v4015 = vadd.f32 %v4011, %v4014
        %vm4016 = vweird.f32 %v3995
        %vm4017 = vweird.f32 %v4011
        %vm4018 = vmor %vm4016, %vm4017
        %v4019 = vsel %vm4018, %v4011, %v4015
        %v4020 = vand.u32 2147483647, %v3995
        %vm4021 = vcmp.eq.f32.partialorder %v4020, 8.507059e+37
        %v4022 = vand.u32 %v3995, 2147483648
        %v4023 = vor.u32 1.1754944e-38, %v4022
        %v4024 = vsel %vm4021, %v4023, %v4019
        %v4025 = vmul.f32 1.0, %v4024
        %v4027 = vrot.slane %v3892, 3
        %v4028 = vrot.slane %v3892, 4
        %v4031 = vadd.f32 %v3285, %v4027
        %v4032 = vadd.f32 %v3288, %v4028
        %v4033 = vxor.u32 %v4031, 2147483648
        %v4034 = vxor.u32 %v4032, 2147483648
        %v4035 = vmul.f32 %v4033, 1.442695
        %v4036 = vpow.pop %v4035
        %v4037 = vmul.f32 %v4034, 1.442695
        %v4038 = vpow.pop %v4037
        %v4039 = vadd.f32 %v4036, 1.0
        %v4040 = vadd.f32 %v4038, 1.0
        %v4041 = vrcp.pop %v4039
        %v4042 = vmul.f32 %v4039, %v4041
        %v4043 = vsub.f32 1.0, %v4042
        %v4044 = vmul.f32 %v4041, %v4043
        %v4045 = vadd.f32 %v4041, %v4044
        %vm4046 = vweird.f32 %v4039
        %vm4047 = vweird.f32 %v4041
        %vm4048 = vmor %vm4046, %vm4047
        %v4049 = vsel %vm4048, %v4041, %v4045
        %v4050 = vand.u32 2147483647, %v4039
        %vm4051 = vcmp.eq.f32.partialorder %v4050, 8.507059e+37
        %v4052 = vand.u32 %v4039, 2147483648
        %v4053 = vor.u32 1.1754944e-38, %v4052
        %v4054 = vsel %vm4051, %v4053, %v4049
        %v4055 = vmul.f32 1.0, %v4054
        %v4056 = vrcp.pop %v4040
        %v4057 = vmul.f32 %v4040, %v4056
        %v4058 = vsub.f32 1.0, %v4057
        %v4059 = vmul.f32 %v4056, %v4058
        %v4060 = vadd.f32 %v4056, %v4059
        %vm4061 = vweird.f32 %v4040
        %vm4062 = vweird.f32 %v4056
        %vm4063 = vmor %vm4061, %vm4062
        %v4064 = vsel %vm4063, %v4056, %v4060
        %v4065 = vand.u32 2147483647, %v4040
        %vm4066 = vcmp.eq.f32.partialorder %v4065, 8.507059e+37
        %v4067 = vand.u32 %v4040, 2147483648
        %v4068 = vor.u32 1.1754944e-38, %v4067
        %v4069 = vsel %vm4066, %v4068, %v4064
        %v4070 = vmul.f32 1.0, %v4069
        %4071 = vrot.lane.b32.xlu0 %v4027, 64
        %v4072 = vpop.permute.xlu0 %4071
        %4073 = vrot.lane.b32.xlu0 %v4028, 64
        %v4074 = vpop.permute.xlu0 %4073
        %v4077 = vmul.f32 %v4010, %v4072
        %v4078 = vmul.f32 %v4025, %v4074
        %4081 = vrot.lane.b32.xlu0 %v4077, 64
        %v4082 = vpop.permute.xlu0 %4081
        %4083 = vrot.lane.b32.xlu0 %v4078, 64
        %v4084 = vpop.permute.xlu0 %4083
        %v4087 = vadd.f32 %v3285, %v4082
        %v4088 = vadd.f32 %v3288, %v4084
        %v4089 = vtanh.pop %v4087
        %v4090 = vtanh.pop %v4088
        %v4091 = vsub.f32 1.0, %v4055
        %v4092 = vsub.f32 1.0, %v4070
        %4095 = vrot.lane.b32.xlu0 %v4089, 96
        %v4096 = vpop.permute.xlu0 %4095
        %4097 = vrot.lane.b32.xlu0 %v4090, 96
        %v4098 = vpop.permute.xlu0 %4097
        %v4101 = vmul.f32 %v4091, %v4096
        %v4102 = vmul.f32 %v4092, %v4098
        %v4103 = vrot.slane %v3849, 4
        %v4104 = vrot.slane %v3849, 5
        %4105 = vrot.lane.b32.xlu0 %v4103, 96
        %v4106 = vpop.permute.xlu0 %4105
        %4107 = vrot.lane.b32.xlu0 %v4104, 96
        %v4108 = vpop.permute.xlu0 %4107
        %v4111 = vmul.f32 %v4055, %v4106
        %v4112 = vmul.f32 %v4070, %v4108
        %v4113 = vadd.f32 %v4101, %v4111
        %v4114 = vadd.f32 %v4102, %v4112
        %v4117 = vrot.slane %v3981, 7
        %v4118 = vsel %vm1772, %v4117, %v3980
        %4119 = vrot.lane.b32.xlu0 %v4118, 96
        %v4120 = vpop.permute.xlu0 %4119
        %v4124 = vrot.slane %v4113, 3
        %v4125 = vrot.slane %v4114, 2
        %v4126 = vsel %vm1772, %v4125, %v4124
        %4127 = vrot.lane.b32.xlu0 %v4126, 32
        %v4128 = vpop.permute.xlu0 %4127
        %v4130 = vsel %vm1222, %v4120, %v4128
        %v4132 = vrot.slane %v4130, 2
        %v4133 = vsel %vm959, %v4132, 0
        %4135 = vmatpush.msra.mxu0 0.0
        %4136 = vmatpush.msra.mxu0 0.0
        %4137 = vmatpush.msra.mxu0 0.0
        %4138 = vmatpush.msra.mxu0 0.0
        %4139 = vmatpush.msra.mxu0 0.0
        %4140 = vmatpush.msra.mxu0 0.0
        %4141 = vmatpush.msra.mxu0 0.0
        %4142 = vmatpush.msra.mxu0 0.0
        %4143 = vmatpush.msra.mxu0 %v3304
        %4144 = vmatpush.msra.mxu0 %v3302
        %4145 = vmatpush.msra.mxu0 %v3300
        %4146 = vmatpush.msra.mxu0 %v3298
        %4147 = vmatpush.msra.mxu0 %v3296
        %4148 = vmatpush.msra.mxu0 %v3294
        %4149 = vmatpush.msra.mxu0 %v3292
        %4150 = vmatpush.msra.mxu0 %v3290
        %4151 = vmatmul.f32.gmra.mxu0 %v4133
        %v4152 = vpop.f32.mrf.mxu0
        %v4153 = vadd.f32 %v3308, %v4152
        %4154 = vdwg.mxu0
        %4155 = vmatpush.msra.mxu0 0.0
        %4156 = vmatpush.msra.mxu0 0.0
        %4157 = vmatpush.msra.mxu0 0.0
        %4158 = vmatpush.msra.mxu0 0.0
        %4159 = vmatpush.msra.mxu0 0.0
        %4160 = vmatpush.msra.mxu0 0.0
        %4161 = vmatpush.msra.mxu0 0.0
        %4162 = vmatpush.msra.mxu0 0.0
        %4163 = vmatpush.msra.mxu0 %v3305
        %4164 = vmatpush.msra.mxu0 %v3303
        %4165 = vmatpush.msra.mxu0 %v3301
        %4166 = vmatpush.msra.mxu0 %v3299
        %4167 = vmatpush.msra.mxu0 %v3297
        %4168 = vmatpush.msra.mxu0 %v3295
        %4169 = vmatpush.msra.mxu0 %v3293
        %4170 = vmatpush.msra.mxu0 %v3291
        %4171 = vmatmul.f32.gmra.mxu0 %v4133
        %v4172 = vpop.f32.mrf.mxu0
        %v4173 = vadd.f32 %v3309, %v4172
        %4174 = vdwg.mxu0
        %v4176 = vrot.slane %v4153, 5
        %v4177 = vrot.slane %v4153, 6
        %v4180 = vadd.f32 %v3262, %v4176
        %v4181 = vadd.f32 %v3265, %v4177
        %v4182 = vxor.u32 %v4180, 2147483648
        %v4183 = vxor.u32 %v4181, 2147483648
        %v4184 = vmul.f32 %v4182, 1.442695
        %v4185 = vpow.pop %v4184
        %v4186 = vmul.f32 %v4183, 1.442695
        %v4187 = vpow.pop %v4186
        %v4188 = vadd.f32 %v4185, 1.0
        %v4189 = vadd.f32 %v4187, 1.0
        %v4190 = vrcp.pop %v4188
        %v4191 = vmul.f32 %v4188, %v4190
        %v4192 = vsub.f32 1.0, %v4191
        %v4193 = vmul.f32 %v4190, %v4192
        %v4194 = vadd.f32 %v4190, %v4193
        %vm4195 = vweird.f32 %v4188
        %vm4196 = vweird.f32 %v4190
        %vm4197 = vmor %vm4195, %vm4196
        %v4198 = vsel %vm4197, %v4190, %v4194
        %v4199 = vand.u32 2147483647, %v4188
        %vm4200 = vcmp.eq.f32.partialorder %v4199, 8.507059e+37
        %v4201 = vand.u32 %v4188, 2147483648
        %v4202 = vor.u32 1.1754944e-38, %v4201
        %v4203 = vsel %vm4200, %v4202, %v4198
        %v4204 = vmul.f32 1.0, %v4203
        %v4205 = vrcp.pop %v4189
        %v4206 = vmul.f32 %v4189, %v4205
        %v4207 = vsub.f32 1.0, %v4206
        %v4208 = vmul.f32 %v4205, %v4207
        %v4209 = vadd.f32 %v4205, %v4208
        %vm4210 = vweird.f32 %v4189
        %vm4211 = vweird.f32 %v4205
        %vm4212 = vmor %vm4210, %vm4211
        %v4213 = vsel %vm4212, %v4205, %v4209
        %v4214 = vand.u32 2147483647, %v4189
        %vm4215 = vcmp.eq.f32.partialorder %v4214, 8.507059e+37
        %v4216 = vand.u32 %v4189, 2147483648
        %v4217 = vor.u32 1.1754944e-38, %v4216
        %v4218 = vsel %vm4215, %v4217, %v4213
        %v4219 = vmul.f32 1.0, %v4218
        %4220 = vrot.lane.b32.xlu0 %v4176, 64
        %v4221 = vpop.permute.xlu0 %4220
        %4222 = vrot.lane.b32.xlu0 %v4177, 64
        %v4223 = vpop.permute.xlu0 %4222
        %v4226 = vmul.f32 %v4204, %v4221
        %v4227 = vmul.f32 %v4219, %v4223
        %4230 = vrot.lane.b32.xlu0 %v4226, 64
        %v4231 = vpop.permute.xlu0 %4230
        %4232 = vrot.lane.b32.xlu0 %v4227, 64
        %v4233 = vpop.permute.xlu0 %4232
        %v4236 = vadd.f32 %v3262, %v4231
        %v4237 = vadd.f32 %v3265, %v4233
        %v4238 = vtanh.pop %v4236
        %v4239 = vtanh.pop %v4237
        %v4240 = vsub.f32 1.0, %v4204
        %v4241 = vsub.f32 1.0, %v4219
        %4244 = vrot.lane.b32.xlu0 %v4238, 96
        %v4245 = vpop.permute.xlu0 %4244
        %4246 = vrot.lane.b32.xlu0 %v4239, 96
        %v4247 = vpop.permute.xlu0 %4246
        %v4250 = vmul.f32 %v4240, %v4245
        %v4251 = vmul.f32 %v4241, %v4247
        %v4252 = vrot.slane %v4130, 7
        %4253 = vrot.lane.b32.xlu0 %v4252, 32
        %v4254 = vpop.permute.xlu0 %4253
        %4255 = vrot.lane.b32.xlu0 %v4130, 32
        %v4256 = vpop.permute.xlu0 %4255
        %v4259 = vmul.f32 %v4204, %v4254
        %v4260 = vmul.f32 %v4219, %v4256
        %v4261 = vadd.f32 %v4250, %v4259
        %v4262 = vadd.f32 %v4251, %v4260
        %v4263 = vrot.slane %v4153, 4
        %v4265 = vadd.f32 %v3262, %v4263
        %v4266 = vadd.f32 %v3265, %v4176
        %v4267 = vxor.u32 %v4265, 2147483648
        %v4268 = vxor.u32 %v4266, 2147483648
        %v4269 = vmul.f32 %v4267, 1.442695
        %v4270 = vpow.pop %v4269
        %v4271 = vmul.f32 %v4268, 1.442695
        %v4272 = vpow.pop %v4271
        %v4273 = vadd.f32 %v4270, 1.0
        %v4274 = vadd.f32 %v4272, 1.0
        %v4275 = vrcp.pop %v4273
        %v4276 = vmul.f32 %v4273, %v4275
        %v4277 = vsub.f32 1.0, %v4276
        %v4278 = vmul.f32 %v4275, %v4277
        %v4279 = vadd.f32 %v4275, %v4278
        %vm4280 = vweird.f32 %v4273
        %vm4281 = vweird.f32 %v4275
        %vm4282 = vmor %vm4280, %vm4281
        %v4283 = vsel %vm4282, %v4275, %v4279
        %v4284 = vand.u32 2147483647, %v4273
        %vm4285 = vcmp.eq.f32.partialorder %v4284, 8.507059e+37
        %v4286 = vand.u32 %v4273, 2147483648
        %v4287 = vor.u32 1.1754944e-38, %v4286
        %v4288 = vsel %vm4285, %v4287, %v4283
        %v4289 = vmul.f32 1.0, %v4288
        %v4290 = vrcp.pop %v4274
        %v4291 = vmul.f32 %v4274, %v4290
        %v4292 = vsub.f32 1.0, %v4291
        %v4293 = vmul.f32 %v4290, %v4292
        %v4294 = vadd.f32 %v4290, %v4293
        %vm4295 = vweird.f32 %v4274
        %vm4296 = vweird.f32 %v4290
        %vm4297 = vmor %vm4295, %vm4296
        %v4298 = vsel %vm4297, %v4290, %v4294
        %v4299 = vand.u32 2147483647, %v4274
        %vm4300 = vcmp.eq.f32.partialorder %v4299, 8.507059e+37
        %v4301 = vand.u32 %v4274, 2147483648
        %v4302 = vor.u32 1.1754944e-38, %v4301
        %v4303 = vsel %vm4300, %v4302, %v4298
        %v4304 = vmul.f32 1.0, %v4303
        %v4306 = vrot.slane %v4173, 4
        %v4307 = vrot.slane %v4173, 5
        %v4310 = vadd.f32 %v3285, %v4306
        %v4311 = vadd.f32 %v3288, %v4307
        %v4312 = vxor.u32 %v4310, 2147483648
        %v4313 = vxor.u32 %v4311, 2147483648
        %v4314 = vmul.f32 %v4312, 1.442695
        %v4315 = vpow.pop %v4314
        %v4316 = vmul.f32 %v4313, 1.442695
        %v4317 = vpow.pop %v4316
        %v4318 = vadd.f32 %v4315, 1.0
        %v4319 = vadd.f32 %v4317, 1.0
        %v4320 = vrcp.pop %v4318
        %v4321 = vmul.f32 %v4318, %v4320
        %v4322 = vsub.f32 1.0, %v4321
        %v4323 = vmul.f32 %v4320, %v4322
        %v4324 = vadd.f32 %v4320, %v4323
        %vm4325 = vweird.f32 %v4318
        %vm4326 = vweird.f32 %v4320
        %vm4327 = vmor %vm4325, %vm4326
        %v4328 = vsel %vm4327, %v4320, %v4324
        %v4329 = vand.u32 2147483647, %v4318
        %vm4330 = vcmp.eq.f32.partialorder %v4329, 8.507059e+37
        %v4331 = vand.u32 %v4318, 2147483648
        %v4332 = vor.u32 1.1754944e-38, %v4331
        %v4333 = vsel %vm4330, %v4332, %v4328
        %v4334 = vmul.f32 1.0, %v4333
        %v4335 = vrcp.pop %v4319
        %v4336 = vmul.f32 %v4319, %v4335
        %v4337 = vsub.f32 1.0, %v4336
        %v4338 = vmul.f32 %v4335, %v4337
        %v4339 = vadd.f32 %v4335, %v4338
        %vm4340 = vweird.f32 %v4319
        %vm4341 = vweird.f32 %v4335
        %vm4342 = vmor %vm4340, %vm4341
        %v4343 = vsel %vm4342, %v4335, %v4339
        %v4344 = vand.u32 2147483647, %v4319
        %vm4345 = vcmp.eq.f32.partialorder %v4344, 8.507059e+37
        %v4346 = vand.u32 %v4319, 2147483648
        %v4347 = vor.u32 1.1754944e-38, %v4346
        %v4348 = vsel %vm4345, %v4347, %v4343
        %v4349 = vmul.f32 1.0, %v4348
        %4350 = vrot.lane.b32.xlu0 %v4306, 64
        %v4351 = vpop.permute.xlu0 %4350
        %4352 = vrot.lane.b32.xlu0 %v4307, 64
        %v4353 = vpop.permute.xlu0 %4352
        %v4356 = vmul.f32 %v4289, %v4351
        %v4357 = vmul.f32 %v4304, %v4353
        %4360 = vrot.lane.b32.xlu0 %v4356, 64
        %v4361 = vpop.permute.xlu0 %4360
        %4362 = vrot.lane.b32.xlu0 %v4357, 64
        %v4363 = vpop.permute.xlu0 %4362
        %v4366 = vadd.f32 %v3285, %v4361
        %v4367 = vadd.f32 %v3288, %v4363
        %v4368 = vtanh.pop %v4366
        %v4369 = vtanh.pop %v4367
        %v4370 = vsub.f32 1.0, %v4334
        %v4371 = vsub.f32 1.0, %v4349
        %4374 = vrot.lane.b32.xlu0 %v4368, 96
        %v4375 = vpop.permute.xlu0 %4374
        %4376 = vrot.lane.b32.xlu0 %v4369, 96
        %v4377 = vpop.permute.xlu0 %4376
        %v4380 = vmul.f32 %v4370, %v4375
        %v4381 = vmul.f32 %v4371, %v4377
        %v4382 = vrot.slane %v4130, 6
        %4383 = vrot.lane.b32.xlu0 %v4382, 96
        %v4384 = vpop.permute.xlu0 %4383
        %4385 = vrot.lane.b32.xlu0 %v4252, 96
        %v4386 = vpop.permute.xlu0 %4385
        %v4389 = vmul.f32 %v4334, %v4384
        %v4390 = vmul.f32 %v4349, %v4386
        %v4391 = vadd.f32 %v4380, %v4389
        %v4392 = vadd.f32 %v4381, %v4390
        %v4395 = vrot.slane %v4262, 7
        %v4396 = vsel %vm2051, %v4395, %v4261
        %4397 = vrot.lane.b32.xlu0 %v4396, 96
        %v4398 = vpop.permute.xlu0 %4397
        %v4402 = vrot.slane %v4391, 1
        %v4403 = vsel %vm2051, %v4392, %v4402
        %4404 = vrot.lane.b32.xlu0 %v4403, 32
        %v4405 = vpop.permute.xlu0 %4404
        %v4407 = vsel %vm1222, %v4398, %v4405
        %v4409 = vrot.slane %v4407, 3
        %v4410 = vsel %vm959, %v4409, 0
        %4412 = vmatpush.msra.mxu0 0.0
        %4413 = vmatpush.msra.mxu0 0.0
        %4414 = vmatpush.msra.mxu0 0.0
        %4415 = vmatpush.msra.mxu0 0.0
        %4416 = vmatpush.msra.mxu0 0.0
        %4417 = vmatpush.msra.mxu0 0.0
        %4418 = vmatpush.msra.mxu0 0.0
        %4419 = vmatpush.msra.mxu0 0.0
        %4420 = vmatpush.msra.mxu0 %v3304
        %4421 = vmatpush.msra.mxu0 %v3302
        %4422 = vmatpush.msra.mxu0 %v3300
        %4423 = vmatpush.msra.mxu0 %v3298
        %4424 = vmatpush.msra.mxu0 %v3296
        %4425 = vmatpush.msra.mxu0 %v3294
        %4426 = vmatpush.msra.mxu0 %v3292
        %4427 = vmatpush.msra.mxu0 %v3290
        %4428 = vmatmul.f32.gmra.mxu0 %v4410
        %v4429 = vpop.f32.mrf.mxu0
        %v4430 = vadd.f32 %v3308, %v4429
        %4431 = vdwg.mxu0
        %4432 = vmatpush.msra.mxu0 0.0
        %4433 = vmatpush.msra.mxu0 0.0
        %4434 = vmatpush.msra.mxu0 0.0
        %4435 = vmatpush.msra.mxu0 0.0
        %4436 = vmatpush.msra.mxu0 0.0
        %4437 = vmatpush.msra.mxu0 0.0
        %4438 = vmatpush.msra.mxu0 0.0
        %4439 = vmatpush.msra.mxu0 0.0
        %4440 = vmatpush.msra.mxu0 %v3305
        %4441 = vmatpush.msra.mxu0 %v3303
        %4442 = vmatpush.msra.mxu0 %v3301
        %4443 = vmatpush.msra.mxu0 %v3299
        %4444 = vmatpush.msra.mxu0 %v3297
        %4445 = vmatpush.msra.mxu0 %v3295
        %4446 = vmatpush.msra.mxu0 %v3293
        %4447 = vmatpush.msra.mxu0 %v3291
        %4448 = vmatmul.f32.gmra.mxu0 %v4410
        %v4449 = vpop.f32.mrf.mxu0
        %v4450 = vadd.f32 %v3309, %v4449
        %4451 = vdwg.mxu0
        %v4453 = vrot.slane %v4430, 4
        %v4454 = vrot.slane %v4430, 5
        %v4457 = vadd.f32 %v3262, %v4453
        %v4458 = vadd.f32 %v3265, %v4454
        %v4459 = vxor.u32 %v4457, 2147483648
        %v4460 = vxor.u32 %v4458, 2147483648
        %v4461 = vmul.f32 %v4459, 1.442695
        %v4462 = vpow.pop %v4461
        %v4463 = vmul.f32 %v4460, 1.442695
        %v4464 = vpow.pop %v4463
        %v4465 = vadd.f32 %v4462, 1.0
        %v4466 = vadd.f32 %v4464, 1.0
        %v4467 = vrcp.pop %v4465
        %v4468 = vmul.f32 %v4465, %v4467
        %v4469 = vsub.f32 1.0, %v4468
        %v4470 = vmul.f32 %v4467, %v4469
        %v4471 = vadd.f32 %v4467, %v4470
        %vm4472 = vweird.f32 %v4465
        %vm4473 = vweird.f32 %v4467
        %vm4474 = vmor %vm4472, %vm4473
        %v4475 = vsel %vm4474, %v4467, %v4471
        %v4476 = vand.u32 2147483647, %v4465
        %vm4477 = vcmp.eq.f32.partialorder %v4476, 8.507059e+37
        %v4478 = vand.u32 %v4465, 2147483648
        %v4479 = vor.u32 1.1754944e-38, %v4478
        %v4480 = vsel %vm4477, %v4479, %v4475
        %v4481 = vmul.f32 1.0, %v4480
        %v4482 = vrcp.pop %v4466
        %v4483 = vmul.f32 %v4466, %v4482
        %v4484 = vsub.f32 1.0, %v4483
        %v4485 = vmul.f32 %v4482, %v4484
        %v4486 = vadd.f32 %v4482, %v4485
        %vm4487 = vweird.f32 %v4466
        %vm4488 = vweird.f32 %v4482
        %vm4489 = vmor %vm4487, %vm4488
        %v4490 = vsel %vm4489, %v4482, %v4486
        %v4491 = vand.u32 2147483647, %v4466
        %vm4492 = vcmp.eq.f32.partialorder %v4491, 8.507059e+37
        %v4493 = vand.u32 %v4466, 2147483648
        %v4494 = vor.u32 1.1754944e-38, %v4493
        %v4495 = vsel %vm4492, %v4494, %v4490
        %v4496 = vmul.f32 1.0, %v4495
        %4497 = vrot.lane.b32.xlu0 %v4453, 64
        %v4498 = vpop.permute.xlu0 %4497
        %4499 = vrot.lane.b32.xlu0 %v4454, 64
        %v4500 = vpop.permute.xlu0 %4499
        %v4503 = vmul.f32 %v4481, %v4498
        %v4504 = vmul.f32 %v4496, %v4500
        %4507 = vrot.lane.b32.xlu0 %v4503, 64
        %v4508 = vpop.permute.xlu0 %4507
        %4509 = vrot.lane.b32.xlu0 %v4504, 64
        %v4510 = vpop.permute.xlu0 %4509
        %v4513 = vadd.f32 %v3262, %v4508
        %v4514 = vadd.f32 %v3265, %v4510
        %v4515 = vtanh.pop %v4513
        %v4516 = vtanh.pop %v4514
        %v4517 = vsub.f32 1.0, %v4481
        %v4518 = vsub.f32 1.0, %v4496
        %4521 = vrot.lane.b32.xlu0 %v4515, 96
        %v4522 = vpop.permute.xlu0 %4521
        %4523 = vrot.lane.b32.xlu0 %v4516, 96
        %v4524 = vpop.permute.xlu0 %4523
        %v4527 = vmul.f32 %v4517, %v4522
        %v4528 = vmul.f32 %v4518, %v4524
        %v4529 = vrot.slane %v4407, 7
        %4530 = vrot.lane.b32.xlu0 %v4529, 32
        %v4531 = vpop.permute.xlu0 %4530
        %4532 = vrot.lane.b32.xlu0 %v4407, 32
        %v4533 = vpop.permute.xlu0 %4532
        %v4536 = vmul.f32 %v4481, %v4531
        %v4537 = vmul.f32 %v4496, %v4533
        %v4538 = vadd.f32 %v4527, %v4536
        %v4539 = vadd.f32 %v4528, %v4537
        %v4540 = vrot.slane %v4430, 6
        %v4542 = vadd.f32 %v3262, %v4454
        %v4543 = vadd.f32 %v3265, %v4540
        %v4544 = vxor.u32 %v4542, 2147483648
        %v4545 = vxor.u32 %v4543, 2147483648
        %v4546 = vmul.f32 %v4544, 1.442695
        %v4547 = vpow.pop %v4546
        %v4548 = vmul.f32 %v4545, 1.442695
        %v4549 = vpow.pop %v4548
        %v4550 = vadd.f32 %v4547, 1.0
        %v4551 = vadd.f32 %v4549, 1.0
        %v4552 = vrcp.pop %v4550
        %v4553 = vmul.f32 %v4550, %v4552
        %v4554 = vsub.f32 1.0, %v4553
        %v4555 = vmul.f32 %v4552, %v4554
        %v4556 = vadd.f32 %v4552, %v4555
        %vm4557 = vweird.f32 %v4550
        %vm4558 = vweird.f32 %v4552
        %vm4559 = vmor %vm4557, %vm4558
        %v4560 = vsel %vm4559, %v4552, %v4556
        %v4561 = vand.u32 2147483647, %v4550
        %vm4562 = vcmp.eq.f32.partialorder %v4561, 8.507059e+37
        %v4563 = vand.u32 %v4550, 2147483648
        %v4564 = vor.u32 1.1754944e-38, %v4563
        %v4565 = vsel %vm4562, %v4564, %v4560
        %v4566 = vmul.f32 1.0, %v4565
        %v4567 = vrcp.pop %v4551
        %v4568 = vmul.f32 %v4551, %v4567
        %v4569 = vsub.f32 1.0, %v4568
        %v4570 = vmul.f32 %v4567, %v4569
        %v4571 = vadd.f32 %v4567, %v4570
        %vm4572 = vweird.f32 %v4551
        %vm4573 = vweird.f32 %v4567
        %vm4574 = vmor %vm4572, %vm4573
        %v4575 = vsel %vm4574, %v4567, %v4571
        %v4576 = vand.u32 2147483647, %v4551
        %vm4577 = vcmp.eq.f32.partialorder %v4576, 8.507059e+37
        %v4578 = vand.u32 %v4551, 2147483648
        %v4579 = vor.u32 1.1754944e-38, %v4578
        %v4580 = vsel %vm4577, %v4579, %v4575
        %v4581 = vmul.f32 1.0, %v4580
        %v4583 = vrot.slane %v4450, 5
        %v4584 = vrot.slane %v4450, 6
        %v4587 = vadd.f32 %v3285, %v4583
        %v4588 = vadd.f32 %v3288, %v4584
        %v4589 = vxor.u32 %v4587, 2147483648
        %v4590 = vxor.u32 %v4588, 2147483648
        %v4591 = vmul.f32 %v4589, 1.442695
        %v4592 = vpow.pop %v4591
        %v4593 = vmul.f32 %v4590, 1.442695
        %v4594 = vpow.pop %v4593
        %v4595 = vadd.f32 %v4592, 1.0
        %v4596 = vadd.f32 %v4594, 1.0
        %v4597 = vrcp.pop %v4595
        %v4598 = vmul.f32 %v4595, %v4597
        %v4599 = vsub.f32 1.0, %v4598
        %v4600 = vmul.f32 %v4597, %v4599
        %v4601 = vadd.f32 %v4597, %v4600
        %vm4602 = vweird.f32 %v4595
        %vm4603 = vweird.f32 %v4597
        %vm4604 = vmor %vm4602, %vm4603
        %v4605 = vsel %vm4604, %v4597, %v4601
        %v4606 = vand.u32 2147483647, %v4595
        %vm4607 = vcmp.eq.f32.partialorder %v4606, 8.507059e+37
        %v4608 = vand.u32 %v4595, 2147483648
        %v4609 = vor.u32 1.1754944e-38, %v4608
        %v4610 = vsel %vm4607, %v4609, %v4605
        %v4611 = vmul.f32 1.0, %v4610
        %v4612 = vrcp.pop %v4596
        %v4613 = vmul.f32 %v4596, %v4612
        %v4614 = vsub.f32 1.0, %v4613
        %v4615 = vmul.f32 %v4612, %v4614
        %v4616 = vadd.f32 %v4612, %v4615
        %vm4617 = vweird.f32 %v4596
        %vm4618 = vweird.f32 %v4612
        %vm4619 = vmor %vm4617, %vm4618
        %v4620 = vsel %vm4619, %v4612, %v4616
        %v4621 = vand.u32 2147483647, %v4596
        %vm4622 = vcmp.eq.f32.partialorder %v4621, 8.507059e+37
        %v4623 = vand.u32 %v4596, 2147483648
        %v4624 = vor.u32 1.1754944e-38, %v4623
        %v4625 = vsel %vm4622, %v4624, %v4620
        %v4626 = vmul.f32 1.0, %v4625
        %4627 = vrot.lane.b32.xlu0 %v4583, 64
        %v4628 = vpop.permute.xlu0 %4627
        %4629 = vrot.lane.b32.xlu0 %v4584, 64
        %v4630 = vpop.permute.xlu0 %4629
        %v4633 = vmul.f32 %v4566, %v4628
        %v4634 = vmul.f32 %v4581, %v4630
        %4637 = vrot.lane.b32.xlu0 %v4633, 64
        %v4638 = vpop.permute.xlu0 %4637
        %4639 = vrot.lane.b32.xlu0 %v4634, 64
        %v4640 = vpop.permute.xlu0 %4639
        %v4643 = vadd.f32 %v3285, %v4638
        %v4644 = vadd.f32 %v3288, %v4640
        %v4645 = vtanh.pop %v4643
        %v4646 = vtanh.pop %v4644
        %v4647 = vsub.f32 1.0, %v4611
        %v4648 = vsub.f32 1.0, %v4626
        %4651 = vrot.lane.b32.xlu0 %v4645, 96
        %v4652 = vpop.permute.xlu0 %4651
        %4653 = vrot.lane.b32.xlu0 %v4646, 96
        %v4654 = vpop.permute.xlu0 %4653
        %v4657 = vmul.f32 %v4647, %v4652
        %v4658 = vmul.f32 %v4648, %v4654
        %v4659 = vrot.slane %v4407, 1
        %4660 = vrot.lane.b32.xlu0 %v4407, 96
        %v4661 = vpop.permute.xlu0 %4660
        %4662 = vrot.lane.b32.xlu0 %v4659, 96
        %v4663 = vpop.permute.xlu0 %4662
        %v4666 = vmul.f32 %v4611, %v4661
        %v4667 = vmul.f32 %v4626, %v4663
        %v4668 = vadd.f32 %v4657, %v4666
        %v4669 = vadd.f32 %v4658, %v4667
        %v4672 = vrot.slane %v4539, 7
        %v4673 = vsel %vm2329, %v4672, %v4538
        %4674 = vrot.lane.b32.xlu0 %v4673, 96
        %v4675 = vpop.permute.xlu0 %4674
        %v4679 = vrot.slane %v4668, 7
        %v4680 = vrot.slane %v4669, 6
        %v4681 = vsel %vm2329, %v4680, %v4679
        %4682 = vrot.lane.b32.xlu0 %v4681, 32
        %v4683 = vpop.permute.xlu0 %4682
        %v4685 = vsel %vm1222, %v4675, %v4683
        %v4687 = vrot.slane %v4685, 4
        %v4688 = vsel %vm959, %v4687, 0
        %4690 = vmatpush.msra.mxu0 0.0
        %4691 = vmatpush.msra.mxu0 0.0
        %4692 = vmatpush.msra.mxu0 0.0
        %4693 = vmatpush.msra.mxu0 0.0
        %4694 = vmatpush.msra.mxu0 0.0
        %4695 = vmatpush.msra.mxu0 0.0
        %4696 = vmatpush.msra.mxu0 0.0
        %4697 = vmatpush.msra.mxu0 0.0
        %4698 = vmatpush.msra.mxu0 %v3304
        %4699 = vmatpush.msra.mxu0 %v3302
        %4700 = vmatpush.msra.mxu0 %v3300
        %4701 = vmatpush.msra.mxu0 %v3298
        %4702 = vmatpush.msra.mxu0 %v3296
        %4703 = vmatpush.msra.mxu0 %v3294
        %4704 = vmatpush.msra.mxu0 %v3292
        %4705 = vmatpush.msra.mxu0 %v3290
        %4706 = vmatmul.f32.gmra.mxu0 %v4688
        %v4707 = vpop.f32.mrf.mxu0
        %v4708 = vadd.f32 %v3308, %v4707
        %4709 = vdwg.mxu0
        %4710 = vmatpush.msra.mxu0 0.0
        %4711 = vmatpush.msra.mxu0 0.0
        %4712 = vmatpush.msra.mxu0 0.0
        %4713 = vmatpush.msra.mxu0 0.0
        %4714 = vmatpush.msra.mxu0 0.0
        %4715 = vmatpush.msra.mxu0 0.0
        %4716 = vmatpush.msra.mxu0 0.0
        %4717 = vmatpush.msra.mxu0 0.0
        %4718 = vmatpush.msra.mxu0 %v3305
        %4719 = vmatpush.msra.mxu0 %v3303
        %4720 = vmatpush.msra.mxu0 %v3301
        %4721 = vmatpush.msra.mxu0 %v3299
        %4722 = vmatpush.msra.mxu0 %v3297
        %4723 = vmatpush.msra.mxu0 %v3295
        %4724 = vmatpush.msra.mxu0 %v3293
        %4725 = vmatpush.msra.mxu0 %v3291
        %4726 = vmatmul.f32.gmra.mxu0 %v4688
        %v4727 = vpop.f32.mrf.mxu0
        %v4728 = vadd.f32 %v3309, %v4727
        %4729 = vdwg.mxu0
        %v4731 = vrot.slane %v4708, 3
        %v4732 = vrot.slane %v4708, 4
        %v4735 = vadd.f32 %v3262, %v4731
        %v4736 = vadd.f32 %v3265, %v4732
        %v4737 = vxor.u32 %v4735, 2147483648
        %v4738 = vxor.u32 %v4736, 2147483648
        %v4739 = vmul.f32 %v4737, 1.442695
        %v4740 = vpow.pop %v4739
        %v4741 = vmul.f32 %v4738, 1.442695
        %v4742 = vpow.pop %v4741
        %v4743 = vadd.f32 %v4740, 1.0
        %v4744 = vadd.f32 %v4742, 1.0
        %v4745 = vrcp.pop %v4743
        %v4746 = vmul.f32 %v4743, %v4745
        %v4747 = vsub.f32 1.0, %v4746
        %v4748 = vmul.f32 %v4745, %v4747
        %v4749 = vadd.f32 %v4745, %v4748
        %vm4750 = vweird.f32 %v4743
        %vm4751 = vweird.f32 %v4745
        %vm4752 = vmor %vm4750, %vm4751
        %v4753 = vsel %vm4752, %v4745, %v4749
        %v4754 = vand.u32 2147483647, %v4743
        %vm4755 = vcmp.eq.f32.partialorder %v4754, 8.507059e+37
        %v4756 = vand.u32 %v4743, 2147483648
        %v4757 = vor.u32 1.1754944e-38, %v4756
        %v4758 = vsel %vm4755, %v4757, %v4753
        %v4759 = vmul.f32 1.0, %v4758
        %v4760 = vrcp.pop %v4744
        %v4761 = vmul.f32 %v4744, %v4760
        %v4762 = vsub.f32 1.0, %v4761
        %v4763 = vmul.f32 %v4760, %v4762
        %v4764 = vadd.f32 %v4760, %v4763
        %vm4765 = vweird.f32 %v4744
        %vm4766 = vweird.f32 %v4760
        %vm4767 = vmor %vm4765, %vm4766
        %v4768 = vsel %vm4767, %v4760, %v4764
        %v4769 = vand.u32 2147483647, %v4744
        %vm4770 = vcmp.eq.f32.partialorder %v4769, 8.507059e+37
        %v4771 = vand.u32 %v4744, 2147483648
        %v4772 = vor.u32 1.1754944e-38, %v4771
        %v4773 = vsel %vm4770, %v4772, %v4768
        %v4774 = vmul.f32 1.0, %v4773
        %4775 = vrot.lane.b32.xlu0 %v4731, 64
        %v4776 = vpop.permute.xlu0 %4775
        %4777 = vrot.lane.b32.xlu0 %v4732, 64
        %v4778 = vpop.permute.xlu0 %4777
        %v4781 = vmul.f32 %v4759, %v4776
        %v4782 = vmul.f32 %v4774, %v4778
        %4785 = vrot.lane.b32.xlu0 %v4781, 64
        %v4786 = vpop.permute.xlu0 %4785
        %4787 = vrot.lane.b32.xlu0 %v4782, 64
        %v4788 = vpop.permute.xlu0 %4787
        %v4791 = vadd.f32 %v3262, %v4786
        %v4792 = vadd.f32 %v3265, %v4788
        %v4793 = vtanh.pop %v4791
        %v4794 = vtanh.pop %v4792
        %v4795 = vsub.f32 1.0, %v4759
        %v4796 = vsub.f32 1.0, %v4774
        %4799 = vrot.lane.b32.xlu0 %v4793, 96
        %v4800 = vpop.permute.xlu0 %4799
        %4801 = vrot.lane.b32.xlu0 %v4794, 96
        %v4802 = vpop.permute.xlu0 %4801
        %v4805 = vmul.f32 %v4795, %v4800
        %v4806 = vmul.f32 %v4796, %v4802
        %v4807 = vrot.slane %v4685, 7
        %4808 = vrot.lane.b32.xlu0 %v4807, 32
        %v4809 = vpop.permute.xlu0 %4808
        %4810 = vrot.lane.b32.xlu0 %v4685, 32
        %v4811 = vpop.permute.xlu0 %4810
        %v4814 = vmul.f32 %v4759, %v4809
        %v4815 = vmul.f32 %v4774, %v4811
        %v4816 = vadd.f32 %v4805, %v4814
        %v4817 = vadd.f32 %v4806, %v4815
        %v4818 = vrot.slane %v4708, 6
        %v4819 = vrot.slane %v4708, 7
        %v4822 = vadd.f32 %v3262, %v4818
        %v4823 = vadd.f32 %v3265, %v4819
        %v4824 = vxor.u32 %v4822, 2147483648
        %v4825 = vxor.u32 %v4823, 2147483648
        %v4826 = vmul.f32 %v4824, 1.442695
        %v4827 = vpow.pop %v4826
        %v4828 = vmul.f32 %v4825, 1.442695
        %v4829 = vpow.pop %v4828
        %v4830 = vadd.f32 %v4827, 1.0
        %v4831 = vadd.f32 %v4829, 1.0
        %v4832 = vrcp.pop %v4830
        %v4833 = vmul.f32 %v4830, %v4832
        %v4834 = vsub.f32 1.0, %v4833
        %v4835 = vmul.f32 %v4832, %v4834
        %v4836 = vadd.f32 %v4832, %v4835
        %vm4837 = vweird.f32 %v4830
        %vm4838 = vweird.f32 %v4832
        %vm4839 = vmor %vm4837, %vm4838
        %v4840 = vsel %vm4839, %v4832, %v4836
        %v4841 = vand.u32 2147483647, %v4830
        %vm4842 = vcmp.eq.f32.partialorder %v4841, 8.507059e+37
        %v4843 = vand.u32 %v4830, 2147483648
        %v4844 = vor.u32 1.1754944e-38, %v4843
        %v4845 = vsel %vm4842, %v4844, %v4840
        %v4846 = vmul.f32 1.0, %v4845
        %v4847 = vrcp.pop %v4831
        %v4848 = vmul.f32 %v4831, %v4847
        %v4849 = vsub.f32 1.0, %v4848
        %v4850 = vmul.f32 %v4847, %v4849
        %v4851 = vadd.f32 %v4847, %v4850
        %vm4852 = vweird.f32 %v4831
        %vm4853 = vweird.f32 %v4847
        %vm4854 = vmor %vm4852, %vm4853
        %v4855 = vsel %vm4854, %v4847, %v4851
        %v4856 = vand.u32 2147483647, %v4831
        %vm4857 = vcmp.eq.f32.partialorder %v4856, 8.507059e+37
        %v4858 = vand.u32 %v4831, 2147483648
        %v4859 = vor.u32 1.1754944e-38, %v4858
        %v4860 = vsel %vm4857, %v4859, %v4855
        %v4861 = vmul.f32 1.0, %v4860
        %v4863 = vrot.slane %v4728, 6
        %v4864 = vrot.slane %v4728, 7
        %v4867 = vadd.f32 %v3285, %v4863
        %v4868 = vadd.f32 %v3288, %v4864
        %v4869 = vxor.u32 %v4867, 2147483648
        %v4870 = vxor.u32 %v4868, 2147483648
        %v4871 = vmul.f32 %v4869, 1.442695
        %v4872 = vpow.pop %v4871
        %v4873 = vmul.f32 %v4870, 1.442695
        %v4874 = vpow.pop %v4873
        %v4875 = vadd.f32 %v4872, 1.0
        %v4876 = vadd.f32 %v4874, 1.0
        %v4877 = vrcp.pop %v4875
        %v4878 = vmul.f32 %v4875, %v4877
        %v4879 = vsub.f32 1.0, %v4878
        %v4880 = vmul.f32 %v4877, %v4879
        %v4881 = vadd.f32 %v4877, %v4880
        %vm4882 = vweird.f32 %v4875
        %vm4883 = vweird.f32 %v4877
        %vm4884 = vmor %vm4882, %vm4883
        %v4885 = vsel %vm4884, %v4877, %v4881
        %v4886 = vand.u32 2147483647, %v4875
        %vm4887 = vcmp.eq.f32.partialorder %v4886, 8.507059e+37
        %v4888 = vand.u32 %v4875, 2147483648
        %v4889 = vor.u32 1.1754944e-38, %v4888
        %v4890 = vsel %vm4887, %v4889, %v4885
        %v4891 = vmul.f32 1.0, %v4890
        %v4892 = vrcp.pop %v4876
        %v4893 = vmul.f32 %v4876, %v4892
        %v4894 = vsub.f32 1.0, %v4893
        %v4895 = vmul.f32 %v4892, %v4894
        %v4896 = vadd.f32 %v4892, %v4895
        %vm4897 = vweird.f32 %v4876
        %vm4898 = vweird.f32 %v4892
        %vm4899 = vmor %vm4897, %vm4898
        %v4900 = vsel %vm4899, %v4892, %v4896
        %v4901 = vand.u32 2147483647, %v4876
        %vm4902 = vcmp.eq.f32.partialorder %v4901, 8.507059e+37
        %v4903 = vand.u32 %v4876, 2147483648
        %v4904 = vor.u32 1.1754944e-38, %v4903
        %v4905 = vsel %vm4902, %v4904, %v4900
        %v4906 = vmul.f32 1.0, %v4905
        %4907 = vrot.lane.b32.xlu0 %v4863, 64
        %v4908 = vpop.permute.xlu0 %4907
        %4909 = vrot.lane.b32.xlu0 %v4864, 64
        %v4910 = vpop.permute.xlu0 %4909
        %v4913 = vmul.f32 %v4846, %v4908
        %v4914 = vmul.f32 %v4861, %v4910
        %4917 = vrot.lane.b32.xlu0 %v4913, 64
        %v4918 = vpop.permute.xlu0 %4917
        %4919 = vrot.lane.b32.xlu0 %v4914, 64
        %v4920 = vpop.permute.xlu0 %4919
        %v4923 = vadd.f32 %v3285, %v4918
        %v4924 = vadd.f32 %v3288, %v4920
        %v4925 = vtanh.pop %v4923
        %v4926 = vtanh.pop %v4924
        %v4927 = vsub.f32 1.0, %v4891
        %v4928 = vsub.f32 1.0, %v4906
        %4931 = vrot.lane.b32.xlu0 %v4925, 96
        %v4932 = vpop.permute.xlu0 %4931
        %4933 = vrot.lane.b32.xlu0 %v4926, 96
        %v4934 = vpop.permute.xlu0 %4933
        %v4937 = vmul.f32 %v4927, %v4932
        %v4938 = vmul.f32 %v4928, %v4934
        %v4939 = vrot.slane %v4685, 2
        %v4940 = vrot.slane %v4685, 3
        %4941 = vrot.lane.b32.xlu0 %v4939, 96
        %v4942 = vpop.permute.xlu0 %4941
        %4943 = vrot.lane.b32.xlu0 %v4940, 96
        %v4944 = vpop.permute.xlu0 %4943
        %v4947 = vmul.f32 %v4891, %v4942
        %v4948 = vmul.f32 %v4906, %v4944
        %v4949 = vadd.f32 %v4937, %v4947
        %v4950 = vadd.f32 %v4938, %v4948
        %v4953 = vrot.slane %v4817, 7
        %v4954 = vsel %vm2611, %v4953, %v4816
        %4955 = vrot.lane.b32.xlu0 %v4954, 96
        %v4956 = vpop.permute.xlu0 %4955
        %v4960 = vrot.slane %v4949, 5
        %v4961 = vrot.slane %v4950, 4
        %v4962 = vsel %vm2611, %v4961, %v4960
        %4963 = vrot.lane.b32.xlu0 %v4962, 32
        %v4964 = vpop.permute.xlu0 %4963
        %v4966 = vsel %vm1222, %v4956, %v4964
        %v4968 = vrot.slane %v4966, 5
        %v4969 = vsel %vm959, %v4968, 0
        %4971 = vmatpush.msra.mxu0 0.0
        %4972 = vmatpush.msra.mxu0 0.0
        %4973 = vmatpush.msra.mxu0 0.0
        %4974 = vmatpush.msra.mxu0 0.0
        %4975 = vmatpush.msra.mxu0 0.0
        %4976 = vmatpush.msra.mxu0 0.0
        %4977 = vmatpush.msra.mxu0 0.0
        %4978 = vmatpush.msra.mxu0 0.0
        %4979 = vmatpush.msra.mxu0 %v3304
        %4980 = vmatpush.msra.mxu0 %v3302
        %4981 = vmatpush.msra.mxu0 %v3300
        %4982 = vmatpush.msra.mxu0 %v3298
        %4983 = vmatpush.msra.mxu0 %v3296
        %4984 = vmatpush.msra.mxu0 %v3294
        %4985 = vmatpush.msra.mxu0 %v3292
        %4986 = vmatpush.msra.mxu0 %v3290
        %4987 = vmatmul.f32.gmra.mxu0 %v4969
        %v4988 = vpop.f32.mrf.mxu0
        %v4989 = vadd.f32 %v3308, %v4988
        %4990 = vdwg.mxu0
        %4991 = vmatpush.msra.mxu0 0.0
        %4992 = vmatpush.msra.mxu0 0.0
        %4993 = vmatpush.msra.mxu0 0.0
        %4994 = vmatpush.msra.mxu0 0.0
        %4995 = vmatpush.msra.mxu0 0.0
        %4996 = vmatpush.msra.mxu0 0.0
        %4997 = vmatpush.msra.mxu0 0.0
        %4998 = vmatpush.msra.mxu0 0.0
        %4999 = vmatpush.msra.mxu0 %v3305
        %5000 = vmatpush.msra.mxu0 %v3303
        %5001 = vmatpush.msra.mxu0 %v3301
        %5002 = vmatpush.msra.mxu0 %v3299
        %5003 = vmatpush.msra.mxu0 %v3297
        %5004 = vmatpush.msra.mxu0 %v3295
        %5005 = vmatpush.msra.mxu0 %v3293
        %5006 = vmatpush.msra.mxu0 %v3291
        %5007 = vmatmul.f32.gmra.mxu0 %v4969
        %v5008 = vpop.f32.mrf.mxu0
        %v5009 = vadd.f32 %v3309, %v5008
        %5010 = vdwg.mxu0
        %v5012 = vrot.slane %v4989, 2
        %v5013 = vrot.slane %v4989, 3
        %v5016 = vadd.f32 %v3262, %v5012
        %v5017 = vadd.f32 %v3265, %v5013
        %v5018 = vxor.u32 %v5016, 2147483648
        %v5019 = vxor.u32 %v5017, 2147483648
        %v5020 = vmul.f32 %v5018, 1.442695
        %v5021 = vpow.pop %v5020
        %v5022 = vmul.f32 %v5019, 1.442695
        %v5023 = vpow.pop %v5022
        %v5024 = vadd.f32 %v5021, 1.0
        %v5025 = vadd.f32 %v5023, 1.0
        %v5026 = vrcp.pop %v5024
        %v5027 = vmul.f32 %v5024, %v5026
        %v5028 = vsub.f32 1.0, %v5027
        %v5029 = vmul.f32 %v5026, %v5028
        %v5030 = vadd.f32 %v5026, %v5029
        %vm5031 = vweird.f32 %v5024
        %vm5032 = vweird.f32 %v5026
        %vm5033 = vmor %vm5031, %vm5032
        %v5034 = vsel %vm5033, %v5026, %v5030
        %v5035 = vand.u32 2147483647, %v5024
        %vm5036 = vcmp.eq.f32.partialorder %v5035, 8.507059e+37
        %v5037 = vand.u32 %v5024, 2147483648
        %v5038 = vor.u32 1.1754944e-38, %v5037
        %v5039 = vsel %vm5036, %v5038, %v5034
        %v5040 = vmul.f32 1.0, %v5039
        %v5041 = vrcp.pop %v5025
        %v5042 = vmul.f32 %v5025, %v5041
        %v5043 = vsub.f32 1.0, %v5042
        %v5044 = vmul.f32 %v5041, %v5043
        %v5045 = vadd.f32 %v5041, %v5044
        %vm5046 = vweird.f32 %v5025
        %vm5047 = vweird.f32 %v5041
        %vm5048 = vmor %vm5046, %vm5047
        %v5049 = vsel %vm5048, %v5041, %v5045
        %v5050 = vand.u32 2147483647, %v5025
        %vm5051 = vcmp.eq.f32.partialorder %v5050, 8.507059e+37
        %v5052 = vand.u32 %v5025, 2147483648
        %v5053 = vor.u32 1.1754944e-38, %v5052
        %v5054 = vsel %vm5051, %v5053, %v5049
        %v5055 = vmul.f32 1.0, %v5054
        %5056 = vrot.lane.b32.xlu0 %v5012, 64
        %v5057 = vpop.permute.xlu0 %5056
        %5058 = vrot.lane.b32.xlu0 %v5013, 64
        %v5059 = vpop.permute.xlu0 %5058
        %v5062 = vmul.f32 %v5040, %v5057
        %v5063 = vmul.f32 %v5055, %v5059
        %5066 = vrot.lane.b32.xlu0 %v5062, 64
        %v5067 = vpop.permute.xlu0 %5066
        %5068 = vrot.lane.b32.xlu0 %v5063, 64
        %v5069 = vpop.permute.xlu0 %5068
        %v5072 = vadd.f32 %v3262, %v5067
        %v5073 = vadd.f32 %v3265, %v5069
        %v5074 = vtanh.pop %v5072
        %v5075 = vtanh.pop %v5073
        %v5076 = vsub.f32 1.0, %v5040
        %v5077 = vsub.f32 1.0, %v5055
        %5080 = vrot.lane.b32.xlu0 %v5074, 96
        %v5081 = vpop.permute.xlu0 %5080
        %5082 = vrot.lane.b32.xlu0 %v5075, 96
        %v5083 = vpop.permute.xlu0 %5082
        %v5086 = vmul.f32 %v5076, %v5081
        %v5087 = vmul.f32 %v5077, %v5083
        %v5088 = vrot.slane %v4966, 7
        %5089 = vrot.lane.b32.xlu0 %v5088, 32
        %v5090 = vpop.permute.xlu0 %5089
        %5091 = vrot.lane.b32.xlu0 %v4966, 32
        %v5092 = vpop.permute.xlu0 %5091
        %v5095 = vmul.f32 %v5040, %v5090
        %v5096 = vmul.f32 %v5055, %v5092
        %v5097 = vadd.f32 %v5086, %v5095
        %v5098 = vadd.f32 %v5087, %v5096
        %v5099 = vrot.slane %v4989, 7
        %v5102 = vadd.f32 %v3262, %v5099
        %v5103 = vadd.f32 %v3265, %v4989
        %v5104 = vxor.u32 %v5102, 2147483648
        %v5105 = vxor.u32 %v5103, 2147483648
        %v5106 = vmul.f32 %v5104, 1.442695
        %v5107 = vpow.pop %v5106
        %v5108 = vmul.f32 %v5105, 1.442695
        %v5109 = vpow.pop %v5108
        %v5110 = vadd.f32 %v5107, 1.0
        %v5111 = vadd.f32 %v5109, 1.0
        %v5112 = vrcp.pop %v5110
        %v5113 = vmul.f32 %v5110, %v5112
        %v5114 = vsub.f32 1.0, %v5113
        %v5115 = vmul.f32 %v5112, %v5114
        %v5116 = vadd.f32 %v5112, %v5115
        %vm5117 = vweird.f32 %v5110
        %vm5118 = vweird.f32 %v5112
        %vm5119 = vmor %vm5117, %vm5118
        %v5120 = vsel %vm5119, %v5112, %v5116
        %v5121 = vand.u32 2147483647, %v5110
        %vm5122 = vcmp.eq.f32.partialorder %v5121, 8.507059e+37
        %v5123 = vand.u32 %v5110, 2147483648
        %v5124 = vor.u32 1.1754944e-38, %v5123
        %v5125 = vsel %vm5122, %v5124, %v5120
        %v5126 = vmul.f32 1.0, %v5125
        %v5127 = vrcp.pop %v5111
        %v5128 = vmul.f32 %v5111, %v5127
        %v5129 = vsub.f32 1.0, %v5128
        %v5130 = vmul.f32 %v5127, %v5129
        %v5131 = vadd.f32 %v5127, %v5130
        %vm5132 = vweird.f32 %v5111
        %vm5133 = vweird.f32 %v5127
        %vm5134 = vmor %vm5132, %vm5133
        %v5135 = vsel %vm5134, %v5127, %v5131
        %v5136 = vand.u32 2147483647, %v5111
        %vm5137 = vcmp.eq.f32.partialorder %v5136, 8.507059e+37
        %v5138 = vand.u32 %v5111, 2147483648
        %v5139 = vor.u32 1.1754944e-38, %v5138
        %v5140 = vsel %vm5137, %v5139, %v5135
        %v5141 = vmul.f32 1.0, %v5140
        %v5143 = vrot.slane %v5009, 7
        %v5146 = vadd.f32 %v3285, %v5143
        %v5147 = vadd.f32 %v3288, %v5009
        %v5148 = vxor.u32 %v5146, 2147483648
        %v5149 = vxor.u32 %v5147, 2147483648
        %v5150 = vmul.f32 %v5148, 1.442695
        %v5151 = vpow.pop %v5150
        %v5152 = vmul.f32 %v5149, 1.442695
        %v5153 = vpow.pop %v5152
        %v5154 = vadd.f32 %v5151, 1.0
        %v5155 = vadd.f32 %v5153, 1.0
        %v5156 = vrcp.pop %v5154
        %v5157 = vmul.f32 %v5154, %v5156
        %v5158 = vsub.f32 1.0, %v5157
        %v5159 = vmul.f32 %v5156, %v5158
        %v5160 = vadd.f32 %v5156, %v5159
        %vm5161 = vweird.f32 %v5154
        %vm5162 = vweird.f32 %v5156
        %vm5163 = vmor %vm5161, %vm5162
        %v5164 = vsel %vm5163, %v5156, %v5160
        %v5165 = vand.u32 2147483647, %v5154
        %vm5166 = vcmp.eq.f32.partialorder %v5165, 8.507059e+37
        %v5167 = vand.u32 %v5154, 2147483648
        %v5168 = vor.u32 1.1754944e-38, %v5167
        %v5169 = vsel %vm5166, %v5168, %v5164
        %v5170 = vmul.f32 1.0, %v5169
        %v5171 = vrcp.pop %v5155
        %v5172 = vmul.f32 %v5155, %v5171
        %v5173 = vsub.f32 1.0, %v5172
        %v5174 = vmul.f32 %v5171, %v5173
        %v5175 = vadd.f32 %v5171, %v5174
        %vm5176 = vweird.f32 %v5155
        %vm5177 = vweird.f32 %v5171
        %vm5178 = vmor %vm5176, %vm5177
        %v5179 = vsel %vm5178, %v5171, %v5175
        %v5180 = vand.u32 2147483647, %v5155
        %vm5181 = vcmp.eq.f32.partialorder %v5180, 8.507059e+37
        %v5182 = vand.u32 %v5155, 2147483648
        %v5183 = vor.u32 1.1754944e-38, %v5182
        %v5184 = vsel %vm5181, %v5183, %v5179
        %v5185 = vmul.f32 1.0, %v5184
        %5186 = vrot.lane.b32.xlu0 %v5143, 64
        %v5187 = vpop.permute.xlu0 %5186
        %5188 = vrot.lane.b32.xlu0 %v5009, 64
        %v5189 = vpop.permute.xlu0 %5188
        %v5192 = vmul.f32 %v5126, %v5187
        %v5193 = vmul.f32 %v5141, %v5189
        %5196 = vrot.lane.b32.xlu0 %v5192, 64
        %v5197 = vpop.permute.xlu0 %5196
        %5198 = vrot.lane.b32.xlu0 %v5193, 64
        %v5199 = vpop.permute.xlu0 %5198
        %v5202 = vadd.f32 %v3285, %v5197
        %v5203 = vadd.f32 %v3288, %v5199
        %v5204 = vtanh.pop %v5202
        %v5205 = vtanh.pop %v5203
        %v5206 = vsub.f32 1.0, %v5170
        %v5207 = vsub.f32 1.0, %v5185
        %5210 = vrot.lane.b32.xlu0 %v5204, 96
        %v5211 = vpop.permute.xlu0 %5210
        %5212 = vrot.lane.b32.xlu0 %v5205, 96
        %v5213 = vpop.permute.xlu0 %5212
        %v5216 = vmul.f32 %v5206, %v5211
        %v5217 = vmul.f32 %v5207, %v5213
        %v5218 = vrot.slane %v4966, 4
        %5219 = vrot.lane.b32.xlu0 %v5218, 96
        %v5220 = vpop.permute.xlu0 %5219
        %5221 = vrot.lane.b32.xlu0 %v4968, 96
        %v5222 = vpop.permute.xlu0 %5221
        %v5225 = vmul.f32 %v5170, %v5220
        %v5226 = vmul.f32 %v5185, %v5222
        %v5227 = vadd.f32 %v5216, %v5225
        %v5228 = vadd.f32 %v5217, %v5226
        %v5231 = vrot.slane %v5098, 7
        %v5232 = vsel %vm2890, %v5231, %v5097
        %5233 = vrot.lane.b32.xlu0 %v5232, 96
        %v5234 = vpop.permute.xlu0 %5233
        %v5238 = vrot.slane %v5227, 3
        %v5239 = vrot.slane %v5228, 2
        %v5240 = vsel %vm2890, %v5239, %v5238
        %5241 = vrot.lane.b32.xlu0 %v5240, 32
        %v5242 = vpop.permute.xlu0 %5241
        %v5244 = vsel %vm1222, %v5234, %v5242
        %v5246 = vrot.slane %v5244, 6
        %v5247 = vsel %vm959, %v5246, 0
        %5249 = vmatpush.msra.mxu0 0.0
        %5250 = vmatpush.msra.mxu0 0.0
        %5251 = vmatpush.msra.mxu0 0.0
        %5252 = vmatpush.msra.mxu0 0.0
        %5253 = vmatpush.msra.mxu0 0.0
        %5254 = vmatpush.msra.mxu0 0.0
        %5255 = vmatpush.msra.mxu0 0.0
        %5256 = vmatpush.msra.mxu0 0.0
        %5257 = vmatpush.msra.mxu0 %v3304
        %5258 = vmatpush.msra.mxu0 %v3302
        %5259 = vmatpush.msra.mxu0 %v3300
        %5260 = vmatpush.msra.mxu0 %v3298
        %5261 = vmatpush.msra.mxu0 %v3296
        %5262 = vmatpush.msra.mxu0 %v3294
        %5263 = vmatpush.msra.mxu0 %v3292
        %5264 = vmatpush.msra.mxu0 %v3290
        %5265 = vmatmul.f32.gmra.mxu0 %v5247
        %v5266 = vpop.f32.mrf.mxu0
        %v5267 = vadd.f32 %v3308, %v5266
        %5268 = vdwg.mxu0
        %5269 = vmatpush.msra.mxu0 0.0
        %5270 = vmatpush.msra.mxu0 0.0
        %5271 = vmatpush.msra.mxu0 0.0
        %5272 = vmatpush.msra.mxu0 0.0
        %5273 = vmatpush.msra.mxu0 0.0
        %5274 = vmatpush.msra.mxu0 0.0
        %5275 = vmatpush.msra.mxu0 0.0
        %5276 = vmatpush.msra.mxu0 0.0
        %5277 = vmatpush.msra.mxu0 %v3305
        %5278 = vmatpush.msra.mxu0 %v3303
        %5279 = vmatpush.msra.mxu0 %v3301
        %5280 = vmatpush.msra.mxu0 %v3299
        %5281 = vmatpush.msra.mxu0 %v3297
        %5282 = vmatpush.msra.mxu0 %v3295
        %5283 = vmatpush.msra.mxu0 %v3293
        %5284 = vmatpush.msra.mxu0 %v3291
        %5285 = vmatmul.f32.gmra.mxu0 %v5247
        %v5286 = vpop.f32.mrf.mxu0
        %v5287 = vadd.f32 %v3309, %v5286
        %5288 = vdwg.mxu0
        %v5290 = vrot.slane %v5267, 1
        %v5291 = vrot.slane %v5267, 2
        %v5294 = vadd.f32 %v3262, %v5290
        %v5295 = vadd.f32 %v3265, %v5291
        %v5296 = vxor.u32 %v5294, 2147483648
        %v5297 = vxor.u32 %v5295, 2147483648
        %v5298 = vmul.f32 %v5296, 1.442695
        %v5299 = vpow.pop %v5298
        %v5300 = vmul.f32 %v5297, 1.442695
        %v5301 = vpow.pop %v5300
        %v5302 = vadd.f32 %v5299, 1.0
        %v5303 = vadd.f32 %v5301, 1.0
        %v5304 = vrcp.pop %v5302
        %v5305 = vmul.f32 %v5302, %v5304
        %v5306 = vsub.f32 1.0, %v5305
        %v5307 = vmul.f32 %v5304, %v5306
        %v5308 = vadd.f32 %v5304, %v5307
        %vm5309 = vweird.f32 %v5302
        %vm5310 = vweird.f32 %v5304
        %vm5311 = vmor %vm5309, %vm5310
        %v5312 = vsel %vm5311, %v5304, %v5308
        %v5313 = vand.u32 2147483647, %v5302
        %vm5314 = vcmp.eq.f32.partialorder %v5313, 8.507059e+37
        %v5315 = vand.u32 %v5302, 2147483648
        %v5316 = vor.u32 1.1754944e-38, %v5315
        %v5317 = vsel %vm5314, %v5316, %v5312
        %v5318 = vmul.f32 1.0, %v5317
        %v5319 = vrcp.pop %v5303
        %v5320 = vmul.f32 %v5303, %v5319
        %v5321 = vsub.f32 1.0, %v5320
        %v5322 = vmul.f32 %v5319, %v5321
        %v5323 = vadd.f32 %v5319, %v5322
        %vm5324 = vweird.f32 %v5303
        %vm5325 = vweird.f32 %v5319
        %vm5326 = vmor %vm5324, %vm5325
        %v5327 = vsel %vm5326, %v5319, %v5323
        %v5328 = vand.u32 2147483647, %v5303
        %vm5329 = vcmp.eq.f32.partialorder %v5328, 8.507059e+37
        %v5330 = vand.u32 %v5303, 2147483648
        %v5331 = vor.u32 1.1754944e-38, %v5330
        %v5332 = vsel %vm5329, %v5331, %v5327
        %v5333 = vmul.f32 1.0, %v5332
        %5334 = vrot.lane.b32.xlu0 %v5290, 64
        %v5335 = vpop.permute.xlu0 %5334
        %5336 = vrot.lane.b32.xlu0 %v5291, 64
        %v5337 = vpop.permute.xlu0 %5336
        %v5340 = vmul.f32 %v5318, %v5335
        %v5341 = vmul.f32 %v5333, %v5337
        %5344 = vrot.lane.b32.xlu0 %v5340, 64
        %v5345 = vpop.permute.xlu0 %5344
        %5346 = vrot.lane.b32.xlu0 %v5341, 64
        %v5347 = vpop.permute.xlu0 %5346
        %v5350 = vadd.f32 %v3262, %v5345
        %v5351 = vadd.f32 %v3265, %v5347
        %v5352 = vtanh.pop %v5350
        %v5353 = vtanh.pop %v5351
        %v5354 = vsub.f32 1.0, %v5318
        %v5355 = vsub.f32 1.0, %v5333
        %5358 = vrot.lane.b32.xlu0 %v5352, 96
        %v5359 = vpop.permute.xlu0 %5358
        %5360 = vrot.lane.b32.xlu0 %v5353, 96
        %v5361 = vpop.permute.xlu0 %5360
        %v5364 = vmul.f32 %v5354, %v5359
        %v5365 = vmul.f32 %v5355, %v5361
        %v5366 = vrot.slane %v5244, 7
        %5367 = vrot.lane.b32.xlu0 %v5366, 32
        %v5368 = vpop.permute.xlu0 %5367
        %5369 = vrot.lane.b32.xlu0 %v5244, 32
        %v5370 = vpop.permute.xlu0 %5369
        %v5373 = vmul.f32 %v5318, %v5368
        %v5374 = vmul.f32 %v5333, %v5370
        %v5375 = vadd.f32 %v5364, %v5373
        %v5376 = vadd.f32 %v5365, %v5374
        %v5378 = vadd.f32 %v3262, %v5267
        %v5379 = vadd.f32 %v3265, %v5290
        %v5380 = vxor.u32 %v5378, 2147483648
        %v5381 = vxor.u32 %v5379, 2147483648
        %v5382 = vmul.f32 %v5380, 1.442695
        %v5383 = vpow.pop %v5382
        %v5384 = vmul.f32 %v5381, 1.442695
        %v5385 = vpow.pop %v5384
        %v5386 = vadd.f32 %v5383, 1.0
        %v5387 = vadd.f32 %v5385, 1.0
        %v5388 = vrcp.pop %v5386
        %v5389 = vmul.f32 %v5386, %v5388
        %v5390 = vsub.f32 1.0, %v5389
        %v5391 = vmul.f32 %v5388, %v5390
        %v5392 = vadd.f32 %v5388, %v5391
        %vm5393 = vweird.f32 %v5386
        %vm5394 = vweird.f32 %v5388
        %vm5395 = vmor %vm5393, %vm5394
        %v5396 = vsel %vm5395, %v5388, %v5392
        %v5397 = vand.u32 2147483647, %v5386
        %vm5398 = vcmp.eq.f32.partialorder %v5397, 8.507059e+37
        %v5399 = vand.u32 %v5386, 2147483648
        %v5400 = vor.u32 1.1754944e-38, %v5399
        %v5401 = vsel %vm5398, %v5400, %v5396
        %v5402 = vmul.f32 1.0, %v5401
        %v5403 = vrcp.pop %v5387
        %v5404 = vmul.f32 %v5387, %v5403
        %v5405 = vsub.f32 1.0, %v5404
        %v5406 = vmul.f32 %v5403, %v5405
        %v5407 = vadd.f32 %v5403, %v5406
        %vm5408 = vweird.f32 %v5387
        %vm5409 = vweird.f32 %v5403
        %vm5410 = vmor %vm5408, %vm5409
        %v5411 = vsel %vm5410, %v5403, %v5407
        %v5412 = vand.u32 2147483647, %v5387
        %vm5413 = vcmp.eq.f32.partialorder %v5412, 8.507059e+37
        %v5414 = vand.u32 %v5387, 2147483648
        %v5415 = vor.u32 1.1754944e-38, %v5414
        %v5416 = vsel %vm5413, %v5415, %v5411
        %v5417 = vmul.f32 1.0, %v5416
        %v5419 = vrot.slane %v5287, 1
        %v5422 = vadd.f32 %v3285, %v5287
        %v5423 = vadd.f32 %v3288, %v5419
        %v5424 = vxor.u32 %v5422, 2147483648
        %v5425 = vxor.u32 %v5423, 2147483648
        %v5426 = vmul.f32 %v5424, 1.442695
        %v5427 = vpow.pop %v5426
        %v5428 = vmul.f32 %v5425, 1.442695
        %v5429 = vpow.pop %v5428
        %v5430 = vadd.f32 %v5427, 1.0
        %v5431 = vadd.f32 %v5429, 1.0
        %v5432 = vrcp.pop %v5430
        %v5433 = vmul.f32 %v5430, %v5432
        %v5434 = vsub.f32 1.0, %v5433
        %v5435 = vmul.f32 %v5432, %v5434
        %v5436 = vadd.f32 %v5432, %v5435
        %vm5437 = vweird.f32 %v5430
        %vm5438 = vweird.f32 %v5432
        %vm5439 = vmor %vm5437, %vm5438
        %v5440 = vsel %vm5439, %v5432, %v5436
        %v5441 = vand.u32 2147483647, %v5430
        %vm5442 = vcmp.eq.f32.partialorder %v5441, 8.507059e+37
        %v5443 = vand.u32 %v5430, 2147483648
        %v5444 = vor.u32 1.1754944e-38, %v5443
        %v5445 = vsel %vm5442, %v5444, %v5440
        %v5446 = vmul.f32 1.0, %v5445
        %v5447 = vrcp.pop %v5431
        %v5448 = vmul.f32 %v5431, %v5447
        %v5449 = vsub.f32 1.0, %v5448
        %v5450 = vmul.f32 %v5447, %v5449
        %v5451 = vadd.f32 %v5447, %v5450
        %vm5452 = vweird.f32 %v5431
        %vm5453 = vweird.f32 %v5447
        %vm5454 = vmor %vm5452, %vm5453
        %v5455 = vsel %vm5454, %v5447, %v5451
        %v5456 = vand.u32 2147483647, %v5431
        %vm5457 = vcmp.eq.f32.partialorder %v5456, 8.507059e+37
        %v5458 = vand.u32 %v5431, 2147483648
        %v5459 = vor.u32 1.1754944e-38, %v5458
        %v5460 = vsel %vm5457, %v5459, %v5455
        %v5461 = vmul.f32 1.0, %v5460
        %5462 = vrot.lane.b32.xlu0 %v5287, 64
        %v5463 = vpop.permute.xlu0 %5462
        %5464 = vrot.lane.b32.xlu0 %v5419, 64
        %v5465 = vpop.permute.xlu0 %5464
        %v5468 = vmul.f32 %v5402, %v5463
        %v5469 = vmul.f32 %v5417, %v5465
        %5472 = vrot.lane.b32.xlu0 %v5468, 64
        %v5473 = vpop.permute.xlu0 %5472
        %5474 = vrot.lane.b32.xlu0 %v5469, 64
        %v5475 = vpop.permute.xlu0 %5474
        %v5478 = vadd.f32 %v3285, %v5473
        %v5479 = vadd.f32 %v3288, %v5475
        %v5480 = vtanh.pop %v5478
        %v5481 = vtanh.pop %v5479
        %v5482 = vsub.f32 1.0, %v5446
        %v5483 = vsub.f32 1.0, %v5461
        %5486 = vrot.lane.b32.xlu0 %v5480, 96
        %v5487 = vpop.permute.xlu0 %5486
        %5488 = vrot.lane.b32.xlu0 %v5481, 96
        %v5489 = vpop.permute.xlu0 %5488
        %v5492 = vmul.f32 %v5482, %v5487
        %v5493 = vmul.f32 %v5483, %v5489
        %5494 = vrot.lane.b32.xlu0 %v5246, 96
        %v5495 = vpop.permute.xlu0 %5494
        %5496 = vrot.lane.b32.xlu0 %v5366, 96
        %v5497 = vpop.permute.xlu0 %5496
        %v5500 = vmul.f32 %v5446, %v5495
        %v5501 = vmul.f32 %v5461, %v5497
        %v5502 = vadd.f32 %v5492, %v5500
        %v5503 = vadd.f32 %v5493, %v5501
        %v5504 = vsel %vm3163, %v3430, %v3699
        %v5505 = vsel %vm3163, %v3431, %v3700
        %v5506 = vsel %vm3166, %v5504, %v3980
        %v5507 = vsel %vm3166, %v5505, %v3981
        %v5508 = vsel %vm3169, %v5506, %v4261
        %v5509 = vsel %vm3169, %v5507, %v4262
        %v5510 = vsel %vm3172, %v5508, %v4538
        %v5511 = vsel %vm3172, %v5509, %v4539
        %v5512 = vsel %vm3175, %v5510, %v4816
        %v5513 = vsel %vm3175, %v5511, %v4817
        %v5514 = vsel %vm3178, %v5512, %v5097
        %v5515 = vsel %vm3178, %v5513, %v5098
        %v5516 = vsel %vm3181, %v5514, %v5375
        %v5517 = vsel %vm3181, %v5515, %v5376
        %v5518 = vsel %vm3163, %v5502, %v5227
        %v5519 = vsel %vm3163, %v5503, %v5228
        %v5520 = vsel %vm3166, %v5518, %v4949
        %v5521 = vsel %vm3166, %v5519, %v4950
        %v5522 = vsel %vm3169, %v5520, %v4668
        %v5523 = vsel %vm3169, %v5521, %v4669
        %v5524 = vsel %vm3172, %v5522, %v4391
        %v5525 = vsel %vm3172, %v5523, %v4392
        %v5526 = vsel %vm3175, %v5524, %v4113
        %v5527 = vsel %vm3175, %v5525, %v4114
        %v5528 = vsel %vm3178, %v5526, %v3832
        %v5529 = vsel %vm3178, %v5527, %v3833
        %v5530 = vsel %vm3181, %v5528, %v3553
        %v5531 = vsel %vm3181, %v5529, %v3554
        %5534 = vrot.lane.b32.xlu0 %v5516, 96
        %v5535 = vpop.permute.xlu0 %5534
        %5536 = vrot.lane.b32.xlu0 %v5517, 96
        %v5537 = vpop.permute.xlu0 %5536
        %5542 = vrot.lane.b32.xlu0 %v5530, 32
        %v5543 = vpop.permute.xlu0 %5542
        %5544 = vrot.lane.b32.xlu0 %v5531, 32
        %v5545 = vpop.permute.xlu0 %5544
        %v5548 = vsel %vm1222, %v5535, %v5543
        %v5549 = vsel %vm1222, %v5537, %v5545
        %v5550 = vld [vmem:[#allocation16] sm:$0xff]
        %v5551 = vld [vmem:[#allocation16 + $0x8] sm:$0xff]
        %v5552 = vld [vmem:[#allocation16 + $0x10] sm:$0xff]
        %v5553 = vld [vmem:[#allocation16 + $0x18] sm:$0xff]
        %v5554 = vld [vmem:[#allocation16 + $0x20] sm:$0xff]
        %v5555 = vld [vmem:[#allocation16 + $0x28] sm:$0xff]
        %v5556 = vld [vmem:[#allocation16 + $0x30] sm:$0xff]
        %v5557 = vld [vmem:[#allocation16 + $0x38] sm:$0xff]
        %v5558 = vld [vmem:[#allocation16 + $0x40] sm:$0xff]
        %v5559 = vld [vmem:[#allocation16 + $0x48] sm:$0xff]
        %v5560 = vld [vmem:[#allocation16 + $0x50] sm:$0xff]
        %v5561 = vld [vmem:[#allocation16 + $0x58] sm:$0xff]
        %v5562 = vld [vmem:[#allocation16 + $0x60] sm:$0xff]
        %v5563 = vld [vmem:[#allocation16 + $0x68] sm:$0xff]
        %v5564 = vld [vmem:[#allocation16 + $0x70] sm:$0xff]
        %v5565 = vld [vmem:[#allocation16 + $0x78] sm:$0xff]
        %v5566 = vld [vmem:[%s10] sm:$0x3]
        %v5568 = vperm.slane %v5566, 0
        %v5569 = vperm.slane %v5566, 1
        %v5573 = vsel %vm959, %v5548, 0
        %v5576 = vsel %vm959, %v5549, 0
        %5578 = vmatpush.msra.mxu0 0.0
        %5579 = vmatpush.msra.mxu0 0.0
        %5580 = vmatpush.msra.mxu0 0.0
        %5581 = vmatpush.msra.mxu0 0.0
        %5582 = vmatpush.msra.mxu0 0.0
        %5583 = vmatpush.msra.mxu0 0.0
        %5584 = vmatpush.msra.mxu0 0.0
        %5585 = vmatpush.msra.mxu0 0.0
        %5586 = vmatpush.msra.mxu0 %v5564
        %5587 = vmatpush.msra.mxu0 %v5562
        %5588 = vmatpush.msra.mxu0 %v5560
        %5589 = vmatpush.msra.mxu0 %v5558
        %5590 = vmatpush.msra.mxu0 %v5556
        %5591 = vmatpush.msra.mxu0 %v5554
        %5592 = vmatpush.msra.mxu0 %v5552
        %5593 = vmatpush.msra.mxu0 %v5550
        %5594 = vmatmul.f32.gmra.mxu0 %v5573
        %v5595 = vpop.f32.mrf.mxu0
        %v5596 = vadd.f32 %v5568, %v5595
        %5597 = vmatmul.f32.gmra.mxu0 %v5576
        %v5598 = vpop.f32.mrf.mxu0
        %v5599 = vadd.f32 %v5568, %v5598
        %5600 = vdwg.mxu0
        %5601 = vmatpush.msra.mxu0 0.0
        %5602 = vmatpush.msra.mxu0 0.0
        %5603 = vmatpush.msra.mxu0 0.0
        %5604 = vmatpush.msra.mxu0 0.0
        %5605 = vmatpush.msra.mxu0 0.0
        %5606 = vmatpush.msra.mxu0 0.0
        %5607 = vmatpush.msra.mxu0 0.0
        %5608 = vmatpush.msra.mxu0 0.0
        %5609 = vmatpush.msra.mxu0 %v5565
        %5610 = vmatpush.msra.mxu0 %v5563
        %5611 = vmatpush.msra.mxu0 %v5561
        %5612 = vmatpush.msra.mxu0 %v5559
        %5613 = vmatpush.msra.mxu0 %v5557
        %5614 = vmatpush.msra.mxu0 %v5555
        %5615 = vmatpush.msra.mxu0 %v5553
        %5616 = vmatpush.msra.mxu0 %v5551
        %5617 = vmatmul.f32.gmra.mxu0 %v5573
        %v5618 = vpop.f32.mrf.mxu0
        %v5619 = vadd.f32 %v5569, %v5618
        %5620 = vmatmul.f32.gmra.mxu0 %v5576
        %v5621 = vpop.f32.mrf.mxu0
        %v5622 = vadd.f32 %v5569, %v5621
        %5623 = vdwg.mxu0
        %5625 = vrot.lane.b32.xlu0 %v5596, 64
        %v5626 = vpop.permute.xlu0 %5625
        %vm5627 = vcmask 64512
        %v5628 = vsel %vm5627, %v5596, 0
        %v5630 = vsel %vm5627, %v5626, 0
        %5632 = vmatpush.xpose.msra.mxu0 0.0
        %5633 = vmatpush.xpose.msra.mxu0 0.0
        %5634 = vmatpush.xpose.msra.mxu0 0.0
        %5635 = vmatpush.xpose.msra.mxu0 0.0
        %5636 = vmatpush.xpose.msra.mxu0 0.0
        %5637 = vmatpush.xpose.msra.mxu0 0.0
        %5638 = vmatpush.xpose.msra.mxu0 0.0
        %5639 = vmatpush.xpose.msra.mxu0 0.0
        %5640 = vmatpush.xpose.msra.mxu0 0.0
        %5641 = vmatpush.xpose.msra.mxu0 0.0
        %5642 = vmatpush.xpose.msra.mxu0 0.0
        %5643 = vmatpush.xpose.msra.mxu0 0.0
        %5644 = vmatpush.xpose.msra.mxu0 0.0
        %5645 = vmatpush.xpose.msra.mxu0 0.0
        %5646 = vmatpush.xpose.msra.mxu0 0.0
        %5647 = vmatpush.xpose.msra.mxu0 %v5630
        %5648 = vmatmul.f32.gmra.mxu0 %v5628
        %v5649 = vpop.f32.mrf.mxu0
        %v5650 = vadd.f32 0.0, %v5649
        %5651 = vdwg.mxu0
        %5653 = vrot.lane.b32.xlu0 %v5599, 64
        %v5654 = vpop.permute.xlu0 %5653
        %v5655 = vsel %vm5627, %v5599, 0
        %v5657 = vsel %vm5627, %v5654, 0
        %5659 = vmatpush.xpose.msra.mxu0 0.0
        %5660 = vmatpush.xpose.msra.mxu0 0.0
        %5661 = vmatpush.xpose.msra.mxu0 0.0
        %5662 = vmatpush.xpose.msra.mxu0 0.0
        %5663 = vmatpush.xpose.msra.mxu0 0.0
        %5664 = vmatpush.xpose.msra.mxu0 0.0
        %5665 = vmatpush.xpose.msra.mxu0 0.0
        %5666 = vmatpush.xpose.msra.mxu0 0.0
        %5667 = vmatpush.xpose.msra.mxu0 0.0
        %5668 = vmatpush.xpose.msra.mxu0 0.0
        %5669 = vmatpush.xpose.msra.mxu0 0.0
        %5670 = vmatpush.xpose.msra.mxu0 0.0
        %5671 = vmatpush.xpose.msra.mxu0 0.0
        %5672 = vmatpush.xpose.msra.mxu0 0.0
        %5673 = vmatpush.xpose.msra.mxu0 0.0
        %5674 = vmatpush.xpose.msra.mxu0 %v5657
        %5675 = vmatmul.f32.gmra.mxu0 %v5655
        %v5676 = vpop.f32.mrf.mxu0
        %v5677 = vadd.f32 0.0, %v5676
        %5678 = vdwg.mxu0
        %v5679 = vsel %vm5627, %v5650, -inf
        %5680 = vmax.xlane.f32.xlu0 %v5679
        %v5681 = vpop.xlane.xlu0 %5680
        %v5682 = vsel %vm5627, %v5677, -inf
        %5683 = vmax.xlane.f32.xlu0 %v5682
        %v5684 = vpop.xlane.xlu0 %5683
        %v5685 = vsub.f32 %v5650, %v5681
        %v5686 = vsub.f32 %v5677, %v5684
        %v5687 = vmul.f32 %v5685, 1.442695
        %v5688 = vpow.pop %v5687
        %v5689 = vmul.f32 %v5686, 1.442695
        %v5690 = vpow.pop %v5689
        %v5691 = vsel %vm5627, %v5688, 0.0
        %5692 = vadd.xlane.f32.xlu0 %v5691
        %v5693 = vpop.xlane.xlu0 %5692
        %v5694 = vsel %vm5627, %v5690, 0.0
        %5695 = vadd.xlane.f32.xlu0 %v5694
        %v5696 = vpop.xlane.xlu0 %5695
        %v5697 = vrcp.pop %v5693
        %v5698 = vrcp.pop %v5696
        %v5699 = vmul.f32 %v5688, %v5697
        %v5700 = vmul.f32 %v5690, %v5698
        %v5702 = vsel %vm5627, %v5699, 0
        %5704 = vmatpush.msra.mxu0 0.0
        %5705 = vmatpush.msra.mxu0 0.0
        %5706 = vmatpush.msra.mxu0 0.0
        %5707 = vmatpush.msra.mxu0 0.0
        %5708 = vmatpush.msra.mxu0 0.0
        %5709 = vmatpush.msra.mxu0 0.0
        %5710 = vmatpush.msra.mxu0 0.0
        %5711 = vmatpush.msra.mxu0 0.0
        %5712 = vmatpush.msra.mxu0 0.0
        %5713 = vmatpush.msra.mxu0 0.0
        %5714 = vmatpush.msra.mxu0 0.0
        %5715 = vmatpush.msra.mxu0 0.0
        %5716 = vmatpush.msra.mxu0 0.0
        %5717 = vmatpush.msra.mxu0 0.0
        %5718 = vmatpush.msra.mxu0 0.0
        %5719 = vmatpush.msra.mxu0 %v5619
        %5720 = vmatmul.f32.gmra.mxu0 %v5702
        %v5721 = vpop.f32.mrf.mxu0
        %v5722 = vadd.f32 0.0, %v5721
        %5723 = vdwg.mxu0
        %v5725 = vsel %vm5627, %v5700, 0
        %5727 = vmatpush.msra.mxu0 0.0
        %5728 = vmatpush.msra.mxu0 0.0
        %5729 = vmatpush.msra.mxu0 0.0
        %5730 = vmatpush.msra.mxu0 0.0
        %5731 = vmatpush.msra.mxu0 0.0
        %5732 = vmatpush.msra.mxu0 0.0
        %5733 = vmatpush.msra.mxu0 0.0
        %5734 = vmatpush.msra.mxu0 0.0
        %5735 = vmatpush.msra.mxu0 0.0
        %5736 = vmatpush.msra.mxu0 0.0
        %5737 = vmatpush.msra.mxu0 0.0
        %5738 = vmatpush.msra.mxu0 0.0
        %5739 = vmatpush.msra.mxu0 0.0
        %5740 = vmatpush.msra.mxu0 0.0
        %5741 = vmatpush.msra.mxu0 0.0
        %5742 = vmatpush.msra.mxu0 %v5622
        %5743 = vmatmul.f32.gmra.mxu0 %v5725
        %v5744 = vpop.f32.mrf.mxu0
        %v5745 = vadd.f32 0.0, %v5744
        %5746 = vdwg.mxu0
        %5747 = vrot.lane.b32.xlu0 %v5596, 120
        %v5748 = vpop.permute.xlu0 %5747
        %5749 = vrot.lane.b32.xlu0 %v5596, 56
        %v5750 = vpop.permute.xlu0 %5749
        %v5751 = vsel %vm5627, %v5748, 0
        %v5753 = vsel %vm5627, %v5750, 0
        %5755 = vmatpush.xpose.msra.mxu0 0.0
        %5756 = vmatpush.xpose.msra.mxu0 0.0
        %5757 = vmatpush.xpose.msra.mxu0 0.0
        %5758 = vmatpush.xpose.msra.mxu0 0.0
        %5759 = vmatpush.xpose.msra.mxu0 0.0
        %5760 = vmatpush.xpose.msra.mxu0 0.0
        %5761 = vmatpush.xpose.msra.mxu0 0.0
        %5762 = vmatpush.xpose.msra.mxu0 0.0
        %5763 = vmatpush.xpose.msra.mxu0 0.0
        %5764 = vmatpush.xpose.msra.mxu0 0.0
        %5765 = vmatpush.xpose.msra.mxu0 0.0
        %5766 = vmatpush.xpose.msra.mxu0 0.0
        %5767 = vmatpush.xpose.msra.mxu0 0.0
        %5768 = vmatpush.xpose.msra.mxu0 0.0
        %5769 = vmatpush.xpose.msra.mxu0 0.0
        %5770 = vmatpush.xpose.msra.mxu0 %v5753
        %5771 = vmatmul.f32.gmra.mxu0 %v5751
        %v5772 = vpop.f32.mrf.mxu0
        %v5773 = vadd.f32 0.0, %v5772
        %5774 = vdwg.mxu0
        %5775 = vrot.lane.b32.xlu0 %v5599, 120
        %v5776 = vpop.permute.xlu0 %5775
        %5777 = vrot.lane.b32.xlu0 %v5599, 56
        %v5778 = vpop.permute.xlu0 %5777
        %v5779 = vsel %vm5627, %v5776, 0
        %v5781 = vsel %vm5627, %v5778, 0
        %5783 = vmatpush.xpose.msra.mxu0 0.0
        %5784 = vmatpush.xpose.msra.mxu0 0.0
        %5785 = vmatpush.xpose.msra.mxu0 0.0
        %5786 = vmatpush.xpose.msra.mxu0 0.0
        %5787 = vmatpush.xpose.msra.mxu0 0.0
        %5788 = vmatpush.xpose.msra.mxu0 0.0
        %5789 = vmatpush.xpose.msra.mxu0 0.0
        %5790 = vmatpush.xpose.msra.mxu0 0.0
        %5791 = vmatpush.xpose.msra.mxu0 0.0
        %5792 = vmatpush.xpose.msra.mxu0 0.0
        %5793 = vmatpush.xpose.msra.mxu0 0.0
        %5794 = vmatpush.xpose.msra.mxu0 0.0
        %5795 = vmatpush.xpose.msra.mxu0 0.0
        %5796 = vmatpush.xpose.msra.mxu0 0.0
        %5797 = vmatpush.xpose.msra.mxu0 0.0
        %5798 = vmatpush.xpose.msra.mxu0 %v5781
        %5799 = vmatmul.f32.gmra.mxu0 %v5779
        %v5800 = vpop.f32.mrf.mxu0
        %v5801 = vadd.f32 0.0, %v5800
        %5802 = vdwg.mxu0
        %v5803 = vsel %vm5627, %v5773, -inf
        %5804 = vmax.xlane.f32.xlu0 %v5803
        %v5805 = vpop.xlane.xlu0 %5804
        %v5806 = vsel %vm5627, %v5801, -inf
        %5807 = vmax.xlane.f32.xlu0 %v5806
        %v5808 = vpop.xlane.xlu0 %5807
        %v5809 = vsub.f32 %v5773, %v5805
        %v5810 = vsub.f32 %v5801, %v5808
        %v5811 = vmul.f32 %v5809, 1.442695
        %v5812 = vpow.pop %v5811
        %v5813 = vmul.f32 %v5810, 1.442695
        %v5814 = vpow.pop %v5813
        %v5815 = vsel %vm5627, %v5812, 0.0
        %5816 = vadd.xlane.f32.xlu0 %v5815
        %v5817 = vpop.xlane.xlu0 %5816
        %v5818 = vsel %vm5627, %v5814, 0.0
        %5819 = vadd.xlane.f32.xlu0 %v5818
        %v5820 = vpop.xlane.xlu0 %5819
        %v5821 = vrcp.pop %v5817
        %v5822 = vrcp.pop %v5820
        %v5823 = vmul.f32 %v5812, %v5821
        %v5824 = vmul.f32 %v5814, %v5822
        %5826 = vrot.lane.b32.xlu0 %v5619, 120
        %v5827 = vpop.permute.xlu0 %5826
        %v5830 = vsel %vm5627, %v5823, 0
        %5832 = vmatpush.msra.mxu0 0.0
        %5833 = vmatpush.msra.mxu0 0.0
        %5834 = vmatpush.msra.mxu0 0.0
        %5835 = vmatpush.msra.mxu0 0.0
        %5836 = vmatpush.msra.mxu0 0.0
        %5837 = vmatpush.msra.mxu0 0.0
        %5838 = vmatpush.msra.mxu0 0.0
        %5839 = vmatpush.msra.mxu0 0.0
        %5840 = vmatpush.msra.mxu0 0.0
        %5841 = vmatpush.msra.mxu0 0.0
        %5842 = vmatpush.msra.mxu0 0.0
        %5843 = vmatpush.msra.mxu0 0.0
        %5844 = vmatpush.msra.mxu0 0.0
        %5845 = vmatpush.msra.mxu0 0.0
        %5846 = vmatpush.msra.mxu0 0.0
        %5847 = vmatpush.msra.mxu0 %v5827
        %5848 = vmatmul.f32.gmra.mxu0 %v5830
        %v5849 = vpop.f32.mrf.mxu0
        %v5850 = vadd.f32 0.0, %v5849
        %5851 = vdwg.mxu0
        %5853 = vrot.lane.b32.xlu0 %v5622, 120
        %v5854 = vpop.permute.xlu0 %5853
        %v5857 = vsel %vm5627, %v5824, 0
        %5859 = vmatpush.msra.mxu0 0.0
        %5860 = vmatpush.msra.mxu0 0.0
        %5861 = vmatpush.msra.mxu0 0.0
        %5862 = vmatpush.msra.mxu0 0.0
        %5863 = vmatpush.msra.mxu0 0.0
        %5864 = vmatpush.msra.mxu0 0.0
        %5865 = vmatpush.msra.mxu0 0.0
        %5866 = vmatpush.msra.mxu0 0.0
        %5867 = vmatpush.msra.mxu0 0.0
        %5868 = vmatpush.msra.mxu0 0.0
        %5869 = vmatpush.msra.mxu0 0.0
        %5870 = vmatpush.msra.mxu0 0.0
        %5871 = vmatpush.msra.mxu0 0.0
        %5872 = vmatpush.msra.mxu0 0.0
        %5873 = vmatpush.msra.mxu0 0.0
        %5874 = vmatpush.msra.mxu0 %v5854
        %5875 = vmatmul.f32.gmra.mxu0 %v5857
        %v5876 = vpop.f32.mrf.mxu0
        %v5877 = vadd.f32 0.0, %v5876
        %5878 = vdwg.mxu0
        %5879 = vrot.lane.b32.xlu0 %v5596, 112
        %v5880 = vpop.permute.xlu0 %5879
        %5881 = vrot.lane.b32.xlu0 %v5596, 48
        %v5882 = vpop.permute.xlu0 %5881
        %v5883 = vsel %vm5627, %v5880, 0
        %v5885 = vsel %vm5627, %v5882, 0
        %5887 = vmatpush.xpose.msra.mxu0 0.0
        %5888 = vmatpush.xpose.msra.mxu0 0.0
        %5889 = vmatpush.xpose.msra.mxu0 0.0
        %5890 = vmatpush.xpose.msra.mxu0 0.0
        %5891 = vmatpush.xpose.msra.mxu0 0.0
        %5892 = vmatpush.xpose.msra.mxu0 0.0
        %5893 = vmatpush.xpose.msra.mxu0 0.0
        %5894 = vmatpush.xpose.msra.mxu0 0.0
        %5895 = vmatpush.xpose.msra.mxu0 0.0
        %5896 = vmatpush.xpose.msra.mxu0 0.0
        %5897 = vmatpush.xpose.msra.mxu0 0.0
        %5898 = vmatpush.xpose.msra.mxu0 0.0
        %5899 = vmatpush.xpose.msra.mxu0 0.0
        %5900 = vmatpush.xpose.msra.mxu0 0.0
        %5901 = vmatpush.xpose.msra.mxu0 0.0
        %5902 = vmatpush.xpose.msra.mxu0 %v5885
        %5903 = vmatmul.f32.gmra.mxu0 %v5883
        %v5904 = vpop.f32.mrf.mxu0
        %v5905 = vadd.f32 0.0, %v5904
        %5906 = vdwg.mxu0
        %5907 = vrot.lane.b32.xlu0 %v5599, 112
        %v5908 = vpop.permute.xlu0 %5907
        %5909 = vrot.lane.b32.xlu0 %v5599, 48
        %v5910 = vpop.permute.xlu0 %5909
        %v5911 = vsel %vm5627, %v5908, 0
        %v5913 = vsel %vm5627, %v5910, 0
        %5915 = vmatpush.xpose.msra.mxu0 0.0
        %5916 = vmatpush.xpose.msra.mxu0 0.0
        %5917 = vmatpush.xpose.msra.mxu0 0.0
        %5918 = vmatpush.xpose.msra.mxu0 0.0
        %5919 = vmatpush.xpose.msra.mxu0 0.0
        %5920 = vmatpush.xpose.msra.mxu0 0.0
        %5921 = vmatpush.xpose.msra.mxu0 0.0
        %5922 = vmatpush.xpose.msra.mxu0 0.0
        %5923 = vmatpush.xpose.msra.mxu0 0.0
        %5924 = vmatpush.xpose.msra.mxu0 0.0
        %5925 = vmatpush.xpose.msra.mxu0 0.0
        %5926 = vmatpush.xpose.msra.mxu0 0.0
        %5927 = vmatpush.xpose.msra.mxu0 0.0
        %5928 = vmatpush.xpose.msra.mxu0 0.0
        %5929 = vmatpush.xpose.msra.mxu0 0.0
        %5930 = vmatpush.xpose.msra.mxu0 %v5913
        %5931 = vmatmul.f32.gmra.mxu0 %v5911
        %v5932 = vpop.f32.mrf.mxu0
        %v5933 = vadd.f32 0.0, %v5932
        %5934 = vdwg.mxu0
        %v5935 = vsel %vm5627, %v5905, -inf
        %5936 = vmax.xlane.f32.xlu0 %v5935
        %v5937 = vpop.xlane.xlu0 %5936
        %v5938 = vsel %vm5627, %v5933, -inf
        %5939 = vmax.xlane.f32.xlu0 %v5938
        %v5940 = vpop.xlane.xlu0 %5939
        %v5941 = vsub.f32 %v5905, %v5937
        %v5942 = vsub.f32 %v5933, %v5940
        %v5943 = vmul.f32 %v5941, 1.442695
        %v5944 = vpow.pop %v5943
        %v5945 = vmul.f32 %v5942, 1.442695
        %v5946 = vpow.pop %v5945
        %v5947 = vsel %vm5627, %v5944, 0.0
        %5948 = vadd.xlane.f32.xlu0 %v5947
        %v5949 = vpop.xlane.xlu0 %5948
        %v5950 = vsel %vm5627, %v5946, 0.0
        %5951 = vadd.xlane.f32.xlu0 %v5950
        %v5952 = vpop.xlane.xlu0 %5951
        %v5953 = vrcp.pop %v5949
        %v5954 = vrcp.pop %v5952
        %v5955 = vmul.f32 %v5944, %v5953
        %v5956 = vmul.f32 %v5946, %v5954
        %5957 = vrot.lane.b32.xlu0 %v5619, 112
        %v5958 = vpop.permute.xlu0 %5957
        %v5961 = vsel %vm5627, %v5955, 0
        %5963 = vmatpush.msra.mxu0 0.0
        %5964 = vmatpush.msra.mxu0 0.0
        %5965 = vmatpush.msra.mxu0 0.0
        %5966 = vmatpush.msra.mxu0 0.0
        %5967 = vmatpush.msra.mxu0 0.0
        %5968 = vmatpush.msra.mxu0 0.0
        %5969 = vmatpush.msra.mxu0 0.0
        %5970 = vmatpush.msra.mxu0 0.0
        %5971 = vmatpush.msra.mxu0 0.0
        %5972 = vmatpush.msra.mxu0 0.0
        %5973 = vmatpush.msra.mxu0 0.0
        %5974 = vmatpush.msra.mxu0 0.0
        %5975 = vmatpush.msra.mxu0 0.0
        %5976 = vmatpush.msra.mxu0 0.0
        %5977 = vmatpush.msra.mxu0 0.0
        %5978 = vmatpush.msra.mxu0 %v5958
        %5979 = vmatmul.f32.gmra.mxu0 %v5961
        %v5980 = vpop.f32.mrf.mxu0
        %v5981 = vadd.f32 0.0, %v5980
        %5982 = vdwg.mxu0
        %5983 = vrot.lane.b32.xlu0 %v5622, 112
        %v5984 = vpop.permute.xlu0 %5983
        %v5987 = vsel %vm5627, %v5956, 0
        %5989 = vmatpush.msra.mxu0 0.0
        %5990 = vmatpush.msra.mxu0 0.0
        %5991 = vmatpush.msra.mxu0 0.0
        %5992 = vmatpush.msra.mxu0 0.0
        %5993 = vmatpush.msra.mxu0 0.0
        %5994 = vmatpush.msra.mxu0 0.0
        %5995 = vmatpush.msra.mxu0 0.0
        %5996 = vmatpush.msra.mxu0 0.0
        %5997 = vmatpush.msra.mxu0 0.0
        %5998 = vmatpush.msra.mxu0 0.0
        %5999 = vmatpush.msra.mxu0 0.0
        %6000 = vmatpush.msra.mxu0 0.0
        %6001 = vmatpush.msra.mxu0 0.0
        %6002 = vmatpush.msra.mxu0 0.0
        %6003 = vmatpush.msra.mxu0 0.0
        %6004 = vmatpush.msra.mxu0 %v5984
        %6005 = vmatmul.f32.gmra.mxu0 %v5987
        %v6006 = vpop.f32.mrf.mxu0
        %v6007 = vadd.f32 0.0, %v6006
        %6008 = vdwg.mxu0
        %6009 = vrot.lane.b32.xlu0 %v5596, 104
        %v6010 = vpop.permute.xlu0 %6009
        %6011 = vrot.lane.b32.xlu0 %v5596, 40
        %v6012 = vpop.permute.xlu0 %6011
        %v6013 = vsel %vm5627, %v6010, 0
        %v6015 = vsel %vm5627, %v6012, 0
        %6017 = vmatpush.xpose.msra.mxu0 0.0
        %6018 = vmatpush.xpose.msra.mxu0 0.0
        %6019 = vmatpush.xpose.msra.mxu0 0.0
        %6020 = vmatpush.xpose.msra.mxu0 0.0
        %6021 = vmatpush.xpose.msra.mxu0 0.0
        %6022 = vmatpush.xpose.msra.mxu0 0.0
        %6023 = vmatpush.xpose.msra.mxu0 0.0
        %6024 = vmatpush.xpose.msra.mxu0 0.0
        %6025 = vmatpush.xpose.msra.mxu0 0.0
        %6026 = vmatpush.xpose.msra.mxu0 0.0
        %6027 = vmatpush.xpose.msra.mxu0 0.0
        %6028 = vmatpush.xpose.msra.mxu0 0.0
        %6029 = vmatpush.xpose.msra.mxu0 0.0
        %6030 = vmatpush.xpose.msra.mxu0 0.0
        %6031 = vmatpush.xpose.msra.mxu0 0.0
        %6032 = vmatpush.xpose.msra.mxu0 %v6015
        %6033 = vmatmul.f32.gmra.mxu0 %v6013
        %v6034 = vpop.f32.mrf.mxu0
        %v6035 = vadd.f32 0.0, %v6034
        %6036 = vdwg.mxu0
        %6037 = vrot.lane.b32.xlu0 %v5599, 104
        %v6038 = vpop.permute.xlu0 %6037
        %6039 = vrot.lane.b32.xlu0 %v5599, 40
        %v6040 = vpop.permute.xlu0 %6039
        %v6041 = vsel %vm5627, %v6038, 0
        %v6043 = vsel %vm5627, %v6040, 0
        %6045 = vmatpush.xpose.msra.mxu0 0.0
        %6046 = vmatpush.xpose.msra.mxu0 0.0
        %6047 = vmatpush.xpose.msra.mxu0 0.0
        %6048 = vmatpush.xpose.msra.mxu0 0.0
        %6049 = vmatpush.xpose.msra.mxu0 0.0
        %6050 = vmatpush.xpose.msra.mxu0 0.0
        %6051 = vmatpush.xpose.msra.mxu0 0.0
        %6052 = vmatpush.xpose.msra.mxu0 0.0
        %6053 = vmatpush.xpose.msra.mxu0 0.0
        %6054 = vmatpush.xpose.msra.mxu0 0.0
        %6055 = vmatpush.xpose.msra.mxu0 0.0
        %6056 = vmatpush.xpose.msra.mxu0 0.0
        %6057 = vmatpush.xpose.msra.mxu0 0.0
        %6058 = vmatpush.xpose.msra.mxu0 0.0
        %6059 = vmatpush.xpose.msra.mxu0 0.0
        %6060 = vmatpush.xpose.msra.mxu0 %v6043
        %6061 = vmatmul.f32.gmra.mxu0 %v6041
        %v6062 = vpop.f32.mrf.mxu0
        %v6063 = vadd.f32 0.0, %v6062
        %6064 = vdwg.mxu0
        %v6065 = vsel %vm5627, %v6035, -inf
        %6066 = vmax.xlane.f32.xlu0 %v6065
        %v6067 = vpop.xlane.xlu0 %6066
        %v6068 = vsel %vm5627, %v6063, -inf
        %6069 = vmax.xlane.f32.xlu0 %v6068
        %v6070 = vpop.xlane.xlu0 %6069
        %v6071 = vsub.f32 %v6035, %v6067
        %v6072 = vsub.f32 %v6063, %v6070
        %v6073 = vmul.f32 %v6071, 1.442695
        %v6074 = vpow.pop %v6073
        %v6075 = vmul.f32 %v6072, 1.442695
        %v6076 = vpow.pop %v6075
        %v6077 = vsel %vm5627, %v6074, 0.0
        %6078 = vadd.xlane.f32.xlu0 %v6077
        %v6079 = vpop.xlane.xlu0 %6078
        %v6080 = vsel %vm5627, %v6076, 0.0
        %6081 = vadd.xlane.f32.xlu0 %v6080
        %v6082 = vpop.xlane.xlu0 %6081
        %v6083 = vrcp.pop %v6079
        %v6084 = vrcp.pop %v6082
        %v6085 = vmul.f32 %v6074, %v6083
        %v6086 = vmul.f32 %v6076, %v6084
        %6087 = vrot.lane.b32.xlu0 %v5619, 104
        %v6088 = vpop.permute.xlu0 %6087
        %v6091 = vsel %vm5627, %v6085, 0
        %6093 = vmatpush.msra.mxu0 0.0
        %6094 = vmatpush.msra.mxu0 0.0
        %6095 = vmatpush.msra.mxu0 0.0
        %6096 = vmatpush.msra.mxu0 0.0
        %6097 = vmatpush.msra.mxu0 0.0
        %6098 = vmatpush.msra.mxu0 0.0
        %6099 = vmatpush.msra.mxu0 0.0
        %6100 = vmatpush.msra.mxu0 0.0
        %6101 = vmatpush.msra.mxu0 0.0
        %6102 = vmatpush.msra.mxu0 0.0
        %6103 = vmatpush.msra.mxu0 0.0
        %6104 = vmatpush.msra.mxu0 0.0
        %6105 = vmatpush.msra.mxu0 0.0
        %6106 = vmatpush.msra.mxu0 0.0
        %6107 = vmatpush.msra.mxu0 0.0
        %6108 = vmatpush.msra.mxu0 %v6088
        %6109 = vmatmul.f32.gmra.mxu0 %v6091
        %v6110 = vpop.f32.mrf.mxu0
        %v6111 = vadd.f32 0.0, %v6110
        %6112 = vdwg.mxu0
        %6113 = vrot.lane.b32.xlu0 %v5622, 104
        %v6114 = vpop.permute.xlu0 %6113
        %v6117 = vsel %vm5627, %v6086, 0
        %6119 = vmatpush.msra.mxu0 0.0
        %6120 = vmatpush.msra.mxu0 0.0
        %6121 = vmatpush.msra.mxu0 0.0
        %6122 = vmatpush.msra.mxu0 0.0
        %6123 = vmatpush.msra.mxu0 0.0
        %6124 = vmatpush.msra.mxu0 0.0
        %6125 = vmatpush.msra.mxu0 0.0
        %6126 = vmatpush.msra.mxu0 0.0
        %6127 = vmatpush.msra.mxu0 0.0
        %6128 = vmatpush.msra.mxu0 0.0
        %6129 = vmatpush.msra.mxu0 0.0
        %6130 = vmatpush.msra.mxu0 0.0
        %6131 = vmatpush.msra.mxu0 0.0
        %6132 = vmatpush.msra.mxu0 0.0
        %6133 = vmatpush.msra.mxu0 0.0
        %6134 = vmatpush.msra.mxu0 %v6114
        %6135 = vmatmul.f32.gmra.mxu0 %v6117
        %v6136 = vpop.f32.mrf.mxu0
        %v6137 = vadd.f32 0.0, %v6136
        %6138 = vdwg.mxu0
        %6139 = vrot.lane.b32.xlu0 %v5596, 96
        %v6140 = vpop.permute.xlu0 %6139
        %6141 = vrot.lane.b32.xlu0 %v5596, 32
        %v6142 = vpop.permute.xlu0 %6141
        %v6143 = vsel %vm5627, %v6140, 0
        %v6145 = vsel %vm5627, %v6142, 0
        %6147 = vmatpush.xpose.msra.mxu0 0.0
        %6148 = vmatpush.xpose.msra.mxu0 0.0
        %6149 = vmatpush.xpose.msra.mxu0 0.0
        %6150 = vmatpush.xpose.msra.mxu0 0.0
        %6151 = vmatpush.xpose.msra.mxu0 0.0
        %6152 = vmatpush.xpose.msra.mxu0 0.0
        %6153 = vmatpush.xpose.msra.mxu0 0.0
        %6154 = vmatpush.xpose.msra.mxu0 0.0
        %6155 = vmatpush.xpose.msra.mxu0 0.0
        %6156 = vmatpush.xpose.msra.mxu0 0.0
        %6157 = vmatpush.xpose.msra.mxu0 0.0
        %6158 = vmatpush.xpose.msra.mxu0 0.0
        %6159 = vmatpush.xpose.msra.mxu0 0.0
        %6160 = vmatpush.xpose.msra.mxu0 0.0
        %6161 = vmatpush.xpose.msra.mxu0 0.0
        %6162 = vmatpush.xpose.msra.mxu0 %v6145
        %6163 = vmatmul.f32.gmra.mxu0 %v6143
        %v6164 = vpop.f32.mrf.mxu0
        %v6165 = vadd.f32 0.0, %v6164
        %6166 = vdwg.mxu0
        %6167 = vrot.lane.b32.xlu0 %v5599, 96
        %v6168 = vpop.permute.xlu0 %6167
        %6169 = vrot.lane.b32.xlu0 %v5599, 32
        %v6170 = vpop.permute.xlu0 %6169
        %v6171 = vsel %vm5627, %v6168, 0
        %v6173 = vsel %vm5627, %v6170, 0
        %6175 = vmatpush.xpose.msra.mxu0 0.0
        %6176 = vmatpush.xpose.msra.mxu0 0.0
        %6177 = vmatpush.xpose.msra.mxu0 0.0
        %6178 = vmatpush.xpose.msra.mxu0 0.0
        %6179 = vmatpush.xpose.msra.mxu0 0.0
        %6180 = vmatpush.xpose.msra.mxu0 0.0
        %6181 = vmatpush.xpose.msra.mxu0 0.0
        %6182 = vmatpush.xpose.msra.mxu0 0.0
        %6183 = vmatpush.xpose.msra.mxu0 0.0
        %6184 = vmatpush.xpose.msra.mxu0 0.0
        %6185 = vmatpush.xpose.msra.mxu0 0.0
        %6186 = vmatpush.xpose.msra.mxu0 0.0
        %6187 = vmatpush.xpose.msra.mxu0 0.0
        %6188 = vmatpush.xpose.msra.mxu0 0.0
        %6189 = vmatpush.xpose.msra.mxu0 0.0
        %6190 = vmatpush.xpose.msra.mxu0 %v6173
        %6191 = vmatmul.f32.gmra.mxu0 %v6171
        %v6192 = vpop.f32.mrf.mxu0
        %v6193 = vadd.f32 0.0, %v6192
        %6194 = vdwg.mxu0
        %v6195 = vsel %vm5627, %v6165, -inf
        %6196 = vmax.xlane.f32.xlu0 %v6195
        %v6197 = vpop.xlane.xlu0 %6196
        %v6198 = vsel %vm5627, %v6193, -inf
        %6199 = vmax.xlane.f32.xlu0 %v6198
        %v6200 = vpop.xlane.xlu0 %6199
        %v6201 = vsub.f32 %v6165, %v6197
        %v6202 = vsub.f32 %v6193, %v6200
        %v6203 = vmul.f32 %v6201, 1.442695
        %v6204 = vpow.pop %v6203
        %v6205 = vmul.f32 %v6202, 1.442695
        %v6206 = vpow.pop %v6205
        %v6207 = vsel %vm5627, %v6204, 0.0
        %6208 = vadd.xlane.f32.xlu0 %v6207
        %v6209 = vpop.xlane.xlu0 %6208
        %v6210 = vsel %vm5627, %v6206, 0.0
        %6211 = vadd.xlane.f32.xlu0 %v6210
        %v6212 = vpop.xlane.xlu0 %6211
        %v6213 = vrcp.pop %v6209
        %v6214 = vrcp.pop %v6212
        %v6215 = vmul.f32 %v6204, %v6213
        %v6216 = vmul.f32 %v6206, %v6214
        %6217 = vrot.lane.b32.xlu0 %v5619, 96
        %v6218 = vpop.permute.xlu0 %6217
        %v6221 = vsel %vm5627, %v6215, 0
        %6223 = vmatpush.msra.mxu0 0.0
        %6224 = vmatpush.msra.mxu0 0.0
        %6225 = vmatpush.msra.mxu0 0.0
        %6226 = vmatpush.msra.mxu0 0.0
        %6227 = vmatpush.msra.mxu0 0.0
        %6228 = vmatpush.msra.mxu0 0.0
        %6229 = vmatpush.msra.mxu0 0.0
        %6230 = vmatpush.msra.mxu0 0.0
        %6231 = vmatpush.msra.mxu0 0.0
        %6232 = vmatpush.msra.mxu0 0.0
        %6233 = vmatpush.msra.mxu0 0.0
        %6234 = vmatpush.msra.mxu0 0.0
        %6235 = vmatpush.msra.mxu0 0.0
        %6236 = vmatpush.msra.mxu0 0.0
        %6237 = vmatpush.msra.mxu0 0.0
        %6238 = vmatpush.msra.mxu0 %v6218
        %6239 = vmatmul.f32.gmra.mxu0 %v6221
        %v6240 = vpop.f32.mrf.mxu0
        %v6241 = vadd.f32 0.0, %v6240
        %6242 = vdwg.mxu0
        %6243 = vrot.lane.b32.xlu0 %v5622, 96
        %v6244 = vpop.permute.xlu0 %6243
        %v6247 = vsel %vm5627, %v6216, 0
        %6249 = vmatpush.msra.mxu0 0.0
        %6250 = vmatpush.msra.mxu0 0.0
        %6251 = vmatpush.msra.mxu0 0.0
        %6252 = vmatpush.msra.mxu0 0.0
        %6253 = vmatpush.msra.mxu0 0.0
        %6254 = vmatpush.msra.mxu0 0.0
        %6255 = vmatpush.msra.mxu0 0.0
        %6256 = vmatpush.msra.mxu0 0.0
        %6257 = vmatpush.msra.mxu0 0.0
        %6258 = vmatpush.msra.mxu0 0.0
        %6259 = vmatpush.msra.mxu0 0.0
        %6260 = vmatpush.msra.mxu0 0.0
        %6261 = vmatpush.msra.mxu0 0.0
        %6262 = vmatpush.msra.mxu0 0.0
        %6263 = vmatpush.msra.mxu0 0.0
        %6264 = vmatpush.msra.mxu0 %v6244
        %6265 = vmatmul.f32.gmra.mxu0 %v6247
        %v6266 = vpop.f32.mrf.mxu0
        %v6267 = vadd.f32 0.0, %v6266
        %6268 = vdwg.mxu0
        %6269 = vrot.lane.b32.xlu0 %v5596, 88
        %v6270 = vpop.permute.xlu0 %6269
        %6271 = vrot.lane.b32.xlu0 %v5596, 24
        %v6272 = vpop.permute.xlu0 %6271
        %v6273 = vsel %vm5627, %v6270, 0
        %v6275 = vsel %vm5627, %v6272, 0
        %6277 = vmatpush.xpose.msra.mxu0 0.0
        %6278 = vmatpush.xpose.msra.mxu0 0.0
        %6279 = vmatpush.xpose.msra.mxu0 0.0
        %6280 = vmatpush.xpose.msra.mxu0 0.0
        %6281 = vmatpush.xpose.msra.mxu0 0.0
        %6282 = vmatpush.xpose.msra.mxu0 0.0
        %6283 = vmatpush.xpose.msra.mxu0 0.0
        %6284 = vmatpush.xpose.msra.mxu0 0.0
        %6285 = vmatpush.xpose.msra.mxu0 0.0
        %6286 = vmatpush.xpose.msra.mxu0 0.0
        %6287 = vmatpush.xpose.msra.mxu0 0.0
        %6288 = vmatpush.xpose.msra.mxu0 0.0
        %6289 = vmatpush.xpose.msra.mxu0 0.0
        %6290 = vmatpush.xpose.msra.mxu0 0.0
        %6291 = vmatpush.xpose.msra.mxu0 0.0
        %6292 = vmatpush.xpose.msra.mxu0 %v6275
        %6293 = vmatmul.f32.gmra.mxu0 %v6273
        %v6294 = vpop.f32.mrf.mxu0
        %v6295 = vadd.f32 0.0, %v6294
        %6296 = vdwg.mxu0
        %6297 = vrot.lane.b32.xlu0 %v5599, 88
        %v6298 = vpop.permute.xlu0 %6297
        %6299 = vrot.lane.b32.xlu0 %v5599, 24
        %v6300 = vpop.permute.xlu0 %6299
        %v6301 = vsel %vm5627, %v6298, 0
        %v6303 = vsel %vm5627, %v6300, 0
        %6305 = vmatpush.xpose.msra.mxu0 0.0
        %6306 = vmatpush.xpose.msra.mxu0 0.0
        %6307 = vmatpush.xpose.msra.mxu0 0.0
        %6308 = vmatpush.xpose.msra.mxu0 0.0
        %6309 = vmatpush.xpose.msra.mxu0 0.0
        %6310 = vmatpush.xpose.msra.mxu0 0.0
        %6311 = vmatpush.xpose.msra.mxu0 0.0
        %6312 = vmatpush.xpose.msra.mxu0 0.0
        %6313 = vmatpush.xpose.msra.mxu0 0.0
        %6314 = vmatpush.xpose.msra.mxu0 0.0
        %6315 = vmatpush.xpose.msra.mxu0 0.0
        %6316 = vmatpush.xpose.msra.mxu0 0.0
        %6317 = vmatpush.xpose.msra.mxu0 0.0
        %6318 = vmatpush.xpose.msra.mxu0 0.0
        %6319 = vmatpush.xpose.msra.mxu0 0.0
        %6320 = vmatpush.xpose.msra.mxu0 %v6303
        %6321 = vmatmul.f32.gmra.mxu0 %v6301
        %v6322 = vpop.f32.mrf.mxu0
        %v6323 = vadd.f32 0.0, %v6322
        %6324 = vdwg.mxu0
        %v6325 = vsel %vm5627, %v6295, -inf
        %6326 = vmax.xlane.f32.xlu0 %v6325
        %v6327 = vpop.xlane.xlu0 %6326
        %v6328 = vsel %vm5627, %v6323, -inf
        %6329 = vmax.xlane.f32.xlu0 %v6328
        %v6330 = vpop.xlane.xlu0 %6329
        %v6331 = vsub.f32 %v6295, %v6327
        %v6332 = vsub.f32 %v6323, %v6330
        %v6333 = vmul.f32 %v6331, 1.442695
        %v6334 = vpow.pop %v6333
        %v6335 = vmul.f32 %v6332, 1.442695
        %v6336 = vpow.pop %v6335
        %v6337 = vsel %vm5627, %v6334, 0.0
        %6338 = vadd.xlane.f32.xlu0 %v6337
        %v6339 = vpop.xlane.xlu0 %6338
        %v6340 = vsel %vm5627, %v6336, 0.0
        %6341 = vadd.xlane.f32.xlu0 %v6340
        %v6342 = vpop.xlane.xlu0 %6341
        %v6343 = vrcp.pop %v6339
        %v6344 = vrcp.pop %v6342
        %v6345 = vmul.f32 %v6334, %v6343
        %v6346 = vmul.f32 %v6336, %v6344
        %6347 = vrot.lane.b32.xlu0 %v5619, 88
        %v6348 = vpop.permute.xlu0 %6347
        %v6351 = vsel %vm5627, %v6345, 0
        %6353 = vmatpush.msra.mxu0 0.0
        %6354 = vmatpush.msra.mxu0 0.0
        %6355 = vmatpush.msra.mxu0 0.0
        %6356 = vmatpush.msra.mxu0 0.0
        %6357 = vmatpush.msra.mxu0 0.0
        %6358 = vmatpush.msra.mxu0 0.0
        %6359 = vmatpush.msra.mxu0 0.0
        %6360 = vmatpush.msra.mxu0 0.0
        %6361 = vmatpush.msra.mxu0 0.0
        %6362 = vmatpush.msra.mxu0 0.0
        %6363 = vmatpush.msra.mxu0 0.0
        %6364 = vmatpush.msra.mxu0 0.0
        %6365 = vmatpush.msra.mxu0 0.0
        %6366 = vmatpush.msra.mxu0 0.0
        %6367 = vmatpush.msra.mxu0 0.0
        %6368 = vmatpush.msra.mxu0 %v6348
        %6369 = vmatmul.f32.gmra.mxu0 %v6351
        %v6370 = vpop.f32.mrf.mxu0
        %v6371 = vadd.f32 0.0, %v6370
        %6372 = vdwg.mxu0
        %6373 = vrot.lane.b32.xlu0 %v5622, 88
        %v6374 = vpop.permute.xlu0 %6373
        %v6377 = vsel %vm5627, %v6346, 0
        %6379 = vmatpush.msra.mxu0 0.0
        %6380 = vmatpush.msra.mxu0 0.0
        %6381 = vmatpush.msra.mxu0 0.0
        %6382 = vmatpush.msra.mxu0 0.0
        %6383 = vmatpush.msra.mxu0 0.0
        %6384 = vmatpush.msra.mxu0 0.0
        %6385 = vmatpush.msra.mxu0 0.0
        %6386 = vmatpush.msra.mxu0 0.0
        %6387 = vmatpush.msra.mxu0 0.0
        %6388 = vmatpush.msra.mxu0 0.0
        %6389 = vmatpush.msra.mxu0 0.0
        %6390 = vmatpush.msra.mxu0 0.0
        %6391 = vmatpush.msra.mxu0 0.0
        %6392 = vmatpush.msra.mxu0 0.0
        %6393 = vmatpush.msra.mxu0 0.0
        %6394 = vmatpush.msra.mxu0 %v6374
        %6395 = vmatmul.f32.gmra.mxu0 %v6377
        %v6396 = vpop.f32.mrf.mxu0
        %v6397 = vadd.f32 0.0, %v6396
        %6398 = vdwg.mxu0
        %6399 = vrot.lane.b32.xlu0 %v5596, 80
        %v6400 = vpop.permute.xlu0 %6399
        %6401 = vrot.lane.b32.xlu0 %v5596, 16
        %v6402 = vpop.permute.xlu0 %6401
        %v6403 = vsel %vm5627, %v6400, 0
        %v6405 = vsel %vm5627, %v6402, 0
        %6407 = vmatpush.xpose.msra.mxu0 0.0
        %6408 = vmatpush.xpose.msra.mxu0 0.0
        %6409 = vmatpush.xpose.msra.mxu0 0.0
        %6410 = vmatpush.xpose.msra.mxu0 0.0
        %6411 = vmatpush.xpose.msra.mxu0 0.0
        %6412 = vmatpush.xpose.msra.mxu0 0.0
        %6413 = vmatpush.xpose.msra.mxu0 0.0
        %6414 = vmatpush.xpose.msra.mxu0 0.0
        %6415 = vmatpush.xpose.msra.mxu0 0.0
        %6416 = vmatpush.xpose.msra.mxu0 0.0
        %6417 = vmatpush.xpose.msra.mxu0 0.0
        %6418 = vmatpush.xpose.msra.mxu0 0.0
        %6419 = vmatpush.xpose.msra.mxu0 0.0
        %6420 = vmatpush.xpose.msra.mxu0 0.0
        %6421 = vmatpush.xpose.msra.mxu0 0.0
        %6422 = vmatpush.xpose.msra.mxu0 %v6405
        %6423 = vmatmul.f32.gmra.mxu0 %v6403
        %v6424 = vpop.f32.mrf.mxu0
        %v6425 = vadd.f32 0.0, %v6424
        %6426 = vdwg.mxu0
        %6427 = vrot.lane.b32.xlu0 %v5599, 80
        %v6428 = vpop.permute.xlu0 %6427
        %6429 = vrot.lane.b32.xlu0 %v5599, 16
        %v6430 = vpop.permute.xlu0 %6429
        %v6431 = vsel %vm5627, %v6428, 0
        %v6433 = vsel %vm5627, %v6430, 0
        %6435 = vmatpush.xpose.msra.mxu0 0.0
        %6436 = vmatpush.xpose.msra.mxu0 0.0
        %6437 = vmatpush.xpose.msra.mxu0 0.0
        %6438 = vmatpush.xpose.msra.mxu0 0.0
        %6439 = vmatpush.xpose.msra.mxu0 0.0
        %6440 = vmatpush.xpose.msra.mxu0 0.0
        %6441 = vmatpush.xpose.msra.mxu0 0.0
        %6442 = vmatpush.xpose.msra.mxu0 0.0
        %6443 = vmatpush.xpose.msra.mxu0 0.0
        %6444 = vmatpush.xpose.msra.mxu0 0.0
        %6445 = vmatpush.xpose.msra.mxu0 0.0
        %6446 = vmatpush.xpose.msra.mxu0 0.0
        %6447 = vmatpush.xpose.msra.mxu0 0.0
        %6448 = vmatpush.xpose.msra.mxu0 0.0
        %6449 = vmatpush.xpose.msra.mxu0 0.0
        %6450 = vmatpush.xpose.msra.mxu0 %v6433
        %6451 = vmatmul.f32.gmra.mxu0 %v6431
        %v6452 = vpop.f32.mrf.mxu0
        %v6453 = vadd.f32 0.0, %v6452
        %6454 = vdwg.mxu0
        %v6455 = vsel %vm5627, %v6425, -inf
        %6456 = vmax.xlane.f32.xlu0 %v6455
        %v6457 = vpop.xlane.xlu0 %6456
        %v6458 = vsel %vm5627, %v6453, -inf
        %6459 = vmax.xlane.f32.xlu0 %v6458
        %v6460 = vpop.xlane.xlu0 %6459
        %v6461 = vsub.f32 %v6425, %v6457
        %v6462 = vsub.f32 %v6453, %v6460
        %v6463 = vmul.f32 %v6461, 1.442695
        %v6464 = vpow.pop %v6463
        %v6465 = vmul.f32 %v6462, 1.442695
        %v6466 = vpow.pop %v6465
        %v6467 = vsel %vm5627, %v6464, 0.0
        %6468 = vadd.xlane.f32.xlu0 %v6467
        %v6469 = vpop.xlane.xlu0 %6468
        %v6470 = vsel %vm5627, %v6466, 0.0
        %6471 = vadd.xlane.f32.xlu0 %v6470
        %v6472 = vpop.xlane.xlu0 %6471
        %v6473 = vrcp.pop %v6469
        %v6474 = vrcp.pop %v6472
        %v6475 = vmul.f32 %v6464, %v6473
        %v6476 = vmul.f32 %v6466, %v6474
        %6477 = vrot.lane.b32.xlu0 %v5619, 80
        %v6478 = vpop.permute.xlu0 %6477
        %v6481 = vsel %vm5627, %v6475, 0
        %6483 = vmatpush.msra.mxu0 0.0
        %6484 = vmatpush.msra.mxu0 0.0
        %6485 = vmatpush.msra.mxu0 0.0
        %6486 = vmatpush.msra.mxu0 0.0
        %6487 = vmatpush.msra.mxu0 0.0
        %6488 = vmatpush.msra.mxu0 0.0
        %6489 = vmatpush.msra.mxu0 0.0
        %6490 = vmatpush.msra.mxu0 0.0
        %6491 = vmatpush.msra.mxu0 0.0
        %6492 = vmatpush.msra.mxu0 0.0
        %6493 = vmatpush.msra.mxu0 0.0
        %6494 = vmatpush.msra.mxu0 0.0
        %6495 = vmatpush.msra.mxu0 0.0
        %6496 = vmatpush.msra.mxu0 0.0
        %6497 = vmatpush.msra.mxu0 0.0
        %6498 = vmatpush.msra.mxu0 %v6478
        %6499 = vmatmul.f32.gmra.mxu0 %v6481
        %v6500 = vpop.f32.mrf.mxu0
        %v6501 = vadd.f32 0.0, %v6500
        %6502 = vdwg.mxu0
        %6503 = vrot.lane.b32.xlu0 %v5622, 80
        %v6504 = vpop.permute.xlu0 %6503
        %v6507 = vsel %vm5627, %v6476, 0
        %6509 = vmatpush.msra.mxu0 0.0
        %6510 = vmatpush.msra.mxu0 0.0
        %6511 = vmatpush.msra.mxu0 0.0
        %6512 = vmatpush.msra.mxu0 0.0
        %6513 = vmatpush.msra.mxu0 0.0
        %6514 = vmatpush.msra.mxu0 0.0
        %6515 = vmatpush.msra.mxu0 0.0
        %6516 = vmatpush.msra.mxu0 0.0
        %6517 = vmatpush.msra.mxu0 0.0
        %6518 = vmatpush.msra.mxu0 0.0
        %6519 = vmatpush.msra.mxu0 0.0
        %6520 = vmatpush.msra.mxu0 0.0
        %6521 = vmatpush.msra.mxu0 0.0
        %6522 = vmatpush.msra.mxu0 0.0
        %6523 = vmatpush.msra.mxu0 0.0
        %6524 = vmatpush.msra.mxu0 %v6504
        %6525 = vmatmul.f32.gmra.mxu0 %v6507
        %v6526 = vpop.f32.mrf.mxu0
        %v6527 = vadd.f32 0.0, %v6526
        %6528 = vdwg.mxu0
        %6529 = vrot.lane.b32.xlu0 %v5596, 72
        %v6530 = vpop.permute.xlu0 %6529
        %6531 = vrot.lane.b32.xlu0 %v5596, 8
        %v6532 = vpop.permute.xlu0 %6531
        %v6533 = vsel %vm5627, %v6530, 0
        %v6535 = vsel %vm5627, %v6532, 0
        %6537 = vmatpush.xpose.msra.mxu0 0.0
        %6538 = vmatpush.xpose.msra.mxu0 0.0
        %6539 = vmatpush.xpose.msra.mxu0 0.0
        %6540 = vmatpush.xpose.msra.mxu0 0.0
        %6541 = vmatpush.xpose.msra.mxu0 0.0
        %6542 = vmatpush.xpose.msra.mxu0 0.0
        %6543 = vmatpush.xpose.msra.mxu0 0.0
        %6544 = vmatpush.xpose.msra.mxu0 0.0
        %6545 = vmatpush.xpose.msra.mxu0 0.0
        %6546 = vmatpush.xpose.msra.mxu0 0.0
        %6547 = vmatpush.xpose.msra.mxu0 0.0
        %6548 = vmatpush.xpose.msra.mxu0 0.0
        %6549 = vmatpush.xpose.msra.mxu0 0.0
        %6550 = vmatpush.xpose.msra.mxu0 0.0
        %6551 = vmatpush.xpose.msra.mxu0 0.0
        %6552 = vmatpush.xpose.msra.mxu0 %v6535
        %6553 = vmatmul.f32.gmra.mxu0 %v6533
        %v6554 = vpop.f32.mrf.mxu0
        %v6555 = vadd.f32 0.0, %v6554
        %6556 = vdwg.mxu0
        %6557 = vrot.lane.b32.xlu0 %v5599, 72
        %v6558 = vpop.permute.xlu0 %6557
        %6559 = vrot.lane.b32.xlu0 %v5599, 8
        %v6560 = vpop.permute.xlu0 %6559
        %v6561 = vsel %vm5627, %v6558, 0
        %v6563 = vsel %vm5627, %v6560, 0
        %6565 = vmatpush.xpose.msra.mxu0 0.0
        %6566 = vmatpush.xpose.msra.mxu0 0.0
        %6567 = vmatpush.xpose.msra.mxu0 0.0
        %6568 = vmatpush.xpose.msra.mxu0 0.0
        %6569 = vmatpush.xpose.msra.mxu0 0.0
        %6570 = vmatpush.xpose.msra.mxu0 0.0
        %6571 = vmatpush.xpose.msra.mxu0 0.0
        %6572 = vmatpush.xpose.msra.mxu0 0.0
        %6573 = vmatpush.xpose.msra.mxu0 0.0
        %6574 = vmatpush.xpose.msra.mxu0 0.0
        %6575 = vmatpush.xpose.msra.mxu0 0.0
        %6576 = vmatpush.xpose.msra.mxu0 0.0
        %6577 = vmatpush.xpose.msra.mxu0 0.0
        %6578 = vmatpush.xpose.msra.mxu0 0.0
        %6579 = vmatpush.xpose.msra.mxu0 0.0
        %6580 = vmatpush.xpose.msra.mxu0 %v6563
        %6581 = vmatmul.f32.gmra.mxu0 %v6561
        %v6582 = vpop.f32.mrf.mxu0
        %v6583 = vadd.f32 0.0, %v6582
        %6584 = vdwg.mxu0
        %v6585 = vsel %vm5627, %v6555, -inf
        %6586 = vmax.xlane.f32.xlu0 %v6585
        %v6587 = vpop.xlane.xlu0 %6586
        %v6588 = vsel %vm5627, %v6583, -inf
        %6589 = vmax.xlane.f32.xlu0 %v6588
        %v6590 = vpop.xlane.xlu0 %6589
        %v6591 = vsub.f32 %v6555, %v6587
        %v6592 = vsub.f32 %v6583, %v6590
        %v6593 = vmul.f32 %v6591, 1.442695
        %v6594 = vpow.pop %v6593
        %v6595 = vmul.f32 %v6592, 1.442695
        %v6596 = vpow.pop %v6595
        %v6597 = vsel %vm5627, %v6594, 0.0
        %6598 = vadd.xlane.f32.xlu0 %v6597
        %v6599 = vpop.xlane.xlu0 %6598
        %v6600 = vsel %vm5627, %v6596, 0.0
        %6601 = vadd.xlane.f32.xlu0 %v6600
        %v6602 = vpop.xlane.xlu0 %6601
        %v6603 = vrcp.pop %v6599
        %v6604 = vrcp.pop %v6602
        %v6605 = vmul.f32 %v6594, %v6603
        %v6606 = vmul.f32 %v6596, %v6604
        %6607 = vrot.lane.b32.xlu0 %v5619, 72
        %v6608 = vpop.permute.xlu0 %6607
        %v6611 = vsel %vm5627, %v6605, 0
        %6613 = vmatpush.msra.mxu0 0.0
        %6614 = vmatpush.msra.mxu0 0.0
        %6615 = vmatpush.msra.mxu0 0.0
        %6616 = vmatpush.msra.mxu0 0.0
        %6617 = vmatpush.msra.mxu0 0.0
        %6618 = vmatpush.msra.mxu0 0.0
        %6619 = vmatpush.msra.mxu0 0.0
        %6620 = vmatpush.msra.mxu0 0.0
        %6621 = vmatpush.msra.mxu0 0.0
        %6622 = vmatpush.msra.mxu0 0.0
        %6623 = vmatpush.msra.mxu0 0.0
        %6624 = vmatpush.msra.mxu0 0.0
        %6625 = vmatpush.msra.mxu0 0.0
        %6626 = vmatpush.msra.mxu0 0.0
        %6627 = vmatpush.msra.mxu0 0.0
        %6628 = vmatpush.msra.mxu0 %v6608
        %6629 = vmatmul.f32.gmra.mxu0 %v6611
        %v6630 = vpop.f32.mrf.mxu0
        %v6631 = vadd.f32 0.0, %v6630
        %6632 = vdwg.mxu0
        %6633 = vrot.lane.b32.xlu0 %v5622, 72
        %v6634 = vpop.permute.xlu0 %6633
        %v6637 = vsel %vm5627, %v6606, 0
        %6639 = vmatpush.msra.mxu0 0.0
        %6640 = vmatpush.msra.mxu0 0.0
        %6641 = vmatpush.msra.mxu0 0.0
        %6642 = vmatpush.msra.mxu0 0.0
        %6643 = vmatpush.msra.mxu0 0.0
        %6644 = vmatpush.msra.mxu0 0.0
        %6645 = vmatpush.msra.mxu0 0.0
        %6646 = vmatpush.msra.mxu0 0.0
        %6647 = vmatpush.msra.mxu0 0.0
        %6648 = vmatpush.msra.mxu0 0.0
        %6649 = vmatpush.msra.mxu0 0.0
        %6650 = vmatpush.msra.mxu0 0.0
        %6651 = vmatpush.msra.mxu0 0.0
        %6652 = vmatpush.msra.mxu0 0.0
        %6653 = vmatpush.msra.mxu0 0.0
        %6654 = vmatpush.msra.mxu0 %v6634
        %6655 = vmatmul.f32.gmra.mxu0 %v6637
        %v6656 = vpop.f32.mrf.mxu0
        %v6657 = vadd.f32 0.0, %v6656
        %6658 = vdwg.mxu0
        %6661 = vrot.lane.b32.xlu0 %v5850, 8
        %v6662 = vpop.permute.xlu0 %6661
        %6663 = vrot.lane.b32.xlu0 %v5877, 8
        %v6664 = vpop.permute.xlu0 %6663
        %6669 = vrot.lane.b32.xlu0 %v5981, 16
        %v6670 = vpop.permute.xlu0 %6669
        %6671 = vrot.lane.b32.xlu0 %v6007, 16
        %v6672 = vpop.permute.xlu0 %6671
        %6677 = vrot.lane.b32.xlu0 %v6111, 24
        %v6678 = vpop.permute.xlu0 %6677
        %6679 = vrot.lane.b32.xlu0 %v6137, 24
        %v6680 = vpop.permute.xlu0 %6679
        %6685 = vrot.lane.b32.xlu0 %v6241, 32
        %v6686 = vpop.permute.xlu0 %6685
        %6687 = vrot.lane.b32.xlu0 %v6267, 32
        %v6688 = vpop.permute.xlu0 %6687
        %6693 = vrot.lane.b32.xlu0 %v6371, 40
        %v6694 = vpop.permute.xlu0 %6693
        %6695 = vrot.lane.b32.xlu0 %v6397, 40
        %v6696 = vpop.permute.xlu0 %6695
        %6701 = vrot.lane.b32.xlu0 %v6501, 48
        %v6702 = vpop.permute.xlu0 %6701
        %6703 = vrot.lane.b32.xlu0 %v6527, 48
        %v6704 = vpop.permute.xlu0 %6703
        %6709 = vrot.lane.b32.xlu0 %v6631, 56
        %v6710 = vpop.permute.xlu0 %6709
        %6711 = vrot.lane.b32.xlu0 %v6657, 56
        %v6712 = vpop.permute.xlu0 %6711
        %v6715 = vsel %vm5627, %v5722, %v6662
        %v6716 = vsel %vm5627, %v5745, %v6664
        %v6717 = vsel %vm884, %v6715, %v6670
        %v6718 = vsel %vm884, %v6716, %v6672
        %vm6719 = vcmask 195584
        %v6720 = vsel %vm6719, %v6717, %v6678
        %v6721 = vsel %vm6719, %v6718, %v6680
        %v6722 = vsel %vm1222, %v6720, %v6686
        %v6723 = vsel %vm1222, %v6721, %v6688
        %vm6724 = vcmask 326656
        %v6725 = vsel %vm6724, %v6722, %v6694
        %v6726 = vsel %vm6724, %v6723, %v6696
        %vm6727 = vcmask 392192
        %v6728 = vsel %vm6727, %v6725, %v6702
        %v6729 = vsel %vm6727, %v6726, %v6704
        %vm6730 = vcmask 457728
        %v6731 = vsel %vm6730, %v6728, %v6710
        %v6732 = vsel %vm6730, %v6729, %v6712
        %v6733 = vld [vmem:[#allocation17] sm:$0xff]
        %v6734 = vld [vmem:[#allocation17 + $0x8] sm:$0xff]
        %v6735 = vld [vmem:[#allocation17 + $0x10] sm:$0xff]
        %v6736 = vld [vmem:[#allocation17 + $0x18] sm:$0xff]
        %v6737 = vld [vmem:[#allocation17 + $0x20] sm:$0xff]
        %v6738 = vld [vmem:[#allocation17 + $0x28] sm:$0xff]
        %v6739 = vld [vmem:[#allocation17 + $0x30] sm:$0xff]
        %v6740 = vld [vmem:[#allocation17 + $0x38] sm:$0xff]
        %v6741 = vld [vmem:[%s12] sm:$0x1]
        %v6743 = vperm.slane %v6741, 0
        %v6746 = vsel %vm959, %v6731, 0
        %v6749 = vsel %vm959, %v6732, 0
        %6751 = vmatpush.msra.mxu0 0.0
        %6752 = vmatpush.msra.mxu0 0.0
        %6753 = vmatpush.msra.mxu0 0.0
        %6754 = vmatpush.msra.mxu0 0.0
        %6755 = vmatpush.msra.mxu0 0.0
        %6756 = vmatpush.msra.mxu0 0.0
        %6757 = vmatpush.msra.mxu0 0.0
        %6758 = vmatpush.msra.mxu0 0.0
        %6759 = vmatpush.msra.mxu0 %v6740
        %6760 = vmatpush.msra.mxu0 %v6739
        %6761 = vmatpush.msra.mxu0 %v6738
        %6762 = vmatpush.msra.mxu0 %v6737
        %6763 = vmatpush.msra.mxu0 %v6736
        %6764 = vmatpush.msra.mxu0 %v6735
        %6765 = vmatpush.msra.mxu0 %v6734
        %6766 = vmatpush.msra.mxu0 %v6733
        %6767 = vmatmul.f32.gmra.mxu0 %v6746
        %v6768 = vpop.f32.mrf.mxu0
        %v6769 = vadd.f32 %v6743, %v6768
        %6770 = vmatmul.f32.gmra.mxu0 %v6749
        %v6771 = vpop.f32.mrf.mxu0
        %v6772 = vadd.f32 %v6743, %v6771
        %6773 = vdwg.mxu0
        %v6774 = vadd.f32 %v5548, %v6769
        %v6775 = vadd.f32 %v5549, %v6772
        %v6776 = vld [vmem:[#allocation19] sm:$0xff]
        %v6777 = vld [vmem:[#allocation19 + $0x8] sm:$0xff]
        %v6778 = vld [vmem:[#allocation19 + $0x10] sm:$0xff]
        %v6779 = vld [vmem:[#allocation19 + $0x18] sm:$0xff]
        %v6780 = vld [vmem:[#allocation19 + $0x20] sm:$0xff]
        %v6781 = vld [vmem:[#allocation19 + $0x28] sm:$0xff]
        %v6782 = vld [vmem:[#allocation19 + $0x30] sm:$0xff]
        %v6783 = vld [vmem:[#allocation19 + $0x38] sm:$0xff]
        %v6784 = vld [vmem:[#allocation19 + $0x40] sm:$0xff]
        %v6785 = vld [vmem:[#allocation19 + $0x48] sm:$0xff]
        %v6786 = vld [vmem:[#allocation19 + $0x50] sm:$0xff]
        %v6787 = vld [vmem:[#allocation19 + $0x58] sm:$0xff]
        %v6788 = vld [vmem:[#allocation19 + $0x60] sm:$0xff]
        %v6789 = vld [vmem:[#allocation19 + $0x68] sm:$0xff]
        %v6790 = vld [vmem:[#allocation19 + $0x70] sm:$0xff]
        %v6791 = vld [vmem:[#allocation19 + $0x78] sm:$0xff]
        %v6792 = vld [vmem:[%s14] sm:$0x3]
        %v6794 = vperm.slane %v6792, 0
        %v6795 = vperm.slane %v6792, 1
        %v6800 = vrot.slane %v6774, 7
        %v6801 = vrot.slane %v6775, 6
        %v6802 = vsel %vm1209, %v6801, %v6800
        %v6803 = vsel %vm959, %v6802, 0
        %6805 = vmatpush.msra.mxu0 0.0
        %6806 = vmatpush.msra.mxu0 0.0
        %6807 = vmatpush.msra.mxu0 0.0
        %6808 = vmatpush.msra.mxu0 0.0
        %6809 = vmatpush.msra.mxu0 0.0
        %6810 = vmatpush.msra.mxu0 0.0
        %6811 = vmatpush.msra.mxu0 0.0
        %6812 = vmatpush.msra.mxu0 0.0
        %6813 = vmatpush.msra.mxu0 %v6790
        %6814 = vmatpush.msra.mxu0 %v6788
        %6815 = vmatpush.msra.mxu0 %v6786
        %6816 = vmatpush.msra.mxu0 %v6784
        %6817 = vmatpush.msra.mxu0 %v6782
        %6818 = vmatpush.msra.mxu0 %v6780
        %6819 = vmatpush.msra.mxu0 %v6778
        %6820 = vmatpush.msra.mxu0 %v6776
        %6821 = vmatmul.f32.gmra.mxu0 %v6803
        %v6822 = vpop.f32.mrf.mxu0
        %v6823 = vadd.f32 %v6794, %v6822
        %6824 = vdwg.mxu0
        %6825 = vmatpush.msra.mxu0 0.0
        %6826 = vmatpush.msra.mxu0 0.0
        %6827 = vmatpush.msra.mxu0 0.0
        %6828 = vmatpush.msra.mxu0 0.0
        %6829 = vmatpush.msra.mxu0 0.0
        %6830 = vmatpush.msra.mxu0 0.0
        %6831 = vmatpush.msra.mxu0 0.0
        %6832 = vmatpush.msra.mxu0 0.0
        %6833 = vmatpush.msra.mxu0 %v6791
        %6834 = vmatpush.msra.mxu0 %v6789
        %6835 = vmatpush.msra.mxu0 %v6787
        %6836 = vmatpush.msra.mxu0 %v6785
        %6837 = vmatpush.msra.mxu0 %v6783
        %6838 = vmatpush.msra.mxu0 %v6781
        %6839 = vmatpush.msra.mxu0 %v6779
        %6840 = vmatpush.msra.mxu0 %v6777
        %6841 = vmatmul.f32.gmra.mxu0 %v6803
        %v6842 = vpop.f32.mrf.mxu0
        %v6843 = vadd.f32 %v6795, %v6842
        %6844 = vdwg.mxu0
        %v6845 = vxor.u32 %v6823, 2147483648
        %v6846 = vxor.u32 %v6843, 2147483648
        %v6847 = vmul.f32 %v6845, 1.442695
        %v6848 = vpow.pop %v6847
        %v6849 = vmul.f32 %v6846, 1.442695
        %v6850 = vpow.pop %v6849
        %v6851 = vadd.f32 %v6848, 1.0
        %v6852 = vadd.f32 %v6850, 1.0
        %v6853 = vrcp.pop %v6851
        %v6854 = vmul.f32 %v6851, %v6853
        %v6855 = vsub.f32 1.0, %v6854
        %v6856 = vmul.f32 %v6853, %v6855
        %v6857 = vadd.f32 %v6853, %v6856
        %vm6858 = vweird.f32 %v6851
        %vm6859 = vweird.f32 %v6853
        %vm6860 = vmor %vm6858, %vm6859
        %v6861 = vsel %vm6860, %v6853, %v6857
        %v6862 = vand.u32 2147483647, %v6851
        %vm6863 = vcmp.eq.f32.partialorder %v6862, 8.507059e+37
        %v6864 = vand.u32 %v6851, 2147483648
        %v6865 = vor.u32 1.1754944e-38, %v6864
        %v6866 = vsel %vm6863, %v6865, %v6861
        %v6867 = vmul.f32 1.0, %v6866
        %v6868 = vrcp.pop %v6852
        %v6869 = vmul.f32 %v6852, %v6868
        %v6870 = vsub.f32 1.0, %v6869
        %v6871 = vmul.f32 %v6868, %v6870
        %v6872 = vadd.f32 %v6868, %v6871
        %vm6873 = vweird.f32 %v6852
        %vm6874 = vweird.f32 %v6868
        %vm6875 = vmor %vm6873, %vm6874
        %v6876 = vsel %vm6875, %v6868, %v6872
        %v6877 = vand.u32 2147483647, %v6852
        %vm6878 = vcmp.eq.f32.partialorder %v6877, 8.507059e+37
        %v6879 = vand.u32 %v6852, 2147483648
        %v6880 = vor.u32 1.1754944e-38, %v6879
        %v6881 = vsel %vm6878, %v6880, %v6876
        %v6882 = vmul.f32 1.0, %v6881
        %v6883 = vmul.f32 %v6823, %v6867
        %v6884 = vmul.f32 %v6843, %v6882
        %v6885 = vld [vmem:[#allocation20] sm:$0xff]
        %v6886 = vld [vmem:[#allocation20 + $0x8] sm:$0xff]
        %v6887 = vld [vmem:[#allocation20 + $0x10] sm:$0xff]
        %v6888 = vld [vmem:[#allocation20 + $0x18] sm:$0xff]
        %v6889 = vld [vmem:[#allocation20 + $0x20] sm:$0xff]
        %v6890 = vld [vmem:[#allocation20 + $0x28] sm:$0xff]
        %v6891 = vld [vmem:[#allocation20 + $0x30] sm:$0xff]
        %v6892 = vld [vmem:[#allocation20 + $0x38] sm:$0xff]
        %v6893 = vld [vmem:[#allocation20 + $0x40] sm:$0xff]
        %v6894 = vld [vmem:[#allocation20 + $0x48] sm:$0xff]
        %v6895 = vld [vmem:[#allocation20 + $0x50] sm:$0xff]
        %v6896 = vld [vmem:[#allocation20 + $0x58] sm:$0xff]
        %v6897 = vld [vmem:[#allocation20 + $0x60] sm:$0xff]
        %v6898 = vld [vmem:[#allocation20 + $0x68] sm:$0xff]
        %v6899 = vld [vmem:[#allocation20 + $0x70] sm:$0xff]
        %v6900 = vld [vmem:[#allocation20 + $0x78] sm:$0xff]
        %v6901 = vld [vmem:[#allocation20 + $0x80] sm:$0xff]
        %v6902 = vld [vmem:[#allocation20 + $0x88] sm:$0xff]
        %v6903 = vld [vmem:[#allocation20 + $0x90] sm:$0xff]
        %v6904 = vld [vmem:[#allocation20 + $0x98] sm:$0xff]
        %v6905 = vld [vmem:[#allocation20 + $0xa0] sm:$0xff]
        %v6906 = vld [vmem:[#allocation20 + $0xa8] sm:$0xff]
        %v6907 = vld [vmem:[#allocation20 + $0xb0] sm:$0xff]
        %v6908 = vld [vmem:[#allocation20 + $0xb8] sm:$0xff]
        %v6909 = vld [vmem:[#allocation20 + $0xc0] sm:$0xff]
        %v6910 = vld [vmem:[#allocation20 + $0xc8] sm:$0xff]
        %v6911 = vld [vmem:[#allocation20 + $0xd0] sm:$0xff]
        %v6912 = vld [vmem:[#allocation20 + $0xd8] sm:$0xff]
        %v6913 = vld [vmem:[#allocation20 + $0xe0] sm:$0xff]
        %v6914 = vld [vmem:[#allocation20 + $0xe8] sm:$0xff]
        %v6915 = vld [vmem:[#allocation20 + $0xf0] sm:$0xff]
        %v6916 = vld [vmem:[#allocation20 + $0xf8] sm:$0xff]
        %v6917 = vld [vmem:[%s16] sm:$0x1]
        %v6919 = vperm.slane %v6917, 0
        %6921 = vmatpush.msra.mxu0 %v6900
        %6922 = vmatpush.msra.mxu0 %v6899
        %6923 = vmatpush.msra.mxu0 %v6898
        %6924 = vmatpush.msra.mxu0 %v6897
        %6925 = vmatpush.msra.mxu0 %v6896
        %6926 = vmatpush.msra.mxu0 %v6895
        %6927 = vmatpush.msra.mxu0 %v6894
        %6928 = vmatpush.msra.mxu0 %v6893
        %6929 = vmatpush.msra.mxu0 %v6892
        %6930 = vmatpush.msra.mxu0 %v6891
        %6931 = vmatpush.msra.mxu0 %v6890
        %6932 = vmatpush.msra.mxu0 %v6889
        %6933 = vmatpush.msra.mxu0 %v6888
        %6934 = vmatpush.msra.mxu0 %v6887
        %6935 = vmatpush.msra.mxu0 %v6886
        %6936 = vmatpush.msra.mxu0 %v6885
        %6937 = vmatmul.f32.gmra.mxu0 %v6883
        %v6938 = vpop.f32.mrf.mxu0
        %v6939 = vadd.f32 %v6919, %v6938
        %6940 = vdwg.mxu0
        %6941 = vmatpush.msra.mxu0 %v6916
        %6942 = vmatpush.msra.mxu0 %v6915
        %6943 = vmatpush.msra.mxu0 %v6914
        %6944 = vmatpush.msra.mxu0 %v6913
        %6945 = vmatpush.msra.mxu0 %v6912
        %6946 = vmatpush.msra.mxu0 %v6911
        %6947 = vmatpush.msra.mxu0 %v6910
        %6948 = vmatpush.msra.mxu0 %v6909
        %6949 = vmatpush.msra.mxu0 %v6908
        %6950 = vmatpush.msra.mxu0 %v6907
        %6951 = vmatpush.msra.mxu0 %v6906
        %6952 = vmatpush.msra.mxu0 %v6905
        %6953 = vmatpush.msra.mxu0 %v6904
        %6954 = vmatpush.msra.mxu0 %v6903
        %6955 = vmatpush.msra.mxu0 %v6902
        %6956 = vmatpush.msra.mxu0 %v6901
        %6957 = vmatmul.f32.gmra.mxu0 %v6884
        %v6958 = vpop.f32.mrf.mxu0
        %v6959 = vadd.f32 %v6939, %v6958
        %6960 = vdwg.mxu0
        %vm6961 = vcmask 517120
        %v6962 = vsel %vm6961, %v6959, 0.0
        %6963 = vadd.xlane.f32.xlu0 %v6962
        %v6964 = vpop.xlane.xlu0 %6963
        %v6965 = vrcp.pop 64.0
        %v6966 = vmul.f32 64.0, %v6965
        %v6967 = vsub.f32 1.0, %v6966
        %v6968 = vmul.f32 %v6965, %v6967
        %v6969 = vadd.f32 %v6965, %v6968
        %vm6970 = vweird.f32 %v6965
        %v6971 = vsel %vm6970, %v6965, %v6969
        %v6972 = vmul.f32 %v6964, %v6971
        %v6973 = vsub.f32 %v6959, %v6972
        %v6974 = vmul.f32 %v6973, %v6973
        %v6975 = vsel %vm6961, %v6974, 0.0
        %6976 = vadd.xlane.f32.xlu0 %v6975
        %v6977 = vpop.xlane.xlu0 %6976
        %v6978 = vmul.f32 %v6977, %v6971
        %v6979 = vadd.f32 %v6978, 1e-05
        %v6980 = vrsqrt.pop %v6979
        %v6981 = vmul.f32 %v6980, %v6979
        %v6982 = vmul.f32 %v6981, %v6980
        %v6983 = vmul.f32 0.5, %v6982
        %v6984 = vsub.f32 1.5, %v6983
        %v6985 = vmul.f32 %v6980, %v6984
        %vm6986 = vweird.f32 %v6979
        %vm6987 = vweird.f32 %v6980
        %vm6988 = vmor %vm6986, %vm6987
        %v6989 = vsel %vm6988, %v6980, %v6985
        %v6990 = vmul.f32 %v6973, %v6989
        %v6991 = vld [vmem:[%s17] sm:$0x1]
        %v6993 = vperm.slane %v6991, 0
        %v6995 = vmul.f32 %v6990, %v6993
        %v6996 = vld [vmem:[%s18] sm:$0x1]
        %v6998 = vperm.slane %v6996, 0
        %v7000 = vadd.f32 %v6995, %v6998
        %v7001 = vxor.u32 %v7000, 2147483648
        %v7002 = vmul.f32 %v7001, 1.442695
        %v7003 = vpow.pop %v7002
        %v7004 = vadd.f32 %v7003, 1.0
        %v7005 = vrcp.pop %v7004
        %v7006 = vmul.f32 %v7004, %v7005
        %v7007 = vsub.f32 1.0, %v7006
        %v7008 = vmul.f32 %v7005, %v7007
        %v7009 = vadd.f32 %v7005, %v7008
        %vm7010 = vweird.f32 %v7004
        %vm7011 = vweird.f32 %v7005
        %vm7012 = vmor %vm7010, %vm7011
        %v7013 = vsel %vm7012, %v7005, %v7009
        %v7014 = vand.u32 2147483647, %v7004
        %vm7015 = vcmp.eq.f32.partialorder %v7014, 8.507059e+37
        %v7016 = vand.u32 %v7004, 2147483648
        %v7017 = vor.u32 1.1754944e-38, %v7016
        %v7018 = vsel %vm7015, %v7017, %v7013
        %v7019 = vmul.f32 1.0, %v7018
        %v7020 = vmul.f32 %v7000, %v7019
        %v7021 = vld [vmem:[#allocation22] sm:$0xff]
        %v7022 = vld [vmem:[#allocation22 + $0x8] sm:$0xff]
        %v7023 = vld [vmem:[#allocation22 + $0x10] sm:$0xff]
        %v7024 = vld [vmem:[#allocation22 + $0x18] sm:$0xff]
        %v7025 = vld [vmem:[#allocation22 + $0x20] sm:$0xff]
        %v7026 = vld [vmem:[#allocation22 + $0x28] sm:$0xff]
        %v7027 = vld [vmem:[#allocation22 + $0x30] sm:$0xff]
        %v7028 = vld [vmem:[#allocation22 + $0x38] sm:$0xff]
        %v7029 = vld [vmem:[#allocation2] sm:$0x1]
        %v7031 = vperm.slane %v7029, 0
        %v7034 = vsel %vm959, %v7020, 0
        %7036 = vmatpush.msra.mxu0 0.0
        %7037 = vmatpush.msra.mxu0 0.0
        %7038 = vmatpush.msra.mxu0 0.0
        %7039 = vmatpush.msra.mxu0 0.0
        %7040 = vmatpush.msra.mxu0 0.0
        %7041 = vmatpush.msra.mxu0 0.0
        %7042 = vmatpush.msra.mxu0 0.0
        %7043 = vmatpush.msra.mxu0 0.0
        %7044 = vmatpush.msra.mxu0 %v7028
        %7045 = vmatpush.msra.mxu0 %v7027
        %7046 = vmatpush.msra.mxu0 %v7026
        %7047 = vmatpush.msra.mxu0 %v7025
        %7048 = vmatpush.msra.mxu0 %v7024
        %7049 = vmatpush.msra.mxu0 %v7023
        %7050 = vmatpush.msra.mxu0 %v7022
        %7051 = vmatpush.msra.mxu0 %v7021
        %7052 = vmatmul.f32.gmra.mxu0 %v7034
        %v7053 = vpop.f32.mrf.mxu0
        %v7054 = vadd.f32 %v7031, %v7053
        %7055 = vdwg.mxu0
        %v7056 = vxor.u32 %v7054, 2147483648
        %v7057 = vmul.f32 %v7056, 1.442695
        %v7058 = vpow.pop %v7057
        %v7059 = vadd.f32 %v7058, 1.0
        %v7060 = vrcp.pop %v7059
        %v7061 = vmul.f32 %v7059, %v7060
        %v7062 = vsub.f32 1.0, %v7061
        %v7063 = vmul.f32 %v7060, %v7062
        %v7064 = vadd.f32 %v7060, %v7063
        %vm7065 = vweird.f32 %v7059
        %vm7066 = vweird.f32 %v7060
        %vm7067 = vmor %vm7065, %vm7066
        %v7068 = vsel %vm7067, %v7060, %v7064
        %v7069 = vand.u32 2147483647, %v7059
        %vm7070 = vcmp.eq.f32.partialorder %v7069, 8.507059e+37
        %v7071 = vand.u32 %v7059, 2147483648
        %v7072 = vor.u32 1.1754944e-38, %v7071
        %v7073 = vsel %vm7070, %v7072, %v7068
        %v7074 = vmul.f32 1.0, %v7073
        %vm7075 = vcmask 1024
        %7076 = vst.msk [vmem:[%s871] sm:$0x3] %vm7075, %v7074
        %p7077 = scmp.lt.s32.totalorder %s43, 1
        %s7078 = scalar_select %p7077, %s43, 1
        %s7079 = smul.addr %s7078, 2
        %s7080 = scalar_lea.vmem %s21, %s7079
        // Predicated region
        $region157: #{forward.1} parent=103 // pred_check
          %p7081 = pneg %p507
        $region158: #{forward.1} parent=103 // pred_check_branch
          %7083 = sbr.rel (%p7081) target = $region160
        $region159: #{forward.1} parent=103 // pred_region
          _
        $region160: #{forward.1} parent=103 // pred_fallthru
          _
      $region104: #{forward.1} parent=5 // pred_fallthru
        _
      %p7084 = scmp.le.s32.totalorder 2, %s38
      // Predicated region
      $region161: #{forward.1} parent=5 // pred_check
        %p7085 = pneg %p7084
      $region162: #{forward.1} parent=5 // pred_check_branch
        %7087 = sbr.rel (%p7085) target = $region164
      $region163: #{forward.1} parent=5 // pred_region
        %s7088 = ssub.s32 %s38, 2
        // Predicated region
        $region165: #{forward.1} parent=163 // pred_check
          %p7089 = pneg %p513
        $region166: #{forward.1} parent=163 // pred_check_branch
          %7091 = sbr.rel (%p7089) target = $region168
        $region167: #{forward.1} parent=163 // pred_region
          %p7092 = scmp.lt.s32.totalorder %s44, 1
          %s7093 = scalar_select %p7092, %s44, 1
          %s7094 = smul.addr %s7093, 2
          %s7095 = scalar_lea.vmem %s21, %s7094
        $region168: #{forward.1} parent=163 // pred_fallthru
          _
      $region164: #{forward.1} parent=5 // pred_fallthru
        _
    $region6: #{forward.1} parent=1 // loop_footer
      %s42 = sadd.s32 1, %s38
    $region7: #{forward.1} parent=1 // loop_footer_branch
      %37 = sbr.rel target = $region3
    $region8: #{forward.1} parent=1 // loop_exit
      _
    %7096 = vsyncpa [#allocation4], 1
    %s7097 = scalar_lea.sflag [#allocation4], 1
    %7098 = vsyncpa %s7097, 1
    %7099 = vsyncpa [#allocation6], 1
    %7100 = vsyncpa [#allocation9], 1
    %7101 = vsyncpa [#allocation12], 1
    %7102 = vsyncpa [#allocation15], 1
    %7103 = vsyncpa [#allocation18], 1
    %7104 = vsyncpa [#allocation21], 1

</llo_original>
